<compile_context>
chip_gen: v6e
topology: v6e:2x2x1
jax: 0.10.0
libtpu: 0.0.40
codegen_flags: <defaults>
</compile_context>

<pallas_src>
import math

import jax
import jax.numpy as jnp
from jax.experimental import pallas as pl
from jax.experimental.pallas import tpu as pltpu


# ----------------------------- fused Pallas kernel ------------------------------


def _make_fused_kernel(T, B, D, C, L, use_audio, use_video):
    """Builds the fused forward kernel for static (T, B, D, C, L, modality) config."""
    H = D
    TB = T * B
    f32 = jnp.float32

    def kernel(*refs):
        it = iter(refs)
        if use_audio:
            audio_ref = next(it)   # (T*B, 321*4) windowed STFT frames
            wa_ref = next(it)      # (321*4, D)
            ba_ref = next(it)      # (1, D)
        if use_video:
            video_ref = next(it)   # (T*B, D)
        if use_audio and use_video:
            wja_ref = next(it)     # (D, D)  jointConv, audio half
            wjv_ref = next(it)     # (D, D)  jointConv, video half
            bj_ref = next(it)      # (1, D)
        wfront_ref = next(it)      # (D, 4H+D)  N-packed [LSTM0 W_ih | attn annotation W]
        bfront_ref = next(it)      # (1, 4H+D)
        whh0_ref = next(it)        # (H, 4H)    LSTM layer-0 recurrent weight
        packs = [(next(it), next(it)) for _ in range(L - 1)]  # ((D+H,4H),(1,4H)) K-packed
        w1h_ref = next(it)         # (D, D)  attention.dense[0], hidden half
        w2_ref = next(it)          # (1, D)  attention.dense[2] weight
        wcf_ref = next(it)         # (2D, D) contextFusion, K-packed [h0 ; context]
        bcf_ref = next(it)         # (1, D)
        woc_ref = next(it)         # (D, C)  outMLP, context half
        woo_ref = next(it)         # (D, C)  outMLP, decoder-out half
        bo_ref = next(it)          # (1, C)
        out_ref = next(it)         # (T*B, C) output
        ctx_sc = next(it)          # VMEM (T*B, D) : all_context accumulator
        dec_sc = next(it)          # VMEM (T*B, D) : all_out (decoder outputs)

        # ---- front-end (whole sequence, single matmuls, all resident in VMEM) ----
        if use_audio:
            audio_feat = (
                jnp.dot(audio_ref[...], wa_ref[...], preferred_element_type=f32)
                + ba_ref[...]
            )  # (T*B, D)
        if use_audio and use_video:
            # jointConv on cat([audio, video]) without materializing the concat
            joint = (
                jnp.dot(audio_feat, wja_ref[...], preferred_element_type=f32)
                + jnp.dot(video_ref[...], wjv_ref[...], preferred_element_type=f32)
                + bj_ref[...]
            )
        elif use_video:
            joint = video_ref[...]
        else:
            joint = audio_feat
        # joint: (T*B, D), rows ordered (t, b)  == jointBatch / attention annotations

        # ---- hoisted, sequence-parallel N-packed projection (off the serial chain):
        # one matmul produces both the layer-0 LSTM input gates and the attention
        # annotation projection (incl. its bias) for all timesteps at once.
        front = (
            jnp.dot(joint, wfront_ref[...], preferred_element_type=f32)
            + bfront_ref[...]
        )                                  # (T*B, 4H + D)
        gx0 = front[:, : 4 * H]            # (T*B, 4H)
        annp = front[:, 4 * H:]            # (T*B, D)
        w2row = w2_ref[...]                # (1, D)

        # ---- loop-invariant constants (hoisted iotas / masks) ----
        lane = jax.lax.broadcasted_iota(jnp.int32, (B, 4 * H), 1)
        g_mask = jnp.logical_and(lane >= 2 * H, lane < 3 * H)   # tanh lanes (gate g)
        # single EUP pass per gate vreg: sigmoid(x) = 0.5*tanh(0.5*x)+0.5,
        # tanh lanes pass through (scale 1, offset 0).
        gate_scale = jnp.where(g_mask, 1.0, 0.5).astype(f32)    # (B, 4H)
        gate_off = jnp.where(g_mask, 0.0, 0.5).astype(f32)      # (B, 4H)
        # rows are ordered (t, b): row r belongs to batch element r % B.
        # segment-sum over time as a tiny matmul constant:
        selT = (
            jax.lax.broadcasted_iota(jnp.int32, (B, TB), 1) % B
            == jax.lax.broadcasted_iota(jnp.int32, (B, TB), 0)
        ).astype(f32)                                            # (B, T*B)
        # masks used to broadcast a per-batch row over all its (t, b) rows
        # without an MXU matmul (VPU select only):
        row_mod = jax.lax.broadcasted_iota(jnp.int32, (TB, D), 0) % B
        batch_masks = [row_mod == b for b in range(1, B)]

        h = [jnp.zeros((B, H), f32) for _ in range(L)]
        c = [jnp.zeros((B, H), f32) for _ in range(L)]

        # ---- sequential decoder loop, statically unrolled in-kernel ----
        for t in range(T):
            r0, r1 = t * B, (t + 1) * B

            # stacked LSTM cell for one timestep (PyTorch gate order i, f, g, o)
            x = None
            for l in range(L):
                if l == 0:
                    gates = gx0[r0:r1, :] + jnp.dot(
                        h[0], whh0_ref[...], preferred_element_type=f32
                    )
                else:
                    wp_ref, bp_ref = packs[l - 1]
                    # K-packed: one (B, 2D)@(2D, 4H) matmul instead of two
                    xh = jnp.concatenate([x, h[l]], axis=1)
                    gates = (
                        jnp.dot(xh, wp_ref[...], preferred_element_type=f32)
                        + bp_ref[...]
                    )
                # one tanh EUP pass + lane-masked affine (covers sigmoid lanes too)
                act = gate_scale * jnp.tanh(gates * gate_scale) + gate_off
                i_g = act[:, 0 * H:1 * H]
                f_g = act[:, 1 * H:2 * H]
                g_g = act[:, 2 * H:3 * H]
                o_g = act[:, 3 * H:4 * H]
                c[l] = f_g * c[l] + i_g * g_g
                h[l] = o_g * jnp.tanh(c[l])
                x = h[l]
            h_last = h[L - 1]
            dec_sc[r0:r1, :] = h_last                       # all_out[t] = decoderOut

            # Bahdanau attention of h_last over the full joint sequence
            hid_proj = jnp.dot(h_last, w1h_ref[...], preferred_element_type=f32)  # (B, D)
            # broadcast hid_proj[b] to every (t, b) row: sublane broadcast + select
            # (no MXU round-trip on the serial chain)
            hid_tiled = jnp.broadcast_to(hid_proj[0:1, :], (TB, D))
            for b in range(1, B):
                hid_tiled = jnp.where(
                    batch_masks[b - 1],
                    jnp.broadcast_to(hid_proj[b:b + 1, :], (TB, D)),
                    hid_tiled,
                )
            e = jnp.sum(
                jax.nn.relu(annp + hid_tiled) * w2row, axis=-1, keepdims=True
            )                                                                     # (T*B, 1)
            # (attention.dense[2].bias omitted: softmax over time is shift-invariant)
            e = e - jnp.max(e, axis=0, keepdims=True)       # global shift, per-b valid
            ee = jnp.exp(e)
            num = jnp.dot(selT, ee * joint, preferred_element_type=f32)           # (B, D)
            den = jnp.dot(selT, ee, preferred_element_type=f32)                   # (B, 1)
            context = num * pl.reciprocal(den, approx=True)  # softmax-weighted annotations
            ctx_sc[r0:r1, :] = context                      # all_context[t]

            # contextFusion (pure Linear) rewrites layer-0 hidden for the next step,
            # K-packed into a single (B, 2D)@(2D, D) matmul
            hcat = jnp.concatenate([h[0], context], axis=1)
            h[0] = (
                jnp.dot(hcat, wcf_ref[...], preferred_element_type=f32)
                + bcf_ref[...]
            )

        # ---- outMLP + log_softmax, hoisted after the loop, single contiguous store ----
        logits = (
            jnp.dot(ctx_sc[...], woc_ref[...], preferred_element_type=f32)
            + jnp.dot(dec_sc[...], woo_ref[...], preferred_element_type=f32)
            + bo_ref[...]
        )
        logits = logits - jnp.max(logits, axis=-1, keepdims=True)
        out_ref[...] = logits - jnp.log(
            jnp.sum(jnp.exp(logits), axis=-1, keepdims=True)
        )

    return kernel


# --------------------------- parameter creation ------------------------------


def init_params(key, d_model, num_layers, num_classes, audio_dim=321):
    """Deterministic PyTorch-style uniform init for all (used) module parameters."""
    D = d_model

    def u(k, shape, bound):
        return jax.random.uniform(k, shape, jnp.float32, -bound, bound)

    keys = iter(jax.random.split(key, 12 + 4 * num_layers))
    p = {}
    b = 1.0 / math.sqrt(audio_dim * 4)
    p["audio_w"] = u(next(keys), (D, audio_dim, 4), b)     # Conv1d(321, D, k=4, s=4)
    p["audio_b"] = u(next(keys), (D,), b)
    b = 1.0 / math.sqrt(2 * D)
    p["joint_w"] = u(next(keys), (D, 2 * D, 1), b)         # Conv1d(2D, D, k=1)
    p["joint_b"] = u(next(keys), (D,), b)
    b = 1.0 / math.sqrt(D)
    p["lstm"] = [
        {
            "w_ih": u(next(keys), (4 * D, D), b),
            "w_hh": u(next(keys), (4 * D, D), b),
            "b_ih": u(next(keys), (4 * D,), b),
            "b_hh": u(next(keys), (4 * D,), b),
        }
        for _ in range(num_layers)
    ]
    b = 1.0 / math.sqrt(2 * D)
    p["attn_w1"] = u(next(keys), (D, 2 * D), b)            # attention.dense[0]
    p["attn_b1"] = u(next(keys), (D,), b)
    b = 1.0 / math.sqrt(D)
    p["attn_w2"] = u(next(keys), (1, D), b)                # attention.dense[2]
    p["attn_b2"] = u(next(keys), (1,), b)                  # no effect (softmax shift)
    b = 1.0 / math.sqrt(2 * D)
    p["cf_w"] = u(next(keys), (D, 2 * D), b)               # contextFusion
    p["cf_b"] = u(next(keys), (D,), b)
    p["out_w"] = u(next(keys), (num_classes, 2 * D), b)    # outMLP
    p["out_b"] = u(next(keys), (num_classes,), b)
    # NOTE: the module also defines outputConv(D, C, k=1) but forward() never uses it.
    return p


# ------------------------------ forward pass ---------------------------------


def cnn_attention_lstm_forward(params, audio, video, d_model, num_layers, num_classes):
    """
    audio: (T_audio, B, 321) with T_audio = 4*T  (or None)
    video: (T, B, d_model)                        (or None)
    returns: (T, B, num_classes) log-probabilities
    """
    use_audio = audio is not None
    use_video = video is not None
    if not (use_audio or use_video):
        raise ValueError("Both audio and visual inputs missing.")

    D, C, L = d_model, num_classes, num_layers
    H = D

    inputs, shapes = [], []

    def add(x):
        x = jnp.asarray(x, jnp.float32)
        inputs.append(x)
        shapes.append(x.shape)

    if use_audio:
        Ta, B, A = audio.shape
        T = Ta // 4
        # stride-4 / kernel-4 Conv1d == window-flatten then matmul.
        # window element (b, c_in, k) == audio[4t+k, b, c_in]; feature index = c*4 + k.
        x_win = (
            audio.reshape(T, 4, B, A).transpose(0, 2, 3, 1).reshape(T * B, A * 4)
        )
        add(x_win)
        add(params["audio_w"].reshape(D, A * 4).T)       # (A*4, D)
        add(params["audio_b"].reshape(1, D))
    if use_video:
        T, B, _ = video.shape
        add(video.reshape(T * B, D))
    if use_audio and use_video:
        wj = params["joint_w"][:, :, 0]                  # (D, 2D)
        add(wj[:, :D].T)                                 # audio half
        add(wj[:, D:].T)                                 # video half
        add(params["joint_b"].reshape(1, D))

    lp0 = params["lstm"][0]
    w1 = params["attn_w1"]                               # (D, 2D): [:, :D]=hidden, [:, D:]=annotation
    # N-packed sequence-parallel projection: [LSTM0 W_ih | attention annotation W]
    add(jnp.concatenate([lp0["w_ih"].T, w1[:, D:].T], axis=1))               # (D, 4H+D)
    add(
        jnp.concatenate([lp0["b_ih"] + lp0["b_hh"], params["attn_b1"]]).reshape(
            1, 4 * H + D
        )
    )
    add(lp0["w_hh"].T)                                   # (H, 4H)
    # K-packed deep-layer LSTM weights: gates = [x, h] @ [[W_ih]; [W_hh]]^T
    for l in range(1, L):
        lp = params["lstm"][l]
        add(jnp.concatenate([lp["w_ih"], lp["w_hh"]], axis=1).T)             # (D+H, 4H)
        add((lp["b_ih"] + lp["b_hh"]).reshape(1, 4 * H))
    add(w1[:, :D].T)                                     # attention hidden half (D, D)
    add(params["attn_w2"].reshape(1, D))
    # attn_b2 intentionally not passed: softmax over time is invariant to it.
    add(params["cf_w"].T)                                # (2D, D) K-packed contextFusion
    add(params["cf_b"].reshape(1, D))
    wo = params["out_w"]                                 # (C, 2D)
    add(wo[:, :D].T)                                     # context half
    add(wo[:, D:].T)                                     # decoder-out half
    add(params["out_b"].reshape(1, C))

    kernel = _make_fused_kernel(T, B, D, C, L, use_audio, use_video)
    out_flat = pl.pallas_call(
        kernel,
        out_shape=jax.ShapeDtypeStruct((T * B, C), jnp.float32),
        grid=(1,),
        in_specs=[pl.BlockSpec(s, lambda i: (0, 0)) for s in shapes],
        out_specs=pl.BlockSpec((T * B, C), lambda i: (0, 0)),
        scratch_shapes=[
            pltpu.VMEM((T * B, D), jnp.float32),   # all_context
            pltpu.VMEM((T * B, D), jnp.float32),   # all_out (decoder outputs)
        ],
        compiler_params=pltpu.CompilerParams(dimension_semantics=("arbitrary",)),
    )(*inputs)
    return out_flat.reshape(T, B, C)


# ---------------------------------- main --------------------------------------


if __name__ == "__main__":
    d_model = 32
    num_layers = 2
    num_classes = 40  # 26 letters + 10 digits + ' + space + blank + <EOS>
    B = 2
    T = 8             # video frames (25 Hz)
    T_audio = 4 * T   # STFT frames (100 Hz)
    audio_dim = 321

    key = jax.random.PRNGKey(0)
    k_param, k_audio, k_video = jax.random.split(key, 3)

    params = init_params(k_param, d_model, num_layers, num_classes, audio_dim)
    audio = jax.random.normal(k_audio, (T_audio, B, audio_dim), dtype=jnp.float32)
    video = jax.random.normal(k_video, (T, B, d_model), dtype=jnp.float32)

    out = cnn_attention_lstm_forward(
        params, audio, video, d_model, num_layers, num_classes
    )
    out = jax.block_until_ready(out)

    assert out.shape == (T, B, num_classes), out.shape
    assert bool(jnp.all(jnp.isfinite(out)))
    # log_softmax rows should sum (in prob space) to ~1
    row_sums = jnp.sum(jnp.exp(out), axis=2)
    assert bool(jnp.allclose(row_sums, 1.0, atol=1e-4))

    print("KERNEL_OK")
</pallas_src>

<mosaic_0001>
module attributes {stable_mosaic.version = 11 : i64} {
  func.func @kernel(%arg0: i32, %arg1: memref<16x1284xf32, #tpu.memory_space<vmem>>, %arg2: memref<1284x32xf32, #tpu.memory_space<vmem>>, %arg3: memref<1x32xf32, #tpu.memory_space<vmem>>, %arg4: memref<16x32xf32, #tpu.memory_space<vmem>>, %arg5: memref<32x32xf32, #tpu.memory_space<vmem>>, %arg6: memref<32x32xf32, #tpu.memory_space<vmem>>, %arg7: memref<1x32xf32, #tpu.memory_space<vmem>>, %arg8: memref<32x160xf32, #tpu.memory_space<vmem>>, %arg9: memref<1x160xf32, #tpu.memory_space<vmem>>, %arg10: memref<32x128xf32, #tpu.memory_space<vmem>>, %arg11: memref<64x128xf32, #tpu.memory_space<vmem>>, %arg12: memref<1x128xf32, #tpu.memory_space<vmem>>, %arg13: memref<32x32xf32, #tpu.memory_space<vmem>>, %arg14: memref<1x32xf32, #tpu.memory_space<vmem>>, %arg15: memref<64x32xf32, #tpu.memory_space<vmem>>, %arg16: memref<1x32xf32, #tpu.memory_space<vmem>>, %arg17: memref<32x40xf32, #tpu.memory_space<vmem>>, %arg18: memref<32x40xf32, #tpu.memory_space<vmem>>, %arg19: memref<1x40xf32, #tpu.memory_space<vmem>>, %arg20: memref<16x40xf32, #tpu.memory_space<vmem>>, %arg21: memref<16x32xf32, #tpu.memory_space<vmem>>, %arg22: memref<16x32xf32, #tpu.memory_space<vmem>>) attributes {dimension_semantics = [#tpu.dimension_semantics<arbitrary>], iteration_bounds = array<i64: 1>, scalar_prefetch = 0 : i64, scratch_operands = 2 : i64, tpu.core_type = #tpu.core_type<tc>, window_params = [{pipeline_mode = #tpu.pipeline_mode<synchronous>, transform_indices = @transform_0, window_bounds = array<i64: 16, 1284>}, {pipeline_mode = #tpu.pipeline_mode<synchronous>, transform_indices = @transform_1, window_bounds = array<i64: 1284, 32>}, {pipeline_mode = #tpu.pipeline_mode<synchronous>, transform_indices = @transform_2, window_bounds = array<i64: 1, 32>}, {pipeline_mode = #tpu.pipeline_mode<synchronous>, transform_indices = @transform_3, window_bounds = array<i64: 16, 32>}, {pipeline_mode = #tpu.pipeline_mode<synchronous>, transform_indices = @transform_4, window_bounds = array<i64: 32, 32>}, {pipeline_mode = #tpu.pipeline_mode<synchronous>, transform_indices = @transform_5, window_bounds = array<i64: 32, 32>}, {pipeline_mode = #tpu.pipeline_mode<synchronous>, transform_indices = @transform_6, window_bounds = array<i64: 1, 32>}, {pipeline_mode = #tpu.pipeline_mode<synchronous>, transform_indices = @transform_7, window_bounds = array<i64: 32, 160>}, {pipeline_mode = #tpu.pipeline_mode<synchronous>, transform_indices = @transform_8, window_bounds = array<i64: 1, 160>}, {pipeline_mode = #tpu.pipeline_mode<synchronous>, transform_indices = @transform_9, window_bounds = array<i64: 32, 128>}, {pipeline_mode = #tpu.pipeline_mode<synchronous>, transform_indices = @transform_10, window_bounds = array<i64: 64, 128>}, {pipeline_mode = #tpu.pipeline_mode<synchronous>, transform_indices = @transform_11, window_bounds = array<i64: 1, 128>}, {pipeline_mode = #tpu.pipeline_mode<synchronous>, transform_indices = @transform_12, window_bounds = array<i64: 32, 32>}, {pipeline_mode = #tpu.pipeline_mode<synchronous>, transform_indices = @transform_13, window_bounds = array<i64: 1, 32>}, {pipeline_mode = #tpu.pipeline_mode<synchronous>, transform_indices = @transform_14, window_bounds = array<i64: 64, 32>}, {pipeline_mode = #tpu.pipeline_mode<synchronous>, transform_indices = @transform_15, window_bounds = array<i64: 1, 32>}, {pipeline_mode = #tpu.pipeline_mode<synchronous>, transform_indices = @transform_16, window_bounds = array<i64: 32, 40>}, {pipeline_mode = #tpu.pipeline_mode<synchronous>, transform_indices = @transform_17, window_bounds = array<i64: 32, 40>}, {pipeline_mode = #tpu.pipeline_mode<synchronous>, transform_indices = @transform_18, window_bounds = array<i64: 1, 40>}, {pipeline_mode = #tpu.pipeline_mode<synchronous>, transform_indices = @transform_19, window_bounds = array<i64: 16, 40>}]} {
    %c0 = arith.constant 0 : index
    %c0_0 = arith.constant 0 : index
    %0 = vector.load %arg1[%c0, %c0_0] : memref<16x1284xf32, #tpu.memory_space<vmem>>, vector<16x1284xf32>
    %c0_1 = arith.constant 0 : index
    %c0_2 = arith.constant 0 : index
    %1 = vector.load %arg2[%c0_1, %c0_2] : memref<1284x32xf32, #tpu.memory_space<vmem>>, vector<1284x32xf32>
    %cst = arith.constant dense<0.000000e+00> : vector<16x32xf32>
    %2 = tpu.matmul %0, %1, %cst {dimension_numbers = #tpu.dot_dimension_numbers<[1], [0], [0], [1], [0, 0, 1, 1], [], []>} : vector<16x1284xf32>, vector<1284x32xf32>, vector<16x32xf32> -> vector<16x32xf32>
    %c0_3 = arith.constant 0 : index
    %c0_4 = arith.constant 0 : index
    %3 = vector.load %arg3[%c0_3, %c0_4] : memref<1x32xf32, #tpu.memory_space<vmem>>, vector<1x32xf32>
    %4 = vector.broadcast %3 : vector<1x32xf32> to vector<16x32xf32>
    %5 = arith.addf %2, %4 : vector<16x32xf32>
    %c0_5 = arith.constant 0 : index
    %c0_6 = arith.constant 0 : index
    %6 = vector.load %arg5[%c0_5, %c0_6] : memref<32x32xf32, #tpu.memory_space<vmem>>, vector<32x32xf32>
    %cst_7 = arith.constant dense<0.000000e+00> : vector<16x32xf32>
    %7 = tpu.matmul %5, %6, %cst_7 {dimension_numbers = #tpu.dot_dimension_numbers<[1], [0], [0], [1], [0, 0, 1, 1], [], []>} : vector<16x32xf32>, vector<32x32xf32>, vector<16x32xf32> -> vector<16x32xf32>
    %c0_8 = arith.constant 0 : index
    %c0_9 = arith.constant 0 : index
    %8 = vector.load %arg4[%c0_8, %c0_9] : memref<16x32xf32, #tpu.memory_space<vmem>>, vector<16x32xf32>
    %c0_10 = arith.constant 0 : index
    %c0_11 = arith.constant 0 : index
    %9 = vector.load %arg6[%c0_10, %c0_11] : memref<32x32xf32, #tpu.memory_space<vmem>>, vector<32x32xf32>
    %cst_12 = arith.constant dense<0.000000e+00> : vector<16x32xf32>
    %10 = tpu.matmul %8, %9, %cst_12 {dimension_numbers = #tpu.dot_dimension_numbers<[1], [0], [0], [1], [0, 0, 1, 1], [], []>} : vector<16x32xf32>, vector<32x32xf32>, vector<16x32xf32> -> vector<16x32xf32>
    %11 = arith.addf %7, %10 : vector<16x32xf32>
    %c0_13 = arith.constant 0 : index
    %c0_14 = arith.constant 0 : index
    %12 = vector.load %arg7[%c0_13, %c0_14] : memref<1x32xf32, #tpu.memory_space<vmem>>, vector<1x32xf32>
    %13 = vector.broadcast %12 : vector<1x32xf32> to vector<16x32xf32>
    %14 = arith.addf %11, %13 : vector<16x32xf32>
    %c0_15 = arith.constant 0 : index
    %c0_16 = arith.constant 0 : index
    %15 = vector.load %arg8[%c0_15, %c0_16] : memref<32x160xf32, #tpu.memory_space<vmem>>, vector<32x160xf32>
    %cst_17 = arith.constant dense<0.000000e+00> : vector<16x160xf32>
    %16 = tpu.matmul %14, %15, %cst_17 {dimension_numbers = #tpu.dot_dimension_numbers<[1], [0], [0], [1], [0, 0, 1, 1], [], []>} : vector<16x32xf32>, vector<32x160xf32>, vector<16x160xf32> -> vector<16x160xf32>
    %c0_18 = arith.constant 0 : index
    %c0_19 = arith.constant 0 : index
    %17 = vector.load %arg9[%c0_18, %c0_19] : memref<1x160xf32, #tpu.memory_space<vmem>>, vector<1x160xf32>
    %18 = vector.broadcast %17 : vector<1x160xf32> to vector<16x160xf32>
    %19 = arith.addf %16, %18 : vector<16x160xf32>
    %20 = vector.extract_strided_slice %19 {offsets = [0, 0], sizes = [16, 128], strides = [1, 1]} : vector<16x160xf32> to vector<16x128xf32>
    %21 = vector.extract_strided_slice %19 {offsets = [0, 128], sizes = [16, 32], strides = [1, 1]} : vector<16x160xf32> to vector<16x32xf32>
    %c0_20 = arith.constant 0 : index
    %c0_21 = arith.constant 0 : index
    %22 = vector.load %arg14[%c0_20, %c0_21] : memref<1x32xf32, #tpu.memory_space<vmem>>, vector<1x32xf32>
    %23 = tpu.iota {dimensions = array<i32: 1>} : vector<2x128xi32>
    %c64_i32 = arith.constant 64 : i32
    %24 = vector.broadcast %c64_i32 : i32 to vector<2x128xi32>
    %25 = arith.cmpi sge, %23, %24 : vector<2x128xi32>
    %c96_i32 = arith.constant 96 : i32
    %26 = vector.broadcast %c96_i32 : i32 to vector<2x128xi32>
    %27 = arith.cmpi slt, %23, %26 : vector<2x128xi32>
    %28 = arith.andi %25, %27 : vector<2x128xi1>
    %cst_22 = arith.constant 1.000000e+00 : f32
    %cst_23 = arith.constant 5.000000e-01 : f32
    %29 = vector.broadcast %cst_22 : f32 to vector<2x128xf32>
    %30 = vector.broadcast %cst_23 : f32 to vector<2x128xf32>
    %31 = arith.select %28, %29, %30 : vector<2x128xi1>, vector<2x128xf32>
    %cst_24 = arith.constant 0.000000e+00 : f32
    %cst_25 = arith.constant 5.000000e-01 : f32
    %32 = vector.broadcast %cst_24 : f32 to vector<2x128xf32>
    %33 = vector.broadcast %cst_25 : f32 to vector<2x128xf32>
    %34 = arith.select %28, %32, %33 : vector<2x128xi1>, vector<2x128xf32>
    %35 = tpu.iota {dimensions = array<i32: 1>} : vector<2x16xi32>
    %c2_i32 = arith.constant 2 : i32
    %c0_i32 = arith.constant 0 : i32
    %36 = arith.cmpi eq, %c2_i32, %c0_i32 : i32
    %c1_i32 = arith.constant 1 : i32
    %37 = arith.select %36, %c1_i32, %c2_i32 : i32
    %38 = vector.broadcast %37 : i32 to vector<2x16xi32>
    %39 = arith.remsi %35, %38 : vector<2x16xi32>
    %c0_i32_26 = arith.constant 0 : i32
    %40 = vector.broadcast %c0_i32_26 : i32 to vector<2x16xi32>
    %41 = arith.cmpi ne, %39, %40 : vector<2x16xi32>
    %c0_i32_27 = arith.constant 0 : i32
    %42 = vector.broadcast %c0_i32_27 : i32 to vector<2x16xi32>
    %43 = arith.cmpi slt, %39, %42 : vector<2x16xi32>
    %c0_i32_28 = arith.constant 0 : i32
    %44 = arith.cmpi slt, %37, %c0_i32_28 : i32
    %45 = vector.broadcast %44 : i1 to vector<2x16xi1>
    %46 = vector.broadcast %45 : vector<2x16xi1> to vector<2x16xi1>
    %47 = arith.xori %43, %46 : vector<2x16xi1>
    %48 = arith.andi %47, %41 : vector<2x16xi1>
    %49 = vector.broadcast %37 : i32 to vector<2x16xi32>
    %50 = arith.addi %39, %49 : vector<2x16xi32>
    %51 = arith.select %48, %50, %39 : vector<2x16xi1>, vector<2x16xi32>
    %52 = tpu.iota {dimensions = array<i32: 0>} : vector<2x16xi32>
    %53 = arith.cmpi eq, %51, %52 : vector<2x16xi32>
    %54 = arith.extui %53 : vector<2x16xi1> to vector<2x16xi32>
    %55 = arith.sitofp %54 : vector<2x16xi32> to vector<2x16xf32>
    %56 = tpu.iota {dimensions = array<i32: 0>} : vector<16x32xi32>
    %c2_i32_29 = arith.constant 2 : i32
    %c0_i32_30 = arith.constant 0 : i32
    %57 = arith.cmpi eq, %c2_i32_29, %c0_i32_30 : i32
    %c1_i32_31 = arith.constant 1 : i32
    %58 = arith.select %57, %c1_i32_31, %c2_i32_29 : i32
    %59 = vector.broadcast %58 : i32 to vector<16x32xi32>
    %60 = arith.remsi %56, %59 : vector<16x32xi32>
    %c0_i32_32 = arith.constant 0 : i32
    %61 = vector.broadcast %c0_i32_32 : i32 to vector<16x32xi32>
    %62 = arith.cmpi ne, %60, %61 : vector<16x32xi32>
    %c0_i32_33 = arith.constant 0 : i32
    %63 = vector.broadcast %c0_i32_33 : i32 to vector<16x32xi32>
    %64 = arith.cmpi slt, %60, %63 : vector<16x32xi32>
    %c0_i32_34 = arith.constant 0 : i32
    %65 = arith.cmpi slt, %58, %c0_i32_34 : i32
    %66 = vector.broadcast %65 : i1 to vector<16x32xi1>
    %67 = vector.broadcast %66 : vector<16x32xi1> to vector<16x32xi1>
    %68 = arith.xori %64, %67 : vector<16x32xi1>
    %69 = arith.andi %68, %62 : vector<16x32xi1>
    %70 = vector.broadcast %58 : i32 to vector<16x32xi32>
    %71 = arith.addi %60, %70 : vector<16x32xi32>
    %72 = arith.select %69, %71, %60 : vector<16x32xi1>, vector<16x32xi32>
    %c1_i32_35 = arith.constant 1 : i32
    %73 = vector.broadcast %c1_i32_35 : i32 to vector<16x32xi32>
    %74 = arith.cmpi eq, %72, %73 : vector<16x32xi32>
    %cst_36 = arith.constant 0.000000e+00 : f32
    %75 = vector.broadcast %cst_36 : f32 to vector<2x32xf32>
    %cst_37 = arith.constant 0.000000e+00 : f32
    %76 = vector.broadcast %cst_37 : f32 to vector<2x32xf32>
    %cst_38 = arith.constant 0.000000e+00 : f32
    %77 = vector.broadcast %cst_38 : f32 to vector<2x32xf32>
    %cst_39 = arith.constant 0.000000e+00 : f32
    %78 = vector.broadcast %cst_39 : f32 to vector<2x32xf32>
    %79 = vector.extract_strided_slice %20 {offsets = [0, 0], sizes = [2, 128], strides = [1, 1]} : vector<16x128xf32> to vector<2x128xf32>
    %c0_40 = arith.constant 0 : index
    %c0_41 = arith.constant 0 : index
    %80 = vector.load %arg10[%c0_40, %c0_41] : memref<32x128xf32, #tpu.memory_space<vmem>>, vector<32x128xf32>
    %cst_42 = arith.constant dense<0.000000e+00> : vector<2x128xf32>
    %81 = tpu.matmul %75, %80, %cst_42 {dimension_numbers = #tpu.dot_dimension_numbers<[1], [0], [0], [1], [0, 0, 1, 1], [], []>} : vector<2x32xf32>, vector<32x128xf32>, vector<2x128xf32> -> vector<2x128xf32>
    %82 = arith.addf %79, %81 : vector<2x128xf32>
    %83 = arith.mulf %82, %31 : vector<2x128xf32>
    %84 = math.tanh %83 : vector<2x128xf32>
    %85 = arith.mulf %31, %84 : vector<2x128xf32>
    %86 = arith.addf %85, %34 : vector<2x128xf32>
    %87 = vector.extract_strided_slice %86 {offsets = [0, 0], sizes = [2, 32], strides = [1, 1]} : vector<2x128xf32> to vector<2x32xf32>
    %88 = vector.extract_strided_slice %86 {offsets = [0, 32], sizes = [2, 32], strides = [1, 1]} : vector<2x128xf32> to vector<2x32xf32>
    %89 = vector.extract_strided_slice %86 {offsets = [0, 64], sizes = [2, 32], strides = [1, 1]} : vector<2x128xf32> to vector<2x32xf32>
    %90 = vector.extract_strided_slice %86 {offsets = [0, 96], sizes = [2, 32], strides = [1, 1]} : vector<2x128xf32> to vector<2x32xf32>
    %91 = arith.mulf %88, %77 : vector<2x32xf32>
    %92 = arith.mulf %87, %89 : vector<2x32xf32>
    %93 = arith.addf %91, %92 : vector<2x32xf32>
    %94 = math.tanh %93 : vector<2x32xf32>
    %95 = arith.mulf %90, %94 : vector<2x32xf32>
    %96 = tpu.concatenate %95, %76 in 1 : vector<2x32xf32>, vector<2x32xf32> -> vector<2x64xf32>
    %c0_43 = arith.constant 0 : index
    %c0_44 = arith.constant 0 : index
    %97 = vector.load %arg11[%c0_43, %c0_44] : memref<64x128xf32, #tpu.memory_space<vmem>>, vector<64x128xf32>
    %cst_45 = arith.constant dense<0.000000e+00> : vector<2x128xf32>
    %98 = tpu.matmul %96, %97, %cst_45 {dimension_numbers = #tpu.dot_dimension_numbers<[1], [0], [0], [1], [0, 0, 1, 1], [], []>} : vector<2x64xf32>, vector<64x128xf32>, vector<2x128xf32> -> vector<2x128xf32>
    %c0_46 = arith.constant 0 : index
    %c0_47 = arith.constant 0 : index
    %99 = vector.load %arg12[%c0_46, %c0_47] : memref<1x128xf32, #tpu.memory_space<vmem>>, vector<1x128xf32>
    %100 = vector.broadcast %99 : vector<1x128xf32> to vector<2x128xf32>
    %101 = arith.addf %98, %100 : vector<2x128xf32>
    %102 = arith.mulf %101, %31 : vector<2x128xf32>
    %103 = math.tanh %102 : vector<2x128xf32>
    %104 = arith.mulf %31, %103 : vector<2x128xf32>
    %105 = arith.addf %104, %34 : vector<2x128xf32>
    %106 = vector.extract_strided_slice %105 {offsets = [0, 0], sizes = [2, 32], strides = [1, 1]} : vector<2x128xf32> to vector<2x32xf32>
    %107 = vector.extract_strided_slice %105 {offsets = [0, 32], sizes = [2, 32], strides = [1, 1]} : vector<2x128xf32> to vector<2x32xf32>
    %108 = vector.extract_strided_slice %105 {offsets = [0, 64], sizes = [2, 32], strides = [1, 1]} : vector<2x128xf32> to vector<2x32xf32>
    %109 = vector.extract_strided_slice %105 {offsets = [0, 96], sizes = [2, 32], strides = [1, 1]} : vector<2x128xf32> to vector<2x32xf32>
    %110 = arith.mulf %107, %78 : vector<2x32xf32>
    %111 = arith.mulf %106, %108 : vector<2x32xf32>
    %112 = arith.addf %110, %111 : vector<2x32xf32>
    %113 = math.tanh %112 : vector<2x32xf32>
    %114 = arith.mulf %109, %113 : vector<2x32xf32>
    %c0_48 = arith.constant 0 : index
    %c0_49 = arith.constant 0 : index
    %115 = vector.load %arg22[%c0_48, %c0_49] : memref<16x32xf32, #tpu.memory_space<vmem>>, vector<2x32xf32>
    tpu.vector_store %arg22[%c0_48, %c0_49], %114 {strides = array<i32>} : memref<16x32xf32, #tpu.memory_space<vmem>>, vector<2x32xf32>,
    %c0_50 = arith.constant 0 : index
    %c0_51 = arith.constant 0 : index
    %116 = vector.load %arg13[%c0_50, %c0_51] : memref<32x32xf32, #tpu.memory_space<vmem>>, vector<32x32xf32>
    %cst_52 = arith.constant dense<0.000000e+00> : vector<2x32xf32>
    %117 = tpu.matmul %114, %116, %cst_52 {dimension_numbers = #tpu.dot_dimension_numbers<[1], [0], [0], [1], [0, 0, 1, 1], [], []>} : vector<2x32xf32>, vector<32x32xf32>, vector<2x32xf32> -> vector<2x32xf32>
    %118 = vector.extract_strided_slice %117 {offsets = [0, 0], sizes = [1, 32], strides = [1, 1]} : vector<2x32xf32> to vector<1x32xf32>
    %119 = vector.shape_cast %118 : vector<1x32xf32> to vector<1x32xf32>
    %120 = vector.broadcast %119 : vector<1x32xf32> to vector<16x32xf32>
    %121 = vector.extract_strided_slice %117 {offsets = [1, 0], sizes = [1, 32], strides = [1, 1]} : vector<2x32xf32> to vector<1x32xf32>
    %122 = vector.shape_cast %121 : vector<1x32xf32> to vector<1x32xf32>
    %123 = vector.broadcast %122 : vector<1x32xf32> to vector<16x32xf32>
    %124 = arith.select %74, %123, %120 : vector<16x32xi1>, vector<16x32xf32>
    %125 = arith.addf %21, %124 : vector<16x32xf32>
    %cst_53 = arith.constant 0.000000e+00 : f32
    %126 = vector.broadcast %cst_53 : f32 to vector<16x32xf32>
    %127 = arith.maximumf %125, %126 : vector<16x32xf32>
    %128 = vector.broadcast %22 : vector<1x32xf32> to vector<16x32xf32>
    %129 = arith.mulf %127, %128 : vector<16x32xf32>
    %cst_54 = arith.constant dense<0.000000e+00> : vector<16xf32>
    %130 = vector.multi_reduction <add>, %129, %cst_54 [1] : vector<16x32xf32> to vector<16xf32>
    %131 = vector.shape_cast %130 : vector<16xf32> to vector<16x1xf32>
    %cst_55 = arith.constant dense<0xFF800000> : vector<1xf32>
    %132 = vector.multi_reduction <maximumf>, %131, %cst_55 [0] : vector<16x1xf32> to vector<1xf32>
    %133 = vector.shape_cast %132 : vector<1xf32> to vector<1x1xf32>
    %134 = vector.broadcast %133 : vector<1x1xf32> to vector<16x1xf32>
    %135 = arith.subf %131, %134 : vector<16x1xf32>
    %136 = math.exp %135 : vector<16x1xf32>
    %137 = vector.broadcast %136 : vector<16x1xf32> to vector<16x32xf32>
    %138 = arith.mulf %137, %14 : vector<16x32xf32>
    %cst_56 = arith.constant dense<0.000000e+00> : vector<2x32xf32>
    %139 = tpu.matmul %55, %138, %cst_56 {dimension_numbers = #tpu.dot_dimension_numbers<[1], [0], [0], [1], [0, 0, 1, 1], [], []>} : vector<2x16xf32>, vector<16x32xf32>, vector<2x32xf32> -> vector<2x32xf32>
    %cst_57 = arith.constant dense<0.000000e+00> : vector<2x1xf32>
    %140 = tpu.matmul %55, %136, %cst_57 {dimension_numbers = #tpu.dot_dimension_numbers<[1], [0], [0], [1], [0, 0, 1, 1], [], []>} : vector<2x16xf32>, vector<16x1xf32>, vector<2x1xf32> -> vector<2x1xf32>
    %141 = tpu.reciprocal %140 {approx = true} : vector<2x1xf32> -> vector<2x1xf32>
    %142 = vector.broadcast %141 : vector<2x1xf32> to vector<2x32xf32>
    %143 = arith.mulf %139, %142 : vector<2x32xf32>
    %c0_58 = arith.constant 0 : index
    %c0_59 = arith.constant 0 : index
    %144 = vector.load %arg21[%c0_58, %c0_59] : memref<16x32xf32, #tpu.memory_space<vmem>>, vector<2x32xf32>
    tpu.vector_store %arg21[%c0_58, %c0_59], %143 {strides = array<i32>} : memref<16x32xf32, #tpu.memory_space<vmem>>, vector<2x32xf32>,
    %145 = tpu.concatenate %95, %143 in 1 : vector<2x32xf32>, vector<2x32xf32> -> vector<2x64xf32>
    %c0_60 = arith.constant 0 : index
    %c0_61 = arith.constant 0 : index
    %146 = vector.load %arg15[%c0_60, %c0_61] : memref<64x32xf32, #tpu.memory_space<vmem>>, vector<64x32xf32>
    %cst_62 = arith.constant dense<0.000000e+00> : vector<2x32xf32>
    %147 = tpu.matmul %145, %146, %cst_62 {dimension_numbers = #tpu.dot_dimension_numbers<[1], [0], [0], [1], [0, 0, 1, 1], [], []>} : vector<2x64xf32>, vector<64x32xf32>, vector<2x32xf32> -> vector<2x32xf32>
    %c0_63 = arith.constant 0 : index
    %c0_64 = arith.constant 0 : index
    %148 = vector.load %arg16[%c0_63, %c0_64] : memref<1x32xf32, #tpu.memory_space<vmem>>, vector<1x32xf32>
    %149 = vector.broadcast %148 : vector<1x32xf32> to vector<2x32xf32>
    %150 = arith.addf %147, %149 : vector<2x32xf32>
    %151 = vector.extract_strided_slice %20 {offsets = [2, 0], sizes = [2, 128], strides = [1, 1]} : vector<16x128xf32> to vector<2x128xf32>
    %c0_65 = arith.constant 0 : index
    %c0_66 = arith.constant 0 : index
    %152 = vector.load %arg10[%c0_65, %c0_66] : memref<32x128xf32, #tpu.memory_space<vmem>>, vector<32x128xf32>
    %cst_67 = arith.constant dense<0.000000e+00> : vector<2x128xf32>
    %153 = tpu.matmul %150, %152, %cst_67 {dimension_numbers = #tpu.dot_dimension_numbers<[1], [0], [0], [1], [0, 0, 1, 1], [], []>} : vector<2x32xf32>, vector<32x128xf32>, vector<2x128xf32> -> vector<2x128xf32>
    %154 = arith.addf %151, %153 : vector<2x128xf32>
    %155 = arith.mulf %154, %31 : vector<2x128xf32>
    %156 = math.tanh %155 : vector<2x128xf32>
    %157 = arith.mulf %31, %156 : vector<2x128xf32>
    %158 = arith.addf %157, %34 : vector<2x128xf32>
    %159 = vector.extract_strided_slice %158 {offsets = [0, 0], sizes = [2, 32], strides = [1, 1]} : vector<2x128xf32> to vector<2x32xf32>
    %160 = vector.extract_strided_slice %158 {offsets = [0, 32], sizes = [2, 32], strides = [1, 1]} : vector<2x128xf32> to vector<2x32xf32>
    %161 = vector.extract_strided_slice %158 {offsets = [0, 64], sizes = [2, 32], strides = [1, 1]} : vector<2x128xf32> to vector<2x32xf32>
    %162 = vector.extract_strided_slice %158 {offsets = [0, 96], sizes = [2, 32], strides = [1, 1]} : vector<2x128xf32> to vector<2x32xf32>
    %163 = arith.mulf %160, %93 : vector<2x32xf32>
    %164 = arith.mulf %159, %161 : vector<2x32xf32>
    %165 = arith.addf %163, %164 : vector<2x32xf32>
    %166 = math.tanh %165 : vector<2x32xf32>
    %167 = arith.mulf %162, %166 : vector<2x32xf32>
    %168 = tpu.concatenate %167, %114 in 1 : vector<2x32xf32>, vector<2x32xf32> -> vector<2x64xf32>
    %c0_68 = arith.constant 0 : index
    %c0_69 = arith.constant 0 : index
    %169 = vector.load %arg11[%c0_68, %c0_69] : memref<64x128xf32, #tpu.memory_space<vmem>>, vector<64x128xf32>
    %cst_70 = arith.constant dense<0.000000e+00> : vector<2x128xf32>
    %170 = tpu.matmul %168, %169, %cst_70 {dimension_numbers = #tpu.dot_dimension_numbers<[1], [0], [0], [1], [0, 0, 1, 1], [], []>} : vector<2x64xf32>, vector<64x128xf32>, vector<2x128xf32> -> vector<2x128xf32>
    %c0_71 = arith.constant 0 : index
    %c0_72 = arith.constant 0 : index
    %171 = vector.load %arg12[%c0_71, %c0_72] : memref<1x128xf32, #tpu.memory_space<vmem>>, vector<1x128xf32>
    %172 = vector.broadcast %171 : vector<1x128xf32> to vector<2x128xf32>
    %173 = arith.addf %170, %172 : vector<2x128xf32>
    %174 = arith.mulf %173, %31 : vector<2x128xf32>
    %175 = math.tanh %174 : vector<2x128xf32>
    %176 = arith.mulf %31, %175 : vector<2x128xf32>
    %177 = arith.addf %176, %34 : vector<2x128xf32>
    %178 = vector.extract_strided_slice %177 {offsets = [0, 0], sizes = [2, 32], strides = [1, 1]} : vector<2x128xf32> to vector<2x32xf32>
    %179 = vector.extract_strided_slice %177 {offsets = [0, 32], sizes = [2, 32], strides = [1, 1]} : vector<2x128xf32> to vector<2x32xf32>
    %180 = vector.extract_strided_slice %177 {offsets = [0, 64], sizes = [2, 32], strides = [1, 1]} : vector<2x128xf32> to vector<2x32xf32>
    %181 = vector.extract_strided_slice %177 {offsets = [0, 96], sizes = [2, 32], strides = [1, 1]} : vector<2x128xf32> to vector<2x32xf32>
    %182 = arith.mulf %179, %112 : vector<2x32xf32>
    %183 = arith.mulf %178, %180 : vector<2x32xf32>
    %184 = arith.addf %182, %183 : vector<2x32xf32>
    %185 = math.tanh %184 : vector<2x32xf32>
    %186 = arith.mulf %181, %185 : vector<2x32xf32>
    %c2 = arith.constant 2 : index
    %c0_73 = arith.constant 0 : index
    %187 = vector.load %arg22[%c2, %c0_73] : memref<16x32xf32, #tpu.memory_space<vmem>>, vector<2x32xf32>
    tpu.vector_store %arg22[%c2, %c0_73], %186 {strides = array<i32>} : memref<16x32xf32, #tpu.memory_space<vmem>>, vector<2x32xf32>,
    %c0_74 = arith.constant 0 : index
    %c0_75 = arith.constant 0 : index
    %188 = vector.load %arg13[%c0_74, %c0_75] : memref<32x32xf32, #tpu.memory_space<vmem>>, vector<32x32xf32>
    %cst_76 = arith.constant dense<0.000000e+00> : vector<2x32xf32>
    %189 = tpu.matmul %186, %188, %cst_76 {dimension_numbers = #tpu.dot_dimension_numbers<[1], [0], [0], [1], [0, 0, 1, 1], [], []>} : vector<2x32xf32>, vector<32x32xf32>, vector<2x32xf32> -> vector<2x32xf32>
    %190 = vector.extract_strided_slice %189 {offsets = [0, 0], sizes = [1, 32], strides = [1, 1]} : vector<2x32xf32> to vector<1x32xf32>
    %191 = vector.shape_cast %190 : vector<1x32xf32> to vector<1x32xf32>
    %192 = vector.broadcast %191 : vector<1x32xf32> to vector<16x32xf32>
    %193 = vector.extract_strided_slice %189 {offsets = [1, 0], sizes = [1, 32], strides = [1, 1]} : vector<2x32xf32> to vector<1x32xf32>
    %194 = vector.shape_cast %193 : vector<1x32xf32> to vector<1x32xf32>
    %195 = vector.broadcast %194 : vector<1x32xf32> to vector<16x32xf32>
    %196 = arith.select %74, %195, %192 : vector<16x32xi1>, vector<16x32xf32>
    %197 = arith.addf %21, %196 : vector<16x32xf32>
    %cst_77 = arith.constant 0.000000e+00 : f32
    %198 = vector.broadcast %cst_77 : f32 to vector<16x32xf32>
    %199 = arith.maximumf %197, %198 : vector<16x32xf32>
    %200 = vector.broadcast %22 : vector<1x32xf32> to vector<16x32xf32>
    %201 = arith.mulf %199, %200 : vector<16x32xf32>
    %cst_78 = arith.constant dense<0.000000e+00> : vector<16xf32>
    %202 = vector.multi_reduction <add>, %201, %cst_78 [1] : vector<16x32xf32> to vector<16xf32>
    %203 = vector.shape_cast %202 : vector<16xf32> to vector<16x1xf32>
    %cst_79 = arith.constant dense<0xFF800000> : vector<1xf32>
    %204 = vector.multi_reduction <maximumf>, %203, %cst_79 [0] : vector<16x1xf32> to vector<1xf32>
    %205 = vector.shape_cast %204 : vector<1xf32> to vector<1x1xf32>
    %206 = vector.broadcast %205 : vector<1x1xf32> to vector<16x1xf32>
    %207 = arith.subf %203, %206 : vector<16x1xf32>
    %208 = math.exp %207 : vector<16x1xf32>
    %209 = vector.broadcast %208 : vector<16x1xf32> to vector<16x32xf32>
    %210 = arith.mulf %209, %14 : vector<16x32xf32>
    %cst_80 = arith.constant dense<0.000000e+00> : vector<2x32xf32>
    %211 = tpu.matmul %55, %210, %cst_80 {dimension_numbers = #tpu.dot_dimension_numbers<[1], [0], [0], [1], [0, 0, 1, 1], [], []>} : vector<2x16xf32>, vector<16x32xf32>, vector<2x32xf32> -> vector<2x32xf32>
    %cst_81 = arith.constant dense<0.000000e+00> : vector<2x1xf32>
    %212 = tpu.matmul %55, %208, %cst_81 {dimension_numbers = #tpu.dot_dimension_numbers<[1], [0], [0], [1], [0, 0, 1, 1], [], []>} : vector<2x16xf32>, vector<16x1xf32>, vector<2x1xf32> -> vector<2x1xf32>
    %213 = tpu.reciprocal %212 {approx = true} : vector<2x1xf32> -> vector<2x1xf32>
    %214 = vector.broadcast %213 : vector<2x1xf32> to vector<2x32xf32>
    %215 = arith.mulf %211, %214 : vector<2x32xf32>
    %c2_82 = arith.constant 2 : index
    %c0_83 = arith.constant 0 : index
    %216 = vector.load %arg21[%c2_82, %c0_83] : memref<16x32xf32, #tpu.memory_space<vmem>>, vector<2x32xf32>
    tpu.vector_store %arg21[%c2_82, %c0_83], %215 {strides = array<i32>} : memref<16x32xf32, #tpu.memory_space<vmem>>, vector<2x32xf32>,
    %217 = tpu.concatenate %167, %215 in 1 : vector<2x32xf32>, vector<2x32xf32> -> vector<2x64xf32>
    %c0_84 = arith.constant 0 : index
    %c0_85 = arith.constant 0 : index
    %218 = vector.load %arg15[%c0_84, %c0_85] : memref<64x32xf32, #tpu.memory_space<vmem>>, vector<64x32xf32>
    %cst_86 = arith.constant dense<0.000000e+00> : vector<2x32xf32>
    %219 = tpu.matmul %217, %218, %cst_86 {dimension_numbers = #tpu.dot_dimension_numbers<[1], [0], [0], [1], [0, 0, 1, 1], [], []>} : vector<2x64xf32>, vector<64x32xf32>, vector<2x32xf32> -> vector<2x32xf32>
    %c0_87 = arith.constant 0 : index
    %c0_88 = arith.constant 0 : index
    %220 = vector.load %arg16[%c0_87, %c0_88] : memref<1x32xf32, #tpu.memory_space<vmem>>, vector<1x32xf32>
    %221 = vector.broadcast %220 : vector<1x32xf32> to vector<2x32xf32>
    %222 = arith.addf %219, %221 : vector<2x32xf32>
    %223 = vector.extract_strided_slice %20 {offsets = [4, 0], sizes = [2, 128], strides = [1, 1]} : vector<16x128xf32> to vector<2x128xf32>
    %c0_89 = arith.constant 0 : index
    %c0_90 = arith.constant 0 : index
    %224 = vector.load %arg10[%c0_89, %c0_90] : memref<32x128xf32, #tpu.memory_space<vmem>>, vector<32x128xf32>
    %cst_91 = arith.constant dense<0.000000e+00> : vector<2x128xf32>
    %225 = tpu.matmul %222, %224, %cst_91 {dimension_numbers = #tpu.dot_dimension_numbers<[1], [0], [0], [1], [0, 0, 1, 1], [], []>} : vector<2x32xf32>, vector<32x128xf32>, vector<2x128xf32> -> vector<2x128xf32>
    %226 = arith.addf %223, %225 : vector<2x128xf32>
    %227 = arith.mulf %226, %31 : vector<2x128xf32>
    %228 = math.tanh %227 : vector<2x128xf32>
    %229 = arith.mulf %31, %228 : vector<2x128xf32>
    %230 = arith.addf %229, %34 : vector<2x128xf32>
    %231 = vector.extract_strided_slice %230 {offsets = [0, 0], sizes = [2, 32], strides = [1, 1]} : vector<2x128xf32> to vector<2x32xf32>
    %232 = vector.extract_strided_slice %230 {offsets = [0, 32], sizes = [2, 32], strides = [1, 1]} : vector<2x128xf32> to vector<2x32xf32>
    %233 = vector.extract_strided_slice %230 {offsets = [0, 64], sizes = [2, 32], strides = [1, 1]} : vector<2x128xf32> to vector<2x32xf32>
    %234 = vector.extract_strided_slice %230 {offsets = [0, 96], sizes = [2, 32], strides = [1, 1]} : vector<2x128xf32> to vector<2x32xf32>
    %235 = arith.mulf %232, %165 : vector<2x32xf32>
    %236 = arith.mulf %231, %233 : vector<2x32xf32>
    %237 = arith.addf %235, %236 : vector<2x32xf32>
    %238 = math.tanh %237 : vector<2x32xf32>
    %239 = arith.mulf %234, %238 : vector<2x32xf32>
    %240 = tpu.concatenate %239, %186 in 1 : vector<2x32xf32>, vector<2x32xf32> -> vector<2x64xf32>
    %c0_92 = arith.constant 0 : index
    %c0_93 = arith.constant 0 : index
    %241 = vector.load %arg11[%c0_92, %c0_93] : memref<64x128xf32, #tpu.memory_space<vmem>>, vector<64x128xf32>
    %cst_94 = arith.constant dense<0.000000e+00> : vector<2x128xf32>
    %242 = tpu.matmul %240, %241, %cst_94 {dimension_numbers = #tpu.dot_dimension_numbers<[1], [0], [0], [1], [0, 0, 1, 1], [], []>} : vector<2x64xf32>, vector<64x128xf32>, vector<2x128xf32> -> vector<2x128xf32>
    %c0_95 = arith.constant 0 : index
    %c0_96 = arith.constant 0 : index
    %243 = vector.load %arg12[%c0_95, %c0_96] : memref<1x128xf32, #tpu.memory_space<vmem>>, vector<1x128xf32>
    %244 = vector.broadcast %243 : vector<1x128xf32> to vector<2x128xf32>
    %245 = arith.addf %242, %244 : vector<2x128xf32>
    %246 = arith.mulf %245, %31 : vector<2x128xf32>
    %247 = math.tanh %246 : vector<2x128xf32>
    %248 = arith.mulf %31, %247 : vector<2x128xf32>
    %249 = arith.addf %248, %34 : vector<2x128xf32>
    %250 = vector.extract_strided_slice %249 {offsets = [0, 0], sizes = [2, 32], strides = [1, 1]} : vector<2x128xf32> to vector<2x32xf32>
    %251 = vector.extract_strided_slice %249 {offsets = [0, 32], sizes = [2, 32], strides = [1, 1]} : vector<2x128xf32> to vector<2x32xf32>
    %252 = vector.extract_strided_slice %249 {offsets = [0, 64], sizes = [2, 32], strides = [1, 1]} : vector<2x128xf32> to vector<2x32xf32>
    %253 = vector.extract_strided_slice %249 {offsets = [0, 96], sizes = [2, 32], strides = [1, 1]} : vector<2x128xf32> to vector<2x32xf32>
    %254 = arith.mulf %251, %184 : vector<2x32xf32>
    %255 = arith.mulf %250, %252 : vector<2x32xf32>
    %256 = arith.addf %254, %255 : vector<2x32xf32>
    %257 = math.tanh %256 : vector<2x32xf32>
    %258 = arith.mulf %253, %257 : vector<2x32xf32>
    %c4 = arith.constant 4 : index
    %c0_97 = arith.constant 0 : index
    %259 = vector.load %arg22[%c4, %c0_97] : memref<16x32xf32, #tpu.memory_space<vmem>>, vector<2x32xf32>
    tpu.vector_store %arg22[%c4, %c0_97], %258 {strides = array<i32>} : memref<16x32xf32, #tpu.memory_space<vmem>>, vector<2x32xf32>,
    %c0_98 = arith.constant 0 : index
    %c0_99 = arith.constant 0 : index
    %260 = vector.load %arg13[%c0_98, %c0_99] : memref<32x32xf32, #tpu.memory_space<vmem>>, vector<32x32xf32>
    %cst_100 = arith.constant dense<0.000000e+00> : vector<2x32xf32>
    %261 = tpu.matmul %258, %260, %cst_100 {dimension_numbers = #tpu.dot_dimension_numbers<[1], [0], [0], [1], [0, 0, 1, 1], [], []>} : vector<2x32xf32>, vector<32x32xf32>, vector<2x32xf32> -> vector<2x32xf32>
    %262 = vector.extract_strided_slice %261 {offsets = [0, 0], sizes = [1, 32], strides = [1, 1]} : vector<2x32xf32> to vector<1x32xf32>
    %263 = vector.shape_cast %262 : vector<1x32xf32> to vector<1x32xf32>
    %264 = vector.broadcast %263 : vector<1x32xf32> to vector<16x32xf32>
    %265 = vector.extract_strided_slice %261 {offsets = [1, 0], sizes = [1, 32], strides = [1, 1]} : vector<2x32xf32> to vector<1x32xf32>
    %266 = vector.shape_cast %265 : vector<1x32xf32> to vector<1x32xf32>
    %267 = vector.broadcast %266 : vector<1x32xf32> to vector<16x32xf32>
    %268 = arith.select %74, %267, %264 : vector<16x32xi1>, vector<16x32xf32>
    %269 = arith.addf %21, %268 : vector<16x32xf32>
    %cst_101 = arith.constant 0.000000e+00 : f32
    %270 = vector.broadcast %cst_101 : f32 to vector<16x32xf32>
    %271 = arith.maximumf %269, %270 : vector<16x32xf32>
    %272 = vector.broadcast %22 : vector<1x32xf32> to vector<16x32xf32>
    %273 = arith.mulf %271, %272 : vector<16x32xf32>
    %cst_102 = arith.constant dense<0.000000e+00> : vector<16xf32>
    %274 = vector.multi_reduction <add>, %273, %cst_102 [1] : vector<16x32xf32> to vector<16xf32>
    %275 = vector.shape_cast %274 : vector<16xf32> to vector<16x1xf32>
    %cst_103 = arith.constant dense<0xFF800000> : vector<1xf32>
    %276 = vector.multi_reduction <maximumf>, %275, %cst_103 [0] : vector<16x1xf32> to vector<1xf32>
    %277 = vector.shape_cast %276 : vector<1xf32> to vector<1x1xf32>
    %278 = vector.broadcast %277 : vector<1x1xf32> to vector<16x1xf32>
    %279 = arith.subf %275, %278 : vector<16x1xf32>
    %280 = math.exp %279 : vector<16x1xf32>
    %281 = vector.broadcast %280 : vector<16x1xf32> to vector<16x32xf32>
    %282 = arith.mulf %281, %14 : vector<16x32xf32>
    %cst_104 = arith.constant dense<0.000000e+00> : vector<2x32xf32>
    %283 = tpu.matmul %55, %282, %cst_104 {dimension_numbers = #tpu.dot_dimension_numbers<[1], [0], [0], [1], [0, 0, 1, 1], [], []>} : vector<2x16xf32>, vector<16x32xf32>, vector<2x32xf32> -> vector<2x32xf32>
    %cst_105 = arith.constant dense<0.000000e+00> : vector<2x1xf32>
    %284 = tpu.matmul %55, %280, %cst_105 {dimension_numbers = #tpu.dot_dimension_numbers<[1], [0], [0], [1], [0, 0, 1, 1], [], []>} : vector<2x16xf32>, vector<16x1xf32>, vector<2x1xf32> -> vector<2x1xf32>
    %285 = tpu.reciprocal %284 {approx = true} : vector<2x1xf32> -> vector<2x1xf32>
    %286 = vector.broadcast %285 : vector<2x1xf32> to vector<2x32xf32>
    %287 = arith.mulf %283, %286 : vector<2x32xf32>
    %c4_106 = arith.constant 4 : index
    %c0_107 = arith.constant 0 : index
    %288 = vector.load %arg21[%c4_106, %c0_107] : memref<16x32xf32, #tpu.memory_space<vmem>>, vector<2x32xf32>
    tpu.vector_store %arg21[%c4_106, %c0_107], %287 {strides = array<i32>} : memref<16x32xf32, #tpu.memory_space<vmem>>, vector<2x32xf32>,
    %289 = tpu.concatenate %239, %287 in 1 : vector<2x32xf32>, vector<2x32xf32> -> vector<2x64xf32>
    %c0_108 = arith.constant 0 : index
    %c0_109 = arith.constant 0 : index
    %290 = vector.load %arg15[%c0_108, %c0_109] : memref<64x32xf32, #tpu.memory_space<vmem>>, vector<64x32xf32>
    %cst_110 = arith.constant dense<0.000000e+00> : vector<2x32xf32>
    %291 = tpu.matmul %289, %290, %cst_110 {dimension_numbers = #tpu.dot_dimension_numbers<[1], [0], [0], [1], [0, 0, 1, 1], [], []>} : vector<2x64xf32>, vector<64x32xf32>, vector<2x32xf32> -> vector<2x32xf32>
    %c0_111 = arith.constant 0 : index
    %c0_112 = arith.constant 0 : index
    %292 = vector.load %arg16[%c0_111, %c0_112] : memref<1x32xf32, #tpu.memory_space<vmem>>, vector<1x32xf32>
    %293 = vector.broadcast %292 : vector<1x32xf32> to vector<2x32xf32>
    %294 = arith.addf %291, %293 : vector<2x32xf32>
    %295 = vector.extract_strided_slice %20 {offsets = [6, 0], sizes = [2, 128], strides = [1, 1]} : vector<16x128xf32> to vector<2x128xf32>
    %c0_113 = arith.constant 0 : index
    %c0_114 = arith.constant 0 : index
    %296 = vector.load %arg10[%c0_113, %c0_114] : memref<32x128xf32, #tpu.memory_space<vmem>>, vector<32x128xf32>
    %cst_115 = arith.constant dense<0.000000e+00> : vector<2x128xf32>
    %297 = tpu.matmul %294, %296, %cst_115 {dimension_numbers = #tpu.dot_dimension_numbers<[1], [0], [0], [1], [0, 0, 1, 1], [], []>} : vector<2x32xf32>, vector<32x128xf32>, vector<2x128xf32> -> vector<2x128xf32>
    %298 = arith.addf %295, %297 : vector<2x128xf32>
    %299 = arith.mulf %298, %31 : vector<2x128xf32>
    %300 = math.tanh %299 : vector<2x128xf32>
    %301 = arith.mulf %31, %300 : vector<2x128xf32>
    %302 = arith.addf %301, %34 : vector<2x128xf32>
    %303 = vector.extract_strided_slice %302 {offsets = [0, 0], sizes = [2, 32], strides = [1, 1]} : vector<2x128xf32> to vector<2x32xf32>
    %304 = vector.extract_strided_slice %302 {offsets = [0, 32], sizes = [2, 32], strides = [1, 1]} : vector<2x128xf32> to vector<2x32xf32>
    %305 = vector.extract_strided_slice %302 {offsets = [0, 64], sizes = [2, 32], strides = [1, 1]} : vector<2x128xf32> to vector<2x32xf32>
    %306 = vector.extract_strided_slice %302 {offsets = [0, 96], sizes = [2, 32], strides = [1, 1]} : vector<2x128xf32> to vector<2x32xf32>
    %307 = arith.mulf %304, %237 : vector<2x32xf32>
    %308 = arith.mulf %303, %305 : vector<2x32xf32>
    %309 = arith.addf %307, %308 : vector<2x32xf32>
    %310 = math.tanh %309 : vector<2x32xf32>
    %311 = arith.mulf %306, %310 : vector<2x32xf32>
    %312 = tpu.concatenate %311, %258 in 1 : vector<2x32xf32>, vector<2x32xf32> -> vector<2x64xf32>
    %c0_116 = arith.constant 0 : index
    %c0_117 = arith.constant 0 : index
    %313 = vector.load %arg11[%c0_116, %c0_117] : memref<64x128xf32, #tpu.memory_space<vmem>>, vector<64x128xf32>
    %cst_118 = arith.constant dense<0.000000e+00> : vector<2x128xf32>
    %314 = tpu.matmul %312, %313, %cst_118 {dimension_numbers = #tpu.dot_dimension_numbers<[1], [0], [0], [1], [0, 0, 1, 1], [], []>} : vector<2x64xf32>, vector<64x128xf32>, vector<2x128xf32> -> vector<2x128xf32>
    %c0_119 = arith.constant 0 : index
    %c0_120 = arith.constant 0 : index
    %315 = vector.load %arg12[%c0_119, %c0_120] : memref<1x128xf32, #tpu.memory_space<vmem>>, vector<1x128xf32>
    %316 = vector.broadcast %315 : vector<1x128xf32> to vector<2x128xf32>
    %317 = arith.addf %314, %316 : vector<2x128xf32>
    %318 = arith.mulf %317, %31 : vector<2x128xf32>
    %319 = math.tanh %318 : vector<2x128xf32>
    %320 = arith.mulf %31, %319 : vector<2x128xf32>
    %321 = arith.addf %320, %34 : vector<2x128xf32>
    %322 = vector.extract_strided_slice %321 {offsets = [0, 0], sizes = [2, 32], strides = [1, 1]} : vector<2x128xf32> to vector<2x32xf32>
    %323 = vector.extract_strided_slice %321 {offsets = [0, 32], sizes = [2, 32], strides = [1, 1]} : vector<2x128xf32> to vector<2x32xf32>
    %324 = vector.extract_strided_slice %321 {offsets = [0, 64], sizes = [2, 32], strides = [1, 1]} : vector<2x128xf32> to vector<2x32xf32>
    %325 = vector.extract_strided_slice %321 {offsets = [0, 96], sizes = [2, 32], strides = [1, 1]} : vector<2x128xf32> to vector<2x32xf32>
    %326 = arith.mulf %323, %256 : vector<2x32xf32>
    %327 = arith.mulf %322, %324 : vector<2x32xf32>
    %328 = arith.addf %326, %327 : vector<2x32xf32>
    %329 = math.tanh %328 : vector<2x32xf32>
    %330 = arith.mulf %325, %329 : vector<2x32xf32>
    %c6 = arith.constant 6 : index
    %c0_121 = arith.constant 0 : index
    %331 = vector.load %arg22[%c6, %c0_121] : memref<16x32xf32, #tpu.memory_space<vmem>>, vector<2x32xf32>
    tpu.vector_store %arg22[%c6, %c0_121], %330 {strides = array<i32>} : memref<16x32xf32, #tpu.memory_space<vmem>>, vector<2x32xf32>,
    %c0_122 = arith.constant 0 : index
    %c0_123 = arith.constant 0 : index
    %332 = vector.load %arg13[%c0_122, %c0_123] : memref<32x32xf32, #tpu.memory_space<vmem>>, vector<32x32xf32>
    %cst_124 = arith.constant dense<0.000000e+00> : vector<2x32xf32>
    %333 = tpu.matmul %330, %332, %cst_124 {dimension_numbers = #tpu.dot_dimension_numbers<[1], [0], [0], [1], [0, 0, 1, 1], [], []>} : vector<2x32xf32>, vector<32x32xf32>, vector<2x32xf32> -> vector<2x32xf32>
    %334 = vector.extract_strided_slice %333 {offsets = [0, 0], sizes = [1, 32], strides = [1, 1]} : vector<2x32xf32> to vector<1x32xf32>
    %335 = vector.shape_cast %334 : vector<1x32xf32> to vector<1x32xf32>
    %336 = vector.broadcast %335 : vector<1x32xf32> to vector<16x32xf32>
    %337 = vector.extract_strided_slice %333 {offsets = [1, 0], sizes = [1, 32], strides = [1, 1]} : vector<2x32xf32> to vector<1x32xf32>
    %338 = vector.shape_cast %337 : vector<1x32xf32> to vector<1x32xf32>
    %339 = vector.broadcast %338 : vector<1x32xf32> to vector<16x32xf32>
    %340 = arith.select %74, %339, %336 : vector<16x32xi1>, vector<16x32xf32>
    %341 = arith.addf %21, %340 : vector<16x32xf32>
    %cst_125 = arith.constant 0.000000e+00 : f32
    %342 = vector.broadcast %cst_125 : f32 to vector<16x32xf32>
    %343 = arith.maximumf %341, %342 : vector<16x32xf32>
    %344 = vector.broadcast %22 : vector<1x32xf32> to vector<16x32xf32>
    %345 = arith.mulf %343, %344 : vector<16x32xf32>
    %cst_126 = arith.constant dense<0.000000e+00> : vector<16xf32>
    %346 = vector.multi_reduction <add>, %345, %cst_126 [1] : vector<16x32xf32> to vector<16xf32>
    %347 = vector.shape_cast %346 : vector<16xf32> to vector<16x1xf32>
    %cst_127 = arith.constant dense<0xFF800000> : vector<1xf32>
    %348 = vector.multi_reduction <maximumf>, %347, %cst_127 [0] : vector<16x1xf32> to vector<1xf32>
    %349 = vector.shape_cast %348 : vector<1xf32> to vector<1x1xf32>
    %350 = vector.broadcast %349 : vector<1x1xf32> to vector<16x1xf32>
    %351 = arith.subf %347, %350 : vector<16x1xf32>
    %352 = math.exp %351 : vector<16x1xf32>
    %353 = vector.broadcast %352 : vector<16x1xf32> to vector<16x32xf32>
    %354 = arith.mulf %353, %14 : vector<16x32xf32>
    %cst_128 = arith.constant dense<0.000000e+00> : vector<2x32xf32>
    %355 = tpu.matmul %55, %354, %cst_128 {dimension_numbers = #tpu.dot_dimension_numbers<[1], [0], [0], [1], [0, 0, 1, 1], [], []>} : vector<2x16xf32>, vector<16x32xf32>, vector<2x32xf32> -> vector<2x32xf32>
    %cst_129 = arith.constant dense<0.000000e+00> : vector<2x1xf32>
    %356 = tpu.matmul %55, %352, %cst_129 {dimension_numbers = #tpu.dot_dimension_numbers<[1], [0], [0], [1], [0, 0, 1, 1], [], []>} : vector<2x16xf32>, vector<16x1xf32>, vector<2x1xf32> -> vector<2x1xf32>
    %357 = tpu.reciprocal %356 {approx = true} : vector<2x1xf32> -> vector<2x1xf32>
    %358 = vector.broadcast %357 : vector<2x1xf32> to vector<2x32xf32>
    %359 = arith.mulf %355, %358 : vector<2x32xf32>
    %c6_130 = arith.constant 6 : index
    %c0_131 = arith.constant 0 : index
    %360 = vector.load %arg21[%c6_130, %c0_131] : memref<16x32xf32, #tpu.memory_space<vmem>>, vector<2x32xf32>
    tpu.vector_store %arg21[%c6_130, %c0_131], %359 {strides = array<i32>} : memref<16x32xf32, #tpu.memory_space<vmem>>, vector<2x32xf32>,
    %361 = tpu.concatenate %311, %359 in 1 : vector<2x32xf32>, vector<2x32xf32> -> vector<2x64xf32>
    %c0_132 = arith.constant 0 : index
    %c0_133 = arith.constant 0 : index
    %362 = vector.load %arg15[%c0_132, %c0_133] : memref<64x32xf32, #tpu.memory_space<vmem>>, vector<64x32xf32>
    %cst_134 = arith.constant dense<0.000000e+00> : vector<2x32xf32>
    %363 = tpu.matmul %361, %362, %cst_134 {dimension_numbers = #tpu.dot_dimension_numbers<[1], [0], [0], [1], [0, 0, 1, 1], [], []>} : vector<2x64xf32>, vector<64x32xf32>, vector<2x32xf32> -> vector<2x32xf32>
    %c0_135 = arith.constant 0 : index
    %c0_136 = arith.constant 0 : index
    %364 = vector.load %arg16[%c0_135, %c0_136] : memref<1x32xf32, #tpu.memory_space<vmem>>, vector<1x32xf32>
    %365 = vector.broadcast %364 : vector<1x32xf32> to vector<2x32xf32>
    %366 = arith.addf %363, %365 : vector<2x32xf32>
    %367 = vector.extract_strided_slice %20 {offsets = [8, 0], sizes = [2, 128], strides = [1, 1]} : vector<16x128xf32> to vector<2x128xf32>
    %c0_137 = arith.constant 0 : index
    %c0_138 = arith.constant 0 : index
    %368 = vector.load %arg10[%c0_137, %c0_138] : memref<32x128xf32, #tpu.memory_space<vmem>>, vector<32x128xf32>
    %cst_139 = arith.constant dense<0.000000e+00> : vector<2x128xf32>
    %369 = tpu.matmul %366, %368, %cst_139 {dimension_numbers = #tpu.dot_dimension_numbers<[1], [0], [0], [1], [0, 0, 1, 1], [], []>} : vector<2x32xf32>, vector<32x128xf32>, vector<2x128xf32> -> vector<2x128xf32>
    %370 = arith.addf %367, %369 : vector<2x128xf32>
    %371 = arith.mulf %370, %31 : vector<2x128xf32>
    %372 = math.tanh %371 : vector<2x128xf32>
    %373 = arith.mulf %31, %372 : vector<2x128xf32>
    %374 = arith.addf %373, %34 : vector<2x128xf32>
    %375 = vector.extract_strided_slice %374 {offsets = [0, 0], sizes = [2, 32], strides = [1, 1]} : vector<2x128xf32> to vector<2x32xf32>
    %376 = vector.extract_strided_slice %374 {offsets = [0, 32], sizes = [2, 32], strides = [1, 1]} : vector<2x128xf32> to vector<2x32xf32>
    %377 = vector.extract_strided_slice %374 {offsets = [0, 64], sizes = [2, 32], strides = [1, 1]} : vector<2x128xf32> to vector<2x32xf32>
    %378 = vector.extract_strided_slice %374 {offsets = [0, 96], sizes = [2, 32], strides = [1, 1]} : vector<2x128xf32> to vector<2x32xf32>
    %379 = arith.mulf %376, %309 : vector<2x32xf32>
    %380 = arith.mulf %375, %377 : vector<2x32xf32>
    %381 = arith.addf %379, %380 : vector<2x32xf32>
    %382 = math.tanh %381 : vector<2x32xf32>
    %383 = arith.mulf %378, %382 : vector<2x32xf32>
    %384 = tpu.concatenate %383, %330 in 1 : vector<2x32xf32>, vector<2x32xf32> -> vector<2x64xf32>
    %c0_140 = arith.constant 0 : index
    %c0_141 = arith.constant 0 : index
    %385 = vector.load %arg11[%c0_140, %c0_141] : memref<64x128xf32, #tpu.memory_space<vmem>>, vector<64x128xf32>
    %cst_142 = arith.constant dense<0.000000e+00> : vector<2x128xf32>
    %386 = tpu.matmul %384, %385, %cst_142 {dimension_numbers = #tpu.dot_dimension_numbers<[1], [0], [0], [1], [0, 0, 1, 1], [], []>} : vector<2x64xf32>, vector<64x128xf32>, vector<2x128xf32> -> vector<2x128xf32>
    %c0_143 = arith.constant 0 : index
    %c0_144 = arith.constant 0 : index
    %387 = vector.load %arg12[%c0_143, %c0_144] : memref<1x128xf32, #tpu.memory_space<vmem>>, vector<1x128xf32>
    %388 = vector.broadcast %387 : vector<1x128xf32> to vector<2x128xf32>
    %389 = arith.addf %386, %388 : vector<2x128xf32>
    %390 = arith.mulf %389, %31 : vector<2x128xf32>
    %391 = math.tanh %390 : vector<2x128xf32>
    %392 = arith.mulf %31, %391 : vector<2x128xf32>
    %393 = arith.addf %392, %34 : vector<2x128xf32>
    %394 = vector.extract_strided_slice %393 {offsets = [0, 0], sizes = [2, 32], strides = [1, 1]} : vector<2x128xf32> to vector<2x32xf32>
    %395 = vector.extract_strided_slice %393 {offsets = [0, 32], sizes = [2, 32], strides = [1, 1]} : vector<2x128xf32> to vector<2x32xf32>
    %396 = vector.extract_strided_slice %393 {offsets = [0, 64], sizes = [2, 32], strides = [1, 1]} : vector<2x128xf32> to vector<2x32xf32>
    %397 = vector.extract_strided_slice %393 {offsets = [0, 96], sizes = [2, 32], strides = [1, 1]} : vector<2x128xf32> to vector<2x32xf32>
    %398 = arith.mulf %395, %328 : vector<2x32xf32>
    %399 = arith.mulf %394, %396 : vector<2x32xf32>
    %400 = arith.addf %398, %399 : vector<2x32xf32>
    %401 = math.tanh %400 : vector<2x32xf32>
    %402 = arith.mulf %397, %401 : vector<2x32xf32>
    %c8 = arith.constant 8 : index
    %c0_145 = arith.constant 0 : index
    %403 = vector.load %arg22[%c8, %c0_145] : memref<16x32xf32, #tpu.memory_space<vmem>>, vector<2x32xf32>
    tpu.vector_store %arg22[%c8, %c0_145], %402 {strides = array<i32>} : memref<16x32xf32, #tpu.memory_space<vmem>>, vector<2x32xf32>,
    %c0_146 = arith.constant 0 : index
    %c0_147 = arith.constant 0 : index
    %404 = vector.load %arg13[%c0_146, %c0_147] : memref<32x32xf32, #tpu.memory_space<vmem>>, vector<32x32xf32>
    %cst_148 = arith.constant dense<0.000000e+00> : vector<2x32xf32>
    %405 = tpu.matmul %402, %404, %cst_148 {dimension_numbers = #tpu.dot_dimension_numbers<[1], [0], [0], [1], [0, 0, 1, 1], [], []>} : vector<2x32xf32>, vector<32x32xf32>, vector<2x32xf32> -> vector<2x32xf32>
    %406 = vector.extract_strided_slice %405 {offsets = [0, 0], sizes = [1, 32], strides = [1, 1]} : vector<2x32xf32> to vector<1x32xf32>
    %407 = vector.shape_cast %406 : vector<1x32xf32> to vector<1x32xf32>
    %408 = vector.broadcast %407 : vector<1x32xf32> to vector<16x32xf32>
    %409 = vector.extract_strided_slice %405 {offsets = [1, 0], sizes = [1, 32], strides = [1, 1]} : vector<2x32xf32> to vector<1x32xf32>
    %410 = vector.shape_cast %409 : vector<1x32xf32> to vector<1x32xf32>
    %411 = vector.broadcast %410 : vector<1x32xf32> to vector<16x32xf32>
    %412 = arith.select %74, %411, %408 : vector<16x32xi1>, vector<16x32xf32>
    %413 = arith.addf %21, %412 : vector<16x32xf32>
    %cst_149 = arith.constant 0.000000e+00 : f32
    %414 = vector.broadcast %cst_149 : f32 to vector<16x32xf32>
    %415 = arith.maximumf %413, %414 : vector<16x32xf32>
    %416 = vector.broadcast %22 : vector<1x32xf32> to vector<16x32xf32>
    %417 = arith.mulf %415, %416 : vector<16x32xf32>
    %cst_150 = arith.constant dense<0.000000e+00> : vector<16xf32>
    %418 = vector.multi_reduction <add>, %417, %cst_150 [1] : vector<16x32xf32> to vector<16xf32>
    %419 = vector.shape_cast %418 : vector<16xf32> to vector<16x1xf32>
    %cst_151 = arith.constant dense<0xFF800000> : vector<1xf32>
    %420 = vector.multi_reduction <maximumf>, %419, %cst_151 [0] : vector<16x1xf32> to vector<1xf32>
    %421 = vector.shape_cast %420 : vector<1xf32> to vector<1x1xf32>
    %422 = vector.broadcast %421 : vector<1x1xf32> to vector<16x1xf32>
    %423 = arith.subf %419, %422 : vector<16x1xf32>
    %424 = math.exp %423 : vector<16x1xf32>
    %425 = vector.broadcast %424 : vector<16x1xf32> to vector<16x32xf32>
    %426 = arith.mulf %425, %14 : vector<16x32xf32>
    %cst_152 = arith.constant dense<0.000000e+00> : vector<2x32xf32>
    %427 = tpu.matmul %55, %426, %cst_152 {dimension_numbers = #tpu.dot_dimension_numbers<[1], [0], [0], [1], [0, 0, 1, 1], [], []>} : vector<2x16xf32>, vector<16x32xf32>, vector<2x32xf32> -> vector<2x32xf32>
    %cst_153 = arith.constant dense<0.000000e+00> : vector<2x1xf32>
    %428 = tpu.matmul %55, %424, %cst_153 {dimension_numbers = #tpu.dot_dimension_numbers<[1], [0], [0], [1], [0, 0, 1, 1], [], []>} : vector<2x16xf32>, vector<16x1xf32>, vector<2x1xf32> -> vector<2x1xf32>
    %429 = tpu.reciprocal %428 {approx = true} : vector<2x1xf32> -> vector<2x1xf32>
    %430 = vector.broadcast %429 : vector<2x1xf32> to vector<2x32xf32>
    %431 = arith.mulf %427, %430 : vector<2x32xf32>
    %c8_154 = arith.constant 8 : index
    %c0_155 = arith.constant 0 : index
    %432 = vector.load %arg21[%c8_154, %c0_155] : memref<16x32xf32, #tpu.memory_space<vmem>>, vector<2x32xf32>
    tpu.vector_store %arg21[%c8_154, %c0_155], %431 {strides = array<i32>} : memref<16x32xf32, #tpu.memory_space<vmem>>, vector<2x32xf32>,
    %433 = tpu.concatenate %383, %431 in 1 : vector<2x32xf32>, vector<2x32xf32> -> vector<2x64xf32>
    %c0_156 = arith.constant 0 : index
    %c0_157 = arith.constant 0 : index
    %434 = vector.load %arg15[%c0_156, %c0_157] : memref<64x32xf32, #tpu.memory_space<vmem>>, vector<64x32xf32>
    %cst_158 = arith.constant dense<0.000000e+00> : vector<2x32xf32>
    %435 = tpu.matmul %433, %434, %cst_158 {dimension_numbers = #tpu.dot_dimension_numbers<[1], [0], [0], [1], [0, 0, 1, 1], [], []>} : vector<2x64xf32>, vector<64x32xf32>, vector<2x32xf32> -> vector<2x32xf32>
    %c0_159 = arith.constant 0 : index
    %c0_160 = arith.constant 0 : index
    %436 = vector.load %arg16[%c0_159, %c0_160] : memref<1x32xf32, #tpu.memory_space<vmem>>, vector<1x32xf32>
    %437 = vector.broadcast %436 : vector<1x32xf32> to vector<2x32xf32>
    %438 = arith.addf %435, %437 : vector<2x32xf32>
    %439 = vector.extract_strided_slice %20 {offsets = [10, 0], sizes = [2, 128], strides = [1, 1]} : vector<16x128xf32> to vector<2x128xf32>
    %c0_161 = arith.constant 0 : index
    %c0_162 = arith.constant 0 : index
    %440 = vector.load %arg10[%c0_161, %c0_162] : memref<32x128xf32, #tpu.memory_space<vmem>>, vector<32x128xf32>
    %cst_163 = arith.constant dense<0.000000e+00> : vector<2x128xf32>
    %441 = tpu.matmul %438, %440, %cst_163 {dimension_numbers = #tpu.dot_dimension_numbers<[1], [0], [0], [1], [0, 0, 1, 1], [], []>} : vector<2x32xf32>, vector<32x128xf32>, vector<2x128xf32> -> vector<2x128xf32>
    %442 = arith.addf %439, %441 : vector<2x128xf32>
    %443 = arith.mulf %442, %31 : vector<2x128xf32>
    %444 = math.tanh %443 : vector<2x128xf32>
    %445 = arith.mulf %31, %444 : vector<2x128xf32>
    %446 = arith.addf %445, %34 : vector<2x128xf32>
    %447 = vector.extract_strided_slice %446 {offsets = [0, 0], sizes = [2, 32], strides = [1, 1]} : vector<2x128xf32> to vector<2x32xf32>
    %448 = vector.extract_strided_slice %446 {offsets = [0, 32], sizes = [2, 32], strides = [1, 1]} : vector<2x128xf32> to vector<2x32xf32>
    %449 = vector.extract_strided_slice %446 {offsets = [0, 64], sizes = [2, 32], strides = [1, 1]} : vector<2x128xf32> to vector<2x32xf32>
    %450 = vector.extract_strided_slice %446 {offsets = [0, 96], sizes = [2, 32], strides = [1, 1]} : vector<2x128xf32> to vector<2x32xf32>
    %451 = arith.mulf %448, %381 : vector<2x32xf32>
    %452 = arith.mulf %447, %449 : vector<2x32xf32>
    %453 = arith.addf %451, %452 : vector<2x32xf32>
    %454 = math.tanh %453 : vector<2x32xf32>
    %455 = arith.mulf %450, %454 : vector<2x32xf32>
    %456 = tpu.concatenate %455, %402 in 1 : vector<2x32xf32>, vector<2x32xf32> -> vector<2x64xf32>
    %c0_164 = arith.constant 0 : index
    %c0_165 = arith.constant 0 : index
    %457 = vector.load %arg11[%c0_164, %c0_165] : memref<64x128xf32, #tpu.memory_space<vmem>>, vector<64x128xf32>
    %cst_166 = arith.constant dense<0.000000e+00> : vector<2x128xf32>
    %458 = tpu.matmul %456, %457, %cst_166 {dimension_numbers = #tpu.dot_dimension_numbers<[1], [0], [0], [1], [0, 0, 1, 1], [], []>} : vector<2x64xf32>, vector<64x128xf32>, vector<2x128xf32> -> vector<2x128xf32>
    %c0_167 = arith.constant 0 : index
    %c0_168 = arith.constant 0 : index
    %459 = vector.load %arg12[%c0_167, %c0_168] : memref<1x128xf32, #tpu.memory_space<vmem>>, vector<1x128xf32>
    %460 = vector.broadcast %459 : vector<1x128xf32> to vector<2x128xf32>
    %461 = arith.addf %458, %460 : vector<2x128xf32>
    %462 = arith.mulf %461, %31 : vector<2x128xf32>
    %463 = math.tanh %462 : vector<2x128xf32>
    %464 = arith.mulf %31, %463 : vector<2x128xf32>
    %465 = arith.addf %464, %34 : vector<2x128xf32>
    %466 = vector.extract_strided_slice %465 {offsets = [0, 0], sizes = [2, 32], strides = [1, 1]} : vector<2x128xf32> to vector<2x32xf32>
    %467 = vector.extract_strided_slice %465 {offsets = [0, 32], sizes = [2, 32], strides = [1, 1]} : vector<2x128xf32> to vector<2x32xf32>
    %468 = vector.extract_strided_slice %465 {offsets = [0, 64], sizes = [2, 32], strides = [1, 1]} : vector<2x128xf32> to vector<2x32xf32>
    %469 = vector.extract_strided_slice %465 {offsets = [0, 96], sizes = [2, 32], strides = [1, 1]} : vector<2x128xf32> to vector<2x32xf32>
    %470 = arith.mulf %467, %400 : vector<2x32xf32>
    %471 = arith.mulf %466, %468 : vector<2x32xf32>
    %472 = arith.addf %470, %471 : vector<2x32xf32>
    %473 = math.tanh %472 : vector<2x32xf32>
    %474 = arith.mulf %469, %473 : vector<2x32xf32>
    %c10 = arith.constant 10 : index
    %c0_169 = arith.constant 0 : index
    %475 = vector.load %arg22[%c10, %c0_169] : memref<16x32xf32, #tpu.memory_space<vmem>>, vector<2x32xf32>
    tpu.vector_store %arg22[%c10, %c0_169], %474 {strides = array<i32>} : memref<16x32xf32, #tpu.memory_space<vmem>>, vector<2x32xf32>,
    %c0_170 = arith.constant 0 : index
    %c0_171 = arith.constant 0 : index
    %476 = vector.load %arg13[%c0_170, %c0_171] : memref<32x32xf32, #tpu.memory_space<vmem>>, vector<32x32xf32>
    %cst_172 = arith.constant dense<0.000000e+00> : vector<2x32xf32>
    %477 = tpu.matmul %474, %476, %cst_172 {dimension_numbers = #tpu.dot_dimension_numbers<[1], [0], [0], [1], [0, 0, 1, 1], [], []>} : vector<2x32xf32>, vector<32x32xf32>, vector<2x32xf32> -> vector<2x32xf32>
    %478 = vector.extract_strided_slice %477 {offsets = [0, 0], sizes = [1, 32], strides = [1, 1]} : vector<2x32xf32> to vector<1x32xf32>
    %479 = vector.shape_cast %478 : vector<1x32xf32> to vector<1x32xf32>
    %480 = vector.broadcast %479 : vector<1x32xf32> to vector<16x32xf32>
    %481 = vector.extract_strided_slice %477 {offsets = [1, 0], sizes = [1, 32], strides = [1, 1]} : vector<2x32xf32> to vector<1x32xf32>
    %482 = vector.shape_cast %481 : vector<1x32xf32> to vector<1x32xf32>
    %483 = vector.broadcast %482 : vector<1x32xf32> to vector<16x32xf32>
    %484 = arith.select %74, %483, %480 : vector<16x32xi1>, vector<16x32xf32>
    %485 = arith.addf %21, %484 : vector<16x32xf32>
    %cst_173 = arith.constant 0.000000e+00 : f32
    %486 = vector.broadcast %cst_173 : f32 to vector<16x32xf32>
    %487 = arith.maximumf %485, %486 : vector<16x32xf32>
    %488 = vector.broadcast %22 : vector<1x32xf32> to vector<16x32xf32>
    %489 = arith.mulf %487, %488 : vector<16x32xf32>
    %cst_174 = arith.constant dense<0.000000e+00> : vector<16xf32>
    %490 = vector.multi_reduction <add>, %489, %cst_174 [1] : vector<16x32xf32> to vector<16xf32>
    %491 = vector.shape_cast %490 : vector<16xf32> to vector<16x1xf32>
    %cst_175 = arith.constant dense<0xFF800000> : vector<1xf32>
    %492 = vector.multi_reduction <maximumf>, %491, %cst_175 [0] : vector<16x1xf32> to vector<1xf32>
    %493 = vector.shape_cast %492 : vector<1xf32> to vector<1x1xf32>
    %494 = vector.broadcast %493 : vector<1x1xf32> to vector<16x1xf32>
    %495 = arith.subf %491, %494 : vector<16x1xf32>
    %496 = math.exp %495 : vector<16x1xf32>
    %497 = vector.broadcast %496 : vector<16x1xf32> to vector<16x32xf32>
    %498 = arith.mulf %497, %14 : vector<16x32xf32>
    %cst_176 = arith.constant dense<0.000000e+00> : vector<2x32xf32>
    %499 = tpu.matmul %55, %498, %cst_176 {dimension_numbers = #tpu.dot_dimension_numbers<[1], [0], [0], [1], [0, 0, 1, 1], [], []>} : vector<2x16xf32>, vector<16x32xf32>, vector<2x32xf32> -> vector<2x32xf32>
    %cst_177 = arith.constant dense<0.000000e+00> : vector<2x1xf32>
    %500 = tpu.matmul %55, %496, %cst_177 {dimension_numbers = #tpu.dot_dimension_numbers<[1], [0], [0], [1], [0, 0, 1, 1], [], []>} : vector<2x16xf32>, vector<16x1xf32>, vector<2x1xf32> -> vector<2x1xf32>
    %501 = tpu.reciprocal %500 {approx = true} : vector<2x1xf32> -> vector<2x1xf32>
    %502 = vector.broadcast %501 : vector<2x1xf32> to vector<2x32xf32>
    %503 = arith.mulf %499, %502 : vector<2x32xf32>
    %c10_178 = arith.constant 10 : index
    %c0_179 = arith.constant 0 : index
    %504 = vector.load %arg21[%c10_178, %c0_179] : memref<16x32xf32, #tpu.memory_space<vmem>>, vector<2x32xf32>
    tpu.vector_store %arg21[%c10_178, %c0_179], %503 {strides = array<i32>} : memref<16x32xf32, #tpu.memory_space<vmem>>, vector<2x32xf32>,
    %505 = tpu.concatenate %455, %503 in 1 : vector<2x32xf32>, vector<2x32xf32> -> vector<2x64xf32>
    %c0_180 = arith.constant 0 : index
    %c0_181 = arith.constant 0 : index
    %506 = vector.load %arg15[%c0_180, %c0_181] : memref<64x32xf32, #tpu.memory_space<vmem>>, vector<64x32xf32>
    %cst_182 = arith.constant dense<0.000000e+00> : vector<2x32xf32>
    %507 = tpu.matmul %505, %506, %cst_182 {dimension_numbers = #tpu.dot_dimension_numbers<[1], [0], [0], [1], [0, 0, 1, 1], [], []>} : vector<2x64xf32>, vector<64x32xf32>, vector<2x32xf32> -> vector<2x32xf32>
    %c0_183 = arith.constant 0 : index
    %c0_184 = arith.constant 0 : index
    %508 = vector.load %arg16[%c0_183, %c0_184] : memref<1x32xf32, #tpu.memory_space<vmem>>, vector<1x32xf32>
    %509 = vector.broadcast %508 : vector<1x32xf32> to vector<2x32xf32>
    %510 = arith.addf %507, %509 : vector<2x32xf32>
    %511 = vector.extract_strided_slice %20 {offsets = [12, 0], sizes = [2, 128], strides = [1, 1]} : vector<16x128xf32> to vector<2x128xf32>
    %c0_185 = arith.constant 0 : index
    %c0_186 = arith.constant 0 : index
    %512 = vector.load %arg10[%c0_185, %c0_186] : memref<32x128xf32, #tpu.memory_space<vmem>>, vector<32x128xf32>
    %cst_187 = arith.constant dense<0.000000e+00> : vector<2x128xf32>
    %513 = tpu.matmul %510, %512, %cst_187 {dimension_numbers = #tpu.dot_dimension_numbers<[1], [0], [0], [1], [0, 0, 1, 1], [], []>} : vector<2x32xf32>, vector<32x128xf32>, vector<2x128xf32> -> vector<2x128xf32>
    %514 = arith.addf %511, %513 : vector<2x128xf32>
    %515 = arith.mulf %514, %31 : vector<2x128xf32>
    %516 = math.tanh %515 : vector<2x128xf32>
    %517 = arith.mulf %31, %516 : vector<2x128xf32>
    %518 = arith.addf %517, %34 : vector<2x128xf32>
    %519 = vector.extract_strided_slice %518 {offsets = [0, 0], sizes = [2, 32], strides = [1, 1]} : vector<2x128xf32> to vector<2x32xf32>
    %520 = vector.extract_strided_slice %518 {offsets = [0, 32], sizes = [2, 32], strides = [1, 1]} : vector<2x128xf32> to vector<2x32xf32>
    %521 = vector.extract_strided_slice %518 {offsets = [0, 64], sizes = [2, 32], strides = [1, 1]} : vector<2x128xf32> to vector<2x32xf32>
    %522 = vector.extract_strided_slice %518 {offsets = [0, 96], sizes = [2, 32], strides = [1, 1]} : vector<2x128xf32> to vector<2x32xf32>
    %523 = arith.mulf %520, %453 : vector<2x32xf32>
    %524 = arith.mulf %519, %521 : vector<2x32xf32>
    %525 = arith.addf %523, %524 : vector<2x32xf32>
    %526 = math.tanh %525 : vector<2x32xf32>
    %527 = arith.mulf %522, %526 : vector<2x32xf32>
    %528 = tpu.concatenate %527, %474 in 1 : vector<2x32xf32>, vector<2x32xf32> -> vector<2x64xf32>
    %c0_188 = arith.constant 0 : index
    %c0_189 = arith.constant 0 : index
    %529 = vector.load %arg11[%c0_188, %c0_189] : memref<64x128xf32, #tpu.memory_space<vmem>>, vector<64x128xf32>
    %cst_190 = arith.constant dense<0.000000e+00> : vector<2x128xf32>
    %530 = tpu.matmul %528, %529, %cst_190 {dimension_numbers = #tpu.dot_dimension_numbers<[1], [0], [0], [1], [0, 0, 1, 1], [], []>} : vector<2x64xf32>, vector<64x128xf32>, vector<2x128xf32> -> vector<2x128xf32>
    %c0_191 = arith.constant 0 : index
    %c0_192 = arith.constant 0 : index
    %531 = vector.load %arg12[%c0_191, %c0_192] : memref<1x128xf32, #tpu.memory_space<vmem>>, vector<1x128xf32>
    %532 = vector.broadcast %531 : vector<1x128xf32> to vector<2x128xf32>
    %533 = arith.addf %530, %532 : vector<2x128xf32>
    %534 = arith.mulf %533, %31 : vector<2x128xf32>
    %535 = math.tanh %534 : vector<2x128xf32>
    %536 = arith.mulf %31, %535 : vector<2x128xf32>
    %537 = arith.addf %536, %34 : vector<2x128xf32>
    %538 = vector.extract_strided_slice %537 {offsets = [0, 0], sizes = [2, 32], strides = [1, 1]} : vector<2x128xf32> to vector<2x32xf32>
    %539 = vector.extract_strided_slice %537 {offsets = [0, 32], sizes = [2, 32], strides = [1, 1]} : vector<2x128xf32> to vector<2x32xf32>
    %540 = vector.extract_strided_slice %537 {offsets = [0, 64], sizes = [2, 32], strides = [1, 1]} : vector<2x128xf32> to vector<2x32xf32>
    %541 = vector.extract_strided_slice %537 {offsets = [0, 96], sizes = [2, 32], strides = [1, 1]} : vector<2x128xf32> to vector<2x32xf32>
    %542 = arith.mulf %539, %472 : vector<2x32xf32>
    %543 = arith.mulf %538, %540 : vector<2x32xf32>
    %544 = arith.addf %542, %543 : vector<2x32xf32>
    %545 = math.tanh %544 : vector<2x32xf32>
    %546 = arith.mulf %541, %545 : vector<2x32xf32>
    %c12 = arith.constant 12 : index
    %c0_193 = arith.constant 0 : index
    %547 = vector.load %arg22[%c12, %c0_193] : memref<16x32xf32, #tpu.memory_space<vmem>>, vector<2x32xf32>
    tpu.vector_store %arg22[%c12, %c0_193], %546 {strides = array<i32>} : memref<16x32xf32, #tpu.memory_space<vmem>>, vector<2x32xf32>,
    %c0_194 = arith.constant 0 : index
    %c0_195 = arith.constant 0 : index
    %548 = vector.load %arg13[%c0_194, %c0_195] : memref<32x32xf32, #tpu.memory_space<vmem>>, vector<32x32xf32>
    %cst_196 = arith.constant dense<0.000000e+00> : vector<2x32xf32>
    %549 = tpu.matmul %546, %548, %cst_196 {dimension_numbers = #tpu.dot_dimension_numbers<[1], [0], [0], [1], [0, 0, 1, 1], [], []>} : vector<2x32xf32>, vector<32x32xf32>, vector<2x32xf32> -> vector<2x32xf32>
    %550 = vector.extract_strided_slice %549 {offsets = [0, 0], sizes = [1, 32], strides = [1, 1]} : vector<2x32xf32> to vector<1x32xf32>
    %551 = vector.shape_cast %550 : vector<1x32xf32> to vector<1x32xf32>
    %552 = vector.broadcast %551 : vector<1x32xf32> to vector<16x32xf32>
    %553 = vector.extract_strided_slice %549 {offsets = [1, 0], sizes = [1, 32], strides = [1, 1]} : vector<2x32xf32> to vector<1x32xf32>
    %554 = vector.shape_cast %553 : vector<1x32xf32> to vector<1x32xf32>
    %555 = vector.broadcast %554 : vector<1x32xf32> to vector<16x32xf32>
    %556 = arith.select %74, %555, %552 : vector<16x32xi1>, vector<16x32xf32>
    %557 = arith.addf %21, %556 : vector<16x32xf32>
    %cst_197 = arith.constant 0.000000e+00 : f32
    %558 = vector.broadcast %cst_197 : f32 to vector<16x32xf32>
    %559 = arith.maximumf %557, %558 : vector<16x32xf32>
    %560 = vector.broadcast %22 : vector<1x32xf32> to vector<16x32xf32>
    %561 = arith.mulf %559, %560 : vector<16x32xf32>
    %cst_198 = arith.constant dense<0.000000e+00> : vector<16xf32>
    %562 = vector.multi_reduction <add>, %561, %cst_198 [1] : vector<16x32xf32> to vector<16xf32>
    %563 = vector.shape_cast %562 : vector<16xf32> to vector<16x1xf32>
    %cst_199 = arith.constant dense<0xFF800000> : vector<1xf32>
    %564 = vector.multi_reduction <maximumf>, %563, %cst_199 [0] : vector<16x1xf32> to vector<1xf32>
    %565 = vector.shape_cast %564 : vector<1xf32> to vector<1x1xf32>
    %566 = vector.broadcast %565 : vector<1x1xf32> to vector<16x1xf32>
    %567 = arith.subf %563, %566 : vector<16x1xf32>
    %568 = math.exp %567 : vector<16x1xf32>
    %569 = vector.broadcast %568 : vector<16x1xf32> to vector<16x32xf32>
    %570 = arith.mulf %569, %14 : vector<16x32xf32>
    %cst_200 = arith.constant dense<0.000000e+00> : vector<2x32xf32>
    %571 = tpu.matmul %55, %570, %cst_200 {dimension_numbers = #tpu.dot_dimension_numbers<[1], [0], [0], [1], [0, 0, 1, 1], [], []>} : vector<2x16xf32>, vector<16x32xf32>, vector<2x32xf32> -> vector<2x32xf32>
    %cst_201 = arith.constant dense<0.000000e+00> : vector<2x1xf32>
    %572 = tpu.matmul %55, %568, %cst_201 {dimension_numbers = #tpu.dot_dimension_numbers<[1], [0], [0], [1], [0, 0, 1, 1], [], []>} : vector<2x16xf32>, vector<16x1xf32>, vector<2x1xf32> -> vector<2x1xf32>
    %573 = tpu.reciprocal %572 {approx = true} : vector<2x1xf32> -> vector<2x1xf32>
    %574 = vector.broadcast %573 : vector<2x1xf32> to vector<2x32xf32>
    %575 = arith.mulf %571, %574 : vector<2x32xf32>
    %c12_202 = arith.constant 12 : index
    %c0_203 = arith.constant 0 : index
    %576 = vector.load %arg21[%c12_202, %c0_203] : memref<16x32xf32, #tpu.memory_space<vmem>>, vector<2x32xf32>
    tpu.vector_store %arg21[%c12_202, %c0_203], %575 {strides = array<i32>} : memref<16x32xf32, #tpu.memory_space<vmem>>, vector<2x32xf32>,
    %577 = tpu.concatenate %527, %575 in 1 : vector<2x32xf32>, vector<2x32xf32> -> vector<2x64xf32>
    %c0_204 = arith.constant 0 : index
    %c0_205 = arith.constant 0 : index
    %578 = vector.load %arg15[%c0_204, %c0_205] : memref<64x32xf32, #tpu.memory_space<vmem>>, vector<64x32xf32>
    %cst_206 = arith.constant dense<0.000000e+00> : vector<2x32xf32>
    %579 = tpu.matmul %577, %578, %cst_206 {dimension_numbers = #tpu.dot_dimension_numbers<[1], [0], [0], [1], [0, 0, 1, 1], [], []>} : vector<2x64xf32>, vector<64x32xf32>, vector<2x32xf32> -> vector<2x32xf32>
    %c0_207 = arith.constant 0 : index
    %c0_208 = arith.constant 0 : index
    %580 = vector.load %arg16[%c0_207, %c0_208] : memref<1x32xf32, #tpu.memory_space<vmem>>, vector<1x32xf32>
    %581 = vector.broadcast %580 : vector<1x32xf32> to vector<2x32xf32>
    %582 = arith.addf %579, %581 : vector<2x32xf32>
    %583 = vector.extract_strided_slice %20 {offsets = [14, 0], sizes = [2, 128], strides = [1, 1]} : vector<16x128xf32> to vector<2x128xf32>
    %c0_209 = arith.constant 0 : index
    %c0_210 = arith.constant 0 : index
    %584 = vector.load %arg10[%c0_209, %c0_210] : memref<32x128xf32, #tpu.memory_space<vmem>>, vector<32x128xf32>
    %cst_211 = arith.constant dense<0.000000e+00> : vector<2x128xf32>
    %585 = tpu.matmul %582, %584, %cst_211 {dimension_numbers = #tpu.dot_dimension_numbers<[1], [0], [0], [1], [0, 0, 1, 1], [], []>} : vector<2x32xf32>, vector<32x128xf32>, vector<2x128xf32> -> vector<2x128xf32>
    %586 = arith.addf %583, %585 : vector<2x128xf32>
    %587 = arith.mulf %586, %31 : vector<2x128xf32>
    %588 = math.tanh %587 : vector<2x128xf32>
    %589 = arith.mulf %31, %588 : vector<2x128xf32>
    %590 = arith.addf %589, %34 : vector<2x128xf32>
    %591 = vector.extract_strided_slice %590 {offsets = [0, 0], sizes = [2, 32], strides = [1, 1]} : vector<2x128xf32> to vector<2x32xf32>
    %592 = vector.extract_strided_slice %590 {offsets = [0, 32], sizes = [2, 32], strides = [1, 1]} : vector<2x128xf32> to vector<2x32xf32>
    %593 = vector.extract_strided_slice %590 {offsets = [0, 64], sizes = [2, 32], strides = [1, 1]} : vector<2x128xf32> to vector<2x32xf32>
    %594 = vector.extract_strided_slice %590 {offsets = [0, 96], sizes = [2, 32], strides = [1, 1]} : vector<2x128xf32> to vector<2x32xf32>
    %595 = arith.mulf %592, %525 : vector<2x32xf32>
    %596 = arith.mulf %591, %593 : vector<2x32xf32>
    %597 = arith.addf %595, %596 : vector<2x32xf32>
    %598 = math.tanh %597 : vector<2x32xf32>
    %599 = arith.mulf %594, %598 : vector<2x32xf32>
    %600 = tpu.concatenate %599, %546 in 1 : vector<2x32xf32>, vector<2x32xf32> -> vector<2x64xf32>
    %c0_212 = arith.constant 0 : index
    %c0_213 = arith.constant 0 : index
    %601 = vector.load %arg11[%c0_212, %c0_213] : memref<64x128xf32, #tpu.memory_space<vmem>>, vector<64x128xf32>
    %cst_214 = arith.constant dense<0.000000e+00> : vector<2x128xf32>
    %602 = tpu.matmul %600, %601, %cst_214 {dimension_numbers = #tpu.dot_dimension_numbers<[1], [0], [0], [1], [0, 0, 1, 1], [], []>} : vector<2x64xf32>, vector<64x128xf32>, vector<2x128xf32> -> vector<2x128xf32>
    %c0_215 = arith.constant 0 : index
    %c0_216 = arith.constant 0 : index
    %603 = vector.load %arg12[%c0_215, %c0_216] : memref<1x128xf32, #tpu.memory_space<vmem>>, vector<1x128xf32>
    %604 = vector.broadcast %603 : vector<1x128xf32> to vector<2x128xf32>
    %605 = arith.addf %602, %604 : vector<2x128xf32>
    %606 = arith.mulf %605, %31 : vector<2x128xf32>
    %607 = math.tanh %606 : vector<2x128xf32>
    %608 = arith.mulf %31, %607 : vector<2x128xf32>
    %609 = arith.addf %608, %34 : vector<2x128xf32>
    %610 = vector.extract_strided_slice %609 {offsets = [0, 0], sizes = [2, 32], strides = [1, 1]} : vector<2x128xf32> to vector<2x32xf32>
    %611 = vector.extract_strided_slice %609 {offsets = [0, 32], sizes = [2, 32], strides = [1, 1]} : vector<2x128xf32> to vector<2x32xf32>
    %612 = vector.extract_strided_slice %609 {offsets = [0, 64], sizes = [2, 32], strides = [1, 1]} : vector<2x128xf32> to vector<2x32xf32>
    %613 = vector.extract_strided_slice %609 {offsets = [0, 96], sizes = [2, 32], strides = [1, 1]} : vector<2x128xf32> to vector<2x32xf32>
    %614 = arith.mulf %611, %544 : vector<2x32xf32>
    %615 = arith.mulf %610, %612 : vector<2x32xf32>
    %616 = arith.addf %614, %615 : vector<2x32xf32>
    %617 = math.tanh %616 : vector<2x32xf32>
    %618 = arith.mulf %613, %617 : vector<2x32xf32>
    %c14 = arith.constant 14 : index
    %c0_217 = arith.constant 0 : index
    %619 = vector.load %arg22[%c14, %c0_217] : memref<16x32xf32, #tpu.memory_space<vmem>>, vector<2x32xf32>
    tpu.vector_store %arg22[%c14, %c0_217], %618 {strides = array<i32>} : memref<16x32xf32, #tpu.memory_space<vmem>>, vector<2x32xf32>,
    %c0_218 = arith.constant 0 : index
    %c0_219 = arith.constant 0 : index
    %620 = vector.load %arg13[%c0_218, %c0_219] : memref<32x32xf32, #tpu.memory_space<vmem>>, vector<32x32xf32>
    %cst_220 = arith.constant dense<0.000000e+00> : vector<2x32xf32>
    %621 = tpu.matmul %618, %620, %cst_220 {dimension_numbers = #tpu.dot_dimension_numbers<[1], [0], [0], [1], [0, 0, 1, 1], [], []>} : vector<2x32xf32>, vector<32x32xf32>, vector<2x32xf32> -> vector<2x32xf32>
    %622 = vector.extract_strided_slice %621 {offsets = [0, 0], sizes = [1, 32], strides = [1, 1]} : vector<2x32xf32> to vector<1x32xf32>
    %623 = vector.shape_cast %622 : vector<1x32xf32> to vector<1x32xf32>
    %624 = vector.broadcast %623 : vector<1x32xf32> to vector<16x32xf32>
    %625 = vector.extract_strided_slice %621 {offsets = [1, 0], sizes = [1, 32], strides = [1, 1]} : vector<2x32xf32> to vector<1x32xf32>
    %626 = vector.shape_cast %625 : vector<1x32xf32> to vector<1x32xf32>
    %627 = vector.broadcast %626 : vector<1x32xf32> to vector<16x32xf32>
    %628 = arith.select %74, %627, %624 : vector<16x32xi1>, vector<16x32xf32>
    %629 = arith.addf %21, %628 : vector<16x32xf32>
    %cst_221 = arith.constant 0.000000e+00 : f32
    %630 = vector.broadcast %cst_221 : f32 to vector<16x32xf32>
    %631 = arith.maximumf %629, %630 : vector<16x32xf32>
    %632 = vector.broadcast %22 : vector<1x32xf32> to vector<16x32xf32>
    %633 = arith.mulf %631, %632 : vector<16x32xf32>
    %cst_222 = arith.constant dense<0.000000e+00> : vector<16xf32>
    %634 = vector.multi_reduction <add>, %633, %cst_222 [1] : vector<16x32xf32> to vector<16xf32>
    %635 = vector.shape_cast %634 : vector<16xf32> to vector<16x1xf32>
    %cst_223 = arith.constant dense<0xFF800000> : vector<1xf32>
    %636 = vector.multi_reduction <maximumf>, %635, %cst_223 [0] : vector<16x1xf32> to vector<1xf32>
    %637 = vector.shape_cast %636 : vector<1xf32> to vector<1x1xf32>
    %638 = vector.broadcast %637 : vector<1x1xf32> to vector<16x1xf32>
    %639 = arith.subf %635, %638 : vector<16x1xf32>
    %640 = math.exp %639 : vector<16x1xf32>
    %641 = vector.broadcast %640 : vector<16x1xf32> to vector<16x32xf32>
    %642 = arith.mulf %641, %14 : vector<16x32xf32>
    %cst_224 = arith.constant dense<0.000000e+00> : vector<2x32xf32>
    %643 = tpu.matmul %55, %642, %cst_224 {dimension_numbers = #tpu.dot_dimension_numbers<[1], [0], [0], [1], [0, 0, 1, 1], [], []>} : vector<2x16xf32>, vector<16x32xf32>, vector<2x32xf32> -> vector<2x32xf32>
    %cst_225 = arith.constant dense<0.000000e+00> : vector<2x1xf32>
    %644 = tpu.matmul %55, %640, %cst_225 {dimension_numbers = #tpu.dot_dimension_numbers<[1], [0], [0], [1], [0, 0, 1, 1], [], []>} : vector<2x16xf32>, vector<16x1xf32>, vector<2x1xf32> -> vector<2x1xf32>
    %645 = tpu.reciprocal %644 {approx = true} : vector<2x1xf32> -> vector<2x1xf32>
    %646 = vector.broadcast %645 : vector<2x1xf32> to vector<2x32xf32>
    %647 = arith.mulf %643, %646 : vector<2x32xf32>
    %c14_226 = arith.constant 14 : index
    %c0_227 = arith.constant 0 : index
    %648 = vector.load %arg21[%c14_226, %c0_227] : memref<16x32xf32, #tpu.memory_space<vmem>>, vector<2x32xf32>
    tpu.vector_store %arg21[%c14_226, %c0_227], %647 {strides = array<i32>} : memref<16x32xf32, #tpu.memory_space<vmem>>, vector<2x32xf32>,
    %c0_228 = arith.constant 0 : index
    %c0_229 = arith.constant 0 : index
    %649 = vector.load %arg21[%c0_228, %c0_229] : memref<16x32xf32, #tpu.memory_space<vmem>>, vector<16x32xf32>
    %c0_230 = arith.constant 0 : index
    %c0_231 = arith.constant 0 : index
    %650 = vector.load %arg17[%c0_230, %c0_231] : memref<32x40xf32, #tpu.memory_space<vmem>>, vector<32x40xf32>
    %cst_232 = arith.constant dense<0.000000e+00> : vector<16x40xf32>
    %651 = tpu.matmul %649, %650, %cst_232 {dimension_numbers = #tpu.dot_dimension_numbers<[1], [0], [0], [1], [0, 0, 1, 1], [], []>} : vector<16x32xf32>, vector<32x40xf32>, vector<16x40xf32> -> vector<16x40xf32>
    %c0_233 = arith.constant 0 : index
    %c0_234 = arith.constant 0 : index
    %652 = vector.load %arg22[%c0_233, %c0_234] : memref<16x32xf32, #tpu.memory_space<vmem>>, vector<16x32xf32>
    %c0_235 = arith.constant 0 : index
    %c0_236 = arith.constant 0 : index
    %653 = vector.load %arg18[%c0_235, %c0_236] : memref<32x40xf32, #tpu.memory_space<vmem>>, vector<32x40xf32>
    %cst_237 = arith.constant dense<0.000000e+00> : vector<16x40xf32>
    %654 = tpu.matmul %652, %653, %cst_237 {dimension_numbers = #tpu.dot_dimension_numbers<[1], [0], [0], [1], [0, 0, 1, 1], [], []>} : vector<16x32xf32>, vector<32x40xf32>, vector<16x40xf32> -> vector<16x40xf32>
    %655 = arith.addf %651, %654 : vector<16x40xf32>
    %c0_238 = arith.constant 0 : index
    %c0_239 = arith.constant 0 : index
    %656 = vector.load %arg19[%c0_238, %c0_239] : memref<1x40xf32, #tpu.memory_space<vmem>>, vector<1x40xf32>
    %657 = vector.broadcast %656 : vector<1x40xf32> to vector<16x40xf32>
    %658 = arith.addf %655, %657 : vector<16x40xf32>
    %cst_240 = arith.constant dense<0xFF800000> : vector<16xf32>
    %659 = vector.multi_reduction <maximumf>, %658, %cst_240 [1] : vector<16x40xf32> to vector<16xf32>
    %660 = vector.shape_cast %659 : vector<16xf32> to vector<16x1xf32>
    %661 = vector.broadcast %660 : vector<16x1xf32> to vector<16x40xf32>
    %662 = arith.subf %658, %661 : vector<16x40xf32>
    %663 = math.exp %662 : vector<16x40xf32>
    %cst_241 = arith.constant dense<0.000000e+00> : vector<16xf32>
    %664 = vector.multi_reduction <add>, %663, %cst_241 [1] : vector<16x40xf32> to vector<16xf32>
    %665 = vector.shape_cast %664 : vector<16xf32> to vector<16x1xf32>
    %666 = math.log %665 : vector<16x1xf32>
    %667 = vector.broadcast %666 : vector<16x1xf32> to vector<16x40xf32>
    %668 = arith.subf %662, %667 : vector<16x40xf32>
    %c0_242 = arith.constant 0 : index
    %c0_243 = arith.constant 0 : index
    %669 = vector.load %arg20[%c0_242, %c0_243] : memref<16x40xf32, #tpu.memory_space<vmem>>, vector<16x40xf32>
    tpu.vector_store %arg20[%c0_242, %c0_243], %668 {strides = array<i32>} : memref<16x40xf32, #tpu.memory_space<vmem>>, vector<16x40xf32>,
    return
  }
  func.func @transform_0(%arg0: i32) -> (i32, i32) {
    %c0_i32 = arith.constant 0 : i32
    %c0_i32_0 = arith.constant 0 : i32
    %c0_i32_1 = arith.constant 0 : i32
    return %c0_i32, %c0_i32_0 : i32, i32
  }
  func.func @transform_1(%arg0: i32) -> (i32, i32) {
    %c0_i32 = arith.constant 0 : i32
    %c0_i32_0 = arith.constant 0 : i32
    %c0_i32_1 = arith.constant 0 : i32
    return %c0_i32, %c0_i32_0 : i32, i32
  }
  func.func @transform_2(%arg0: i32) -> (i32, i32) {
    %c0_i32 = arith.constant 0 : i32
    %c0_i32_0 = arith.constant 0 : i32
    %c0_i32_1 = arith.constant 0 : i32
    return %c0_i32, %c0_i32_0 : i32, i32
  }
  func.func @transform_3(%arg0: i32) -> (i32, i32) {
    %c0_i32 = arith.constant 0 : i32
    %c0_i32_0 = arith.constant 0 : i32
    %c0_i32_1 = arith.constant 0 : i32
    return %c0_i32, %c0_i32_0 : i32, i32
  }
  func.func @transform_4(%arg0: i32) -> (i32, i32) {
    %c0_i32 = arith.constant 0 : i32
    %c0_i32_0 = arith.constant 0 : i32
    %c0_i32_1 = arith.constant 0 : i32
    return %c0_i32, %c0_i32_0 : i32, i32
  }
  func.func @transform_5(%arg0: i32) -> (i32, i32) {
    %c0_i32 = arith.constant 0 : i32
    %c0_i32_0 = arith.constant 0 : i32
    %c0_i32_1 = arith.constant 0 : i32
    return %c0_i32, %c0_i32_0 : i32, i32
  }
  func.func @transform_6(%arg0: i32) -> (i32, i32) {
    %c0_i32 = arith.constant 0 : i32
    %c0_i32_0 = arith.constant 0 : i32
    %c0_i32_1 = arith.constant 0 : i32
    return %c0_i32, %c0_i32_0 : i32, i32
  }
  func.func @transform_7(%arg0: i32) -> (i32, i32) {
    %c0_i32 = arith.constant 0 : i32
    %c0_i32_0 = arith.constant 0 : i32
    %c0_i32_1 = arith.constant 0 : i32
    return %c0_i32, %c0_i32_0 : i32, i32
  }
  func.func @transform_8(%arg0: i32) -> (i32, i32) {
    %c0_i32 = arith.constant 0 : i32
    %c0_i32_0 = arith.constant 0 : i32
    %c0_i32_1 = arith.constant 0 : i32
    return %c0_i32, %c0_i32_0 : i32, i32
  }
  func.func @transform_9(%arg0: i32) -> (i32, i32) {
    %c0_i32 = arith.constant 0 : i32
    %c0_i32_0 = arith.constant 0 : i32
    %c0_i32_1 = arith.constant 0 : i32
    return %c0_i32, %c0_i32_0 : i32, i32
  }
  func.func @transform_10(%arg0: i32) -> (i32, i32) {
    %c0_i32 = arith.constant 0 : i32
    %c0_i32_0 = arith.constant 0 : i32
    %c0_i32_1 = arith.constant 0 : i32
    return %c0_i32, %c0_i32_0 : i32, i32
  }
  func.func @transform_11(%arg0: i32) -> (i32, i32) {
    %c0_i32 = arith.constant 0 : i32
    %c0_i32_0 = arith.constant 0 : i32
    %c0_i32_1 = arith.constant 0 : i32
    return %c0_i32, %c0_i32_0 : i32, i32
  }
  func.func @transform_12(%arg0: i32) -> (i32, i32) {
    %c0_i32 = arith.constant 0 : i32
    %c0_i32_0 = arith.constant 0 : i32
    %c0_i32_1 = arith.constant 0 : i32
    return %c0_i32, %c0_i32_0 : i32, i32
  }
  func.func @transform_13(%arg0: i32) -> (i32, i32) {
    %c0_i32 = arith.constant 0 : i32
    %c0_i32_0 = arith.constant 0 : i32
    %c0_i32_1 = arith.constant 0 : i32
    return %c0_i32, %c0_i32_0 : i32, i32
  }
  func.func @transform_14(%arg0: i32) -> (i32, i32) {
    %c0_i32 = arith.constant 0 : i32
    %c0_i32_0 = arith.constant 0 : i32
    %c0_i32_1 = arith.constant 0 : i32
    return %c0_i32, %c0_i32_0 : i32, i32
  }
  func.func @transform_15(%arg0: i32) -> (i32, i32) {
    %c0_i32 = arith.constant 0 : i32
    %c0_i32_0 = arith.constant 0 : i32
    %c0_i32_1 = arith.constant 0 : i32
    return %c0_i32, %c0_i32_0 : i32, i32
  }
  func.func @transform_16(%arg0: i32) -> (i32, i32) {
    %c0_i32 = arith.constant 0 : i32
    %c0_i32_0 = arith.constant 0 : i32
    %c0_i32_1 = arith.constant 0 : i32
    return %c0_i32, %c0_i32_0 : i32, i32
  }
  func.func @transform_17(%arg0: i32) -> (i32, i32) {
    %c0_i32 = arith.constant 0 : i32
    %c0_i32_0 = arith.constant 0 : i32
    %c0_i32_1 = arith.constant 0 : i32
    return %c0_i32, %c0_i32_0 : i32, i32
  }
  func.func @transform_18(%arg0: i32) -> (i32, i32) {
    %c0_i32 = arith.constant 0 : i32
    %c0_i32_0 = arith.constant 0 : i32
    %c0_i32_1 = arith.constant 0 : i32
    return %c0_i32, %c0_i32_0 : i32, i32
  }
  func.func @transform_19(%arg0: i32) -> (i32, i32) {
    %c0_i32 = arith.constant 0 : i32
    %c0_i32_0 = arith.constant 0 : i32
    %c0_i32_1 = arith.constant 0 : i32
    return %c0_i32, %c0_i32_0 : i32, i32
  }
}

</mosaic_0001>

<llo_original>
// kernel: tpu_custom_call.1
$region0: #{tpu_custom_call.1}
  #allocation0 [shape = 'u32[]', space=smem, size = 0x4, offset = 0x4, fixed_abs, tag = 'smem constant byte address 0x4 - core index']
  #allocation1 [shape = 'u32[144,128]{1,0:T(1,128)}', space=vmem, size = 0x12000, scoped, tag = 'internal scratch']
  #allocation2 [shape = 'f32[16,32]{1,0:T(8,128)}', space=vmem, size = 0x2000, scoped, tag = 'scratch operand']
  #allocation3 [shape = 'f32[16,32]{1,0:T(8,128)}', space=vmem, size = 0x2000, scoped, tag = 'scratch operand']
  %s0 = inlined_call_operand.vmem [shape: f32[16,1284], index: 0, kind: input, shape index: {}]
  %s1 = inlined_call_operand.vmem [shape: f32[1284,32], index: 1, kind: input, shape index: {}]
  %s2 = inlined_call_operand.vmem [shape: f32[1,32], index: 2, kind: input, shape index: {}]
  %s3 = inlined_call_operand.vmem [shape: f32[16,32], index: 3, kind: input, shape index: {}]
  %s4 = inlined_call_operand.vmem [shape: f32[32,32], index: 4, kind: input, shape index: {}]
  %s5 = inlined_call_operand.vmem [shape: f32[32,32], index: 5, kind: input, shape index: {}]
  %s6 = inlined_call_operand.vmem [shape: f32[1,32], index: 6, kind: input, shape index: {}]
  %s7 = inlined_call_operand.vmem [shape: f32[32,160], index: 7, kind: input, shape index: {}]
  %s8 = inlined_call_operand.vmem [shape: f32[1,160], index: 8, kind: input, shape index: {}]
  %s9 = inlined_call_operand.vmem [shape: f32[32,128], index: 9, kind: input, shape index: {}]
  %s10 = inlined_call_operand.vmem [shape: f32[64,128], index: 10, kind: input, shape index: {}]
  %s11 = inlined_call_operand.vmem [shape: f32[1,128], index: 11, kind: input, shape index: {}]
  %s12 = inlined_call_operand.vmem [shape: f32[32,32], index: 12, kind: input, shape index: {}]
  %s13 = inlined_call_operand.vmem [shape: f32[1,32], index: 13, kind: input, shape index: {}]
  %s14 = inlined_call_operand.vmem [shape: f32[64,32], index: 14, kind: input, shape index: {}]
  %s15 = inlined_call_operand.vmem [shape: f32[1,32], index: 15, kind: input, shape index: {}]
  %s16 = inlined_call_operand.vmem [shape: f32[32,40], index: 16, kind: input, shape index: {}]
  %s17 = inlined_call_operand.vmem [shape: f32[32,40], index: 17, kind: input, shape index: {}]
  %s18 = inlined_call_operand.vmem [shape: f32[1,40], index: 18, kind: input, shape index: {}]
  %s19 = inlined_call_operand.hbm [shape: f32[16,40], index: 19, kind: output, shape index: {}]
  %s20 = sld [smem:[#allocation0]]
  $region86: #{tpu_custom_call.1} parent=0
    _
  %s22 = ssub.s32 1, %s20
  %s23 = scalar_select 0, %s22, %s20
  $region1: #{tpu_custom_call.1} parent=0
    #allocation4 [shape = 'u8[8192]{0}', space=vmem, size = 0x2000, scoped, tag = 'output window, operand 0, single buffered']
    #allocation5 [shape = 's32[1]{0}', space=sflag, size = 0x4, scoped, tag = 'scoped memory for tpu_custom_call.1']
    %24 = vsyncpa [#allocation5], 0
    // Predicated region
    $region2: #{tpu_custom_call.1} parent=1 // pred_check
      _
    $region3: #{tpu_custom_call.1} parent=1 // pred_check_branch
      %26 = sbr.rel (0) target = $region5
    $region4: #{tpu_custom_call.1} parent=1 // pred_region
      _
    $region5: #{tpu_custom_call.1} parent=1 // pred_fallthru
      _
    // Predicated region
    $region6: #{tpu_custom_call.1} parent=1 // pred_check
      _
    $region7: #{tpu_custom_call.1} parent=1 // pred_check_branch
      %28 = sbr.rel (0) target = $region9
    $region8: #{tpu_custom_call.1} parent=1 // pred_region
      _
    $region9: #{tpu_custom_call.1} parent=1 // pred_fallthru
      _
    // Predicated region
    $region10: #{tpu_custom_call.1} parent=1 // pred_check
      _
    $region11: #{tpu_custom_call.1} parent=1 // pred_check_branch
      %30 = sbr.rel (0) target = $region13
    $region12: #{tpu_custom_call.1} parent=1 // pred_region
      _
    $region13: #{tpu_custom_call.1} parent=1 // pred_fallthru
      _
    // Predicated region
    $region14: #{tpu_custom_call.1} parent=1 // pred_check
      _
    $region15: #{tpu_custom_call.1} parent=1 // pred_check_branch
      %32 = sbr.rel (0) target = $region17
    $region16: #{tpu_custom_call.1} parent=1 // pred_region
      _
    $region17: #{tpu_custom_call.1} parent=1 // pred_fallthru
      _
    // Predicated region
    $region18: #{tpu_custom_call.1} parent=1 // pred_check
      _
    $region19: #{tpu_custom_call.1} parent=1 // pred_check_branch
      %34 = sbr.rel (0) target = $region21
    $region20: #{tpu_custom_call.1} parent=1 // pred_region
      _
    $region21: #{tpu_custom_call.1} parent=1 // pred_fallthru
      _
    // Predicated region
    $region22: #{tpu_custom_call.1} parent=1 // pred_check
      _
    $region23: #{tpu_custom_call.1} parent=1 // pred_check_branch
      %36 = sbr.rel (0) target = $region25
    $region24: #{tpu_custom_call.1} parent=1 // pred_region
      _
    $region25: #{tpu_custom_call.1} parent=1 // pred_fallthru
      _
    // Predicated region
    $region26: #{tpu_custom_call.1} parent=1 // pred_check
      _
    $region27: #{tpu_custom_call.1} parent=1 // pred_check_branch
      %38 = sbr.rel (0) target = $region29
    $region28: #{tpu_custom_call.1} parent=1 // pred_region
      _
    $region29: #{tpu_custom_call.1} parent=1 // pred_fallthru
      _
    // Predicated region
    $region30: #{tpu_custom_call.1} parent=1 // pred_check
      _
    $region31: #{tpu_custom_call.1} parent=1 // pred_check_branch
      %40 = sbr.rel (0) target = $region33
    $region32: #{tpu_custom_call.1} parent=1 // pred_region
      _
    $region33: #{tpu_custom_call.1} parent=1 // pred_fallthru
      _
    // Predicated region
    $region34: #{tpu_custom_call.1} parent=1 // pred_check
      _
    $region35: #{tpu_custom_call.1} parent=1 // pred_check_branch
      %42 = sbr.rel (0) target = $region37
    $region36: #{tpu_custom_call.1} parent=1 // pred_region
      _
    $region37: #{tpu_custom_call.1} parent=1 // pred_fallthru
      _
    // Predicated region
    $region38: #{tpu_custom_call.1} parent=1 // pred_check
      _
    $region39: #{tpu_custom_call.1} parent=1 // pred_check_branch
      %44 = sbr.rel (0) target = $region41
    $region40: #{tpu_custom_call.1} parent=1 // pred_region
      _
    $region41: #{tpu_custom_call.1} parent=1 // pred_fallthru
      _
    // Predicated region
    $region42: #{tpu_custom_call.1} parent=1 // pred_check
      _
    $region43: #{tpu_custom_call.1} parent=1 // pred_check_branch
      %46 = sbr.rel (0) target = $region45
    $region44: #{tpu_custom_call.1} parent=1 // pred_region
      _
    $region45: #{tpu_custom_call.1} parent=1 // pred_fallthru
      _
    // Predicated region
    $region46: #{tpu_custom_call.1} parent=1 // pred_check
      _
    $region47: #{tpu_custom_call.1} parent=1 // pred_check_branch
      %48 = sbr.rel (0) target = $region49
    $region48: #{tpu_custom_call.1} parent=1 // pred_region
      _
    $region49: #{tpu_custom_call.1} parent=1 // pred_fallthru
      _
    // Predicated region
    $region50: #{tpu_custom_call.1} parent=1 // pred_check
      _
    $region51: #{tpu_custom_call.1} parent=1 // pred_check_branch
      %50 = sbr.rel (0) target = $region53
    $region52: #{tpu_custom_call.1} parent=1 // pred_region
      _
    $region53: #{tpu_custom_call.1} parent=1 // pred_fallthru
      _
    // Predicated region
    $region54: #{tpu_custom_call.1} parent=1 // pred_check
      _
    $region55: #{tpu_custom_call.1} parent=1 // pred_check_branch
      %52 = sbr.rel (0) target = $region57
    $region56: #{tpu_custom_call.1} parent=1 // pred_region
      _
    $region57: #{tpu_custom_call.1} parent=1 // pred_fallthru
      _
    // Predicated region
    $region58: #{tpu_custom_call.1} parent=1 // pred_check
      _
    $region59: #{tpu_custom_call.1} parent=1 // pred_check_branch
      %54 = sbr.rel (0) target = $region61
    $region60: #{tpu_custom_call.1} parent=1 // pred_region
      _
    $region61: #{tpu_custom_call.1} parent=1 // pred_fallthru
      _
    // Predicated region
    $region62: #{tpu_custom_call.1} parent=1 // pred_check
      _
    $region63: #{tpu_custom_call.1} parent=1 // pred_check_branch
      %56 = sbr.rel (0) target = $region65
    $region64: #{tpu_custom_call.1} parent=1 // pred_region
      _
    $region65: #{tpu_custom_call.1} parent=1 // pred_fallthru
      _
    // Predicated region
    $region66: #{tpu_custom_call.1} parent=1 // pred_check
      _
    $region67: #{tpu_custom_call.1} parent=1 // pred_check_branch
      %58 = sbr.rel (0) target = $region69
    $region68: #{tpu_custom_call.1} parent=1 // pred_region
      _
    $region69: #{tpu_custom_call.1} parent=1 // pred_fallthru
      _
    // Predicated region
    $region70: #{tpu_custom_call.1} parent=1 // pred_check
      _
    $region71: #{tpu_custom_call.1} parent=1 // pred_check_branch
      %60 = sbr.rel (0) target = $region73
    $region72: #{tpu_custom_call.1} parent=1 // pred_region
      _
    $region73: #{tpu_custom_call.1} parent=1 // pred_fallthru
      _
    // Predicated region
    $region74: #{tpu_custom_call.1} parent=1 // pred_check
      _
    $region75: #{tpu_custom_call.1} parent=1 // pred_check_branch
      %62 = sbr.rel (0) target = $region77
    $region76: #{tpu_custom_call.1} parent=1 // pred_region
      _
    $region77: #{tpu_custom_call.1} parent=1 // pred_fallthru
      _
    %v63 = vld [vmem:[%s0] sm:$0xff]
    %v64 = vld [vmem:[%s0 + $0x8] sm:$0xff]
    %v65 = vld [vmem:[%s0 + $0x10] sm:$0xff]
    %v66 = vld [vmem:[%s0 + $0x18] sm:$0xff]
    %v67 = vld [vmem:[%s0 + $0x20] sm:$0xff]
    %v68 = vld [vmem:[%s0 + $0x28] sm:$0xff]
    %v69 = vld [vmem:[%s0 + $0x30] sm:$0xff]
    %v70 = vld [vmem:[%s0 + $0x38] sm:$0xff]
    %v71 = vld [vmem:[%s0 + $0x40] sm:$0xff]
    %v72 = vld [vmem:[%s0 + $0x48] sm:$0xff]
    %v73 = vld [vmem:[%s0 + $0x50] sm:$0xff]
    %v74 = vld [vmem:[%s0 + $0x58] sm:$0xff]
    %v75 = vld [vmem:[%s0 + $0x60] sm:$0xff]
    %v76 = vld [vmem:[%s0 + $0x68] sm:$0xff]
    %v77 = vld [vmem:[%s0 + $0x70] sm:$0xff]
    %v78 = vld [vmem:[%s0 + $0x78] sm:$0xff]
    %v79 = vld [vmem:[%s0 + $0x80] sm:$0xff]
    %v80 = vld [vmem:[%s0 + $0x88] sm:$0xff]
    %v81 = vld [vmem:[%s0 + $0x90] sm:$0xff]
    %v82 = vld [vmem:[%s0 + $0x98] sm:$0xff]
    %v83 = vld [vmem:[%s0 + $0xa0] sm:$0xff]
    %v84 = vld [vmem:[%s0 + $0xa8] sm:$0xff]
    %v85 = vld [vmem:[%s1] sm:$0xff]
    %v86 = vld [vmem:[%s1 + $0x8] sm:$0xff]
    %v87 = vld [vmem:[%s1 + $0x10] sm:$0xff]
    %v88 = vld [vmem:[%s1 + $0x18] sm:$0xff]
    %v89 = vld [vmem:[%s1 + $0x20] sm:$0xff]
    %v90 = vld [vmem:[%s1 + $0x28] sm:$0xff]
    %v91 = vld [vmem:[%s1 + $0x30] sm:$0xff]
    %v92 = vld [vmem:[%s1 + $0x38] sm:$0xff]
    %v93 = vld [vmem:[%s1 + $0x40] sm:$0xff]
    %v94 = vld [vmem:[%s1 + $0x48] sm:$0xff]
    %v95 = vld [vmem:[%s1 + $0x50] sm:$0xff]
    %v96 = vld [vmem:[%s1 + $0x58] sm:$0xff]
    %v97 = vld [vmem:[%s1 + $0x60] sm:$0xff]
    %v98 = vld [vmem:[%s1 + $0x68] sm:$0xff]
    %v99 = vld [vmem:[%s1 + $0x70] sm:$0xff]
    %v100 = vld [vmem:[%s1 + $0x78] sm:$0xff]
    %v101 = vld [vmem:[%s1 + $0x80] sm:$0xff]
    %v102 = vld [vmem:[%s1 + $0x88] sm:$0xff]
    %v103 = vld [vmem:[%s1 + $0x90] sm:$0xff]
    %v104 = vld [vmem:[%s1 + $0x98] sm:$0xff]
    %v105 = vld [vmem:[%s1 + $0xa0] sm:$0xff]
    %v106 = vld [vmem:[%s1 + $0xa8] sm:$0xff]
    %v107 = vld [vmem:[%s1 + $0xb0] sm:$0xff]
    %v108 = vld [vmem:[%s1 + $0xb8] sm:$0xff]
    %v109 = vld [vmem:[%s1 + $0xc0] sm:$0xff]
    %v110 = vld [vmem:[%s1 + $0xc8] sm:$0xff]
    %v111 = vld [vmem:[%s1 + $0xd0] sm:$0xff]
    %v112 = vld [vmem:[%s1 + $0xd8] sm:$0xff]
    %v113 = vld [vmem:[%s1 + $0xe0] sm:$0xff]
    %v114 = vld [vmem:[%s1 + $0xe8] sm:$0xff]
    %v115 = vld [vmem:[%s1 + $0xf0] sm:$0xff]
    %v116 = vld [vmem:[%s1 + $0xf8] sm:$0xff]
    %v117 = vld [vmem:[%s1 + $0x100] sm:$0xff]
    %v118 = vld [vmem:[%s1 + $0x108] sm:$0xff]
    %v119 = vld [vmem:[%s1 + $0x110] sm:$0xff]
    %v120 = vld [vmem:[%s1 + $0x118] sm:$0xff]
    %v121 = vld [vmem:[%s1 + $0x120] sm:$0xff]
    %v122 = vld [vmem:[%s1 + $0x128] sm:$0xff]
    %v123 = vld [vmem:[%s1 + $0x130] sm:$0xff]
    %v124 = vld [vmem:[%s1 + $0x138] sm:$0xff]
    %v125 = vld [vmem:[%s1 + $0x140] sm:$0xff]
    %v126 = vld [vmem:[%s1 + $0x148] sm:$0xff]
    %v127 = vld [vmem:[%s1 + $0x150] sm:$0xff]
    %v128 = vld [vmem:[%s1 + $0x158] sm:$0xff]
    %v129 = vld [vmem:[%s1 + $0x160] sm:$0xff]
    %v130 = vld [vmem:[%s1 + $0x168] sm:$0xff]
    %v131 = vld [vmem:[%s1 + $0x170] sm:$0xff]
    %v132 = vld [vmem:[%s1 + $0x178] sm:$0xff]
    %v133 = vld [vmem:[%s1 + $0x180] sm:$0xff]
    %v134 = vld [vmem:[%s1 + $0x188] sm:$0xff]
    %v135 = vld [vmem:[%s1 + $0x190] sm:$0xff]
    %v136 = vld [vmem:[%s1 + $0x198] sm:$0xff]
    %v137 = vld [vmem:[%s1 + $0x1a0] sm:$0xff]
    %v138 = vld [vmem:[%s1 + $0x1a8] sm:$0xff]
    %v139 = vld [vmem:[%s1 + $0x1b0] sm:$0xff]
    %v140 = vld [vmem:[%s1 + $0x1b8] sm:$0xff]
    %v141 = vld [vmem:[%s1 + $0x1c0] sm:$0xff]
    %v142 = vld [vmem:[%s1 + $0x1c8] sm:$0xff]
    %v143 = vld [vmem:[%s1 + $0x1d0] sm:$0xff]
    %v144 = vld [vmem:[%s1 + $0x1d8] sm:$0xff]
    %v145 = vld [vmem:[%s1 + $0x1e0] sm:$0xff]
    %v146 = vld [vmem:[%s1 + $0x1e8] sm:$0xff]
    %v147 = vld [vmem:[%s1 + $0x1f0] sm:$0xff]
    %v148 = vld [vmem:[%s1 + $0x1f8] sm:$0xff]
    %v149 = vld [vmem:[%s1 + $0x200] sm:$0xff]
    %v150 = vld [vmem:[%s1 + $0x208] sm:$0xff]
    %v151 = vld [vmem:[%s1 + $0x210] sm:$0xff]
    %v152 = vld [vmem:[%s1 + $0x218] sm:$0xff]
    %v153 = vld [vmem:[%s1 + $0x220] sm:$0xff]
    %v154 = vld [vmem:[%s1 + $0x228] sm:$0xff]
    %v155 = vld [vmem:[%s1 + $0x230] sm:$0xff]
    %v156 = vld [vmem:[%s1 + $0x238] sm:$0xff]
    %v157 = vld [vmem:[%s1 + $0x240] sm:$0xff]
    %v158 = vld [vmem:[%s1 + $0x248] sm:$0xff]
    %v159 = vld [vmem:[%s1 + $0x250] sm:$0xff]
    %v160 = vld [vmem:[%s1 + $0x258] sm:$0xff]
    %v161 = vld [vmem:[%s1 + $0x260] sm:$0xff]
    %v162 = vld [vmem:[%s1 + $0x268] sm:$0xff]
    %v163 = vld [vmem:[%s1 + $0x270] sm:$0xff]
    %v164 = vld [vmem:[%s1 + $0x278] sm:$0xff]
    %v165 = vld [vmem:[%s1 + $0x280] sm:$0xff]
    %v166 = vld [vmem:[%s1 + $0x288] sm:$0xff]
    %v167 = vld [vmem:[%s1 + $0x290] sm:$0xff]
    %v168 = vld [vmem:[%s1 + $0x298] sm:$0xff]
    %v169 = vld [vmem:[%s1 + $0x2a0] sm:$0xff]
    %v170 = vld [vmem:[%s1 + $0x2a8] sm:$0xff]
    %v171 = vld [vmem:[%s1 + $0x2b0] sm:$0xff]
    %v172 = vld [vmem:[%s1 + $0x2b8] sm:$0xff]
    %v173 = vld [vmem:[%s1 + $0x2c0] sm:$0xff]
    %v174 = vld [vmem:[%s1 + $0x2c8] sm:$0xff]
    %v175 = vld [vmem:[%s1 + $0x2d0] sm:$0xff]
    %v176 = vld [vmem:[%s1 + $0x2d8] sm:$0xff]
    %v177 = vld [vmem:[%s1 + $0x2e0] sm:$0xff]
    %v178 = vld [vmem:[%s1 + $0x2e8] sm:$0xff]
    %v179 = vld [vmem:[%s1 + $0x2f0] sm:$0xff]
    %v180 = vld [vmem:[%s1 + $0x2f8] sm:$0xff]
    %v181 = vld [vmem:[%s1 + $0x300] sm:$0xff]
    %v182 = vld [vmem:[%s1 + $0x308] sm:$0xff]
    %v183 = vld [vmem:[%s1 + $0x310] sm:$0xff]
    %v184 = vld [vmem:[%s1 + $0x318] sm:$0xff]
    %v185 = vld [vmem:[%s1 + $0x320] sm:$0xff]
    %v186 = vld [vmem:[%s1 + $0x328] sm:$0xff]
    %v187 = vld [vmem:[%s1 + $0x330] sm:$0xff]
    %v188 = vld [vmem:[%s1 + $0x338] sm:$0xff]
    %v189 = vld [vmem:[%s1 + $0x340] sm:$0xff]
    %v190 = vld [vmem:[%s1 + $0x348] sm:$0xff]
    %v191 = vld [vmem:[%s1 + $0x350] sm:$0xff]
    %v192 = vld [vmem:[%s1 + $0x358] sm:$0xff]
    %v193 = vld [vmem:[%s1 + $0x360] sm:$0xff]
    %v194 = vld [vmem:[%s1 + $0x368] sm:$0xff]
    %v195 = vld [vmem:[%s1 + $0x370] sm:$0xff]
    %v196 = vld [vmem:[%s1 + $0x378] sm:$0xff]
    %v197 = vld [vmem:[%s1 + $0x380] sm:$0xff]
    %v198 = vld [vmem:[%s1 + $0x388] sm:$0xff]
    %v199 = vld [vmem:[%s1 + $0x390] sm:$0xff]
    %v200 = vld [vmem:[%s1 + $0x398] sm:$0xff]
    %v201 = vld [vmem:[%s1 + $0x3a0] sm:$0xff]
    %v202 = vld [vmem:[%s1 + $0x3a8] sm:$0xff]
    %v203 = vld [vmem:[%s1 + $0x3b0] sm:$0xff]
    %v204 = vld [vmem:[%s1 + $0x3b8] sm:$0xff]
    %v205 = vld [vmem:[%s1 + $0x3c0] sm:$0xff]
    %v206 = vld [vmem:[%s1 + $0x3c8] sm:$0xff]
    %v207 = vld [vmem:[%s1 + $0x3d0] sm:$0xff]
    %v208 = vld [vmem:[%s1 + $0x3d8] sm:$0xff]
    %v209 = vld [vmem:[%s1 + $0x3e0] sm:$0xff]
    %v210 = vld [vmem:[%s1 + $0x3e8] sm:$0xff]
    %v211 = vld [vmem:[%s1 + $0x3f0] sm:$0xff]
    %v212 = vld [vmem:[%s1 + $0x3f8] sm:$0xff]
    %v213 = vld [vmem:[%s1 + $0x400] sm:$0xff]
    %v214 = vld [vmem:[%s1 + $0x408] sm:$0xff]
    %v215 = vld [vmem:[%s1 + $0x410] sm:$0xff]
    %v216 = vld [vmem:[%s1 + $0x418] sm:$0xff]
    %v217 = vld [vmem:[%s1 + $0x420] sm:$0xff]
    %v218 = vld [vmem:[%s1 + $0x428] sm:$0xff]
    %v219 = vld [vmem:[%s1 + $0x430] sm:$0xff]
    %v220 = vld [vmem:[%s1 + $0x438] sm:$0xff]
    %v221 = vld [vmem:[%s1 + $0x440] sm:$0xff]
    %v222 = vld [vmem:[%s1 + $0x448] sm:$0xff]
    %v223 = vld [vmem:[%s1 + $0x450] sm:$0xff]
    %v224 = vld [vmem:[%s1 + $0x458] sm:$0xff]
    %v225 = vld [vmem:[%s1 + $0x460] sm:$0xff]
    %v226 = vld [vmem:[%s1 + $0x468] sm:$0xff]
    %v227 = vld [vmem:[%s1 + $0x470] sm:$0xff]
    %v228 = vld [vmem:[%s1 + $0x478] sm:$0xff]
    %v229 = vld [vmem:[%s1 + $0x480] sm:$0xff]
    %v230 = vld [vmem:[%s1 + $0x488] sm:$0xff]
    %v231 = vld [vmem:[%s1 + $0x490] sm:$0xff]
    %v232 = vld [vmem:[%s1 + $0x498] sm:$0xff]
    %v233 = vld [vmem:[%s1 + $0x4a0] sm:$0xff]
    %v234 = vld [vmem:[%s1 + $0x4a8] sm:$0xff]
    %v235 = vld [vmem:[%s1 + $0x4b0] sm:$0xff]
    %v236 = vld [vmem:[%s1 + $0x4b8] sm:$0xff]
    %v237 = vld [vmem:[%s1 + $0x4c0] sm:$0xff]
    %v238 = vld [vmem:[%s1 + $0x4c8] sm:$0xff]
    %v239 = vld [vmem:[%s1 + $0x4d0] sm:$0xff]
    %v240 = vld [vmem:[%s1 + $0x4d8] sm:$0xff]
    %v241 = vld [vmem:[%s1 + $0x4e0] sm:$0xff]
    %v242 = vld [vmem:[%s1 + $0x4e8] sm:$0xff]
    %v243 = vld [vmem:[%s1 + $0x4f0] sm:$0xff]
    %v244 = vld [vmem:[%s1 + $0x4f8] sm:$0xff]
    %v245 = vld [vmem:[%s1 + $0x500] sm:$0xf]
    %v246 = vld [vmem:[%s2] sm:$0x1]
    %v248 = vlaneseq
    %v249 = vshrl.u32 %v248, 7
    %v250 = vsub.s32 0, %v249
    %v251 = vrot.slane %v246, %v250
    %vm253 = vcmask 31744
    %v255 = vsel %vm253, %v73, 0
    %v258 = vsel %vm253, %v84, 0
    %vm260 = vcmask 1043456
    %v262 = vsel %vm260, %v245, 0
    %264 = vmatprep.subr.mxu0 0.0
    %265 = vmatpush1.msra.mxu0 %v100
    %266 = vmatprep.subr.mxu0 0.0
    %267 = vmatpush1.msra.mxu0 %v99
    %268 = vmatprep.subr.mxu0 0.0
    %269 = vmatpush1.msra.mxu0 %v98
    %270 = vmatprep.subr.mxu0 0.0
    %271 = vmatpush1.msra.mxu0 %v97
    %272 = vmatprep.subr.mxu0 0.0
    %273 = vmatpush1.msra.mxu0 %v96
    %274 = vmatprep.subr.mxu0 0.0
    %275 = vmatpush1.msra.mxu0 %v95
    %276 = vmatprep.subr.mxu0 0.0
    %277 = vmatpush1.msra.mxu0 %v94
    %278 = vmatprep.subr.mxu0 0.0
    %279 = vmatpush1.msra.mxu0 %v93
    %280 = vmatprep.subr.mxu0 0.0
    %281 = vmatpush1.msra.mxu0 %v92
    %282 = vmatprep.subr.mxu0 0.0
    %283 = vmatpush1.msra.mxu0 %v91
    %284 = vmatprep.subr.mxu0 0.0
    %285 = vmatpush1.msra.mxu0 %v90
    %286 = vmatprep.subr.mxu0 0.0
    %287 = vmatpush1.msra.mxu0 %v89
    %288 = vmatprep.subr.mxu0 0.0
    %289 = vmatpush1.msra.mxu0 %v88
    %290 = vmatprep.subr.mxu0 0.0
    %291 = vmatpush1.msra.mxu0 %v87
    %292 = vmatprep.subr.mxu0 0.0
    %293 = vmatpush1.msra.mxu0 %v86
    %294 = vmatprep.subr.mxu0 0.0
    %295 = vmatpush1.msra.mxu0 %v85
    %296 = vmatprep.subr.mxu0 0.0
    %297 = vmatpush2.msra.mxu0 %v116
    %298 = vmatprep.subr.mxu0 0.0
    %299 = vmatpush2.msra.mxu0 %v115
    %300 = vmatprep.subr.mxu0 0.0
    %301 = vmatpush2.msra.mxu0 %v114
    %302 = vmatprep.subr.mxu0 0.0
    %303 = vmatpush2.msra.mxu0 %v113
    %304 = vmatprep.subr.mxu0 0.0
    %305 = vmatpush2.msra.mxu0 %v112
    %306 = vmatprep.subr.mxu0 0.0
    %307 = vmatpush2.msra.mxu0 %v111
    %308 = vmatprep.subr.mxu0 0.0
    %309 = vmatpush2.msra.mxu0 %v110
    %310 = vmatprep.subr.mxu0 0.0
    %311 = vmatpush2.msra.mxu0 %v109
    %312 = vmatprep.subr.mxu0 0.0
    %313 = vmatpush2.msra.mxu0 %v108
    %314 = vmatprep.subr.mxu0 0.0
    %315 = vmatpush2.msra.mxu0 %v107
    %316 = vmatprep.subr.mxu0 0.0
    %317 = vmatpush2.msra.mxu0 %v106
    %318 = vmatprep.subr.mxu0 0.0
    %319 = vmatpush2.msra.mxu0 %v105
    %320 = vmatprep.subr.mxu0 0.0
    %321 = vmatpush2.msra.mxu0 %v104
    %322 = vmatprep.subr.mxu0 0.0
    %323 = vmatpush2.msra.mxu0 %v103
    %324 = vmatprep.subr.mxu0 0.0
    %325 = vmatpush2.msra.mxu0 %v102
    %326 = vmatprep.subr.mxu0 0.0
    %327 = vmatpush2.msra.mxu0 %v101
    %328 = vmatprep.mubr.f32.mxu0 %v64
    %329 = vmatmul.mubr.f32.gmra.mxu0 %v63
    %v330 = vpop.f32.mrf.mxu0
    %v331 = vadd.f32 %v251, %v330
    %v332 = vpop.f32.mrf.mxu0
    %333 = vmatprep.mubr.f32.mxu0 %v75
    %334 = vmatmul.mubr.f32.gmra.mxu0 %v74
    %v335 = vpop.f32.mrf.mxu0
    %v336 = vadd.f32 %v251, %v335
    %v337 = vpop.f32.mrf.mxu0
    %338 = vdwg.mxu0
    %339 = vmatprep.subr.mxu0 0.0
    %340 = vmatpush1.msra.mxu0 %v132
    %341 = vmatprep.subr.mxu0 0.0
    %342 = vmatpush1.msra.mxu0 %v131
    %343 = vmatprep.subr.mxu0 0.0
    %344 = vmatpush1.msra.mxu0 %v130
    %345 = vmatprep.subr.mxu0 0.0
    %346 = vmatpush1.msra.mxu0 %v129
    %347 = vmatprep.subr.mxu0 0.0
    %348 = vmatpush1.msra.mxu0 %v128
    %349 = vmatprep.subr.mxu0 0.0
    %350 = vmatpush1.msra.mxu0 %v127
    %351 = vmatprep.subr.mxu0 0.0
    %352 = vmatpush1.msra.mxu0 %v126
    %353 = vmatprep.subr.mxu0 0.0
    %354 = vmatpush1.msra.mxu0 %v125
    %355 = vmatprep.subr.mxu0 0.0
    %356 = vmatpush1.msra.mxu0 %v124
    %357 = vmatprep.subr.mxu0 0.0
    %358 = vmatpush1.msra.mxu0 %v123
    %359 = vmatprep.subr.mxu0 0.0
    %360 = vmatpush1.msra.mxu0 %v122
    %361 = vmatprep.subr.mxu0 0.0
    %362 = vmatpush1.msra.mxu0 %v121
    %363 = vmatprep.subr.mxu0 0.0
    %364 = vmatpush1.msra.mxu0 %v120
    %365 = vmatprep.subr.mxu0 0.0
    %366 = vmatpush1.msra.mxu0 %v119
    %367 = vmatprep.subr.mxu0 0.0
    %368 = vmatpush1.msra.mxu0 %v118
    %369 = vmatprep.subr.mxu0 0.0
    %370 = vmatpush1.msra.mxu0 %v117
    %371 = vmatprep.subr.mxu0 0.0
    %372 = vmatpush2.msra.mxu0 %v148
    %373 = vmatprep.subr.mxu0 0.0
    %374 = vmatpush2.msra.mxu0 %v147
    %375 = vmatprep.subr.mxu0 0.0
    %376 = vmatpush2.msra.mxu0 %v146
    %377 = vmatprep.subr.mxu0 0.0
    %378 = vmatpush2.msra.mxu0 %v145
    %379 = vmatprep.subr.mxu0 0.0
    %380 = vmatpush2.msra.mxu0 %v144
    %381 = vmatprep.subr.mxu0 0.0
    %382 = vmatpush2.msra.mxu0 %v143
    %383 = vmatprep.subr.mxu0 0.0
    %384 = vmatpush2.msra.mxu0 %v142
    %385 = vmatprep.subr.mxu0 0.0
    %386 = vmatpush2.msra.mxu0 %v141
    %387 = vmatprep.subr.mxu0 0.0
    %388 = vmatpush2.msra.mxu0 %v140
    %389 = vmatprep.subr.mxu0 0.0
    %390 = vmatpush2.msra.mxu0 %v139
    %391 = vmatprep.subr.mxu0 0.0
    %392 = vmatpush2.msra.mxu0 %v138
    %393 = vmatprep.subr.mxu0 0.0
    %394 = vmatpush2.msra.mxu0 %v137
    %395 = vmatprep.subr.mxu0 0.0
    %396 = vmatpush2.msra.mxu0 %v136
    %397 = vmatprep.subr.mxu0 0.0
    %398 = vmatpush2.msra.mxu0 %v135
    %399 = vmatprep.subr.mxu0 0.0
    %400 = vmatpush2.msra.mxu0 %v134
    %401 = vmatprep.subr.mxu0 0.0
    %402 = vmatpush2.msra.mxu0 %v133
    %403 = vmatprep.mubr.f32.mxu0 %v66
    %404 = vmatmul.mubr.f32.gmra.mxu0 %v65
    %v405 = vpop.f32.mrf.mxu0
    %v406 = vadd.f32 %v331, %v405
    %v407 = vpop.f32.mrf.mxu0
    %408 = vmatprep.mubr.f32.mxu0 %v77
    %409 = vmatmul.mubr.f32.gmra.mxu0 %v76
    %v410 = vpop.f32.mrf.mxu0
    %v411 = vadd.f32 %v336, %v410
    %v412 = vpop.f32.mrf.mxu0
    %413 = vdwg.mxu0
    %414 = vmatprep.subr.mxu0 0.0
    %415 = vmatpush1.msra.mxu0 %v164
    %416 = vmatprep.subr.mxu0 0.0
    %417 = vmatpush1.msra.mxu0 %v163
    %418 = vmatprep.subr.mxu0 0.0
    %419 = vmatpush1.msra.mxu0 %v162
    %420 = vmatprep.subr.mxu0 0.0
    %421 = vmatpush1.msra.mxu0 %v161
    %422 = vmatprep.subr.mxu0 0.0
    %423 = vmatpush1.msra.mxu0 %v160
    %424 = vmatprep.subr.mxu0 0.0
    %425 = vmatpush1.msra.mxu0 %v159
    %426 = vmatprep.subr.mxu0 0.0
    %427 = vmatpush1.msra.mxu0 %v158
    %428 = vmatprep.subr.mxu0 0.0
    %429 = vmatpush1.msra.mxu0 %v157
    %430 = vmatprep.subr.mxu0 0.0
    %431 = vmatpush1.msra.mxu0 %v156
    %432 = vmatprep.subr.mxu0 0.0
    %433 = vmatpush1.msra.mxu0 %v155
    %434 = vmatprep.subr.mxu0 0.0
    %435 = vmatpush1.msra.mxu0 %v154
    %436 = vmatprep.subr.mxu0 0.0
    %437 = vmatpush1.msra.mxu0 %v153
    %438 = vmatprep.subr.mxu0 0.0
    %439 = vmatpush1.msra.mxu0 %v152
    %440 = vmatprep.subr.mxu0 0.0
    %441 = vmatpush1.msra.mxu0 %v151
    %442 = vmatprep.subr.mxu0 0.0
    %443 = vmatpush1.msra.mxu0 %v150
    %444 = vmatprep.subr.mxu0 0.0
    %445 = vmatpush1.msra.mxu0 %v149
    %446 = vmatprep.subr.mxu0 0.0
    %447 = vmatpush2.msra.mxu0 %v180
    %448 = vmatprep.subr.mxu0 0.0
    %449 = vmatpush2.msra.mxu0 %v179
    %450 = vmatprep.subr.mxu0 0.0
    %451 = vmatpush2.msra.mxu0 %v178
    %452 = vmatprep.subr.mxu0 0.0
    %453 = vmatpush2.msra.mxu0 %v177
    %454 = vmatprep.subr.mxu0 0.0
    %455 = vmatpush2.msra.mxu0 %v176
    %456 = vmatprep.subr.mxu0 0.0
    %457 = vmatpush2.msra.mxu0 %v175
    %458 = vmatprep.subr.mxu0 0.0
    %459 = vmatpush2.msra.mxu0 %v174
    %460 = vmatprep.subr.mxu0 0.0
    %461 = vmatpush2.msra.mxu0 %v173
    %462 = vmatprep.subr.mxu0 0.0
    %463 = vmatpush2.msra.mxu0 %v172
    %464 = vmatprep.subr.mxu0 0.0
    %465 = vmatpush2.msra.mxu0 %v171
    %466 = vmatprep.subr.mxu0 0.0
    %467 = vmatpush2.msra.mxu0 %v170
    %468 = vmatprep.subr.mxu0 0.0
    %469 = vmatpush2.msra.mxu0 %v169
    %470 = vmatprep.subr.mxu0 0.0
    %471 = vmatpush2.msra.mxu0 %v168
    %472 = vmatprep.subr.mxu0 0.0
    %473 = vmatpush2.msra.mxu0 %v167
    %474 = vmatprep.subr.mxu0 0.0
    %475 = vmatpush2.msra.mxu0 %v166
    %476 = vmatprep.subr.mxu0 0.0
    %477 = vmatpush2.msra.mxu0 %v165
    %478 = vmatprep.mubr.f32.mxu0 %v68
    %479 = vmatmul.mubr.f32.gmra.mxu0 %v67
    %v480 = vpop.f32.mrf.mxu0
    %v481 = vadd.f32 %v406, %v480
    %v482 = vpop.f32.mrf.mxu0
    %483 = vmatprep.mubr.f32.mxu0 %v79
    %484 = vmatmul.mubr.f32.gmra.mxu0 %v78
    %v485 = vpop.f32.mrf.mxu0
    %v486 = vadd.f32 %v411, %v485
    %v487 = vpop.f32.mrf.mxu0
    %488 = vdwg.mxu0
    %489 = vmatprep.subr.mxu0 0.0
    %490 = vmatpush1.msra.mxu0 %v196
    %491 = vmatprep.subr.mxu0 0.0
    %492 = vmatpush1.msra.mxu0 %v195
    %493 = vmatprep.subr.mxu0 0.0
    %494 = vmatpush1.msra.mxu0 %v194
    %495 = vmatprep.subr.mxu0 0.0
    %496 = vmatpush1.msra.mxu0 %v193
    %497 = vmatprep.subr.mxu0 0.0
    %498 = vmatpush1.msra.mxu0 %v192
    %499 = vmatprep.subr.mxu0 0.0
    %500 = vmatpush1.msra.mxu0 %v191
    %501 = vmatprep.subr.mxu0 0.0
    %502 = vmatpush1.msra.mxu0 %v190
    %503 = vmatprep.subr.mxu0 0.0
    %504 = vmatpush1.msra.mxu0 %v189
    %505 = vmatprep.subr.mxu0 0.0
    %506 = vmatpush1.msra.mxu0 %v188
    %507 = vmatprep.subr.mxu0 0.0
    %508 = vmatpush1.msra.mxu0 %v187
    %509 = vmatprep.subr.mxu0 0.0
    %510 = vmatpush1.msra.mxu0 %v186
    %511 = vmatprep.subr.mxu0 0.0
    %512 = vmatpush1.msra.mxu0 %v185
    %513 = vmatprep.subr.mxu0 0.0
    %514 = vmatpush1.msra.mxu0 %v184
    %515 = vmatprep.subr.mxu0 0.0
    %516 = vmatpush1.msra.mxu0 %v183
    %517 = vmatprep.subr.mxu0 0.0
    %518 = vmatpush1.msra.mxu0 %v182
    %519 = vmatprep.subr.mxu0 0.0
    %520 = vmatpush1.msra.mxu0 %v181
    %521 = vmatprep.subr.mxu0 0.0
    %522 = vmatpush2.msra.mxu0 %v212
    %523 = vmatprep.subr.mxu0 0.0
    %524 = vmatpush2.msra.mxu0 %v211
    %525 = vmatprep.subr.mxu0 0.0
    %526 = vmatpush2.msra.mxu0 %v210
    %527 = vmatprep.subr.mxu0 0.0
    %528 = vmatpush2.msra.mxu0 %v209
    %529 = vmatprep.subr.mxu0 0.0
    %530 = vmatpush2.msra.mxu0 %v208
    %531 = vmatprep.subr.mxu0 0.0
    %532 = vmatpush2.msra.mxu0 %v207
    %533 = vmatprep.subr.mxu0 0.0
    %534 = vmatpush2.msra.mxu0 %v206
    %535 = vmatprep.subr.mxu0 0.0
    %536 = vmatpush2.msra.mxu0 %v205
    %537 = vmatprep.subr.mxu0 0.0
    %538 = vmatpush2.msra.mxu0 %v204
    %539 = vmatprep.subr.mxu0 0.0
    %540 = vmatpush2.msra.mxu0 %v203
    %541 = vmatprep.subr.mxu0 0.0
    %542 = vmatpush2.msra.mxu0 %v202
    %543 = vmatprep.subr.mxu0 0.0
    %544 = vmatpush2.msra.mxu0 %v201
    %545 = vmatprep.subr.mxu0 0.0
    %546 = vmatpush2.msra.mxu0 %v200
    %547 = vmatprep.subr.mxu0 0.0
    %548 = vmatpush2.msra.mxu0 %v199
    %549 = vmatprep.subr.mxu0 0.0
    %550 = vmatpush2.msra.mxu0 %v198
    %551 = vmatprep.subr.mxu0 0.0
    %552 = vmatpush2.msra.mxu0 %v197
    %553 = vmatprep.mubr.f32.mxu0 %v70
    %554 = vmatmul.mubr.f32.gmra.mxu0 %v69
    %v555 = vpop.f32.mrf.mxu0
    %v556 = vadd.f32 %v481, %v555
    %v557 = vpop.f32.mrf.mxu0
    %558 = vmatprep.mubr.f32.mxu0 %v81
    %559 = vmatmul.mubr.f32.gmra.mxu0 %v80
    %v560 = vpop.f32.mrf.mxu0
    %v561 = vadd.f32 %v486, %v560
    %v562 = vpop.f32.mrf.mxu0
    %563 = vdwg.mxu0
    %564 = vmatprep.subr.mxu0 0.0
    %565 = vmatpush1.msra.mxu0 %v228
    %566 = vmatprep.subr.mxu0 0.0
    %567 = vmatpush1.msra.mxu0 %v227
    %568 = vmatprep.subr.mxu0 0.0
    %569 = vmatpush1.msra.mxu0 %v226
    %570 = vmatprep.subr.mxu0 0.0
    %571 = vmatpush1.msra.mxu0 %v225
    %572 = vmatprep.subr.mxu0 0.0
    %573 = vmatpush1.msra.mxu0 %v224
    %574 = vmatprep.subr.mxu0 0.0
    %575 = vmatpush1.msra.mxu0 %v223
    %576 = vmatprep.subr.mxu0 0.0
    %577 = vmatpush1.msra.mxu0 %v222
    %578 = vmatprep.subr.mxu0 0.0
    %579 = vmatpush1.msra.mxu0 %v221
    %580 = vmatprep.subr.mxu0 0.0
    %581 = vmatpush1.msra.mxu0 %v220
    %582 = vmatprep.subr.mxu0 0.0
    %583 = vmatpush1.msra.mxu0 %v219
    %584 = vmatprep.subr.mxu0 0.0
    %585 = vmatpush1.msra.mxu0 %v218
    %586 = vmatprep.subr.mxu0 0.0
    %587 = vmatpush1.msra.mxu0 %v217
    %588 = vmatprep.subr.mxu0 0.0
    %589 = vmatpush1.msra.mxu0 %v216
    %590 = vmatprep.subr.mxu0 0.0
    %591 = vmatpush1.msra.mxu0 %v215
    %592 = vmatprep.subr.mxu0 0.0
    %593 = vmatpush1.msra.mxu0 %v214
    %594 = vmatprep.subr.mxu0 0.0
    %595 = vmatpush1.msra.mxu0 %v213
    %596 = vmatprep.subr.mxu0 0.0
    %597 = vmatpush2.msra.mxu0 %v244
    %598 = vmatprep.subr.mxu0 0.0
    %599 = vmatpush2.msra.mxu0 %v243
    %600 = vmatprep.subr.mxu0 0.0
    %601 = vmatpush2.msra.mxu0 %v242
    %602 = vmatprep.subr.mxu0 0.0
    %603 = vmatpush2.msra.mxu0 %v241
    %604 = vmatprep.subr.mxu0 0.0
    %605 = vmatpush2.msra.mxu0 %v240
    %606 = vmatprep.subr.mxu0 0.0
    %607 = vmatpush2.msra.mxu0 %v239
    %608 = vmatprep.subr.mxu0 0.0
    %609 = vmatpush2.msra.mxu0 %v238
    %610 = vmatprep.subr.mxu0 0.0
    %611 = vmatpush2.msra.mxu0 %v237
    %612 = vmatprep.subr.mxu0 0.0
    %613 = vmatpush2.msra.mxu0 %v236
    %614 = vmatprep.subr.mxu0 0.0
    %615 = vmatpush2.msra.mxu0 %v235
    %616 = vmatprep.subr.mxu0 0.0
    %617 = vmatpush2.msra.mxu0 %v234
    %618 = vmatprep.subr.mxu0 0.0
    %619 = vmatpush2.msra.mxu0 %v233
    %620 = vmatprep.subr.mxu0 0.0
    %621 = vmatpush2.msra.mxu0 %v232
    %622 = vmatprep.subr.mxu0 0.0
    %623 = vmatpush2.msra.mxu0 %v231
    %624 = vmatprep.subr.mxu0 0.0
    %625 = vmatpush2.msra.mxu0 %v230
    %626 = vmatprep.subr.mxu0 0.0
    %627 = vmatpush2.msra.mxu0 %v229
    %628 = vmatprep.mubr.f32.mxu0 %v72
    %629 = vmatmul.mubr.f32.gmra.mxu0 %v71
    %v630 = vpop.f32.mrf.mxu0
    %v631 = vadd.f32 %v556, %v630
    %v632 = vpop.f32.mrf.mxu0
    %633 = vmatprep.mubr.f32.mxu0 %v83
    %634 = vmatmul.mubr.f32.gmra.mxu0 %v82
    %v635 = vpop.f32.mrf.mxu0
    %v636 = vadd.f32 %v561, %v635
    %v637 = vpop.f32.mrf.mxu0
    %638 = vdwg.mxu0
    %639 = vmatprep.subr.mxu0 0.0
    %640 = vmatpush1.msra.mxu0 0.0
    %641 = vmatprep.subr.mxu0 0.0
    %642 = vmatpush1.msra.mxu0 0.0
    %643 = vmatprep.subr.mxu0 0.0
    %644 = vmatpush1.msra.mxu0 0.0
    %645 = vmatprep.subr.mxu0 0.0
    %646 = vmatpush1.msra.mxu0 0.0
    %647 = vmatprep.subr.mxu0 0.0
    %648 = vmatpush1.msra.mxu0 0.0
    %649 = vmatprep.subr.mxu0 0.0
    %650 = vmatpush1.msra.mxu0 0.0
    %651 = vmatprep.subr.mxu0 0.0
    %652 = vmatpush1.msra.mxu0 0.0
    %653 = vmatprep.subr.mxu0 0.0
    %654 = vmatpush1.msra.mxu0 0.0
    %655 = vmatprep.subr.mxu0 0.0
    %656 = vmatpush1.msra.mxu0 0.0
    %657 = vmatprep.subr.mxu0 0.0
    %658 = vmatpush1.msra.mxu0 0.0
    %659 = vmatprep.subr.mxu0 0.0
    %660 = vmatpush1.msra.mxu0 0.0
    %661 = vmatprep.subr.mxu0 0.0
    %662 = vmatpush1.msra.mxu0 0.0
    %663 = vmatprep.subr.mxu0 0.0
    %664 = vmatpush1.msra.mxu0 0.0
    %665 = vmatprep.subr.mxu0 0.0
    %666 = vmatpush1.msra.mxu0 0.0
    %667 = vmatprep.subr.mxu0 0.0
    %668 = vmatpush1.msra.mxu0 0.0
    %669 = vmatprep.subr.mxu0 0.0
    %670 = vmatpush1.msra.mxu0 %v262
    %671 = vmatprep.subr.mxu0 0.0
    %672 = vmatpush2.msra.mxu0 0.0
    %673 = vmatprep.subr.mxu0 0.0
    %674 = vmatpush2.msra.mxu0 0.0
    %675 = vmatprep.subr.mxu0 0.0
    %676 = vmatpush2.msra.mxu0 0.0
    %677 = vmatprep.subr.mxu0 0.0
    %678 = vmatpush2.msra.mxu0 0.0
    %679 = vmatprep.subr.mxu0 0.0
    %680 = vmatpush2.msra.mxu0 0.0
    %681 = vmatprep.subr.mxu0 0.0
    %682 = vmatpush2.msra.mxu0 0.0
    %683 = vmatprep.subr.mxu0 0.0
    %684 = vmatpush2.msra.mxu0 0.0
    %685 = vmatprep.subr.mxu0 0.0
    %686 = vmatpush2.msra.mxu0 0.0
    %687 = vmatprep.subr.mxu0 0.0
    %688 = vmatpush2.msra.mxu0 0.0
    %689 = vmatprep.subr.mxu0 0.0
    %690 = vmatpush2.msra.mxu0 0.0
    %691 = vmatprep.subr.mxu0 0.0
    %692 = vmatpush2.msra.mxu0 0.0
    %693 = vmatprep.subr.mxu0 0.0
    %694 = vmatpush2.msra.mxu0 0.0
    %695 = vmatprep.subr.mxu0 0.0
    %696 = vmatpush2.msra.mxu0 0.0
    %697 = vmatprep.subr.mxu0 0.0
    %698 = vmatpush2.msra.mxu0 0.0
    %699 = vmatprep.subr.mxu0 0.0
    %700 = vmatpush2.msra.mxu0 0.0
    %701 = vmatprep.subr.mxu0 0.0
    %702 = vmatpush2.msra.mxu0 0.0
    %703 = vmatprep.mubr.f32.mxu0 0.0
    %704 = vmatmul.mubr.f32.gmra.mxu0 %v255
    %v705 = vpop.f32.mrf.mxu0
    %v706 = vadd.f32 %v631, %v705
    %v707 = vpop.f32.mrf.mxu0
    %708 = vmatprep.mubr.f32.mxu0 0.0
    %709 = vmatmul.mubr.f32.gmra.mxu0 %v258
    %v710 = vpop.f32.mrf.mxu0
    %v711 = vadd.f32 %v636, %v710
    %v712 = vpop.f32.mrf.mxu0
    %713 = vdwg.mxu0
    %v714 = vld [vmem:[%s4] sm:$0xff]
    %v715 = vld [vmem:[%s4 + $0x8] sm:$0xff]
    %v716 = vld [vmem:[%s4 + $0x10] sm:$0xff]
    %v717 = vld [vmem:[%s4 + $0x18] sm:$0xff]
    %v718 = vld [vmem:[%s3] sm:$0xff]
    %v719 = vld [vmem:[%s3 + $0x8] sm:$0xff]
    %v720 = vld [vmem:[%s5] sm:$0xff]
    %v721 = vld [vmem:[%s5 + $0x8] sm:$0xff]
    %v722 = vld [vmem:[%s5 + $0x10] sm:$0xff]
    %v723 = vld [vmem:[%s5 + $0x18] sm:$0xff]
    %vm724 = vcmask 261120
    %v726 = vsel %vm724, %v718, 0
    %v729 = vsel %vm724, %v719, 0
    %731 = vmatprep.subr.mxu0 0.0
    %732 = vmatpush1.msra.mxu0 0.0
    %733 = vmatprep.subr.mxu0 0.0
    %734 = vmatpush1.msra.mxu0 0.0
    %735 = vmatprep.subr.mxu0 0.0
    %736 = vmatpush1.msra.mxu0 0.0
    %737 = vmatprep.subr.mxu0 0.0
    %738 = vmatpush1.msra.mxu0 0.0
    %739 = vmatprep.subr.mxu0 0.0
    %740 = vmatpush1.msra.mxu0 0.0
    %741 = vmatprep.subr.mxu0 0.0
    %742 = vmatpush1.msra.mxu0 0.0
    %743 = vmatprep.subr.mxu0 0.0
    %744 = vmatpush1.msra.mxu0 0.0
    %745 = vmatprep.subr.mxu0 0.0
    %746 = vmatpush1.msra.mxu0 0.0
    %747 = vmatprep.subr.mxu0 0.0
    %748 = vmatpush1.msra.mxu0 0.0
    %749 = vmatprep.subr.mxu0 0.0
    %750 = vmatpush1.msra.mxu0 0.0
    %751 = vmatprep.subr.mxu0 0.0
    %752 = vmatpush1.msra.mxu0 0.0
    %753 = vmatprep.subr.mxu0 0.0
    %754 = vmatpush1.msra.mxu0 0.0
    %755 = vmatprep.subr.mxu0 0.0
    %756 = vmatpush1.msra.mxu0 %v723
    %757 = vmatprep.subr.mxu0 0.0
    %758 = vmatpush1.msra.mxu0 %v722
    %759 = vmatprep.subr.mxu0 0.0
    %760 = vmatpush1.msra.mxu0 %v721
    %761 = vmatprep.subr.mxu0 0.0
    %762 = vmatpush1.msra.mxu0 %v720
    %763 = vmatprep.subr.mxu0 0.0
    %764 = vmatpush2.msra.mxu0 0.0
    %765 = vmatprep.subr.mxu0 0.0
    %766 = vmatpush2.msra.mxu0 0.0
    %767 = vmatprep.subr.mxu0 0.0
    %768 = vmatpush2.msra.mxu0 0.0
    %769 = vmatprep.subr.mxu0 0.0
    %770 = vmatpush2.msra.mxu0 0.0
    %771 = vmatprep.subr.mxu0 0.0
    %772 = vmatpush2.msra.mxu0 0.0
    %773 = vmatprep.subr.mxu0 0.0
    %774 = vmatpush2.msra.mxu0 0.0
    %775 = vmatprep.subr.mxu0 0.0
    %776 = vmatpush2.msra.mxu0 0.0
    %777 = vmatprep.subr.mxu0 0.0
    %778 = vmatpush2.msra.mxu0 0.0
    %779 = vmatprep.subr.mxu0 0.0
    %780 = vmatpush2.msra.mxu0 0.0
    %781 = vmatprep.subr.mxu0 0.0
    %782 = vmatpush2.msra.mxu0 0.0
    %783 = vmatprep.subr.mxu0 0.0
    %784 = vmatpush2.msra.mxu0 0.0
    %785 = vmatprep.subr.mxu0 0.0
    %786 = vmatpush2.msra.mxu0 0.0
    %787 = vmatprep.subr.mxu0 0.0
    %788 = vmatpush2.msra.mxu0 0.0
    %789 = vmatprep.subr.mxu0 0.0
    %790 = vmatpush2.msra.mxu0 0.0
    %791 = vmatprep.subr.mxu0 0.0
    %792 = vmatpush2.msra.mxu0 0.0
    %793 = vmatprep.subr.mxu0 0.0
    %794 = vmatpush2.msra.mxu0 0.0
    %795 = vmatprep.mubr.f32.mxu0 0.0
    %796 = vmatmul.mubr.f32.gmra.mxu0 %v726
    %v797 = vpop.f32.mrf.mxu0
    %v798 = vadd.f32 0.0, %v797
    %v799 = vpop.f32.mrf.mxu0
    %800 = vmatprep.mubr.f32.mxu0 0.0
    %801 = vmatmul.mubr.f32.gmra.mxu0 %v729
    %v802 = vpop.f32.mrf.mxu0
    %v803 = vadd.f32 0.0, %v802
    %v804 = vpop.f32.mrf.mxu0
    %805 = vdwg.mxu0
    %v807 = vsel %vm724, %v706, 0
    %v810 = vsel %vm724, %v711, 0
    %812 = vmatprep.subr.mxu0 0.0
    %813 = vmatpush1.msra.mxu0 0.0
    %814 = vmatprep.subr.mxu0 0.0
    %815 = vmatpush1.msra.mxu0 0.0
    %816 = vmatprep.subr.mxu0 0.0
    %817 = vmatpush1.msra.mxu0 0.0
    %818 = vmatprep.subr.mxu0 0.0
    %819 = vmatpush1.msra.mxu0 0.0
    %820 = vmatprep.subr.mxu0 0.0
    %821 = vmatpush1.msra.mxu0 0.0
    %822 = vmatprep.subr.mxu0 0.0
    %823 = vmatpush1.msra.mxu0 0.0
    %824 = vmatprep.subr.mxu0 0.0
    %825 = vmatpush1.msra.mxu0 0.0
    %826 = vmatprep.subr.mxu0 0.0
    %827 = vmatpush1.msra.mxu0 0.0
    %828 = vmatprep.subr.mxu0 0.0
    %829 = vmatpush1.msra.mxu0 0.0
    %830 = vmatprep.subr.mxu0 0.0
    %831 = vmatpush1.msra.mxu0 0.0
    %832 = vmatprep.subr.mxu0 0.0
    %833 = vmatpush1.msra.mxu0 0.0
    %834 = vmatprep.subr.mxu0 0.0
    %835 = vmatpush1.msra.mxu0 0.0
    %836 = vmatprep.subr.mxu0 0.0
    %837 = vmatpush1.msra.mxu0 %v717
    %838 = vmatprep.subr.mxu0 0.0
    %839 = vmatpush1.msra.mxu0 %v716
    %840 = vmatprep.subr.mxu0 0.0
    %841 = vmatpush1.msra.mxu0 %v715
    %842 = vmatprep.subr.mxu0 0.0
    %843 = vmatpush1.msra.mxu0 %v714
    %844 = vmatprep.subr.mxu0 0.0
    %845 = vmatpush2.msra.mxu0 0.0
    %846 = vmatprep.subr.mxu0 0.0
    %847 = vmatpush2.msra.mxu0 0.0
    %848 = vmatprep.subr.mxu0 0.0
    %849 = vmatpush2.msra.mxu0 0.0
    %850 = vmatprep.subr.mxu0 0.0
    %851 = vmatpush2.msra.mxu0 0.0
    %852 = vmatprep.subr.mxu0 0.0
    %853 = vmatpush2.msra.mxu0 0.0
    %854 = vmatprep.subr.mxu0 0.0
    %855 = vmatpush2.msra.mxu0 0.0
    %856 = vmatprep.subr.mxu0 0.0
    %857 = vmatpush2.msra.mxu0 0.0
    %858 = vmatprep.subr.mxu0 0.0
    %859 = vmatpush2.msra.mxu0 0.0
    %860 = vmatprep.subr.mxu0 0.0
    %861 = vmatpush2.msra.mxu0 0.0
    %862 = vmatprep.subr.mxu0 0.0
    %863 = vmatpush2.msra.mxu0 0.0
    %864 = vmatprep.subr.mxu0 0.0
    %865 = vmatpush2.msra.mxu0 0.0
    %866 = vmatprep.subr.mxu0 0.0
    %867 = vmatpush2.msra.mxu0 0.0
    %868 = vmatprep.subr.mxu0 0.0
    %869 = vmatpush2.msra.mxu0 0.0
    %870 = vmatprep.subr.mxu0 0.0
    %871 = vmatpush2.msra.mxu0 0.0
    %872 = vmatprep.subr.mxu0 0.0
    %873 = vmatpush2.msra.mxu0 0.0
    %874 = vmatprep.subr.mxu0 0.0
    %875 = vmatpush2.msra.mxu0 0.0
    %876 = vmatprep.mubr.f32.mxu0 0.0
    %877 = vmatmul.mubr.f32.gmra.mxu0 %v807
    %v878 = vpop.f32.mrf.mxu0
    %v879 = vadd.f32 %v798, %v878
    %v880 = vpop.f32.mrf.mxu0
    %881 = vmatprep.mubr.f32.mxu0 0.0
    %882 = vmatmul.mubr.f32.gmra.mxu0 %v810
    %v883 = vpop.f32.mrf.mxu0
    %v884 = vadd.f32 %v803, %v883
    %v885 = vpop.f32.mrf.mxu0
    %886 = vdwg.mxu0
    %v887 = vld [vmem:[%s6] sm:$0x1]
    %v889 = vlaneseq
    %v890 = vshrl.u32 %v889, 7
    %v891 = vsub.s32 0, %v890
    %v892 = vrot.slane %v887, %v891
    %v894 = vadd.f32 %v879, %v892
    %v895 = vadd.f32 %v884, %v892
    %v896 = vld [vmem:[%s7] sm:$0xff]
    %v897 = vld [vmem:[%s7 + $0x8] sm:$0xff]
    %v898 = vld [vmem:[%s7 + $0x10] sm:$0xff]
    %v899 = vld [vmem:[%s7 + $0x18] sm:$0xff]
    %v900 = vld [vmem:[%s7 + $0x20] sm:$0xff]
    %v901 = vld [vmem:[%s7 + $0x28] sm:$0xff]
    %v902 = vld [vmem:[%s7 + $0x30] sm:$0xff]
    %v903 = vld [vmem:[%s7 + $0x38] sm:$0xff]
    %v904 = vld [vmem:[%s8] sm:$0x3]
    %v906 = vlaneseq
    %v907 = vshrl.u32 %v906, 7
    %v908 = vsub.s32 0, %v907
    %v909 = vrot.slane %v904, %v908
    %v910 = vlaneseq
    %v911 = vshrl.u32 %v910, 7
    %v912 = vsub.s32 1, %v911
    %v913 = vrot.slane %v904, %v912
    %v917 = vsel %vm724, %v894, 0
    %v920 = vsel %vm724, %v895, 0
    %922 = vmatprep.subr.mxu0 0.0
    %923 = vmatpush1.msra.mxu0 0.0
    %924 = vmatprep.subr.mxu0 0.0
    %925 = vmatpush1.msra.mxu0 0.0
    %926 = vmatprep.subr.mxu0 0.0
    %927 = vmatpush1.msra.mxu0 0.0
    %928 = vmatprep.subr.mxu0 0.0
    %929 = vmatpush1.msra.mxu0 0.0
    %930 = vmatprep.subr.mxu0 0.0
    %931 = vmatpush1.msra.mxu0 0.0
    %932 = vmatprep.subr.mxu0 0.0
    %933 = vmatpush1.msra.mxu0 0.0
    %934 = vmatprep.subr.mxu0 0.0
    %935 = vmatpush1.msra.mxu0 0.0
    %936 = vmatprep.subr.mxu0 0.0
    %937 = vmatpush1.msra.mxu0 0.0
    %938 = vmatprep.subr.mxu0 0.0
    %939 = vmatpush1.msra.mxu0 0.0
    %940 = vmatprep.subr.mxu0 0.0
    %941 = vmatpush1.msra.mxu0 0.0
    %942 = vmatprep.subr.mxu0 0.0
    %943 = vmatpush1.msra.mxu0 0.0
    %944 = vmatprep.subr.mxu0 0.0
    %945 = vmatpush1.msra.mxu0 0.0
    %946 = vmatprep.subr.mxu0 %v903
    %947 = vmatpush1.msra.mxu0 %v902
    %948 = vmatprep.subr.mxu0 %v901
    %949 = vmatpush1.msra.mxu0 %v900
    %950 = vmatprep.subr.mxu0 %v899
    %951 = vmatpush1.msra.mxu0 %v898
    %952 = vmatprep.subr.mxu0 %v897
    %953 = vmatpush1.msra.mxu0 %v896
    %954 = vmatprep.subr.mxu0 0.0
    %955 = vmatpush2.msra.mxu0 0.0
    %956 = vmatprep.subr.mxu0 0.0
    %957 = vmatpush2.msra.mxu0 0.0
    %958 = vmatprep.subr.mxu0 0.0
    %959 = vmatpush2.msra.mxu0 0.0
    %960 = vmatprep.subr.mxu0 0.0
    %961 = vmatpush2.msra.mxu0 0.0
    %962 = vmatprep.subr.mxu0 0.0
    %963 = vmatpush2.msra.mxu0 0.0
    %964 = vmatprep.subr.mxu0 0.0
    %965 = vmatpush2.msra.mxu0 0.0
    %966 = vmatprep.subr.mxu0 0.0
    %967 = vmatpush2.msra.mxu0 0.0
    %968 = vmatprep.subr.mxu0 0.0
    %969 = vmatpush2.msra.mxu0 0.0
    %970 = vmatprep.subr.mxu0 0.0
    %971 = vmatpush2.msra.mxu0 0.0
    %972 = vmatprep.subr.mxu0 0.0
    %973 = vmatpush2.msra.mxu0 0.0
    %974 = vmatprep.subr.mxu0 0.0
    %975 = vmatpush2.msra.mxu0 0.0
    %976 = vmatprep.subr.mxu0 0.0
    %977 = vmatpush2.msra.mxu0 0.0
    %978 = vmatprep.subr.mxu0 0.0
    %979 = vmatpush2.msra.mxu0 0.0
    %980 = vmatprep.subr.mxu0 0.0
    %981 = vmatpush2.msra.mxu0 0.0
    %982 = vmatprep.subr.mxu0 0.0
    %983 = vmatpush2.msra.mxu0 0.0
    %984 = vmatprep.subr.mxu0 0.0
    %985 = vmatpush2.msra.mxu0 0.0
    %986 = vmatprep.mubr.f32.mxu0 0.0
    %987 = vmatmul.mubr.f32.gmra.mxu0 %v917
    %v988 = vpop.f32.mrf.mxu0
    %v989 = vadd.f32 %v909, %v988
    %v990 = vpop.f32.mrf.mxu0
    %v991 = vadd.f32 %v913, %v990
    %992 = vmatprep.mubr.f32.mxu0 0.0
    %993 = vmatmul.mubr.f32.gmra.mxu0 %v920
    %v994 = vpop.f32.mrf.mxu0
    %v995 = vadd.f32 %v909, %v994
    %v996 = vpop.f32.mrf.mxu0
    %v997 = vadd.f32 %v913, %v996
    %998 = vdwg.mxu0
    %v999 = vld [vmem:[%s13] sm:$0x1]
    %v1000 = vlaneseq
    %v1001 = vand.u32 %v1000, 127
    %vm1002 = vcmp.ge.s32.totalorder %v1001, 64
    %vm1003 = vcmp.lt.s32.totalorder %v1001, 96
    %vm1004 = vmand %vm1002, %vm1003
    %v1005 = vsel %vm1004, 1.0, 0.5
    %v1006 = vsel %vm1004, 0.0, 0.5
    %vm1007 = vcmp.lt.s32.totalorder %v1001, 0
    %v1008 = vsub.s32 0, %v1001
    %v1009 = vsel %vm1007, %v1008, %v1001
    %v1010 = vshrl.u32 %v1009, 1
    %v1011 = vand.u32 %v1009, 1
    %v1012 = vsub.s32 0, %v1011
    %v1013 = vsel %vm1007, %v1012, %v1011
    %vm1014 = vcmp.ne.s32.totalorder %v1013, 0
    %vm1015 = vcmp.lt.s32.totalorder %v1013, 0
    %vm1016 = vmand %vm1015, %vm1014
    %v1017 = vadd.s32 %v1013, 2
    %v1018 = vsel %vm1016, %v1017, %v1013
    %v1019 = vlaneseq
    %v1020 = vshrl.u32 %v1019, 7
    %vm1021 = vcmp.eq.s32.totalorder %v1018, %v1020
    %v1022 = vsel %vm1021, 1, 0
    %v1023 = vcvt.s32.f32 %v1022
    %v1024 = vadd.s32 %v1020, 8
    %vm1025 = vcmp.lt.s32.totalorder %v1020, 0
    %v1026 = vsub.s32 0, %v1020
    %v1027 = vsel %vm1025, %v1026, %v1020
    %v1028 = vshrl.u32 %v1027, 1
    %v1029 = vand.u32 %v1027, 1
    %v1030 = vsub.s32 0, %v1029
    %v1031 = vsel %vm1025, %v1030, %v1029
    %vm1032 = vcmp.lt.s32.totalorder %v1024, 0
    %v1033 = vsub.s32 0, %v1024
    %v1034 = vsel %vm1032, %v1033, %v1024
    %v1035 = vshrl.u32 %v1034, 1
    %v1036 = vand.u32 %v1034, 1
    %v1037 = vsub.s32 0, %v1036
    %v1038 = vsel %vm1032, %v1037, %v1036
    %vm1039 = vcmp.ne.s32.totalorder %v1031, 0
    %vm1040 = vcmp.ne.s32.totalorder %v1038, 0
    %vm1041 = vcmp.lt.s32.totalorder %v1031, 0
    %vm1042 = vcmp.lt.s32.totalorder %v1038, 0
    %vm1043 = vmand %vm1041, %vm1039
    %vm1044 = vmand %vm1042, %vm1040
    %v1045 = vadd.s32 %v1031, 2
    %v1046 = vadd.s32 %v1038, 2
    %v1047 = vsel %vm1043, %v1045, %v1031
    %v1048 = vsel %vm1044, %v1046, %v1038
    %vm1049 = vcmp.eq.s32.totalorder %v1047, 1
    %vm1050 = vcmp.eq.s32.totalorder %v1048, 1
    %v1051 = vld [vmem:[%s9] sm:$0xff]
    %v1052 = vld [vmem:[%s9 + $0x8] sm:$0xff]
    %v1053 = vld [vmem:[%s9 + $0x10] sm:$0xff]
    %v1054 = vld [vmem:[%s9 + $0x18] sm:$0xff]
    %v1056 = vsel %vm724, 0.0, 0
    %1058 = vmatprep.subr.mxu0 0.0
    %1059 = vmatpush1.msra.mxu0 0.0
    %1060 = vmatprep.subr.mxu0 0.0
    %1061 = vmatpush1.msra.mxu0 0.0
    %1062 = vmatprep.subr.mxu0 0.0
    %1063 = vmatpush1.msra.mxu0 0.0
    %1064 = vmatprep.subr.mxu0 0.0
    %1065 = vmatpush1.msra.mxu0 0.0
    %1066 = vmatprep.subr.mxu0 0.0
    %1067 = vmatpush1.msra.mxu0 0.0
    %1068 = vmatprep.subr.mxu0 0.0
    %1069 = vmatpush1.msra.mxu0 0.0
    %1070 = vmatprep.subr.mxu0 0.0
    %1071 = vmatpush1.msra.mxu0 0.0
    %1072 = vmatprep.subr.mxu0 0.0
    %1073 = vmatpush1.msra.mxu0 0.0
    %1074 = vmatprep.subr.mxu0 0.0
    %1075 = vmatpush1.msra.mxu0 0.0
    %1076 = vmatprep.subr.mxu0 0.0
    %1077 = vmatpush1.msra.mxu0 0.0
    %1078 = vmatprep.subr.mxu0 0.0
    %1079 = vmatpush1.msra.mxu0 0.0
    %1080 = vmatprep.subr.mxu0 0.0
    %1081 = vmatpush1.msra.mxu0 0.0
    %1082 = vmatprep.subr.mxu0 0.0
    %1083 = vmatpush1.msra.mxu0 %v1054
    %1084 = vmatprep.subr.mxu0 0.0
    %1085 = vmatpush1.msra.mxu0 %v1053
    %1086 = vmatprep.subr.mxu0 0.0
    %1087 = vmatpush1.msra.mxu0 %v1052
    %1088 = vmatprep.subr.mxu0 0.0
    %1089 = vmatpush1.msra.mxu0 %v1051
    %1090 = vmatprep.subr.mxu0 0.0
    %1091 = vmatpush2.msra.mxu0 0.0
    %1092 = vmatprep.subr.mxu0 0.0
    %1093 = vmatpush2.msra.mxu0 0.0
    %1094 = vmatprep.subr.mxu0 0.0
    %1095 = vmatpush2.msra.mxu0 0.0
    %1096 = vmatprep.subr.mxu0 0.0
    %1097 = vmatpush2.msra.mxu0 0.0
    %1098 = vmatprep.subr.mxu0 0.0
    %1099 = vmatpush2.msra.mxu0 0.0
    %1100 = vmatprep.subr.mxu0 0.0
    %1101 = vmatpush2.msra.mxu0 0.0
    %1102 = vmatprep.subr.mxu0 0.0
    %1103 = vmatpush2.msra.mxu0 0.0
    %1104 = vmatprep.subr.mxu0 0.0
    %1105 = vmatpush2.msra.mxu0 0.0
    %1106 = vmatprep.subr.mxu0 0.0
    %1107 = vmatpush2.msra.mxu0 0.0
    %1108 = vmatprep.subr.mxu0 0.0
    %1109 = vmatpush2.msra.mxu0 0.0
    %1110 = vmatprep.subr.mxu0 0.0
    %1111 = vmatpush2.msra.mxu0 0.0
    %1112 = vmatprep.subr.mxu0 0.0
    %1113 = vmatpush2.msra.mxu0 0.0
    %1114 = vmatprep.subr.mxu0 0.0
    %1115 = vmatpush2.msra.mxu0 0.0
    %1116 = vmatprep.subr.mxu0 0.0
    %1117 = vmatpush2.msra.mxu0 0.0
    %1118 = vmatprep.subr.mxu0 0.0
    %1119 = vmatpush2.msra.mxu0 0.0
    %1120 = vmatprep.subr.mxu0 0.0
    %1121 = vmatpush2.msra.mxu0 0.0
    %1122 = vmatprep.mubr.f32.mxu0 0.0
    %1123 = vmatmul.mubr.f32.gmra.mxu0 %v1056
    %v1124 = vpop.f32.mrf.mxu0
    %v1125 = vadd.f32 0.0, %v1124
    %v1126 = vpop.f32.mrf.mxu0
    %1127 = vdwg.mxu0
    %v1128 = vadd.f32 %v989, %v1125
    %v1129 = vmul.f32 %v1128, %v1005
    %v1130 = vtanh.pop %v1129
    %v1131 = vmul.f32 %v1005, %v1130
    %v1132 = vadd.f32 %v1131, %v1006
    %v1133 = vmul.f32 %v1132, 0.0
    %1135 = vrot.lane.b32.xlu0 %v1132, 64
    %v1136 = vpop.permute.xlu0 %1135
    %v1138 = vmul.f32 %v1132, %v1136
    %1140 = vrot.lane.b32.xlu0 %v1138, 32
    %v1141 = vpop.permute.xlu0 %1140
    %v1143 = vadd.f32 %v1133, %v1141
    %v1144 = vtanh.pop %v1143
    %1146 = vrot.lane.b32.xlu0 %v1144, 64
    %v1147 = vpop.permute.xlu0 %1146
    %v1149 = vmul.f32 %v1132, %v1147
    %1151 = vrot.lane.b32.xlu0 %v1149, 32
    %v1152 = vpop.permute.xlu0 %1151
    %v1154 = vsel %vm724, %v1152, 0.0
    %v1155 = vld [vmem:[%s10] sm:$0xff]
    %v1156 = vld [vmem:[%s10 + $0x8] sm:$0xff]
    %v1157 = vld [vmem:[%s10 + $0x10] sm:$0xff]
    %v1158 = vld [vmem:[%s10 + $0x18] sm:$0xff]
    %v1159 = vld [vmem:[%s10 + $0x20] sm:$0xff]
    %v1160 = vld [vmem:[%s10 + $0x28] sm:$0xff]
    %v1161 = vld [vmem:[%s10 + $0x30] sm:$0xff]
    %v1162 = vld [vmem:[%s10 + $0x38] sm:$0xff]
    %v1163 = vld [vmem:[%s11] sm:$0x1]
    %v1165 = vlaneseq
    %v1166 = vshrl.u32 %v1165, 7
    %v1167 = vsub.s32 0, %v1166
    %v1168 = vrot.slane %v1163, %v1167
    %vm1170 = vcmask 523264
    %v1172 = vsel %vm1170, %v1154, 0
    %1174 = vmatprep.subr.mxu0 0.0
    %1175 = vmatpush1.msra.mxu0 0.0
    %1176 = vmatprep.subr.mxu0 0.0
    %1177 = vmatpush1.msra.mxu0 0.0
    %1178 = vmatprep.subr.mxu0 0.0
    %1179 = vmatpush1.msra.mxu0 0.0
    %1180 = vmatprep.subr.mxu0 0.0
    %1181 = vmatpush1.msra.mxu0 0.0
    %1182 = vmatprep.subr.mxu0 0.0
    %1183 = vmatpush1.msra.mxu0 0.0
    %1184 = vmatprep.subr.mxu0 0.0
    %1185 = vmatpush1.msra.mxu0 0.0
    %1186 = vmatprep.subr.mxu0 0.0
    %1187 = vmatpush1.msra.mxu0 0.0
    %1188 = vmatprep.subr.mxu0 0.0
    %1189 = vmatpush1.msra.mxu0 0.0
    %1190 = vmatprep.subr.mxu0 0.0
    %1191 = vmatpush1.msra.mxu0 %v1162
    %1192 = vmatprep.subr.mxu0 0.0
    %1193 = vmatpush1.msra.mxu0 %v1161
    %1194 = vmatprep.subr.mxu0 0.0
    %1195 = vmatpush1.msra.mxu0 %v1160
    %1196 = vmatprep.subr.mxu0 0.0
    %1197 = vmatpush1.msra.mxu0 %v1159
    %1198 = vmatprep.subr.mxu0 0.0
    %1199 = vmatpush1.msra.mxu0 %v1158
    %1200 = vmatprep.subr.mxu0 0.0
    %1201 = vmatpush1.msra.mxu0 %v1157
    %1202 = vmatprep.subr.mxu0 0.0
    %1203 = vmatpush1.msra.mxu0 %v1156
    %1204 = vmatprep.subr.mxu0 0.0
    %1205 = vmatpush1.msra.mxu0 %v1155
    %1206 = vmatprep.subr.mxu0 0.0
    %1207 = vmatpush2.msra.mxu0 0.0
    %1208 = vmatprep.subr.mxu0 0.0
    %1209 = vmatpush2.msra.mxu0 0.0
    %1210 = vmatprep.subr.mxu0 0.0
    %1211 = vmatpush2.msra.mxu0 0.0
    %1212 = vmatprep.subr.mxu0 0.0
    %1213 = vmatpush2.msra.mxu0 0.0
    %1214 = vmatprep.subr.mxu0 0.0
    %1215 = vmatpush2.msra.mxu0 0.0
    %1216 = vmatprep.subr.mxu0 0.0
    %1217 = vmatpush2.msra.mxu0 0.0
    %1218 = vmatprep.subr.mxu0 0.0
    %1219 = vmatpush2.msra.mxu0 0.0
    %1220 = vmatprep.subr.mxu0 0.0
    %1221 = vmatpush2.msra.mxu0 0.0
    %1222 = vmatprep.subr.mxu0 0.0
    %1223 = vmatpush2.msra.mxu0 0.0
    %1224 = vmatprep.subr.mxu0 0.0
    %1225 = vmatpush2.msra.mxu0 0.0
    %1226 = vmatprep.subr.mxu0 0.0
    %1227 = vmatpush2.msra.mxu0 0.0
    %1228 = vmatprep.subr.mxu0 0.0
    %1229 = vmatpush2.msra.mxu0 0.0
    %1230 = vmatprep.subr.mxu0 0.0
    %1231 = vmatpush2.msra.mxu0 0.0
    %1232 = vmatprep.subr.mxu0 0.0
    %1233 = vmatpush2.msra.mxu0 0.0
    %1234 = vmatprep.subr.mxu0 0.0
    %1235 = vmatpush2.msra.mxu0 0.0
    %1236 = vmatprep.subr.mxu0 0.0
    %1237 = vmatpush2.msra.mxu0 0.0
    %1238 = vmatprep.mubr.f32.mxu0 0.0
    %1239 = vmatmul.mubr.f32.gmra.mxu0 %v1172
    %v1240 = vpop.f32.mrf.mxu0
    %v1241 = vadd.f32 %v1168, %v1240
    %v1242 = vpop.f32.mrf.mxu0
    %1243 = vdwg.mxu0
    %v1244 = vmul.f32 %v1241, %v1005
    %v1245 = vtanh.pop %v1244
    %v1246 = vmul.f32 %v1005, %v1245
    %v1247 = vadd.f32 %v1246, %v1006
    %v1248 = vmul.f32 %v1247, 0.0
    %1250 = vrot.lane.b32.xlu0 %v1247, 64
    %v1251 = vpop.permute.xlu0 %1250
    %v1253 = vmul.f32 %v1247, %v1251
    %1255 = vrot.lane.b32.xlu0 %v1253, 32
    %v1256 = vpop.permute.xlu0 %1255
    %v1258 = vadd.f32 %v1248, %v1256
    %v1259 = vtanh.pop %v1258
    %1261 = vrot.lane.b32.xlu0 %v1259, 64
    %v1262 = vpop.permute.xlu0 %1261
    %v1264 = vmul.f32 %v1247, %v1262
    %1266 = vrot.lane.b32.xlu0 %v1264, 32
    %v1267 = vpop.permute.xlu0 %1266
    %vm1269 = vcmask 254976
    %1270 = vst.msk [vmem:[#allocation3] sm:$0x3] %vm1269, %v1267
    %v1271 = vld [vmem:[%s12] sm:$0xff]
    %v1272 = vld [vmem:[%s12 + $0x8] sm:$0xff]
    %v1273 = vld [vmem:[%s12 + $0x10] sm:$0xff]
    %v1274 = vld [vmem:[%s12 + $0x18] sm:$0xff]
    %v1275 = vsel %vm724, %v1267, 0
    %1277 = vmatprep.subr.mxu0 0.0
    %1278 = vmatpush1.msra.mxu0 0.0
    %1279 = vmatprep.subr.mxu0 0.0
    %1280 = vmatpush1.msra.mxu0 0.0
    %1281 = vmatprep.subr.mxu0 0.0
    %1282 = vmatpush1.msra.mxu0 0.0
    %1283 = vmatprep.subr.mxu0 0.0
    %1284 = vmatpush1.msra.mxu0 0.0
    %1285 = vmatprep.subr.mxu0 0.0
    %1286 = vmatpush1.msra.mxu0 0.0
    %1287 = vmatprep.subr.mxu0 0.0
    %1288 = vmatpush1.msra.mxu0 0.0
    %1289 = vmatprep.subr.mxu0 0.0
    %1290 = vmatpush1.msra.mxu0 0.0
    %1291 = vmatprep.subr.mxu0 0.0
    %1292 = vmatpush1.msra.mxu0 0.0
    %1293 = vmatprep.subr.mxu0 0.0
    %1294 = vmatpush1.msra.mxu0 0.0
    %1295 = vmatprep.subr.mxu0 0.0
    %1296 = vmatpush1.msra.mxu0 0.0
    %1297 = vmatprep.subr.mxu0 0.0
    %1298 = vmatpush1.msra.mxu0 0.0
    %1299 = vmatprep.subr.mxu0 0.0
    %1300 = vmatpush1.msra.mxu0 0.0
    %1301 = vmatprep.subr.mxu0 0.0
    %1302 = vmatpush1.msra.mxu0 %v1274
    %1303 = vmatprep.subr.mxu0 0.0
    %1304 = vmatpush1.msra.mxu0 %v1273
    %1305 = vmatprep.subr.mxu0 0.0
    %1306 = vmatpush1.msra.mxu0 %v1272
    %1307 = vmatprep.subr.mxu0 0.0
    %1308 = vmatpush1.msra.mxu0 %v1271
    %1309 = vmatprep.subr.mxu0 0.0
    %1310 = vmatpush2.msra.mxu0 0.0
    %1311 = vmatprep.subr.mxu0 0.0
    %1312 = vmatpush2.msra.mxu0 0.0
    %1313 = vmatprep.subr.mxu0 0.0
    %1314 = vmatpush2.msra.mxu0 0.0
    %1315 = vmatprep.subr.mxu0 0.0
    %1316 = vmatpush2.msra.mxu0 0.0
    %1317 = vmatprep.subr.mxu0 0.0
    %1318 = vmatpush2.msra.mxu0 0.0
    %1319 = vmatprep.subr.mxu0 0.0
    %1320 = vmatpush2.msra.mxu0 0.0
    %1321 = vmatprep.subr.mxu0 0.0
    %1322 = vmatpush2.msra.mxu0 0.0
    %1323 = vmatprep.subr.mxu0 0.0
    %1324 = vmatpush2.msra.mxu0 0.0
    %1325 = vmatprep.subr.mxu0 0.0
    %1326 = vmatpush2.msra.mxu0 0.0
    %1327 = vmatprep.subr.mxu0 0.0
    %1328 = vmatpush2.msra.mxu0 0.0
    %1329 = vmatprep.subr.mxu0 0.0
    %1330 = vmatpush2.msra.mxu0 0.0
    %1331 = vmatprep.subr.mxu0 0.0
    %1332 = vmatpush2.msra.mxu0 0.0
    %1333 = vmatprep.subr.mxu0 0.0
    %1334 = vmatpush2.msra.mxu0 0.0
    %1335 = vmatprep.subr.mxu0 0.0
    %1336 = vmatpush2.msra.mxu0 0.0
    %1337 = vmatprep.subr.mxu0 0.0
    %1338 = vmatpush2.msra.mxu0 0.0
    %1339 = vmatprep.subr.mxu0 0.0
    %1340 = vmatpush2.msra.mxu0 0.0
    %1341 = vmatprep.mubr.f32.mxu0 0.0
    %1342 = vmatmul.mubr.f32.gmra.mxu0 %v1275
    %v1343 = vpop.f32.mrf.mxu0
    %v1344 = vadd.f32 0.0, %v1343
    %v1345 = vpop.f32.mrf.mxu0
    %1346 = vdwg.mxu0
    %v1347 = vlaneseq
    %v1348 = vshrl.u32 %v1347, 7
    %v1349 = vsub.s32 0, %v1348
    %v1350 = vrot.slane %v1344, %v1349
    %v1351 = vlaneseq
    %v1352 = vshrl.u32 %v1351, 7
    %v1353 = vsub.s32 1, %v1352
    %v1354 = vrot.slane %v1344, %v1353
    %v1355 = vsel %vm1049, %v1354, %v1350
    %v1356 = vsel %vm1050, %v1354, %v1350
    %v1357 = vadd.f32 %v991, %v1355
    %v1358 = vadd.f32 %v997, %v1356
    %v1359 = vmax.f32 %v1357, 0.0
    %v1360 = vmax.f32 %v1358, 0.0
    %v1362 = vlaneseq
    %v1363 = vshrl.u32 %v1362, 7
    %v1364 = vsub.s32 0, %v1363
    %v1365 = vrot.slane %v999, %v1364
    %v1367 = vmul.f32 %v1359, %v1365
    %v1368 = vmul.f32 %v1360, %v1365
    %v1369 = vsel %vm724, %v1367, 0.0
    %1370 = vadd.xlane.f32.xlu0 %v1369
    %v1371 = vpop.xlane.xlu0 %1370
    %v1372 = vsel %vm724, %v1368, 0.0
    %1373 = vadd.xlane.f32.xlu0 %v1372
    %v1374 = vpop.xlane.xlu0 %1373
    %v1375 = vmax.f32 %v1371, %v1374
    %v1376 = vrot.slane %v1375, 4
    %v1377 = vmax.f32 %v1375, %v1376
    %v1378 = vrot.slane %v1377, 2
    %v1379 = vmax.f32 %v1377, %v1378
    %v1380 = vrot.slane %v1379, 1
    %v1381 = vmax.f32 %v1379, %v1380
    %v1382 = vsub.f32 %v1371, %v1381
    %v1383 = vsub.f32 %v1374, %v1381
    %v1384 = vmul.f32 %v1382, 1.442695
    %v1385 = vpow.pop %v1384
    %v1386 = vmul.f32 %v1383, 1.442695
    %v1387 = vpow.pop %v1386
    %v1388 = vmul.f32 %v1385, %v894
    %v1389 = vmul.f32 %v1387, %v895
    %vm1390 = vcmask 130048
    %v1392 = vsel %vm1390, %v1023, 0
    %1394 = vmatprep.subr.mxu0 0.0
    %1395 = vmatpush1.msra.mxu0 0.0
    %1396 = vmatprep.subr.mxu0 0.0
    %1397 = vmatpush1.msra.mxu0 0.0
    %1398 = vmatprep.subr.mxu0 0.0
    %1399 = vmatpush1.msra.mxu0 0.0
    %1400 = vmatprep.subr.mxu0 0.0
    %1401 = vmatpush1.msra.mxu0 0.0
    %1402 = vmatprep.subr.mxu0 0.0
    %1403 = vmatpush1.msra.mxu0 0.0
    %1404 = vmatprep.subr.mxu0 0.0
    %1405 = vmatpush1.msra.mxu0 0.0
    %1406 = vmatprep.subr.mxu0 0.0
    %1407 = vmatpush1.msra.mxu0 0.0
    %1408 = vmatprep.subr.mxu0 0.0
    %1409 = vmatpush1.msra.mxu0 0.0
    %1410 = vmatprep.subr.mxu0 0.0
    %1411 = vmatpush1.msra.mxu0 0.0
    %1412 = vmatprep.subr.mxu0 0.0
    %1413 = vmatpush1.msra.mxu0 0.0
    %1414 = vmatprep.subr.mxu0 0.0
    %1415 = vmatpush1.msra.mxu0 0.0
    %1416 = vmatprep.subr.mxu0 0.0
    %1417 = vmatpush1.msra.mxu0 0.0
    %1418 = vmatprep.subr.mxu0 0.0
    %1419 = vmatpush1.msra.mxu0 0.0
    %1420 = vmatprep.subr.mxu0 0.0
    %1421 = vmatpush1.msra.mxu0 0.0
    %1422 = vmatprep.subr.mxu0 0.0
    %1423 = vmatpush1.msra.mxu0 %v1389
    %1424 = vmatprep.subr.mxu0 0.0
    %1425 = vmatpush1.msra.mxu0 %v1388
    %1426 = vmatprep.subr.mxu0 0.0
    %1427 = vmatpush2.msra.mxu0 0.0
    %1428 = vmatprep.subr.mxu0 0.0
    %1429 = vmatpush2.msra.mxu0 0.0
    %1430 = vmatprep.subr.mxu0 0.0
    %1431 = vmatpush2.msra.mxu0 0.0
    %1432 = vmatprep.subr.mxu0 0.0
    %1433 = vmatpush2.msra.mxu0 0.0
    %1434 = vmatprep.subr.mxu0 0.0
    %1435 = vmatpush2.msra.mxu0 0.0
    %1436 = vmatprep.subr.mxu0 0.0
    %1437 = vmatpush2.msra.mxu0 0.0
    %1438 = vmatprep.subr.mxu0 0.0
    %1439 = vmatpush2.msra.mxu0 0.0
    %1440 = vmatprep.subr.mxu0 0.0
    %1441 = vmatpush2.msra.mxu0 0.0
    %1442 = vmatprep.subr.mxu0 0.0
    %1443 = vmatpush2.msra.mxu0 0.0
    %1444 = vmatprep.subr.mxu0 0.0
    %1445 = vmatpush2.msra.mxu0 0.0
    %1446 = vmatprep.subr.mxu0 0.0
    %1447 = vmatpush2.msra.mxu0 0.0
    %1448 = vmatprep.subr.mxu0 0.0
    %1449 = vmatpush2.msra.mxu0 0.0
    %1450 = vmatprep.subr.mxu0 0.0
    %1451 = vmatpush2.msra.mxu0 0.0
    %1452 = vmatprep.subr.mxu0 0.0
    %1453 = vmatpush2.msra.mxu0 0.0
    %1454 = vmatprep.subr.mxu0 0.0
    %1455 = vmatpush2.msra.mxu0 0.0
    %1456 = vmatprep.subr.mxu0 0.0
    %1457 = vmatpush2.msra.mxu0 0.0
    %1458 = vmatprep.mubr.f32.mxu0 0.0
    %1459 = vmatmul.mubr.f32.gmra.mxu0 %v1392
    %v1460 = vpop.f32.mrf.mxu0
    %v1461 = vadd.f32 0.0, %v1460
    %v1462 = vpop.f32.mrf.mxu0
    %1463 = vdwg.mxu0
    %1464 = vmatprep.subr.mxu0 0.0
    %1465 = vmatpush1.msra.mxu0 0.0
    %1466 = vmatprep.subr.mxu0 0.0
    %1467 = vmatpush1.msra.mxu0 0.0
    %1468 = vmatprep.subr.mxu0 0.0
    %1469 = vmatpush1.msra.mxu0 0.0
    %1470 = vmatprep.subr.mxu0 0.0
    %1471 = vmatpush1.msra.mxu0 0.0
    %1472 = vmatprep.subr.mxu0 0.0
    %1473 = vmatpush1.msra.mxu0 0.0
    %1474 = vmatprep.subr.mxu0 0.0
    %1475 = vmatpush1.msra.mxu0 0.0
    %1476 = vmatprep.subr.mxu0 0.0
    %1477 = vmatpush1.msra.mxu0 0.0
    %1478 = vmatprep.subr.mxu0 0.0
    %1479 = vmatpush1.msra.mxu0 0.0
    %1480 = vmatprep.subr.mxu0 0.0
    %1481 = vmatpush1.msra.mxu0 0.0
    %1482 = vmatprep.subr.mxu0 0.0
    %1483 = vmatpush1.msra.mxu0 0.0
    %1484 = vmatprep.subr.mxu0 0.0
    %1485 = vmatpush1.msra.mxu0 0.0
    %1486 = vmatprep.subr.mxu0 0.0
    %1487 = vmatpush1.msra.mxu0 0.0
    %1488 = vmatprep.subr.mxu0 0.0
    %1489 = vmatpush1.msra.mxu0 0.0
    %1490 = vmatprep.subr.mxu0 0.0
    %1491 = vmatpush1.msra.mxu0 0.0
    %1492 = vmatprep.subr.mxu0 0.0
    %1493 = vmatpush1.msra.mxu0 %v1387
    %1494 = vmatprep.subr.mxu0 0.0
    %1495 = vmatpush1.msra.mxu0 %v1385
    %1496 = vmatprep.subr.mxu0 0.0
    %1497 = vmatpush2.msra.mxu0 0.0
    %1498 = vmatprep.subr.mxu0 0.0
    %1499 = vmatpush2.msra.mxu0 0.0
    %1500 = vmatprep.subr.mxu0 0.0
    %1501 = vmatpush2.msra.mxu0 0.0
    %1502 = vmatprep.subr.mxu0 0.0
    %1503 = vmatpush2.msra.mxu0 0.0
    %1504 = vmatprep.subr.mxu0 0.0
    %1505 = vmatpush2.msra.mxu0 0.0
    %1506 = vmatprep.subr.mxu0 0.0
    %1507 = vmatpush2.msra.mxu0 0.0
    %1508 = vmatprep.subr.mxu0 0.0
    %1509 = vmatpush2.msra.mxu0 0.0
    %1510 = vmatprep.subr.mxu0 0.0
    %1511 = vmatpush2.msra.mxu0 0.0
    %1512 = vmatprep.subr.mxu0 0.0
    %1513 = vmatpush2.msra.mxu0 0.0
    %1514 = vmatprep.subr.mxu0 0.0
    %1515 = vmatpush2.msra.mxu0 0.0
    %1516 = vmatprep.subr.mxu0 0.0
    %1517 = vmatpush2.msra.mxu0 0.0
    %1518 = vmatprep.subr.mxu0 0.0
    %1519 = vmatpush2.msra.mxu0 0.0
    %1520 = vmatprep.subr.mxu0 0.0
    %1521 = vmatpush2.msra.mxu0 0.0
    %1522 = vmatprep.subr.mxu0 0.0
    %1523 = vmatpush2.msra.mxu0 0.0
    %1524 = vmatprep.subr.mxu0 0.0
    %1525 = vmatpush2.msra.mxu0 0.0
    %1526 = vmatprep.subr.mxu0 0.0
    %1527 = vmatpush2.msra.mxu0 0.0
    %1528 = vmatprep.mubr.f32.mxu0 0.0
    %1529 = vmatmul.mubr.f32.gmra.mxu0 %v1392
    %v1530 = vpop.f32.mrf.mxu0
    %v1531 = vadd.f32 0.0, %v1530
    %v1532 = vpop.f32.mrf.mxu0
    %1533 = vdwg.mxu0
    %v1534 = vrcp.pop %v1531
    %1536 = vset.pattern.permute.xlu0 0
    %1537 = vperm.xlu0 %1536, %v1534
    %v1538 = vpop.permute.xlu0 %1537
    %v1540 = vmul.f32 %v1461, %v1538
    %1541 = vst.msk [vmem:[#allocation2] sm:$0x3] %vm1269, %v1540
    %1543 = vrot.lane.b32.xlu0 %v1540, 32
    %v1544 = vpop.permute.xlu0 %1543
    %v1546 = vsel %vm724, %v1152, %v1544
    %v1547 = vld [vmem:[%s14] sm:$0xff]
    %v1548 = vld [vmem:[%s14 + $0x8] sm:$0xff]
    %v1549 = vld [vmem:[%s14 + $0x10] sm:$0xff]
    %v1550 = vld [vmem:[%s14 + $0x18] sm:$0xff]
    %v1551 = vld [vmem:[%s14 + $0x20] sm:$0xff]
    %v1552 = vld [vmem:[%s14 + $0x28] sm:$0xff]
    %v1553 = vld [vmem:[%s14 + $0x30] sm:$0xff]
    %v1554 = vld [vmem:[%s14 + $0x38] sm:$0xff]
    %v1555 = vld [vmem:[%s15] sm:$0x1]
    %v1557 = vlaneseq
    %v1558 = vshrl.u32 %v1557, 7
    %v1559 = vsub.s32 0, %v1558
    %v1560 = vrot.slane %v1555, %v1559
    %v1563 = vsel %vm1170, %v1546, 0
    %1565 = vmatprep.subr.mxu0 0.0
    %1566 = vmatpush1.msra.mxu0 0.0
    %1567 = vmatprep.subr.mxu0 0.0
    %1568 = vmatpush1.msra.mxu0 0.0
    %1569 = vmatprep.subr.mxu0 0.0
    %1570 = vmatpush1.msra.mxu0 0.0
    %1571 = vmatprep.subr.mxu0 0.0
    %1572 = vmatpush1.msra.mxu0 0.0
    %1573 = vmatprep.subr.mxu0 0.0
    %1574 = vmatpush1.msra.mxu0 0.0
    %1575 = vmatprep.subr.mxu0 0.0
    %1576 = vmatpush1.msra.mxu0 0.0
    %1577 = vmatprep.subr.mxu0 0.0
    %1578 = vmatpush1.msra.mxu0 0.0
    %1579 = vmatprep.subr.mxu0 0.0
    %1580 = vmatpush1.msra.mxu0 0.0
    %1581 = vmatprep.subr.mxu0 0.0
    %1582 = vmatpush1.msra.mxu0 %v1554
    %1583 = vmatprep.subr.mxu0 0.0
    %1584 = vmatpush1.msra.mxu0 %v1553
    %1585 = vmatprep.subr.mxu0 0.0
    %1586 = vmatpush1.msra.mxu0 %v1552
    %1587 = vmatprep.subr.mxu0 0.0
    %1588 = vmatpush1.msra.mxu0 %v1551
    %1589 = vmatprep.subr.mxu0 0.0
    %1590 = vmatpush1.msra.mxu0 %v1550
    %1591 = vmatprep.subr.mxu0 0.0
    %1592 = vmatpush1.msra.mxu0 %v1549
    %1593 = vmatprep.subr.mxu0 0.0
    %1594 = vmatpush1.msra.mxu0 %v1548
    %1595 = vmatprep.subr.mxu0 0.0
    %1596 = vmatpush1.msra.mxu0 %v1547
    %1597 = vmatprep.subr.mxu0 0.0
    %1598 = vmatpush2.msra.mxu0 0.0
    %1599 = vmatprep.subr.mxu0 0.0
    %1600 = vmatpush2.msra.mxu0 0.0
    %1601 = vmatprep.subr.mxu0 0.0
    %1602 = vmatpush2.msra.mxu0 0.0
    %1603 = vmatprep.subr.mxu0 0.0
    %1604 = vmatpush2.msra.mxu0 0.0
    %1605 = vmatprep.subr.mxu0 0.0
    %1606 = vmatpush2.msra.mxu0 0.0
    %1607 = vmatprep.subr.mxu0 0.0
    %1608 = vmatpush2.msra.mxu0 0.0
    %1609 = vmatprep.subr.mxu0 0.0
    %1610 = vmatpush2.msra.mxu0 0.0
    %1611 = vmatprep.subr.mxu0 0.0
    %1612 = vmatpush2.msra.mxu0 0.0
    %1613 = vmatprep.subr.mxu0 0.0
    %1614 = vmatpush2.msra.mxu0 0.0
    %1615 = vmatprep.subr.mxu0 0.0
    %1616 = vmatpush2.msra.mxu0 0.0
    %1617 = vmatprep.subr.mxu0 0.0
    %1618 = vmatpush2.msra.mxu0 0.0
    %1619 = vmatprep.subr.mxu0 0.0
    %1620 = vmatpush2.msra.mxu0 0.0
    %1621 = vmatprep.subr.mxu0 0.0
    %1622 = vmatpush2.msra.mxu0 0.0
    %1623 = vmatprep.subr.mxu0 0.0
    %1624 = vmatpush2.msra.mxu0 0.0
    %1625 = vmatprep.subr.mxu0 0.0
    %1626 = vmatpush2.msra.mxu0 0.0
    %1627 = vmatprep.subr.mxu0 0.0
    %1628 = vmatpush2.msra.mxu0 0.0
    %1629 = vmatprep.mubr.f32.mxu0 0.0
    %1630 = vmatmul.mubr.f32.gmra.mxu0 %v1563
    %v1631 = vpop.f32.mrf.mxu0
    %v1632 = vadd.f32 %v1560, %v1631
    %v1633 = vpop.f32.mrf.mxu0
    %1634 = vdwg.mxu0
    %v1635 = vld [vmem:[%s9] sm:$0xff]
    %v1636 = vld [vmem:[%s9 + $0x8] sm:$0xff]
    %v1637 = vld [vmem:[%s9 + $0x10] sm:$0xff]
    %v1638 = vld [vmem:[%s9 + $0x18] sm:$0xff]
    %v1640 = vsel %vm724, %v1632, 0
    %1642 = vmatprep.subr.mxu0 0.0
    %1643 = vmatpush1.msra.mxu0 0.0
    %1644 = vmatprep.subr.mxu0 0.0
    %1645 = vmatpush1.msra.mxu0 0.0
    %1646 = vmatprep.subr.mxu0 0.0
    %1647 = vmatpush1.msra.mxu0 0.0
    %1648 = vmatprep.subr.mxu0 0.0
    %1649 = vmatpush1.msra.mxu0 0.0
    %1650 = vmatprep.subr.mxu0 0.0
    %1651 = vmatpush1.msra.mxu0 0.0
    %1652 = vmatprep.subr.mxu0 0.0
    %1653 = vmatpush1.msra.mxu0 0.0
    %1654 = vmatprep.subr.mxu0 0.0
    %1655 = vmatpush1.msra.mxu0 0.0
    %1656 = vmatprep.subr.mxu0 0.0
    %1657 = vmatpush1.msra.mxu0 0.0
    %1658 = vmatprep.subr.mxu0 0.0
    %1659 = vmatpush1.msra.mxu0 0.0
    %1660 = vmatprep.subr.mxu0 0.0
    %1661 = vmatpush1.msra.mxu0 0.0
    %1662 = vmatprep.subr.mxu0 0.0
    %1663 = vmatpush1.msra.mxu0 0.0
    %1664 = vmatprep.subr.mxu0 0.0
    %1665 = vmatpush1.msra.mxu0 0.0
    %1666 = vmatprep.subr.mxu0 0.0
    %1667 = vmatpush1.msra.mxu0 %v1638
    %1668 = vmatprep.subr.mxu0 0.0
    %1669 = vmatpush1.msra.mxu0 %v1637
    %1670 = vmatprep.subr.mxu0 0.0
    %1671 = vmatpush1.msra.mxu0 %v1636
    %1672 = vmatprep.subr.mxu0 0.0
    %1673 = vmatpush1.msra.mxu0 %v1635
    %1674 = vmatprep.subr.mxu0 0.0
    %1675 = vmatpush2.msra.mxu0 0.0
    %1676 = vmatprep.subr.mxu0 0.0
    %1677 = vmatpush2.msra.mxu0 0.0
    %1678 = vmatprep.subr.mxu0 0.0
    %1679 = vmatpush2.msra.mxu0 0.0
    %1680 = vmatprep.subr.mxu0 0.0
    %1681 = vmatpush2.msra.mxu0 0.0
    %1682 = vmatprep.subr.mxu0 0.0
    %1683 = vmatpush2.msra.mxu0 0.0
    %1684 = vmatprep.subr.mxu0 0.0
    %1685 = vmatpush2.msra.mxu0 0.0
    %1686 = vmatprep.subr.mxu0 0.0
    %1687 = vmatpush2.msra.mxu0 0.0
    %1688 = vmatprep.subr.mxu0 0.0
    %1689 = vmatpush2.msra.mxu0 0.0
    %1690 = vmatprep.subr.mxu0 0.0
    %1691 = vmatpush2.msra.mxu0 0.0
    %1692 = vmatprep.subr.mxu0 0.0
    %1693 = vmatpush2.msra.mxu0 0.0
    %1694 = vmatprep.subr.mxu0 0.0
    %1695 = vmatpush2.msra.mxu0 0.0
    %1696 = vmatprep.subr.mxu0 0.0
    %1697 = vmatpush2.msra.mxu0 0.0
    %1698 = vmatprep.subr.mxu0 0.0
    %1699 = vmatpush2.msra.mxu0 0.0
    %1700 = vmatprep.subr.mxu0 0.0
    %1701 = vmatpush2.msra.mxu0 0.0
    %1702 = vmatprep.subr.mxu0 0.0
    %1703 = vmatpush2.msra.mxu0 0.0
    %1704 = vmatprep.subr.mxu0 0.0
    %1705 = vmatpush2.msra.mxu0 0.0
    %1706 = vmatprep.mubr.f32.mxu0 0.0
    %1707 = vmatmul.mubr.f32.gmra.mxu0 %v1640
    %v1708 = vpop.f32.mrf.mxu0
    %v1709 = vadd.f32 0.0, %v1708
    %v1710 = vpop.f32.mrf.mxu0
    %1711 = vdwg.mxu0
    %v1713 = vrot.slane %v1709, 6
    %v1715 = vadd.f32 %v989, %v1713
    %v1716 = vmul.f32 %v1715, %v1005
    %v1717 = vtanh.pop %v1716
    %v1718 = vmul.f32 %v1005, %v1717
    %v1719 = vadd.f32 %v1718, %v1006
    %v1721 = vrot.slane %v1143, 6
    %v1723 = vmul.f32 %v1719, %v1721
    %1725 = vrot.lane.b32.xlu0 %v1719, 64
    %v1726 = vpop.permute.xlu0 %1725
    %v1728 = vmul.f32 %v1719, %v1726
    %1730 = vrot.lane.b32.xlu0 %v1728, 32
    %v1731 = vpop.permute.xlu0 %1730
    %v1733 = vadd.f32 %v1723, %v1731
    %v1734 = vtanh.pop %v1733
    %1736 = vrot.lane.b32.xlu0 %v1734, 64
    %v1737 = vpop.permute.xlu0 %1736
    %v1739 = vmul.f32 %v1719, %v1737
    %1741 = vrot.lane.b32.xlu0 %v1739, 32
    %v1742 = vpop.permute.xlu0 %1741
    %v1744 = vrot.slane %v1264, 6
    %1745 = vrot.lane.b32.xlu0 %v1744, 64
    %v1746 = vpop.permute.xlu0 %1745
    %v1748 = vsel %vm724, %v1742, %v1746
    %v1749 = vld [vmem:[%s10] sm:$0xff]
    %v1750 = vld [vmem:[%s10 + $0x8] sm:$0xff]
    %v1751 = vld [vmem:[%s10 + $0x10] sm:$0xff]
    %v1752 = vld [vmem:[%s10 + $0x18] sm:$0xff]
    %v1753 = vld [vmem:[%s10 + $0x20] sm:$0xff]
    %v1754 = vld [vmem:[%s10 + $0x28] sm:$0xff]
    %v1755 = vld [vmem:[%s10 + $0x30] sm:$0xff]
    %v1756 = vld [vmem:[%s10 + $0x38] sm:$0xff]
    %v1757 = vld [vmem:[%s11] sm:$0x1]
    %v1759 = vlaneseq
    %v1760 = vshrl.u32 %v1759, 7
    %v1761 = vsub.s32 0, %v1760
    %v1762 = vrot.slane %v1757, %v1761
    %v1765 = vrot.slane %v1748, 2
    %v1766 = vsel %vm1170, %v1765, 0
    %1768 = vmatprep.subr.mxu0 0.0
    %1769 = vmatpush1.msra.mxu0 0.0
    %1770 = vmatprep.subr.mxu0 0.0
    %1771 = vmatpush1.msra.mxu0 0.0
    %1772 = vmatprep.subr.mxu0 0.0
    %1773 = vmatpush1.msra.mxu0 0.0
    %1774 = vmatprep.subr.mxu0 0.0
    %1775 = vmatpush1.msra.mxu0 0.0
    %1776 = vmatprep.subr.mxu0 0.0
    %1777 = vmatpush1.msra.mxu0 0.0
    %1778 = vmatprep.subr.mxu0 0.0
    %1779 = vmatpush1.msra.mxu0 0.0
    %1780 = vmatprep.subr.mxu0 0.0
    %1781 = vmatpush1.msra.mxu0 0.0
    %1782 = vmatprep.subr.mxu0 0.0
    %1783 = vmatpush1.msra.mxu0 0.0
    %1784 = vmatprep.subr.mxu0 0.0
    %1785 = vmatpush1.msra.mxu0 %v1756
    %1786 = vmatprep.subr.mxu0 0.0
    %1787 = vmatpush1.msra.mxu0 %v1755
    %1788 = vmatprep.subr.mxu0 0.0
    %1789 = vmatpush1.msra.mxu0 %v1754
    %1790 = vmatprep.subr.mxu0 0.0
    %1791 = vmatpush1.msra.mxu0 %v1753
    %1792 = vmatprep.subr.mxu0 0.0
    %1793 = vmatpush1.msra.mxu0 %v1752
    %1794 = vmatprep.subr.mxu0 0.0
    %1795 = vmatpush1.msra.mxu0 %v1751
    %1796 = vmatprep.subr.mxu0 0.0
    %1797 = vmatpush1.msra.mxu0 %v1750
    %1798 = vmatprep.subr.mxu0 0.0
    %1799 = vmatpush1.msra.mxu0 %v1749
    %1800 = vmatprep.subr.mxu0 0.0
    %1801 = vmatpush2.msra.mxu0 0.0
    %1802 = vmatprep.subr.mxu0 0.0
    %1803 = vmatpush2.msra.mxu0 0.0
    %1804 = vmatprep.subr.mxu0 0.0
    %1805 = vmatpush2.msra.mxu0 0.0
    %1806 = vmatprep.subr.mxu0 0.0
    %1807 = vmatpush2.msra.mxu0 0.0
    %1808 = vmatprep.subr.mxu0 0.0
    %1809 = vmatpush2.msra.mxu0 0.0
    %1810 = vmatprep.subr.mxu0 0.0
    %1811 = vmatpush2.msra.mxu0 0.0
    %1812 = vmatprep.subr.mxu0 0.0
    %1813 = vmatpush2.msra.mxu0 0.0
    %1814 = vmatprep.subr.mxu0 0.0
    %1815 = vmatpush2.msra.mxu0 0.0
    %1816 = vmatprep.subr.mxu0 0.0
    %1817 = vmatpush2.msra.mxu0 0.0
    %1818 = vmatprep.subr.mxu0 0.0
    %1819 = vmatpush2.msra.mxu0 0.0
    %1820 = vmatprep.subr.mxu0 0.0
    %1821 = vmatpush2.msra.mxu0 0.0
    %1822 = vmatprep.subr.mxu0 0.0
    %1823 = vmatpush2.msra.mxu0 0.0
    %1824 = vmatprep.subr.mxu0 0.0
    %1825 = vmatpush2.msra.mxu0 0.0
    %1826 = vmatprep.subr.mxu0 0.0
    %1827 = vmatpush2.msra.mxu0 0.0
    %1828 = vmatprep.subr.mxu0 0.0
    %1829 = vmatpush2.msra.mxu0 0.0
    %1830 = vmatprep.subr.mxu0 0.0
    %1831 = vmatpush2.msra.mxu0 0.0
    %1832 = vmatprep.mubr.f32.mxu0 0.0
    %1833 = vmatmul.mubr.f32.gmra.mxu0 %v1766
    %v1834 = vpop.f32.mrf.mxu0
    %v1835 = vadd.f32 %v1762, %v1834
    %v1836 = vpop.f32.mrf.mxu0
    %1837 = vdwg.mxu0
    %v1838 = vmul.f32 %v1835, %v1005
    %v1839 = vtanh.pop %v1838
    %v1840 = vmul.f32 %v1005, %v1839
    %v1841 = vadd.f32 %v1840, %v1006
    %v1842 = vmul.f32 %v1841, %v1258
    %1844 = vrot.lane.b32.xlu0 %v1841, 64
    %v1845 = vpop.permute.xlu0 %1844
    %v1847 = vmul.f32 %v1841, %v1845
    %1849 = vrot.lane.b32.xlu0 %v1847, 32
    %v1850 = vpop.permute.xlu0 %1849
    %v1852 = vadd.f32 %v1842, %v1850
    %v1853 = vtanh.pop %v1852
    %1855 = vrot.lane.b32.xlu0 %v1853, 64
    %v1856 = vpop.permute.xlu0 %1855
    %v1858 = vmul.f32 %v1841, %v1856
    %1860 = vrot.lane.b32.xlu0 %v1858, 32
    %v1861 = vpop.permute.xlu0 %1860
    %1863 = vst.msk [vmem:[#allocation3 + $0x2] sm:$0x3] %vm1269, %v1861
    %v1864 = vld [vmem:[%s12] sm:$0xff]
    %v1865 = vld [vmem:[%s12 + $0x8] sm:$0xff]
    %v1866 = vld [vmem:[%s12 + $0x10] sm:$0xff]
    %v1867 = vld [vmem:[%s12 + $0x18] sm:$0xff]
    %v1868 = vsel %vm724, %v1861, 0
    %1870 = vmatprep.subr.mxu0 0.0
    %1871 = vmatpush1.msra.mxu0 0.0
    %1872 = vmatprep.subr.mxu0 0.0
    %1873 = vmatpush1.msra.mxu0 0.0
    %1874 = vmatprep.subr.mxu0 0.0
    %1875 = vmatpush1.msra.mxu0 0.0
    %1876 = vmatprep.subr.mxu0 0.0
    %1877 = vmatpush1.msra.mxu0 0.0
    %1878 = vmatprep.subr.mxu0 0.0
    %1879 = vmatpush1.msra.mxu0 0.0
    %1880 = vmatprep.subr.mxu0 0.0
    %1881 = vmatpush1.msra.mxu0 0.0
    %1882 = vmatprep.subr.mxu0 0.0
    %1883 = vmatpush1.msra.mxu0 0.0
    %1884 = vmatprep.subr.mxu0 0.0
    %1885 = vmatpush1.msra.mxu0 0.0
    %1886 = vmatprep.subr.mxu0 0.0
    %1887 = vmatpush1.msra.mxu0 0.0
    %1888 = vmatprep.subr.mxu0 0.0
    %1889 = vmatpush1.msra.mxu0 0.0
    %1890 = vmatprep.subr.mxu0 0.0
    %1891 = vmatpush1.msra.mxu0 0.0
    %1892 = vmatprep.subr.mxu0 0.0
    %1893 = vmatpush1.msra.mxu0 0.0
    %1894 = vmatprep.subr.mxu0 0.0
    %1895 = vmatpush1.msra.mxu0 %v1867
    %1896 = vmatprep.subr.mxu0 0.0
    %1897 = vmatpush1.msra.mxu0 %v1866
    %1898 = vmatprep.subr.mxu0 0.0
    %1899 = vmatpush1.msra.mxu0 %v1865
    %1900 = vmatprep.subr.mxu0 0.0
    %1901 = vmatpush1.msra.mxu0 %v1864
    %1902 = vmatprep.subr.mxu0 0.0
    %1903 = vmatpush2.msra.mxu0 0.0
    %1904 = vmatprep.subr.mxu0 0.0
    %1905 = vmatpush2.msra.mxu0 0.0
    %1906 = vmatprep.subr.mxu0 0.0
    %1907 = vmatpush2.msra.mxu0 0.0
    %1908 = vmatprep.subr.mxu0 0.0
    %1909 = vmatpush2.msra.mxu0 0.0
    %1910 = vmatprep.subr.mxu0 0.0
    %1911 = vmatpush2.msra.mxu0 0.0
    %1912 = vmatprep.subr.mxu0 0.0
    %1913 = vmatpush2.msra.mxu0 0.0
    %1914 = vmatprep.subr.mxu0 0.0
    %1915 = vmatpush2.msra.mxu0 0.0
    %1916 = vmatprep.subr.mxu0 0.0
    %1917 = vmatpush2.msra.mxu0 0.0
    %1918 = vmatprep.subr.mxu0 0.0
    %1919 = vmatpush2.msra.mxu0 0.0
    %1920 = vmatprep.subr.mxu0 0.0
    %1921 = vmatpush2.msra.mxu0 0.0
    %1922 = vmatprep.subr.mxu0 0.0
    %1923 = vmatpush2.msra.mxu0 0.0
    %1924 = vmatprep.subr.mxu0 0.0
    %1925 = vmatpush2.msra.mxu0 0.0
    %1926 = vmatprep.subr.mxu0 0.0
    %1927 = vmatpush2.msra.mxu0 0.0
    %1928 = vmatprep.subr.mxu0 0.0
    %1929 = vmatpush2.msra.mxu0 0.0
    %1930 = vmatprep.subr.mxu0 0.0
    %1931 = vmatpush2.msra.mxu0 0.0
    %1932 = vmatprep.subr.mxu0 0.0
    %1933 = vmatpush2.msra.mxu0 0.0
    %1934 = vmatprep.mubr.f32.mxu0 0.0
    %1935 = vmatmul.mubr.f32.gmra.mxu0 %v1868
    %v1936 = vpop.f32.mrf.mxu0
    %v1937 = vadd.f32 0.0, %v1936
    %v1938 = vpop.f32.mrf.mxu0
    %1939 = vdwg.mxu0
    %v1940 = vlaneseq
    %v1941 = vshrl.u32 %v1940, 7
    %v1942 = vsub.s32 0, %v1941
    %v1943 = vrot.slane %v1937, %v1942
    %v1944 = vlaneseq
    %v1945 = vshrl.u32 %v1944, 7
    %v1946 = vsub.s32 1, %v1945
    %v1947 = vrot.slane %v1937, %v1946
    %v1948 = vsel %vm1049, %v1947, %v1943
    %v1949 = vsel %vm1050, %v1947, %v1943
    %v1950 = vadd.f32 %v991, %v1948
    %v1951 = vadd.f32 %v997, %v1949
    %v1952 = vmax.f32 %v1950, 0.0
    %v1953 = vmax.f32 %v1951, 0.0
    %v1954 = vmul.f32 %v1952, %v1365
    %v1955 = vmul.f32 %v1953, %v1365
    %v1956 = vsel %vm724, %v1954, 0.0
    %1957 = vadd.xlane.f32.xlu0 %v1956
    %v1958 = vpop.xlane.xlu0 %1957
    %v1959 = vsel %vm724, %v1955, 0.0
    %1960 = vadd.xlane.f32.xlu0 %v1959
    %v1961 = vpop.xlane.xlu0 %1960
    %v1962 = vmax.f32 %v1958, %v1961
    %v1963 = vrot.slane %v1962, 4
    %v1964 = vmax.f32 %v1962, %v1963
    %v1965 = vrot.slane %v1964, 2
    %v1966 = vmax.f32 %v1964, %v1965
    %v1967 = vrot.slane %v1966, 1
    %v1968 = vmax.f32 %v1966, %v1967
    %v1969 = vsub.f32 %v1958, %v1968
    %v1970 = vsub.f32 %v1961, %v1968
    %v1971 = vmul.f32 %v1969, 1.442695
    %v1972 = vpow.pop %v1971
    %v1973 = vmul.f32 %v1970, 1.442695
    %v1974 = vpow.pop %v1973
    %v1975 = vmul.f32 %v1972, %v894
    %v1976 = vmul.f32 %v1974, %v895
    %1977 = vmatprep.subr.mxu0 0.0
    %1978 = vmatpush1.msra.mxu0 0.0
    %1979 = vmatprep.subr.mxu0 0.0
    %1980 = vmatpush1.msra.mxu0 0.0
    %1981 = vmatprep.subr.mxu0 0.0
    %1982 = vmatpush1.msra.mxu0 0.0
    %1983 = vmatprep.subr.mxu0 0.0
    %1984 = vmatpush1.msra.mxu0 0.0
    %1985 = vmatprep.subr.mxu0 0.0
    %1986 = vmatpush1.msra.mxu0 0.0
    %1987 = vmatprep.subr.mxu0 0.0
    %1988 = vmatpush1.msra.mxu0 0.0
    %1989 = vmatprep.subr.mxu0 0.0
    %1990 = vmatpush1.msra.mxu0 0.0
    %1991 = vmatprep.subr.mxu0 0.0
    %1992 = vmatpush1.msra.mxu0 0.0
    %1993 = vmatprep.subr.mxu0 0.0
    %1994 = vmatpush1.msra.mxu0 0.0
    %1995 = vmatprep.subr.mxu0 0.0
    %1996 = vmatpush1.msra.mxu0 0.0
    %1997 = vmatprep.subr.mxu0 0.0
    %1998 = vmatpush1.msra.mxu0 0.0
    %1999 = vmatprep.subr.mxu0 0.0
    %2000 = vmatpush1.msra.mxu0 0.0
    %2001 = vmatprep.subr.mxu0 0.0
    %2002 = vmatpush1.msra.mxu0 0.0
    %2003 = vmatprep.subr.mxu0 0.0
    %2004 = vmatpush1.msra.mxu0 0.0
    %2005 = vmatprep.subr.mxu0 0.0
    %2006 = vmatpush1.msra.mxu0 %v1976
    %2007 = vmatprep.subr.mxu0 0.0
    %2008 = vmatpush1.msra.mxu0 %v1975
    %2009 = vmatprep.subr.mxu0 0.0
    %2010 = vmatpush2.msra.mxu0 0.0
    %2011 = vmatprep.subr.mxu0 0.0
    %2012 = vmatpush2.msra.mxu0 0.0
    %2013 = vmatprep.subr.mxu0 0.0
    %2014 = vmatpush2.msra.mxu0 0.0
    %2015 = vmatprep.subr.mxu0 0.0
    %2016 = vmatpush2.msra.mxu0 0.0
    %2017 = vmatprep.subr.mxu0 0.0
    %2018 = vmatpush2.msra.mxu0 0.0
    %2019 = vmatprep.subr.mxu0 0.0
    %2020 = vmatpush2.msra.mxu0 0.0
    %2021 = vmatprep.subr.mxu0 0.0
    %2022 = vmatpush2.msra.mxu0 0.0
    %2023 = vmatprep.subr.mxu0 0.0
    %2024 = vmatpush2.msra.mxu0 0.0
    %2025 = vmatprep.subr.mxu0 0.0
    %2026 = vmatpush2.msra.mxu0 0.0
    %2027 = vmatprep.subr.mxu0 0.0
    %2028 = vmatpush2.msra.mxu0 0.0
    %2029 = vmatprep.subr.mxu0 0.0
    %2030 = vmatpush2.msra.mxu0 0.0
    %2031 = vmatprep.subr.mxu0 0.0
    %2032 = vmatpush2.msra.mxu0 0.0
    %2033 = vmatprep.subr.mxu0 0.0
    %2034 = vmatpush2.msra.mxu0 0.0
    %2035 = vmatprep.subr.mxu0 0.0
    %2036 = vmatpush2.msra.mxu0 0.0
    %2037 = vmatprep.subr.mxu0 0.0
    %2038 = vmatpush2.msra.mxu0 0.0
    %2039 = vmatprep.subr.mxu0 0.0
    %2040 = vmatpush2.msra.mxu0 0.0
    %2041 = vmatprep.mubr.f32.mxu0 0.0
    %2042 = vmatmul.mubr.f32.gmra.mxu0 %v1392
    %v2043 = vpop.f32.mrf.mxu0
    %v2044 = vadd.f32 0.0, %v2043
    %v2045 = vpop.f32.mrf.mxu0
    %2046 = vdwg.mxu0
    %2047 = vmatprep.subr.mxu0 0.0
    %2048 = vmatpush1.msra.mxu0 0.0
    %2049 = vmatprep.subr.mxu0 0.0
    %2050 = vmatpush1.msra.mxu0 0.0
    %2051 = vmatprep.subr.mxu0 0.0
    %2052 = vmatpush1.msra.mxu0 0.0
    %2053 = vmatprep.subr.mxu0 0.0
    %2054 = vmatpush1.msra.mxu0 0.0
    %2055 = vmatprep.subr.mxu0 0.0
    %2056 = vmatpush1.msra.mxu0 0.0
    %2057 = vmatprep.subr.mxu0 0.0
    %2058 = vmatpush1.msra.mxu0 0.0
    %2059 = vmatprep.subr.mxu0 0.0
    %2060 = vmatpush1.msra.mxu0 0.0
    %2061 = vmatprep.subr.mxu0 0.0
    %2062 = vmatpush1.msra.mxu0 0.0
    %2063 = vmatprep.subr.mxu0 0.0
    %2064 = vmatpush1.msra.mxu0 0.0
    %2065 = vmatprep.subr.mxu0 0.0
    %2066 = vmatpush1.msra.mxu0 0.0
    %2067 = vmatprep.subr.mxu0 0.0
    %2068 = vmatpush1.msra.mxu0 0.0
    %2069 = vmatprep.subr.mxu0 0.0
    %2070 = vmatpush1.msra.mxu0 0.0
    %2071 = vmatprep.subr.mxu0 0.0
    %2072 = vmatpush1.msra.mxu0 0.0
    %2073 = vmatprep.subr.mxu0 0.0
    %2074 = vmatpush1.msra.mxu0 0.0
    %2075 = vmatprep.subr.mxu0 0.0
    %2076 = vmatpush1.msra.mxu0 %v1974
    %2077 = vmatprep.subr.mxu0 0.0
    %2078 = vmatpush1.msra.mxu0 %v1972
    %2079 = vmatprep.subr.mxu0 0.0
    %2080 = vmatpush2.msra.mxu0 0.0
    %2081 = vmatprep.subr.mxu0 0.0
    %2082 = vmatpush2.msra.mxu0 0.0
    %2083 = vmatprep.subr.mxu0 0.0
    %2084 = vmatpush2.msra.mxu0 0.0
    %2085 = vmatprep.subr.mxu0 0.0
    %2086 = vmatpush2.msra.mxu0 0.0
    %2087 = vmatprep.subr.mxu0 0.0
    %2088 = vmatpush2.msra.mxu0 0.0
    %2089 = vmatprep.subr.mxu0 0.0
    %2090 = vmatpush2.msra.mxu0 0.0
    %2091 = vmatprep.subr.mxu0 0.0
    %2092 = vmatpush2.msra.mxu0 0.0
    %2093 = vmatprep.subr.mxu0 0.0
    %2094 = vmatpush2.msra.mxu0 0.0
    %2095 = vmatprep.subr.mxu0 0.0
    %2096 = vmatpush2.msra.mxu0 0.0
    %2097 = vmatprep.subr.mxu0 0.0
    %2098 = vmatpush2.msra.mxu0 0.0
    %2099 = vmatprep.subr.mxu0 0.0
    %2100 = vmatpush2.msra.mxu0 0.0
    %2101 = vmatprep.subr.mxu0 0.0
    %2102 = vmatpush2.msra.mxu0 0.0
    %2103 = vmatprep.subr.mxu0 0.0
    %2104 = vmatpush2.msra.mxu0 0.0
    %2105 = vmatprep.subr.mxu0 0.0
    %2106 = vmatpush2.msra.mxu0 0.0
    %2107 = vmatprep.subr.mxu0 0.0
    %2108 = vmatpush2.msra.mxu0 0.0
    %2109 = vmatprep.subr.mxu0 0.0
    %2110 = vmatpush2.msra.mxu0 0.0
    %2111 = vmatprep.mubr.f32.mxu0 0.0
    %2112 = vmatmul.mubr.f32.gmra.mxu0 %v1392
    %v2113 = vpop.f32.mrf.mxu0
    %v2114 = vadd.f32 0.0, %v2113
    %v2115 = vpop.f32.mrf.mxu0
    %2116 = vdwg.mxu0
    %v2117 = vrcp.pop %v2114
    %2119 = vset.pattern.permute.xlu0 0
    %2120 = vperm.xlu0 %2119, %v2117
    %v2121 = vpop.permute.xlu0 %2120
    %v2123 = vmul.f32 %v2044, %v2121
    %2124 = vst.msk [vmem:[#allocation2 + $0x2] sm:$0x3] %vm1269, %v2123
    %v2126 = vrot.slane %v2123, 6
    %2127 = vrot.lane.b32.xlu0 %v2126, 32
    %v2128 = vpop.permute.xlu0 %2127
    %v2130 = vsel %vm724, %v1742, %v2128
    %v2131 = vld [vmem:[%s14] sm:$0xff]
    %v2132 = vld [vmem:[%s14 + $0x8] sm:$0xff]
    %v2133 = vld [vmem:[%s14 + $0x10] sm:$0xff]
    %v2134 = vld [vmem:[%s14 + $0x18] sm:$0xff]
    %v2135 = vld [vmem:[%s14 + $0x20] sm:$0xff]
    %v2136 = vld [vmem:[%s14 + $0x28] sm:$0xff]
    %v2137 = vld [vmem:[%s14 + $0x30] sm:$0xff]
    %v2138 = vld [vmem:[%s14 + $0x38] sm:$0xff]
    %v2139 = vld [vmem:[%s15] sm:$0x1]
    %v2141 = vlaneseq
    %v2142 = vshrl.u32 %v2141, 7
    %v2143 = vsub.s32 0, %v2142
    %v2144 = vrot.slane %v2139, %v2143
    %v2147 = vrot.slane %v2130, 2
    %v2148 = vsel %vm1170, %v2147, 0
    %2150 = vmatprep.subr.mxu0 0.0
    %2151 = vmatpush1.msra.mxu0 0.0
    %2152 = vmatprep.subr.mxu0 0.0
    %2153 = vmatpush1.msra.mxu0 0.0
    %2154 = vmatprep.subr.mxu0 0.0
    %2155 = vmatpush1.msra.mxu0 0.0
    %2156 = vmatprep.subr.mxu0 0.0
    %2157 = vmatpush1.msra.mxu0 0.0
    %2158 = vmatprep.subr.mxu0 0.0
    %2159 = vmatpush1.msra.mxu0 0.0
    %2160 = vmatprep.subr.mxu0 0.0
    %2161 = vmatpush1.msra.mxu0 0.0
    %2162 = vmatprep.subr.mxu0 0.0
    %2163 = vmatpush1.msra.mxu0 0.0
    %2164 = vmatprep.subr.mxu0 0.0
    %2165 = vmatpush1.msra.mxu0 0.0
    %2166 = vmatprep.subr.mxu0 0.0
    %2167 = vmatpush1.msra.mxu0 %v2138
    %2168 = vmatprep.subr.mxu0 0.0
    %2169 = vmatpush1.msra.mxu0 %v2137
    %2170 = vmatprep.subr.mxu0 0.0
    %2171 = vmatpush1.msra.mxu0 %v2136
    %2172 = vmatprep.subr.mxu0 0.0
    %2173 = vmatpush1.msra.mxu0 %v2135
    %2174 = vmatprep.subr.mxu0 0.0
    %2175 = vmatpush1.msra.mxu0 %v2134
    %2176 = vmatprep.subr.mxu0 0.0
    %2177 = vmatpush1.msra.mxu0 %v2133
    %2178 = vmatprep.subr.mxu0 0.0
    %2179 = vmatpush1.msra.mxu0 %v2132
    %2180 = vmatprep.subr.mxu0 0.0
    %2181 = vmatpush1.msra.mxu0 %v2131
    %2182 = vmatprep.subr.mxu0 0.0
    %2183 = vmatpush2.msra.mxu0 0.0
    %2184 = vmatprep.subr.mxu0 0.0
    %2185 = vmatpush2.msra.mxu0 0.0
    %2186 = vmatprep.subr.mxu0 0.0
    %2187 = vmatpush2.msra.mxu0 0.0
    %2188 = vmatprep.subr.mxu0 0.0
    %2189 = vmatpush2.msra.mxu0 0.0
    %2190 = vmatprep.subr.mxu0 0.0
    %2191 = vmatpush2.msra.mxu0 0.0
    %2192 = vmatprep.subr.mxu0 0.0
    %2193 = vmatpush2.msra.mxu0 0.0
    %2194 = vmatprep.subr.mxu0 0.0
    %2195 = vmatpush2.msra.mxu0 0.0
    %2196 = vmatprep.subr.mxu0 0.0
    %2197 = vmatpush2.msra.mxu0 0.0
    %2198 = vmatprep.subr.mxu0 0.0
    %2199 = vmatpush2.msra.mxu0 0.0
    %2200 = vmatprep.subr.mxu0 0.0
    %2201 = vmatpush2.msra.mxu0 0.0
    %2202 = vmatprep.subr.mxu0 0.0
    %2203 = vmatpush2.msra.mxu0 0.0
    %2204 = vmatprep.subr.mxu0 0.0
    %2205 = vmatpush2.msra.mxu0 0.0
    %2206 = vmatprep.subr.mxu0 0.0
    %2207 = vmatpush2.msra.mxu0 0.0
    %2208 = vmatprep.subr.mxu0 0.0
    %2209 = vmatpush2.msra.mxu0 0.0
    %2210 = vmatprep.subr.mxu0 0.0
    %2211 = vmatpush2.msra.mxu0 0.0
    %2212 = vmatprep.subr.mxu0 0.0
    %2213 = vmatpush2.msra.mxu0 0.0
    %2214 = vmatprep.mubr.f32.mxu0 0.0
    %2215 = vmatmul.mubr.f32.gmra.mxu0 %v2148
    %v2216 = vpop.f32.mrf.mxu0
    %v2217 = vadd.f32 %v2144, %v2216
    %v2218 = vpop.f32.mrf.mxu0
    %2219 = vdwg.mxu0
    %v2220 = vld [vmem:[%s9] sm:$0xff]
    %v2221 = vld [vmem:[%s9 + $0x8] sm:$0xff]
    %v2222 = vld [vmem:[%s9 + $0x10] sm:$0xff]
    %v2223 = vld [vmem:[%s9 + $0x18] sm:$0xff]
    %v2225 = vsel %vm724, %v2217, 0
    %2227 = vmatprep.subr.mxu0 0.0
    %2228 = vmatpush1.msra.mxu0 0.0
    %2229 = vmatprep.subr.mxu0 0.0
    %2230 = vmatpush1.msra.mxu0 0.0
    %2231 = vmatprep.subr.mxu0 0.0
    %2232 = vmatpush1.msra.mxu0 0.0
    %2233 = vmatprep.subr.mxu0 0.0
    %2234 = vmatpush1.msra.mxu0 0.0
    %2235 = vmatprep.subr.mxu0 0.0
    %2236 = vmatpush1.msra.mxu0 0.0
    %2237 = vmatprep.subr.mxu0 0.0
    %2238 = vmatpush1.msra.mxu0 0.0
    %2239 = vmatprep.subr.mxu0 0.0
    %2240 = vmatpush1.msra.mxu0 0.0
    %2241 = vmatprep.subr.mxu0 0.0
    %2242 = vmatpush1.msra.mxu0 0.0
    %2243 = vmatprep.subr.mxu0 0.0
    %2244 = vmatpush1.msra.mxu0 0.0
    %2245 = vmatprep.subr.mxu0 0.0
    %2246 = vmatpush1.msra.mxu0 0.0
    %2247 = vmatprep.subr.mxu0 0.0
    %2248 = vmatpush1.msra.mxu0 0.0
    %2249 = vmatprep.subr.mxu0 0.0
    %2250 = vmatpush1.msra.mxu0 0.0
    %2251 = vmatprep.subr.mxu0 0.0
    %2252 = vmatpush1.msra.mxu0 %v2223
    %2253 = vmatprep.subr.mxu0 0.0
    %2254 = vmatpush1.msra.mxu0 %v2222
    %2255 = vmatprep.subr.mxu0 0.0
    %2256 = vmatpush1.msra.mxu0 %v2221
    %2257 = vmatprep.subr.mxu0 0.0
    %2258 = vmatpush1.msra.mxu0 %v2220
    %2259 = vmatprep.subr.mxu0 0.0
    %2260 = vmatpush2.msra.mxu0 0.0
    %2261 = vmatprep.subr.mxu0 0.0
    %2262 = vmatpush2.msra.mxu0 0.0
    %2263 = vmatprep.subr.mxu0 0.0
    %2264 = vmatpush2.msra.mxu0 0.0
    %2265 = vmatprep.subr.mxu0 0.0
    %2266 = vmatpush2.msra.mxu0 0.0
    %2267 = vmatprep.subr.mxu0 0.0
    %2268 = vmatpush2.msra.mxu0 0.0
    %2269 = vmatprep.subr.mxu0 0.0
    %2270 = vmatpush2.msra.mxu0 0.0
    %2271 = vmatprep.subr.mxu0 0.0
    %2272 = vmatpush2.msra.mxu0 0.0
    %2273 = vmatprep.subr.mxu0 0.0
    %2274 = vmatpush2.msra.mxu0 0.0
    %2275 = vmatprep.subr.mxu0 0.0
    %2276 = vmatpush2.msra.mxu0 0.0
    %2277 = vmatprep.subr.mxu0 0.0
    %2278 = vmatpush2.msra.mxu0 0.0
    %2279 = vmatprep.subr.mxu0 0.0
    %2280 = vmatpush2.msra.mxu0 0.0
    %2281 = vmatprep.subr.mxu0 0.0
    %2282 = vmatpush2.msra.mxu0 0.0
    %2283 = vmatprep.subr.mxu0 0.0
    %2284 = vmatpush2.msra.mxu0 0.0
    %2285 = vmatprep.subr.mxu0 0.0
    %2286 = vmatpush2.msra.mxu0 0.0
    %2287 = vmatprep.subr.mxu0 0.0
    %2288 = vmatpush2.msra.mxu0 0.0
    %2289 = vmatprep.subr.mxu0 0.0
    %2290 = vmatpush2.msra.mxu0 0.0
    %2291 = vmatprep.mubr.f32.mxu0 0.0
    %2292 = vmatmul.mubr.f32.gmra.mxu0 %v2225
    %v2293 = vpop.f32.mrf.mxu0
    %v2294 = vadd.f32 0.0, %v2293
    %v2295 = vpop.f32.mrf.mxu0
    %2296 = vdwg.mxu0
    %v2298 = vrot.slane %v2294, 4
    %v2300 = vadd.f32 %v989, %v2298
    %v2301 = vmul.f32 %v2300, %v1005
    %v2302 = vtanh.pop %v2301
    %v2303 = vmul.f32 %v1005, %v2302
    %v2304 = vadd.f32 %v2303, %v1006
    %v2306 = vrot.slane %v1733, 6
    %v2308 = vmul.f32 %v2304, %v2306
    %2310 = vrot.lane.b32.xlu0 %v2304, 64
    %v2311 = vpop.permute.xlu0 %2310
    %v2313 = vmul.f32 %v2304, %v2311
    %2315 = vrot.lane.b32.xlu0 %v2313, 32
    %v2316 = vpop.permute.xlu0 %2315
    %v2318 = vadd.f32 %v2308, %v2316
    %v2319 = vtanh.pop %v2318
    %2321 = vrot.lane.b32.xlu0 %v2319, 64
    %v2322 = vpop.permute.xlu0 %2321
    %v2324 = vmul.f32 %v2304, %v2322
    %2326 = vrot.lane.b32.xlu0 %v2324, 32
    %v2327 = vpop.permute.xlu0 %2326
    %v2329 = vrot.slane %v1858, 4
    %2330 = vrot.lane.b32.xlu0 %v2329, 64
    %v2331 = vpop.permute.xlu0 %2330
    %v2333 = vsel %vm724, %v2327, %v2331
    %v2334 = vld [vmem:[%s10] sm:$0xff]
    %v2335 = vld [vmem:[%s10 + $0x8] sm:$0xff]
    %v2336 = vld [vmem:[%s10 + $0x10] sm:$0xff]
    %v2337 = vld [vmem:[%s10 + $0x18] sm:$0xff]
    %v2338 = vld [vmem:[%s10 + $0x20] sm:$0xff]
    %v2339 = vld [vmem:[%s10 + $0x28] sm:$0xff]
    %v2340 = vld [vmem:[%s10 + $0x30] sm:$0xff]
    %v2341 = vld [vmem:[%s10 + $0x38] sm:$0xff]
    %v2342 = vld [vmem:[%s11] sm:$0x1]
    %v2344 = vlaneseq
    %v2345 = vshrl.u32 %v2344, 7
    %v2346 = vsub.s32 0, %v2345
    %v2347 = vrot.slane %v2342, %v2346
    %v2350 = vrot.slane %v2333, 4
    %v2351 = vsel %vm1170, %v2350, 0
    %2353 = vmatprep.subr.mxu0 0.0
    %2354 = vmatpush1.msra.mxu0 0.0
    %2355 = vmatprep.subr.mxu0 0.0
    %2356 = vmatpush1.msra.mxu0 0.0
    %2357 = vmatprep.subr.mxu0 0.0
    %2358 = vmatpush1.msra.mxu0 0.0
    %2359 = vmatprep.subr.mxu0 0.0
    %2360 = vmatpush1.msra.mxu0 0.0
    %2361 = vmatprep.subr.mxu0 0.0
    %2362 = vmatpush1.msra.mxu0 0.0
    %2363 = vmatprep.subr.mxu0 0.0
    %2364 = vmatpush1.msra.mxu0 0.0
    %2365 = vmatprep.subr.mxu0 0.0
    %2366 = vmatpush1.msra.mxu0 0.0
    %2367 = vmatprep.subr.mxu0 0.0
    %2368 = vmatpush1.msra.mxu0 0.0
    %2369 = vmatprep.subr.mxu0 0.0
    %2370 = vmatpush1.msra.mxu0 %v2341
    %2371 = vmatprep.subr.mxu0 0.0
    %2372 = vmatpush1.msra.mxu0 %v2340
    %2373 = vmatprep.subr.mxu0 0.0
    %2374 = vmatpush1.msra.mxu0 %v2339
    %2375 = vmatprep.subr.mxu0 0.0
    %2376 = vmatpush1.msra.mxu0 %v2338
    %2377 = vmatprep.subr.mxu0 0.0
    %2378 = vmatpush1.msra.mxu0 %v2337
    %2379 = vmatprep.subr.mxu0 0.0
    %2380 = vmatpush1.msra.mxu0 %v2336
    %2381 = vmatprep.subr.mxu0 0.0
    %2382 = vmatpush1.msra.mxu0 %v2335
    %2383 = vmatprep.subr.mxu0 0.0
    %2384 = vmatpush1.msra.mxu0 %v2334
    %2385 = vmatprep.subr.mxu0 0.0
    %2386 = vmatpush2.msra.mxu0 0.0
    %2387 = vmatprep.subr.mxu0 0.0
    %2388 = vmatpush2.msra.mxu0 0.0
    %2389 = vmatprep.subr.mxu0 0.0
    %2390 = vmatpush2.msra.mxu0 0.0
    %2391 = vmatprep.subr.mxu0 0.0
    %2392 = vmatpush2.msra.mxu0 0.0
    %2393 = vmatprep.subr.mxu0 0.0
    %2394 = vmatpush2.msra.mxu0 0.0
    %2395 = vmatprep.subr.mxu0 0.0
    %2396 = vmatpush2.msra.mxu0 0.0
    %2397 = vmatprep.subr.mxu0 0.0
    %2398 = vmatpush2.msra.mxu0 0.0
    %2399 = vmatprep.subr.mxu0 0.0
    %2400 = vmatpush2.msra.mxu0 0.0
    %2401 = vmatprep.subr.mxu0 0.0
    %2402 = vmatpush2.msra.mxu0 0.0
    %2403 = vmatprep.subr.mxu0 0.0
    %2404 = vmatpush2.msra.mxu0 0.0
    %2405 = vmatprep.subr.mxu0 0.0
    %2406 = vmatpush2.msra.mxu0 0.0
    %2407 = vmatprep.subr.mxu0 0.0
    %2408 = vmatpush2.msra.mxu0 0.0
    %2409 = vmatprep.subr.mxu0 0.0
    %2410 = vmatpush2.msra.mxu0 0.0
    %2411 = vmatprep.subr.mxu0 0.0
    %2412 = vmatpush2.msra.mxu0 0.0
    %2413 = vmatprep.subr.mxu0 0.0
    %2414 = vmatpush2.msra.mxu0 0.0
    %2415 = vmatprep.subr.mxu0 0.0
    %2416 = vmatpush2.msra.mxu0 0.0
    %2417 = vmatprep.mubr.f32.mxu0 0.0
    %2418 = vmatmul.mubr.f32.gmra.mxu0 %v2351
    %v2419 = vpop.f32.mrf.mxu0
    %v2420 = vadd.f32 %v2347, %v2419
    %v2421 = vpop.f32.mrf.mxu0
    %2422 = vdwg.mxu0
    %v2423 = vmul.f32 %v2420, %v1005
    %v2424 = vtanh.pop %v2423
    %v2425 = vmul.f32 %v1005, %v2424
    %v2426 = vadd.f32 %v2425, %v1006
    %v2427 = vmul.f32 %v2426, %v1852
    %2429 = vrot.lane.b32.xlu0 %v2426, 64
    %v2430 = vpop.permute.xlu0 %2429
    %v2432 = vmul.f32 %v2426, %v2430
    %2434 = vrot.lane.b32.xlu0 %v2432, 32
    %v2435 = vpop.permute.xlu0 %2434
    %v2437 = vadd.f32 %v2427, %v2435
    %v2438 = vtanh.pop %v2437
    %2440 = vrot.lane.b32.xlu0 %v2438, 64
    %v2441 = vpop.permute.xlu0 %2440
    %v2443 = vmul.f32 %v2426, %v2441
    %2445 = vrot.lane.b32.xlu0 %v2443, 32
    %v2446 = vpop.permute.xlu0 %2445
    %2448 = vst.msk [vmem:[#allocation3 + $0x4] sm:$0x3] %vm1269, %v2446
    %v2449 = vld [vmem:[%s12] sm:$0xff]
    %v2450 = vld [vmem:[%s12 + $0x8] sm:$0xff]
    %v2451 = vld [vmem:[%s12 + $0x10] sm:$0xff]
    %v2452 = vld [vmem:[%s12 + $0x18] sm:$0xff]
    %v2453 = vsel %vm724, %v2446, 0
    %2455 = vmatprep.subr.mxu0 0.0
    %2456 = vmatpush1.msra.mxu0 0.0
    %2457 = vmatprep.subr.mxu0 0.0
    %2458 = vmatpush1.msra.mxu0 0.0
    %2459 = vmatprep.subr.mxu0 0.0
    %2460 = vmatpush1.msra.mxu0 0.0
    %2461 = vmatprep.subr.mxu0 0.0
    %2462 = vmatpush1.msra.mxu0 0.0
    %2463 = vmatprep.subr.mxu0 0.0
    %2464 = vmatpush1.msra.mxu0 0.0
    %2465 = vmatprep.subr.mxu0 0.0
    %2466 = vmatpush1.msra.mxu0 0.0
    %2467 = vmatprep.subr.mxu0 0.0
    %2468 = vmatpush1.msra.mxu0 0.0
    %2469 = vmatprep.subr.mxu0 0.0
    %2470 = vmatpush1.msra.mxu0 0.0
    %2471 = vmatprep.subr.mxu0 0.0
    %2472 = vmatpush1.msra.mxu0 0.0
    %2473 = vmatprep.subr.mxu0 0.0
    %2474 = vmatpush1.msra.mxu0 0.0
    %2475 = vmatprep.subr.mxu0 0.0
    %2476 = vmatpush1.msra.mxu0 0.0
    %2477 = vmatprep.subr.mxu0 0.0
    %2478 = vmatpush1.msra.mxu0 0.0
    %2479 = vmatprep.subr.mxu0 0.0
    %2480 = vmatpush1.msra.mxu0 %v2452
    %2481 = vmatprep.subr.mxu0 0.0
    %2482 = vmatpush1.msra.mxu0 %v2451
    %2483 = vmatprep.subr.mxu0 0.0
    %2484 = vmatpush1.msra.mxu0 %v2450
    %2485 = vmatprep.subr.mxu0 0.0
    %2486 = vmatpush1.msra.mxu0 %v2449
    %2487 = vmatprep.subr.mxu0 0.0
    %2488 = vmatpush2.msra.mxu0 0.0
    %2489 = vmatprep.subr.mxu0 0.0
    %2490 = vmatpush2.msra.mxu0 0.0
    %2491 = vmatprep.subr.mxu0 0.0
    %2492 = vmatpush2.msra.mxu0 0.0
    %2493 = vmatprep.subr.mxu0 0.0
    %2494 = vmatpush2.msra.mxu0 0.0
    %2495 = vmatprep.subr.mxu0 0.0
    %2496 = vmatpush2.msra.mxu0 0.0
    %2497 = vmatprep.subr.mxu0 0.0
    %2498 = vmatpush2.msra.mxu0 0.0
    %2499 = vmatprep.subr.mxu0 0.0
    %2500 = vmatpush2.msra.mxu0 0.0
    %2501 = vmatprep.subr.mxu0 0.0
    %2502 = vmatpush2.msra.mxu0 0.0
    %2503 = vmatprep.subr.mxu0 0.0
    %2504 = vmatpush2.msra.mxu0 0.0
    %2505 = vmatprep.subr.mxu0 0.0
    %2506 = vmatpush2.msra.mxu0 0.0
    %2507 = vmatprep.subr.mxu0 0.0
    %2508 = vmatpush2.msra.mxu0 0.0
    %2509 = vmatprep.subr.mxu0 0.0
    %2510 = vmatpush2.msra.mxu0 0.0
    %2511 = vmatprep.subr.mxu0 0.0
    %2512 = vmatpush2.msra.mxu0 0.0
    %2513 = vmatprep.subr.mxu0 0.0
    %2514 = vmatpush2.msra.mxu0 0.0
    %2515 = vmatprep.subr.mxu0 0.0
    %2516 = vmatpush2.msra.mxu0 0.0
    %2517 = vmatprep.subr.mxu0 0.0
    %2518 = vmatpush2.msra.mxu0 0.0
    %2519 = vmatprep.mubr.f32.mxu0 0.0
    %2520 = vmatmul.mubr.f32.gmra.mxu0 %v2453
    %v2521 = vpop.f32.mrf.mxu0
    %v2522 = vadd.f32 0.0, %v2521
    %v2523 = vpop.f32.mrf.mxu0
    %2524 = vdwg.mxu0
    %v2525 = vlaneseq
    %v2526 = vshrl.u32 %v2525, 7
    %v2527 = vsub.s32 0, %v2526
    %v2528 = vrot.slane %v2522, %v2527
    %v2529 = vlaneseq
    %v2530 = vshrl.u32 %v2529, 7
    %v2531 = vsub.s32 1, %v2530
    %v2532 = vrot.slane %v2522, %v2531
    %v2533 = vsel %vm1049, %v2532, %v2528
    %v2534 = vsel %vm1050, %v2532, %v2528
    %v2535 = vadd.f32 %v991, %v2533
    %v2536 = vadd.f32 %v997, %v2534
    %v2537 = vmax.f32 %v2535, 0.0
    %v2538 = vmax.f32 %v2536, 0.0
    %v2539 = vmul.f32 %v2537, %v1365
    %v2540 = vmul.f32 %v2538, %v1365
    %v2541 = vsel %vm724, %v2539, 0.0
    %2542 = vadd.xlane.f32.xlu0 %v2541
    %v2543 = vpop.xlane.xlu0 %2542
    %v2544 = vsel %vm724, %v2540, 0.0
    %2545 = vadd.xlane.f32.xlu0 %v2544
    %v2546 = vpop.xlane.xlu0 %2545
    %v2547 = vmax.f32 %v2543, %v2546
    %v2548 = vrot.slane %v2547, 4
    %v2549 = vmax.f32 %v2547, %v2548
    %v2550 = vrot.slane %v2549, 2
    %v2551 = vmax.f32 %v2549, %v2550
    %v2552 = vrot.slane %v2551, 1
    %v2553 = vmax.f32 %v2551, %v2552
    %v2554 = vsub.f32 %v2543, %v2553
    %v2555 = vsub.f32 %v2546, %v2553
    %v2556 = vmul.f32 %v2554, 1.442695
    %v2557 = vpow.pop %v2556
    %v2558 = vmul.f32 %v2555, 1.442695
    %v2559 = vpow.pop %v2558
    %v2560 = vmul.f32 %v2557, %v894
    %v2561 = vmul.f32 %v2559, %v895
    %2562 = vmatprep.subr.mxu0 0.0
    %2563 = vmatpush1.msra.mxu0 0.0
    %2564 = vmatprep.subr.mxu0 0.0
    %2565 = vmatpush1.msra.mxu0 0.0
    %2566 = vmatprep.subr.mxu0 0.0
    %2567 = vmatpush1.msra.mxu0 0.0
    %2568 = vmatprep.subr.mxu0 0.0
    %2569 = vmatpush1.msra.mxu0 0.0
    %2570 = vmatprep.subr.mxu0 0.0
    %2571 = vmatpush1.msra.mxu0 0.0
    %2572 = vmatprep.subr.mxu0 0.0
    %2573 = vmatpush1.msra.mxu0 0.0
    %2574 = vmatprep.subr.mxu0 0.0
    %2575 = vmatpush1.msra.mxu0 0.0
    %2576 = vmatprep.subr.mxu0 0.0
    %2577 = vmatpush1.msra.mxu0 0.0
    %2578 = vmatprep.subr.mxu0 0.0
    %2579 = vmatpush1.msra.mxu0 0.0
    %2580 = vmatprep.subr.mxu0 0.0
    %2581 = vmatpush1.msra.mxu0 0.0
    %2582 = vmatprep.subr.mxu0 0.0
    %2583 = vmatpush1.msra.mxu0 0.0
    %2584 = vmatprep.subr.mxu0 0.0
    %2585 = vmatpush1.msra.mxu0 0.0
    %2586 = vmatprep.subr.mxu0 0.0
    %2587 = vmatpush1.msra.mxu0 0.0
    %2588 = vmatprep.subr.mxu0 0.0
    %2589 = vmatpush1.msra.mxu0 0.0
    %2590 = vmatprep.subr.mxu0 0.0
    %2591 = vmatpush1.msra.mxu0 %v2561
    %2592 = vmatprep.subr.mxu0 0.0
    %2593 = vmatpush1.msra.mxu0 %v2560
    %2594 = vmatprep.subr.mxu0 0.0
    %2595 = vmatpush2.msra.mxu0 0.0
    %2596 = vmatprep.subr.mxu0 0.0
    %2597 = vmatpush2.msra.mxu0 0.0
    %2598 = vmatprep.subr.mxu0 0.0
    %2599 = vmatpush2.msra.mxu0 0.0
    %2600 = vmatprep.subr.mxu0 0.0
    %2601 = vmatpush2.msra.mxu0 0.0
    %2602 = vmatprep.subr.mxu0 0.0
    %2603 = vmatpush2.msra.mxu0 0.0
    %2604 = vmatprep.subr.mxu0 0.0
    %2605 = vmatpush2.msra.mxu0 0.0
    %2606 = vmatprep.subr.mxu0 0.0
    %2607 = vmatpush2.msra.mxu0 0.0
    %2608 = vmatprep.subr.mxu0 0.0
    %2609 = vmatpush2.msra.mxu0 0.0
    %2610 = vmatprep.subr.mxu0 0.0
    %2611 = vmatpush2.msra.mxu0 0.0
    %2612 = vmatprep.subr.mxu0 0.0
    %2613 = vmatpush2.msra.mxu0 0.0
    %2614 = vmatprep.subr.mxu0 0.0
    %2615 = vmatpush2.msra.mxu0 0.0
    %2616 = vmatprep.subr.mxu0 0.0
    %2617 = vmatpush2.msra.mxu0 0.0
    %2618 = vmatprep.subr.mxu0 0.0
    %2619 = vmatpush2.msra.mxu0 0.0
    %2620 = vmatprep.subr.mxu0 0.0
    %2621 = vmatpush2.msra.mxu0 0.0
    %2622 = vmatprep.subr.mxu0 0.0
    %2623 = vmatpush2.msra.mxu0 0.0
    %2624 = vmatprep.subr.mxu0 0.0
    %2625 = vmatpush2.msra.mxu0 0.0
    %2626 = vmatprep.mubr.f32.mxu0 0.0
    %2627 = vmatmul.mubr.f32.gmra.mxu0 %v1392
    %v2628 = vpop.f32.mrf.mxu0
    %v2629 = vadd.f32 0.0, %v2628
    %v2630 = vpop.f32.mrf.mxu0
    %2631 = vdwg.mxu0
    %2632 = vmatprep.subr.mxu0 0.0
    %2633 = vmatpush1.msra.mxu0 0.0
    %2634 = vmatprep.subr.mxu0 0.0
    %2635 = vmatpush1.msra.mxu0 0.0
    %2636 = vmatprep.subr.mxu0 0.0
    %2637 = vmatpush1.msra.mxu0 0.0
    %2638 = vmatprep.subr.mxu0 0.0
    %2639 = vmatpush1.msra.mxu0 0.0
    %2640 = vmatprep.subr.mxu0 0.0
    %2641 = vmatpush1.msra.mxu0 0.0
    %2642 = vmatprep.subr.mxu0 0.0
    %2643 = vmatpush1.msra.mxu0 0.0
    %2644 = vmatprep.subr.mxu0 0.0
    %2645 = vmatpush1.msra.mxu0 0.0
    %2646 = vmatprep.subr.mxu0 0.0
    %2647 = vmatpush1.msra.mxu0 0.0
    %2648 = vmatprep.subr.mxu0 0.0
    %2649 = vmatpush1.msra.mxu0 0.0
    %2650 = vmatprep.subr.mxu0 0.0
    %2651 = vmatpush1.msra.mxu0 0.0
    %2652 = vmatprep.subr.mxu0 0.0
    %2653 = vmatpush1.msra.mxu0 0.0
    %2654 = vmatprep.subr.mxu0 0.0
    %2655 = vmatpush1.msra.mxu0 0.0
    %2656 = vmatprep.subr.mxu0 0.0
    %2657 = vmatpush1.msra.mxu0 0.0
    %2658 = vmatprep.subr.mxu0 0.0
    %2659 = vmatpush1.msra.mxu0 0.0
    %2660 = vmatprep.subr.mxu0 0.0
    %2661 = vmatpush1.msra.mxu0 %v2559
    %2662 = vmatprep.subr.mxu0 0.0
    %2663 = vmatpush1.msra.mxu0 %v2557
    %2664 = vmatprep.subr.mxu0 0.0
    %2665 = vmatpush2.msra.mxu0 0.0
    %2666 = vmatprep.subr.mxu0 0.0
    %2667 = vmatpush2.msra.mxu0 0.0
    %2668 = vmatprep.subr.mxu0 0.0
    %2669 = vmatpush2.msra.mxu0 0.0
    %2670 = vmatprep.subr.mxu0 0.0
    %2671 = vmatpush2.msra.mxu0 0.0
    %2672 = vmatprep.subr.mxu0 0.0
    %2673 = vmatpush2.msra.mxu0 0.0
    %2674 = vmatprep.subr.mxu0 0.0
    %2675 = vmatpush2.msra.mxu0 0.0
    %2676 = vmatprep.subr.mxu0 0.0
    %2677 = vmatpush2.msra.mxu0 0.0
    %2678 = vmatprep.subr.mxu0 0.0
    %2679 = vmatpush2.msra.mxu0 0.0
    %2680 = vmatprep.subr.mxu0 0.0
    %2681 = vmatpush2.msra.mxu0 0.0
    %2682 = vmatprep.subr.mxu0 0.0
    %2683 = vmatpush2.msra.mxu0 0.0
    %2684 = vmatprep.subr.mxu0 0.0
    %2685 = vmatpush2.msra.mxu0 0.0
    %2686 = vmatprep.subr.mxu0 0.0
    %2687 = vmatpush2.msra.mxu0 0.0
    %2688 = vmatprep.subr.mxu0 0.0
    %2689 = vmatpush2.msra.mxu0 0.0
    %2690 = vmatprep.subr.mxu0 0.0
    %2691 = vmatpush2.msra.mxu0 0.0
    %2692 = vmatprep.subr.mxu0 0.0
    %2693 = vmatpush2.msra.mxu0 0.0
    %2694 = vmatprep.subr.mxu0 0.0
    %2695 = vmatpush2.msra.mxu0 0.0
    %2696 = vmatprep.mubr.f32.mxu0 0.0
    %2697 = vmatmul.mubr.f32.gmra.mxu0 %v1392
    %v2698 = vpop.f32.mrf.mxu0
    %v2699 = vadd.f32 0.0, %v2698
    %v2700 = vpop.f32.mrf.mxu0
    %2701 = vdwg.mxu0
    %v2702 = vrcp.pop %v2699
    %2704 = vset.pattern.permute.xlu0 0
    %2705 = vperm.xlu0 %2704, %v2702
    %v2706 = vpop.permute.xlu0 %2705
    %v2708 = vmul.f32 %v2629, %v2706
    %2709 = vst.msk [vmem:[#allocation2 + $0x4] sm:$0x3] %vm1269, %v2708
    %v2711 = vrot.slane %v2708, 4
    %2712 = vrot.lane.b32.xlu0 %v2711, 32
    %v2713 = vpop.permute.xlu0 %2712
    %v2715 = vsel %vm724, %v2327, %v2713
    %v2716 = vld [vmem:[%s14] sm:$0xff]
    %v2717 = vld [vmem:[%s14 + $0x8] sm:$0xff]
    %v2718 = vld [vmem:[%s14 + $0x10] sm:$0xff]
    %v2719 = vld [vmem:[%s14 + $0x18] sm:$0xff]
    %v2720 = vld [vmem:[%s14 + $0x20] sm:$0xff]
    %v2721 = vld [vmem:[%s14 + $0x28] sm:$0xff]
    %v2722 = vld [vmem:[%s14 + $0x30] sm:$0xff]
    %v2723 = vld [vmem:[%s14 + $0x38] sm:$0xff]
    %v2724 = vld [vmem:[%s15] sm:$0x1]
    %v2726 = vlaneseq
    %v2727 = vshrl.u32 %v2726, 7
    %v2728 = vsub.s32 0, %v2727
    %v2729 = vrot.slane %v2724, %v2728
    %v2732 = vrot.slane %v2715, 4
    %v2733 = vsel %vm1170, %v2732, 0
    %2735 = vmatprep.subr.mxu0 0.0
    %2736 = vmatpush1.msra.mxu0 0.0
    %2737 = vmatprep.subr.mxu0 0.0
    %2738 = vmatpush1.msra.mxu0 0.0
    %2739 = vmatprep.subr.mxu0 0.0
    %2740 = vmatpush1.msra.mxu0 0.0
    %2741 = vmatprep.subr.mxu0 0.0
    %2742 = vmatpush1.msra.mxu0 0.0
    %2743 = vmatprep.subr.mxu0 0.0
    %2744 = vmatpush1.msra.mxu0 0.0
    %2745 = vmatprep.subr.mxu0 0.0
    %2746 = vmatpush1.msra.mxu0 0.0
    %2747 = vmatprep.subr.mxu0 0.0
    %2748 = vmatpush1.msra.mxu0 0.0
    %2749 = vmatprep.subr.mxu0 0.0
    %2750 = vmatpush1.msra.mxu0 0.0
    %2751 = vmatprep.subr.mxu0 0.0
    %2752 = vmatpush1.msra.mxu0 %v2723
    %2753 = vmatprep.subr.mxu0 0.0
    %2754 = vmatpush1.msra.mxu0 %v2722
    %2755 = vmatprep.subr.mxu0 0.0
    %2756 = vmatpush1.msra.mxu0 %v2721
    %2757 = vmatprep.subr.mxu0 0.0
    %2758 = vmatpush1.msra.mxu0 %v2720
    %2759 = vmatprep.subr.mxu0 0.0
    %2760 = vmatpush1.msra.mxu0 %v2719
    %2761 = vmatprep.subr.mxu0 0.0
    %2762 = vmatpush1.msra.mxu0 %v2718
    %2763 = vmatprep.subr.mxu0 0.0
    %2764 = vmatpush1.msra.mxu0 %v2717
    %2765 = vmatprep.subr.mxu0 0.0
    %2766 = vmatpush1.msra.mxu0 %v2716
    %2767 = vmatprep.subr.mxu0 0.0
    %2768 = vmatpush2.msra.mxu0 0.0
    %2769 = vmatprep.subr.mxu0 0.0
    %2770 = vmatpush2.msra.mxu0 0.0
    %2771 = vmatprep.subr.mxu0 0.0
    %2772 = vmatpush2.msra.mxu0 0.0
    %2773 = vmatprep.subr.mxu0 0.0
    %2774 = vmatpush2.msra.mxu0 0.0
    %2775 = vmatprep.subr.mxu0 0.0
    %2776 = vmatpush2.msra.mxu0 0.0
    %2777 = vmatprep.subr.mxu0 0.0
    %2778 = vmatpush2.msra.mxu0 0.0
    %2779 = vmatprep.subr.mxu0 0.0
    %2780 = vmatpush2.msra.mxu0 0.0
    %2781 = vmatprep.subr.mxu0 0.0
    %2782 = vmatpush2.msra.mxu0 0.0
    %2783 = vmatprep.subr.mxu0 0.0
    %2784 = vmatpush2.msra.mxu0 0.0
    %2785 = vmatprep.subr.mxu0 0.0
    %2786 = vmatpush2.msra.mxu0 0.0
    %2787 = vmatprep.subr.mxu0 0.0
    %2788 = vmatpush2.msra.mxu0 0.0
    %2789 = vmatprep.subr.mxu0 0.0
    %2790 = vmatpush2.msra.mxu0 0.0
    %2791 = vmatprep.subr.mxu0 0.0
    %2792 = vmatpush2.msra.mxu0 0.0
    %2793 = vmatprep.subr.mxu0 0.0
    %2794 = vmatpush2.msra.mxu0 0.0
    %2795 = vmatprep.subr.mxu0 0.0
    %2796 = vmatpush2.msra.mxu0 0.0
    %2797 = vmatprep.subr.mxu0 0.0
    %2798 = vmatpush2.msra.mxu0 0.0
    %2799 = vmatprep.mubr.f32.mxu0 0.0
    %2800 = vmatmul.mubr.f32.gmra.mxu0 %v2733
    %v2801 = vpop.f32.mrf.mxu0
    %v2802 = vadd.f32 %v2729, %v2801
    %v2803 = vpop.f32.mrf.mxu0
    %2804 = vdwg.mxu0
    %v2805 = vld [vmem:[%s9] sm:$0xff]
    %v2806 = vld [vmem:[%s9 + $0x8] sm:$0xff]
    %v2807 = vld [vmem:[%s9 + $0x10] sm:$0xff]
    %v2808 = vld [vmem:[%s9 + $0x18] sm:$0xff]
    %v2810 = vsel %vm724, %v2802, 0
    %2812 = vmatprep.subr.mxu0 0.0
    %2813 = vmatpush1.msra.mxu0 0.0
    %2814 = vmatprep.subr.mxu0 0.0
    %2815 = vmatpush1.msra.mxu0 0.0
    %2816 = vmatprep.subr.mxu0 0.0
    %2817 = vmatpush1.msra.mxu0 0.0
    %2818 = vmatprep.subr.mxu0 0.0
    %2819 = vmatpush1.msra.mxu0 0.0
    %2820 = vmatprep.subr.mxu0 0.0
    %2821 = vmatpush1.msra.mxu0 0.0
    %2822 = vmatprep.subr.mxu0 0.0
    %2823 = vmatpush1.msra.mxu0 0.0
    %2824 = vmatprep.subr.mxu0 0.0
    %2825 = vmatpush1.msra.mxu0 0.0
    %2826 = vmatprep.subr.mxu0 0.0
    %2827 = vmatpush1.msra.mxu0 0.0
    %2828 = vmatprep.subr.mxu0 0.0
    %2829 = vmatpush1.msra.mxu0 0.0
    %2830 = vmatprep.subr.mxu0 0.0
    %2831 = vmatpush1.msra.mxu0 0.0
    %2832 = vmatprep.subr.mxu0 0.0
    %2833 = vmatpush1.msra.mxu0 0.0
    %2834 = vmatprep.subr.mxu0 0.0
    %2835 = vmatpush1.msra.mxu0 0.0
    %2836 = vmatprep.subr.mxu0 0.0
    %2837 = vmatpush1.msra.mxu0 %v2808
    %2838 = vmatprep.subr.mxu0 0.0
    %2839 = vmatpush1.msra.mxu0 %v2807
    %2840 = vmatprep.subr.mxu0 0.0
    %2841 = vmatpush1.msra.mxu0 %v2806
    %2842 = vmatprep.subr.mxu0 0.0
    %2843 = vmatpush1.msra.mxu0 %v2805
    %2844 = vmatprep.subr.mxu0 0.0
    %2845 = vmatpush2.msra.mxu0 0.0
    %2846 = vmatprep.subr.mxu0 0.0
    %2847 = vmatpush2.msra.mxu0 0.0
    %2848 = vmatprep.subr.mxu0 0.0
    %2849 = vmatpush2.msra.mxu0 0.0
    %2850 = vmatprep.subr.mxu0 0.0
    %2851 = vmatpush2.msra.mxu0 0.0
    %2852 = vmatprep.subr.mxu0 0.0
    %2853 = vmatpush2.msra.mxu0 0.0
    %2854 = vmatprep.subr.mxu0 0.0
    %2855 = vmatpush2.msra.mxu0 0.0
    %2856 = vmatprep.subr.mxu0 0.0
    %2857 = vmatpush2.msra.mxu0 0.0
    %2858 = vmatprep.subr.mxu0 0.0
    %2859 = vmatpush2.msra.mxu0 0.0
    %2860 = vmatprep.subr.mxu0 0.0
    %2861 = vmatpush2.msra.mxu0 0.0
    %2862 = vmatprep.subr.mxu0 0.0
    %2863 = vmatpush2.msra.mxu0 0.0
    %2864 = vmatprep.subr.mxu0 0.0
    %2865 = vmatpush2.msra.mxu0 0.0
    %2866 = vmatprep.subr.mxu0 0.0
    %2867 = vmatpush2.msra.mxu0 0.0
    %2868 = vmatprep.subr.mxu0 0.0
    %2869 = vmatpush2.msra.mxu0 0.0
    %2870 = vmatprep.subr.mxu0 0.0
    %2871 = vmatpush2.msra.mxu0 0.0
    %2872 = vmatprep.subr.mxu0 0.0
    %2873 = vmatpush2.msra.mxu0 0.0
    %2874 = vmatprep.subr.mxu0 0.0
    %2875 = vmatpush2.msra.mxu0 0.0
    %2876 = vmatprep.mubr.f32.mxu0 0.0
    %2877 = vmatmul.mubr.f32.gmra.mxu0 %v2810
    %v2878 = vpop.f32.mrf.mxu0
    %v2879 = vadd.f32 0.0, %v2878
    %v2880 = vpop.f32.mrf.mxu0
    %2881 = vdwg.mxu0
    %v2883 = vrot.slane %v2879, 2
    %v2885 = vadd.f32 %v989, %v2883
    %v2886 = vmul.f32 %v2885, %v1005
    %v2887 = vtanh.pop %v2886
    %v2888 = vmul.f32 %v1005, %v2887
    %v2889 = vadd.f32 %v2888, %v1006
    %v2891 = vrot.slane %v2318, 6
    %v2893 = vmul.f32 %v2889, %v2891
    %2895 = vrot.lane.b32.xlu0 %v2889, 64
    %v2896 = vpop.permute.xlu0 %2895
    %v2898 = vmul.f32 %v2889, %v2896
    %2900 = vrot.lane.b32.xlu0 %v2898, 32
    %v2901 = vpop.permute.xlu0 %2900
    %v2903 = vadd.f32 %v2893, %v2901
    %v2904 = vtanh.pop %v2903
    %2906 = vrot.lane.b32.xlu0 %v2904, 64
    %v2907 = vpop.permute.xlu0 %2906
    %v2909 = vmul.f32 %v2889, %v2907
    %2911 = vrot.lane.b32.xlu0 %v2909, 32
    %v2912 = vpop.permute.xlu0 %2911
    %v2914 = vrot.slane %v2443, 2
    %2915 = vrot.lane.b32.xlu0 %v2914, 64
    %v2916 = vpop.permute.xlu0 %2915
    %v2918 = vsel %vm724, %v2912, %v2916
    %v2919 = vld [vmem:[%s10] sm:$0xff]
    %v2920 = vld [vmem:[%s10 + $0x8] sm:$0xff]
    %v2921 = vld [vmem:[%s10 + $0x10] sm:$0xff]
    %v2922 = vld [vmem:[%s10 + $0x18] sm:$0xff]
    %v2923 = vld [vmem:[%s10 + $0x20] sm:$0xff]
    %v2924 = vld [vmem:[%s10 + $0x28] sm:$0xff]
    %v2925 = vld [vmem:[%s10 + $0x30] sm:$0xff]
    %v2926 = vld [vmem:[%s10 + $0x38] sm:$0xff]
    %v2927 = vld [vmem:[%s11] sm:$0x1]
    %v2929 = vlaneseq
    %v2930 = vshrl.u32 %v2929, 7
    %v2931 = vsub.s32 0, %v2930
    %v2932 = vrot.slane %v2927, %v2931
    %v2935 = vrot.slane %v2918, 6
    %v2936 = vsel %vm1170, %v2935, 0
    %2938 = vmatprep.subr.mxu0 0.0
    %2939 = vmatpush1.msra.mxu0 0.0
    %2940 = vmatprep.subr.mxu0 0.0
    %2941 = vmatpush1.msra.mxu0 0.0
    %2942 = vmatprep.subr.mxu0 0.0
    %2943 = vmatpush1.msra.mxu0 0.0
    %2944 = vmatprep.subr.mxu0 0.0
    %2945 = vmatpush1.msra.mxu0 0.0
    %2946 = vmatprep.subr.mxu0 0.0
    %2947 = vmatpush1.msra.mxu0 0.0
    %2948 = vmatprep.subr.mxu0 0.0
    %2949 = vmatpush1.msra.mxu0 0.0
    %2950 = vmatprep.subr.mxu0 0.0
    %2951 = vmatpush1.msra.mxu0 0.0
    %2952 = vmatprep.subr.mxu0 0.0
    %2953 = vmatpush1.msra.mxu0 0.0
    %2954 = vmatprep.subr.mxu0 0.0
    %2955 = vmatpush1.msra.mxu0 %v2926
    %2956 = vmatprep.subr.mxu0 0.0
    %2957 = vmatpush1.msra.mxu0 %v2925
    %2958 = vmatprep.subr.mxu0 0.0
    %2959 = vmatpush1.msra.mxu0 %v2924
    %2960 = vmatprep.subr.mxu0 0.0
    %2961 = vmatpush1.msra.mxu0 %v2923
    %2962 = vmatprep.subr.mxu0 0.0
    %2963 = vmatpush1.msra.mxu0 %v2922
    %2964 = vmatprep.subr.mxu0 0.0
    %2965 = vmatpush1.msra.mxu0 %v2921
    %2966 = vmatprep.subr.mxu0 0.0
    %2967 = vmatpush1.msra.mxu0 %v2920
    %2968 = vmatprep.subr.mxu0 0.0
    %2969 = vmatpush1.msra.mxu0 %v2919
    %2970 = vmatprep.subr.mxu0 0.0
    %2971 = vmatpush2.msra.mxu0 0.0
    %2972 = vmatprep.subr.mxu0 0.0
    %2973 = vmatpush2.msra.mxu0 0.0
    %2974 = vmatprep.subr.mxu0 0.0
    %2975 = vmatpush2.msra.mxu0 0.0
    %2976 = vmatprep.subr.mxu0 0.0
    %2977 = vmatpush2.msra.mxu0 0.0
    %2978 = vmatprep.subr.mxu0 0.0
    %2979 = vmatpush2.msra.mxu0 0.0
    %2980 = vmatprep.subr.mxu0 0.0
    %2981 = vmatpush2.msra.mxu0 0.0
    %2982 = vmatprep.subr.mxu0 0.0
    %2983 = vmatpush2.msra.mxu0 0.0
    %2984 = vmatprep.subr.mxu0 0.0
    %2985 = vmatpush2.msra.mxu0 0.0
    %2986 = vmatprep.subr.mxu0 0.0
    %2987 = vmatpush2.msra.mxu0 0.0
    %2988 = vmatprep.subr.mxu0 0.0
    %2989 = vmatpush2.msra.mxu0 0.0
    %2990 = vmatprep.subr.mxu0 0.0
    %2991 = vmatpush2.msra.mxu0 0.0
    %2992 = vmatprep.subr.mxu0 0.0
    %2993 = vmatpush2.msra.mxu0 0.0
    %2994 = vmatprep.subr.mxu0 0.0
    %2995 = vmatpush2.msra.mxu0 0.0
    %2996 = vmatprep.subr.mxu0 0.0
    %2997 = vmatpush2.msra.mxu0 0.0
    %2998 = vmatprep.subr.mxu0 0.0
    %2999 = vmatpush2.msra.mxu0 0.0
    %3000 = vmatprep.subr.mxu0 0.0
    %3001 = vmatpush2.msra.mxu0 0.0
    %3002 = vmatprep.mubr.f32.mxu0 0.0
    %3003 = vmatmul.mubr.f32.gmra.mxu0 %v2936
    %v3004 = vpop.f32.mrf.mxu0
    %v3005 = vadd.f32 %v2932, %v3004
    %v3006 = vpop.f32.mrf.mxu0
    %3007 = vdwg.mxu0
    %v3008 = vmul.f32 %v3005, %v1005
    %v3009 = vtanh.pop %v3008
    %v3010 = vmul.f32 %v1005, %v3009
    %v3011 = vadd.f32 %v3010, %v1006
    %v3012 = vmul.f32 %v3011, %v2437
    %3014 = vrot.lane.b32.xlu0 %v3011, 64
    %v3015 = vpop.permute.xlu0 %3014
    %v3017 = vmul.f32 %v3011, %v3015
    %3019 = vrot.lane.b32.xlu0 %v3017, 32
    %v3020 = vpop.permute.xlu0 %3019
    %v3022 = vadd.f32 %v3012, %v3020
    %v3023 = vtanh.pop %v3022
    %3025 = vrot.lane.b32.xlu0 %v3023, 64
    %v3026 = vpop.permute.xlu0 %3025
    %v3028 = vmul.f32 %v3011, %v3026
    %3030 = vrot.lane.b32.xlu0 %v3028, 32
    %v3031 = vpop.permute.xlu0 %3030
    %3033 = vst.msk [vmem:[#allocation3 + $0x6] sm:$0x3] %vm1269, %v3031
    %v3034 = vld [vmem:[%s12] sm:$0xff]
    %v3035 = vld [vmem:[%s12 + $0x8] sm:$0xff]
    %v3036 = vld [vmem:[%s12 + $0x10] sm:$0xff]
    %v3037 = vld [vmem:[%s12 + $0x18] sm:$0xff]
    %v3038 = vsel %vm724, %v3031, 0
    %3040 = vmatprep.subr.mxu0 0.0
    %3041 = vmatpush1.msra.mxu0 0.0
    %3042 = vmatprep.subr.mxu0 0.0
    %3043 = vmatpush1.msra.mxu0 0.0
    %3044 = vmatprep.subr.mxu0 0.0
    %3045 = vmatpush1.msra.mxu0 0.0
    %3046 = vmatprep.subr.mxu0 0.0
    %3047 = vmatpush1.msra.mxu0 0.0
    %3048 = vmatprep.subr.mxu0 0.0
    %3049 = vmatpush1.msra.mxu0 0.0
    %3050 = vmatprep.subr.mxu0 0.0
    %3051 = vmatpush1.msra.mxu0 0.0
    %3052 = vmatprep.subr.mxu0 0.0
    %3053 = vmatpush1.msra.mxu0 0.0
    %3054 = vmatprep.subr.mxu0 0.0
    %3055 = vmatpush1.msra.mxu0 0.0
    %3056 = vmatprep.subr.mxu0 0.0
    %3057 = vmatpush1.msra.mxu0 0.0
    %3058 = vmatprep.subr.mxu0 0.0
    %3059 = vmatpush1.msra.mxu0 0.0
    %3060 = vmatprep.subr.mxu0 0.0
    %3061 = vmatpush1.msra.mxu0 0.0
    %3062 = vmatprep.subr.mxu0 0.0
    %3063 = vmatpush1.msra.mxu0 0.0
    %3064 = vmatprep.subr.mxu0 0.0
    %3065 = vmatpush1.msra.mxu0 %v3037
    %3066 = vmatprep.subr.mxu0 0.0
    %3067 = vmatpush1.msra.mxu0 %v3036
    %3068 = vmatprep.subr.mxu0 0.0
    %3069 = vmatpush1.msra.mxu0 %v3035
    %3070 = vmatprep.subr.mxu0 0.0
    %3071 = vmatpush1.msra.mxu0 %v3034
    %3072 = vmatprep.subr.mxu0 0.0
    %3073 = vmatpush2.msra.mxu0 0.0
    %3074 = vmatprep.subr.mxu0 0.0
    %3075 = vmatpush2.msra.mxu0 0.0
    %3076 = vmatprep.subr.mxu0 0.0
    %3077 = vmatpush2.msra.mxu0 0.0
    %3078 = vmatprep.subr.mxu0 0.0
    %3079 = vmatpush2.msra.mxu0 0.0
    %3080 = vmatprep.subr.mxu0 0.0
    %3081 = vmatpush2.msra.mxu0 0.0
    %3082 = vmatprep.subr.mxu0 0.0
    %3083 = vmatpush2.msra.mxu0 0.0
    %3084 = vmatprep.subr.mxu0 0.0
    %3085 = vmatpush2.msra.mxu0 0.0
    %3086 = vmatprep.subr.mxu0 0.0
    %3087 = vmatpush2.msra.mxu0 0.0
    %3088 = vmatprep.subr.mxu0 0.0
    %3089 = vmatpush2.msra.mxu0 0.0
    %3090 = vmatprep.subr.mxu0 0.0
    %3091 = vmatpush2.msra.mxu0 0.0
    %3092 = vmatprep.subr.mxu0 0.0
    %3093 = vmatpush2.msra.mxu0 0.0
    %3094 = vmatprep.subr.mxu0 0.0
    %3095 = vmatpush2.msra.mxu0 0.0
    %3096 = vmatprep.subr.mxu0 0.0
    %3097 = vmatpush2.msra.mxu0 0.0
    %3098 = vmatprep.subr.mxu0 0.0
    %3099 = vmatpush2.msra.mxu0 0.0
    %3100 = vmatprep.subr.mxu0 0.0
    %3101 = vmatpush2.msra.mxu0 0.0
    %3102 = vmatprep.subr.mxu0 0.0
    %3103 = vmatpush2.msra.mxu0 0.0
    %3104 = vmatprep.mubr.f32.mxu0 0.0
    %3105 = vmatmul.mubr.f32.gmra.mxu0 %v3038
    %v3106 = vpop.f32.mrf.mxu0
    %v3107 = vadd.f32 0.0, %v3106
    %v3108 = vpop.f32.mrf.mxu0
    %3109 = vdwg.mxu0
    %v3110 = vlaneseq
    %v3111 = vshrl.u32 %v3110, 7
    %v3112 = vsub.s32 0, %v3111
    %v3113 = vrot.slane %v3107, %v3112
    %v3114 = vlaneseq
    %v3115 = vshrl.u32 %v3114, 7
    %v3116 = vsub.s32 1, %v3115
    %v3117 = vrot.slane %v3107, %v3116
    %v3118 = vsel %vm1049, %v3117, %v3113
    %v3119 = vsel %vm1050, %v3117, %v3113
    %v3120 = vadd.f32 %v991, %v3118
    %v3121 = vadd.f32 %v997, %v3119
    %v3122 = vmax.f32 %v3120, 0.0
    %v3123 = vmax.f32 %v3121, 0.0
    %v3124 = vmul.f32 %v3122, %v1365
    %v3125 = vmul.f32 %v3123, %v1365
    %v3126 = vsel %vm724, %v3124, 0.0
    %3127 = vadd.xlane.f32.xlu0 %v3126
    %v3128 = vpop.xlane.xlu0 %3127
    %v3129 = vsel %vm724, %v3125, 0.0
    %3130 = vadd.xlane.f32.xlu0 %v3129
    %v3131 = vpop.xlane.xlu0 %3130
    %v3132 = vmax.f32 %v3128, %v3131
    %v3133 = vrot.slane %v3132, 4
    %v3134 = vmax.f32 %v3132, %v3133
    %v3135 = vrot.slane %v3134, 2
    %v3136 = vmax.f32 %v3134, %v3135
    %v3137 = vrot.slane %v3136, 1
    %v3138 = vmax.f32 %v3136, %v3137
    %v3139 = vsub.f32 %v3128, %v3138
    %v3140 = vsub.f32 %v3131, %v3138
    %v3141 = vmul.f32 %v3139, 1.442695
    %v3142 = vpow.pop %v3141
    %v3143 = vmul.f32 %v3140, 1.442695
    %v3144 = vpow.pop %v3143
    %v3145 = vmul.f32 %v3142, %v894
    %v3146 = vmul.f32 %v3144, %v895
    %3147 = vmatprep.subr.mxu0 0.0
    %3148 = vmatpush1.msra.mxu0 0.0
    %3149 = vmatprep.subr.mxu0 0.0
    %3150 = vmatpush1.msra.mxu0 0.0
    %3151 = vmatprep.subr.mxu0 0.0
    %3152 = vmatpush1.msra.mxu0 0.0
    %3153 = vmatprep.subr.mxu0 0.0
    %3154 = vmatpush1.msra.mxu0 0.0
    %3155 = vmatprep.subr.mxu0 0.0
    %3156 = vmatpush1.msra.mxu0 0.0
    %3157 = vmatprep.subr.mxu0 0.0
    %3158 = vmatpush1.msra.mxu0 0.0
    %3159 = vmatprep.subr.mxu0 0.0
    %3160 = vmatpush1.msra.mxu0 0.0
    %3161 = vmatprep.subr.mxu0 0.0
    %3162 = vmatpush1.msra.mxu0 0.0
    %3163 = vmatprep.subr.mxu0 0.0
    %3164 = vmatpush1.msra.mxu0 0.0
    %3165 = vmatprep.subr.mxu0 0.0
    %3166 = vmatpush1.msra.mxu0 0.0
    %3167 = vmatprep.subr.mxu0 0.0
    %3168 = vmatpush1.msra.mxu0 0.0
    %3169 = vmatprep.subr.mxu0 0.0
    %3170 = vmatpush1.msra.mxu0 0.0
    %3171 = vmatprep.subr.mxu0 0.0
    %3172 = vmatpush1.msra.mxu0 0.0
    %3173 = vmatprep.subr.mxu0 0.0
    %3174 = vmatpush1.msra.mxu0 0.0
    %3175 = vmatprep.subr.mxu0 0.0
    %3176 = vmatpush1.msra.mxu0 %v3146
    %3177 = vmatprep.subr.mxu0 0.0
    %3178 = vmatpush1.msra.mxu0 %v3145
    %3179 = vmatprep.subr.mxu0 0.0
    %3180 = vmatpush2.msra.mxu0 0.0
    %3181 = vmatprep.subr.mxu0 0.0
    %3182 = vmatpush2.msra.mxu0 0.0
    %3183 = vmatprep.subr.mxu0 0.0
    %3184 = vmatpush2.msra.mxu0 0.0
    %3185 = vmatprep.subr.mxu0 0.0
    %3186 = vmatpush2.msra.mxu0 0.0
    %3187 = vmatprep.subr.mxu0 0.0
    %3188 = vmatpush2.msra.mxu0 0.0
    %3189 = vmatprep.subr.mxu0 0.0
    %3190 = vmatpush2.msra.mxu0 0.0
    %3191 = vmatprep.subr.mxu0 0.0
    %3192 = vmatpush2.msra.mxu0 0.0
    %3193 = vmatprep.subr.mxu0 0.0
    %3194 = vmatpush2.msra.mxu0 0.0
    %3195 = vmatprep.subr.mxu0 0.0
    %3196 = vmatpush2.msra.mxu0 0.0
    %3197 = vmatprep.subr.mxu0 0.0
    %3198 = vmatpush2.msra.mxu0 0.0
    %3199 = vmatprep.subr.mxu0 0.0
    %3200 = vmatpush2.msra.mxu0 0.0
    %3201 = vmatprep.subr.mxu0 0.0
    %3202 = vmatpush2.msra.mxu0 0.0
    %3203 = vmatprep.subr.mxu0 0.0
    %3204 = vmatpush2.msra.mxu0 0.0
    %3205 = vmatprep.subr.mxu0 0.0
    %3206 = vmatpush2.msra.mxu0 0.0
    %3207 = vmatprep.subr.mxu0 0.0
    %3208 = vmatpush2.msra.mxu0 0.0
    %3209 = vmatprep.subr.mxu0 0.0
    %3210 = vmatpush2.msra.mxu0 0.0
    %3211 = vmatprep.mubr.f32.mxu0 0.0
    %3212 = vmatmul.mubr.f32.gmra.mxu0 %v1392
    %v3213 = vpop.f32.mrf.mxu0
    %v3214 = vadd.f32 0.0, %v3213
    %v3215 = vpop.f32.mrf.mxu0
    %3216 = vdwg.mxu0
    %3217 = vmatprep.subr.mxu0 0.0
    %3218 = vmatpush1.msra.mxu0 0.0
    %3219 = vmatprep.subr.mxu0 0.0
    %3220 = vmatpush1.msra.mxu0 0.0
    %3221 = vmatprep.subr.mxu0 0.0
    %3222 = vmatpush1.msra.mxu0 0.0
    %3223 = vmatprep.subr.mxu0 0.0
    %3224 = vmatpush1.msra.mxu0 0.0
    %3225 = vmatprep.subr.mxu0 0.0
    %3226 = vmatpush1.msra.mxu0 0.0
    %3227 = vmatprep.subr.mxu0 0.0
    %3228 = vmatpush1.msra.mxu0 0.0
    %3229 = vmatprep.subr.mxu0 0.0
    %3230 = vmatpush1.msra.mxu0 0.0
    %3231 = vmatprep.subr.mxu0 0.0
    %3232 = vmatpush1.msra.mxu0 0.0
    %3233 = vmatprep.subr.mxu0 0.0
    %3234 = vmatpush1.msra.mxu0 0.0
    %3235 = vmatprep.subr.mxu0 0.0
    %3236 = vmatpush1.msra.mxu0 0.0
    %3237 = vmatprep.subr.mxu0 0.0
    %3238 = vmatpush1.msra.mxu0 0.0
    %3239 = vmatprep.subr.mxu0 0.0
    %3240 = vmatpush1.msra.mxu0 0.0
    %3241 = vmatprep.subr.mxu0 0.0
    %3242 = vmatpush1.msra.mxu0 0.0
    %3243 = vmatprep.subr.mxu0 0.0
    %3244 = vmatpush1.msra.mxu0 0.0
    %3245 = vmatprep.subr.mxu0 0.0
    %3246 = vmatpush1.msra.mxu0 %v3144
    %3247 = vmatprep.subr.mxu0 0.0
    %3248 = vmatpush1.msra.mxu0 %v3142
    %3249 = vmatprep.subr.mxu0 0.0
    %3250 = vmatpush2.msra.mxu0 0.0
    %3251 = vmatprep.subr.mxu0 0.0
    %3252 = vmatpush2.msra.mxu0 0.0
    %3253 = vmatprep.subr.mxu0 0.0
    %3254 = vmatpush2.msra.mxu0 0.0
    %3255 = vmatprep.subr.mxu0 0.0
    %3256 = vmatpush2.msra.mxu0 0.0
    %3257 = vmatprep.subr.mxu0 0.0
    %3258 = vmatpush2.msra.mxu0 0.0
    %3259 = vmatprep.subr.mxu0 0.0
    %3260 = vmatpush2.msra.mxu0 0.0
    %3261 = vmatprep.subr.mxu0 0.0
    %3262 = vmatpush2.msra.mxu0 0.0
    %3263 = vmatprep.subr.mxu0 0.0
    %3264 = vmatpush2.msra.mxu0 0.0
    %3265 = vmatprep.subr.mxu0 0.0
    %3266 = vmatpush2.msra.mxu0 0.0
    %3267 = vmatprep.subr.mxu0 0.0
    %3268 = vmatpush2.msra.mxu0 0.0
    %3269 = vmatprep.subr.mxu0 0.0
    %3270 = vmatpush2.msra.mxu0 0.0
    %3271 = vmatprep.subr.mxu0 0.0
    %3272 = vmatpush2.msra.mxu0 0.0
    %3273 = vmatprep.subr.mxu0 0.0
    %3274 = vmatpush2.msra.mxu0 0.0
    %3275 = vmatprep.subr.mxu0 0.0
    %3276 = vmatpush2.msra.mxu0 0.0
    %3277 = vmatprep.subr.mxu0 0.0
    %3278 = vmatpush2.msra.mxu0 0.0
    %3279 = vmatprep.subr.mxu0 0.0
    %3280 = vmatpush2.msra.mxu0 0.0
    %3281 = vmatprep.mubr.f32.mxu0 0.0
    %3282 = vmatmul.mubr.f32.gmra.mxu0 %v1392
    %v3283 = vpop.f32.mrf.mxu0
    %v3284 = vadd.f32 0.0, %v3283
    %v3285 = vpop.f32.mrf.mxu0
    %3286 = vdwg.mxu0
    %v3287 = vrcp.pop %v3284
    %3289 = vset.pattern.permute.xlu0 0
    %3290 = vperm.xlu0 %3289, %v3287
    %v3291 = vpop.permute.xlu0 %3290
    %v3293 = vmul.f32 %v3214, %v3291
    %3294 = vst.msk [vmem:[#allocation2 + $0x6] sm:$0x3] %vm1269, %v3293
    %v3296 = vrot.slane %v3293, 2
    %3297 = vrot.lane.b32.xlu0 %v3296, 32
    %v3298 = vpop.permute.xlu0 %3297
    %v3300 = vsel %vm724, %v2912, %v3298
    %v3301 = vld [vmem:[%s14] sm:$0xff]
    %v3302 = vld [vmem:[%s14 + $0x8] sm:$0xff]
    %v3303 = vld [vmem:[%s14 + $0x10] sm:$0xff]
    %v3304 = vld [vmem:[%s14 + $0x18] sm:$0xff]
    %v3305 = vld [vmem:[%s14 + $0x20] sm:$0xff]
    %v3306 = vld [vmem:[%s14 + $0x28] sm:$0xff]
    %v3307 = vld [vmem:[%s14 + $0x30] sm:$0xff]
    %v3308 = vld [vmem:[%s14 + $0x38] sm:$0xff]
    %v3309 = vld [vmem:[%s15] sm:$0x1]
    %v3311 = vlaneseq
    %v3312 = vshrl.u32 %v3311, 7
    %v3313 = vsub.s32 0, %v3312
    %v3314 = vrot.slane %v3309, %v3313
    %v3317 = vrot.slane %v3300, 6
    %v3318 = vsel %vm1170, %v3317, 0
    %3320 = vmatprep.subr.mxu0 0.0
    %3321 = vmatpush1.msra.mxu0 0.0
    %3322 = vmatprep.subr.mxu0 0.0
    %3323 = vmatpush1.msra.mxu0 0.0
    %3324 = vmatprep.subr.mxu0 0.0
    %3325 = vmatpush1.msra.mxu0 0.0
    %3326 = vmatprep.subr.mxu0 0.0
    %3327 = vmatpush1.msra.mxu0 0.0
    %3328 = vmatprep.subr.mxu0 0.0
    %3329 = vmatpush1.msra.mxu0 0.0
    %3330 = vmatprep.subr.mxu0 0.0
    %3331 = vmatpush1.msra.mxu0 0.0
    %3332 = vmatprep.subr.mxu0 0.0
    %3333 = vmatpush1.msra.mxu0 0.0
    %3334 = vmatprep.subr.mxu0 0.0
    %3335 = vmatpush1.msra.mxu0 0.0
    %3336 = vmatprep.subr.mxu0 0.0
    %3337 = vmatpush1.msra.mxu0 %v3308
    %3338 = vmatprep.subr.mxu0 0.0
    %3339 = vmatpush1.msra.mxu0 %v3307
    %3340 = vmatprep.subr.mxu0 0.0
    %3341 = vmatpush1.msra.mxu0 %v3306
    %3342 = vmatprep.subr.mxu0 0.0
    %3343 = vmatpush1.msra.mxu0 %v3305
    %3344 = vmatprep.subr.mxu0 0.0
    %3345 = vmatpush1.msra.mxu0 %v3304
    %3346 = vmatprep.subr.mxu0 0.0
    %3347 = vmatpush1.msra.mxu0 %v3303
    %3348 = vmatprep.subr.mxu0 0.0
    %3349 = vmatpush1.msra.mxu0 %v3302
    %3350 = vmatprep.subr.mxu0 0.0
    %3351 = vmatpush1.msra.mxu0 %v3301
    %3352 = vmatprep.subr.mxu0 0.0
    %3353 = vmatpush2.msra.mxu0 0.0
    %3354 = vmatprep.subr.mxu0 0.0
    %3355 = vmatpush2.msra.mxu0 0.0
    %3356 = vmatprep.subr.mxu0 0.0
    %3357 = vmatpush2.msra.mxu0 0.0
    %3358 = vmatprep.subr.mxu0 0.0
    %3359 = vmatpush2.msra.mxu0 0.0
    %3360 = vmatprep.subr.mxu0 0.0
    %3361 = vmatpush2.msra.mxu0 0.0
    %3362 = vmatprep.subr.mxu0 0.0
    %3363 = vmatpush2.msra.mxu0 0.0
    %3364 = vmatprep.subr.mxu0 0.0
    %3365 = vmatpush2.msra.mxu0 0.0
    %3366 = vmatprep.subr.mxu0 0.0
    %3367 = vmatpush2.msra.mxu0 0.0
    %3368 = vmatprep.subr.mxu0 0.0
    %3369 = vmatpush2.msra.mxu0 0.0
    %3370 = vmatprep.subr.mxu0 0.0
    %3371 = vmatpush2.msra.mxu0 0.0
    %3372 = vmatprep.subr.mxu0 0.0
    %3373 = vmatpush2.msra.mxu0 0.0
    %3374 = vmatprep.subr.mxu0 0.0
    %3375 = vmatpush2.msra.mxu0 0.0
    %3376 = vmatprep.subr.mxu0 0.0
    %3377 = vmatpush2.msra.mxu0 0.0
    %3378 = vmatprep.subr.mxu0 0.0
    %3379 = vmatpush2.msra.mxu0 0.0
    %3380 = vmatprep.subr.mxu0 0.0
    %3381 = vmatpush2.msra.mxu0 0.0
    %3382 = vmatprep.subr.mxu0 0.0
    %3383 = vmatpush2.msra.mxu0 0.0
    %3384 = vmatprep.mubr.f32.mxu0 0.0
    %3385 = vmatmul.mubr.f32.gmra.mxu0 %v3318
    %v3386 = vpop.f32.mrf.mxu0
    %v3387 = vadd.f32 %v3314, %v3386
    %v3388 = vpop.f32.mrf.mxu0
    %3389 = vdwg.mxu0
    %v3390 = vld [vmem:[%s9] sm:$0xff]
    %v3391 = vld [vmem:[%s9 + $0x8] sm:$0xff]
    %v3392 = vld [vmem:[%s9 + $0x10] sm:$0xff]
    %v3393 = vld [vmem:[%s9 + $0x18] sm:$0xff]
    %v3395 = vsel %vm724, %v3387, 0
    %3397 = vmatprep.subr.mxu0 0.0
    %3398 = vmatpush1.msra.mxu0 0.0
    %3399 = vmatprep.subr.mxu0 0.0
    %3400 = vmatpush1.msra.mxu0 0.0
    %3401 = vmatprep.subr.mxu0 0.0
    %3402 = vmatpush1.msra.mxu0 0.0
    %3403 = vmatprep.subr.mxu0 0.0
    %3404 = vmatpush1.msra.mxu0 0.0
    %3405 = vmatprep.subr.mxu0 0.0
    %3406 = vmatpush1.msra.mxu0 0.0
    %3407 = vmatprep.subr.mxu0 0.0
    %3408 = vmatpush1.msra.mxu0 0.0
    %3409 = vmatprep.subr.mxu0 0.0
    %3410 = vmatpush1.msra.mxu0 0.0
    %3411 = vmatprep.subr.mxu0 0.0
    %3412 = vmatpush1.msra.mxu0 0.0
    %3413 = vmatprep.subr.mxu0 0.0
    %3414 = vmatpush1.msra.mxu0 0.0
    %3415 = vmatprep.subr.mxu0 0.0
    %3416 = vmatpush1.msra.mxu0 0.0
    %3417 = vmatprep.subr.mxu0 0.0
    %3418 = vmatpush1.msra.mxu0 0.0
    %3419 = vmatprep.subr.mxu0 0.0
    %3420 = vmatpush1.msra.mxu0 0.0
    %3421 = vmatprep.subr.mxu0 0.0
    %3422 = vmatpush1.msra.mxu0 %v3393
    %3423 = vmatprep.subr.mxu0 0.0
    %3424 = vmatpush1.msra.mxu0 %v3392
    %3425 = vmatprep.subr.mxu0 0.0
    %3426 = vmatpush1.msra.mxu0 %v3391
    %3427 = vmatprep.subr.mxu0 0.0
    %3428 = vmatpush1.msra.mxu0 %v3390
    %3429 = vmatprep.subr.mxu0 0.0
    %3430 = vmatpush2.msra.mxu0 0.0
    %3431 = vmatprep.subr.mxu0 0.0
    %3432 = vmatpush2.msra.mxu0 0.0
    %3433 = vmatprep.subr.mxu0 0.0
    %3434 = vmatpush2.msra.mxu0 0.0
    %3435 = vmatprep.subr.mxu0 0.0
    %3436 = vmatpush2.msra.mxu0 0.0
    %3437 = vmatprep.subr.mxu0 0.0
    %3438 = vmatpush2.msra.mxu0 0.0
    %3439 = vmatprep.subr.mxu0 0.0
    %3440 = vmatpush2.msra.mxu0 0.0
    %3441 = vmatprep.subr.mxu0 0.0
    %3442 = vmatpush2.msra.mxu0 0.0
    %3443 = vmatprep.subr.mxu0 0.0
    %3444 = vmatpush2.msra.mxu0 0.0
    %3445 = vmatprep.subr.mxu0 0.0
    %3446 = vmatpush2.msra.mxu0 0.0
    %3447 = vmatprep.subr.mxu0 0.0
    %3448 = vmatpush2.msra.mxu0 0.0
    %3449 = vmatprep.subr.mxu0 0.0
    %3450 = vmatpush2.msra.mxu0 0.0
    %3451 = vmatprep.subr.mxu0 0.0
    %3452 = vmatpush2.msra.mxu0 0.0
    %3453 = vmatprep.subr.mxu0 0.0
    %3454 = vmatpush2.msra.mxu0 0.0
    %3455 = vmatprep.subr.mxu0 0.0
    %3456 = vmatpush2.msra.mxu0 0.0
    %3457 = vmatprep.subr.mxu0 0.0
    %3458 = vmatpush2.msra.mxu0 0.0
    %3459 = vmatprep.subr.mxu0 0.0
    %3460 = vmatpush2.msra.mxu0 0.0
    %3461 = vmatprep.mubr.f32.mxu0 0.0
    %3462 = vmatmul.mubr.f32.gmra.mxu0 %v3395
    %v3463 = vpop.f32.mrf.mxu0
    %v3464 = vadd.f32 0.0, %v3463
    %v3465 = vpop.f32.mrf.mxu0
    %3466 = vdwg.mxu0
    %v3467 = vadd.f32 %v995, %v3464
    %v3468 = vmul.f32 %v3467, %v1005
    %v3469 = vtanh.pop %v3468
    %v3470 = vmul.f32 %v1005, %v3469
    %v3471 = vadd.f32 %v3470, %v1006
    %v3473 = vrot.slane %v2903, 6
    %v3475 = vmul.f32 %v3471, %v3473
    %3477 = vrot.lane.b32.xlu0 %v3471, 64
    %v3478 = vpop.permute.xlu0 %3477
    %v3480 = vmul.f32 %v3471, %v3478
    %3482 = vrot.lane.b32.xlu0 %v3480, 32
    %v3483 = vpop.permute.xlu0 %3482
    %v3485 = vadd.f32 %v3475, %v3483
    %v3486 = vtanh.pop %v3485
    %3488 = vrot.lane.b32.xlu0 %v3486, 64
    %v3489 = vpop.permute.xlu0 %3488
    %v3491 = vmul.f32 %v3471, %v3489
    %3493 = vrot.lane.b32.xlu0 %v3491, 32
    %v3494 = vpop.permute.xlu0 %3493
    %3496 = vrot.lane.b32.xlu0 %v3028, 64
    %v3497 = vpop.permute.xlu0 %3496
    %v3499 = vsel %vm724, %v3494, %v3497
    %v3500 = vld [vmem:[%s10] sm:$0xff]
    %v3501 = vld [vmem:[%s10 + $0x8] sm:$0xff]
    %v3502 = vld [vmem:[%s10 + $0x10] sm:$0xff]
    %v3503 = vld [vmem:[%s10 + $0x18] sm:$0xff]
    %v3504 = vld [vmem:[%s10 + $0x20] sm:$0xff]
    %v3505 = vld [vmem:[%s10 + $0x28] sm:$0xff]
    %v3506 = vld [vmem:[%s10 + $0x30] sm:$0xff]
    %v3507 = vld [vmem:[%s10 + $0x38] sm:$0xff]
    %v3508 = vld [vmem:[%s11] sm:$0x1]
    %v3510 = vlaneseq
    %v3511 = vshrl.u32 %v3510, 7
    %v3512 = vsub.s32 0, %v3511
    %v3513 = vrot.slane %v3508, %v3512
    %v3516 = vsel %vm1170, %v3499, 0
    %3518 = vmatprep.subr.mxu0 0.0
    %3519 = vmatpush1.msra.mxu0 0.0
    %3520 = vmatprep.subr.mxu0 0.0
    %3521 = vmatpush1.msra.mxu0 0.0
    %3522 = vmatprep.subr.mxu0 0.0
    %3523 = vmatpush1.msra.mxu0 0.0
    %3524 = vmatprep.subr.mxu0 0.0
    %3525 = vmatpush1.msra.mxu0 0.0
    %3526 = vmatprep.subr.mxu0 0.0
    %3527 = vmatpush1.msra.mxu0 0.0
    %3528 = vmatprep.subr.mxu0 0.0
    %3529 = vmatpush1.msra.mxu0 0.0
    %3530 = vmatprep.subr.mxu0 0.0
    %3531 = vmatpush1.msra.mxu0 0.0
    %3532 = vmatprep.subr.mxu0 0.0
    %3533 = vmatpush1.msra.mxu0 0.0
    %3534 = vmatprep.subr.mxu0 0.0
    %3535 = vmatpush1.msra.mxu0 %v3507
    %3536 = vmatprep.subr.mxu0 0.0
    %3537 = vmatpush1.msra.mxu0 %v3506
    %3538 = vmatprep.subr.mxu0 0.0
    %3539 = vmatpush1.msra.mxu0 %v3505
    %3540 = vmatprep.subr.mxu0 0.0
    %3541 = vmatpush1.msra.mxu0 %v3504
    %3542 = vmatprep.subr.mxu0 0.0
    %3543 = vmatpush1.msra.mxu0 %v3503
    %3544 = vmatprep.subr.mxu0 0.0
    %3545 = vmatpush1.msra.mxu0 %v3502
    %3546 = vmatprep.subr.mxu0 0.0
    %3547 = vmatpush1.msra.mxu0 %v3501
    %3548 = vmatprep.subr.mxu0 0.0
    %3549 = vmatpush1.msra.mxu0 %v3500
    %3550 = vmatprep.subr.mxu0 0.0
    %3551 = vmatpush2.msra.mxu0 0.0
    %3552 = vmatprep.subr.mxu0 0.0
    %3553 = vmatpush2.msra.mxu0 0.0
    %3554 = vmatprep.subr.mxu0 0.0
    %3555 = vmatpush2.msra.mxu0 0.0
    %3556 = vmatprep.subr.mxu0 0.0
    %3557 = vmatpush2.msra.mxu0 0.0
    %3558 = vmatprep.subr.mxu0 0.0
    %3559 = vmatpush2.msra.mxu0 0.0
    %3560 = vmatprep.subr.mxu0 0.0
    %3561 = vmatpush2.msra.mxu0 0.0
    %3562 = vmatprep.subr.mxu0 0.0
    %3563 = vmatpush2.msra.mxu0 0.0
    %3564 = vmatprep.subr.mxu0 0.0
    %3565 = vmatpush2.msra.mxu0 0.0
    %3566 = vmatprep.subr.mxu0 0.0
    %3567 = vmatpush2.msra.mxu0 0.0
    %3568 = vmatprep.subr.mxu0 0.0
    %3569 = vmatpush2.msra.mxu0 0.0
    %3570 = vmatprep.subr.mxu0 0.0
    %3571 = vmatpush2.msra.mxu0 0.0
    %3572 = vmatprep.subr.mxu0 0.0
    %3573 = vmatpush2.msra.mxu0 0.0
    %3574 = vmatprep.subr.mxu0 0.0
    %3575 = vmatpush2.msra.mxu0 0.0
    %3576 = vmatprep.subr.mxu0 0.0
    %3577 = vmatpush2.msra.mxu0 0.0
    %3578 = vmatprep.subr.mxu0 0.0
    %3579 = vmatpush2.msra.mxu0 0.0
    %3580 = vmatprep.subr.mxu0 0.0
    %3581 = vmatpush2.msra.mxu0 0.0
    %3582 = vmatprep.mubr.f32.mxu0 0.0
    %3583 = vmatmul.mubr.f32.gmra.mxu0 %v3516
    %v3584 = vpop.f32.mrf.mxu0
    %v3585 = vadd.f32 %v3513, %v3584
    %v3586 = vpop.f32.mrf.mxu0
    %3587 = vdwg.mxu0
    %v3588 = vmul.f32 %v3585, %v1005
    %v3589 = vtanh.pop %v3588
    %v3590 = vmul.f32 %v1005, %v3589
    %v3591 = vadd.f32 %v3590, %v1006
    %v3592 = vmul.f32 %v3591, %v3022
    %3594 = vrot.lane.b32.xlu0 %v3591, 64
    %v3595 = vpop.permute.xlu0 %3594
    %v3597 = vmul.f32 %v3591, %v3595
    %3599 = vrot.lane.b32.xlu0 %v3597, 32
    %v3600 = vpop.permute.xlu0 %3599
    %v3602 = vadd.f32 %v3592, %v3600
    %v3603 = vtanh.pop %v3602
    %3605 = vrot.lane.b32.xlu0 %v3603, 64
    %v3606 = vpop.permute.xlu0 %3605
    %v3608 = vmul.f32 %v3591, %v3606
    %3610 = vrot.lane.b32.xlu0 %v3608, 32
    %v3611 = vpop.permute.xlu0 %3610
    %3613 = vst.msk [vmem:[#allocation3 + $0x8] sm:$0x3] %vm1269, %v3611
    %v3614 = vld [vmem:[%s12] sm:$0xff]
    %v3615 = vld [vmem:[%s12 + $0x8] sm:$0xff]
    %v3616 = vld [vmem:[%s12 + $0x10] sm:$0xff]
    %v3617 = vld [vmem:[%s12 + $0x18] sm:$0xff]
    %v3618 = vsel %vm724, %v3611, 0
    %3620 = vmatprep.subr.mxu0 0.0
    %3621 = vmatpush1.msra.mxu0 0.0
    %3622 = vmatprep.subr.mxu0 0.0
    %3623 = vmatpush1.msra.mxu0 0.0
    %3624 = vmatprep.subr.mxu0 0.0
    %3625 = vmatpush1.msra.mxu0 0.0
    %3626 = vmatprep.subr.mxu0 0.0
    %3627 = vmatpush1.msra.mxu0 0.0
    %3628 = vmatprep.subr.mxu0 0.0
    %3629 = vmatpush1.msra.mxu0 0.0
    %3630 = vmatprep.subr.mxu0 0.0
    %3631 = vmatpush1.msra.mxu0 0.0
    %3632 = vmatprep.subr.mxu0 0.0
    %3633 = vmatpush1.msra.mxu0 0.0
    %3634 = vmatprep.subr.mxu0 0.0
    %3635 = vmatpush1.msra.mxu0 0.0
    %3636 = vmatprep.subr.mxu0 0.0
    %3637 = vmatpush1.msra.mxu0 0.0
    %3638 = vmatprep.subr.mxu0 0.0
    %3639 = vmatpush1.msra.mxu0 0.0
    %3640 = vmatprep.subr.mxu0 0.0
    %3641 = vmatpush1.msra.mxu0 0.0
    %3642 = vmatprep.subr.mxu0 0.0
    %3643 = vmatpush1.msra.mxu0 0.0
    %3644 = vmatprep.subr.mxu0 0.0
    %3645 = vmatpush1.msra.mxu0 %v3617
    %3646 = vmatprep.subr.mxu0 0.0
    %3647 = vmatpush1.msra.mxu0 %v3616
    %3648 = vmatprep.subr.mxu0 0.0
    %3649 = vmatpush1.msra.mxu0 %v3615
    %3650 = vmatprep.subr.mxu0 0.0
    %3651 = vmatpush1.msra.mxu0 %v3614
    %3652 = vmatprep.subr.mxu0 0.0
    %3653 = vmatpush2.msra.mxu0 0.0
    %3654 = vmatprep.subr.mxu0 0.0
    %3655 = vmatpush2.msra.mxu0 0.0
    %3656 = vmatprep.subr.mxu0 0.0
    %3657 = vmatpush2.msra.mxu0 0.0
    %3658 = vmatprep.subr.mxu0 0.0
    %3659 = vmatpush2.msra.mxu0 0.0
    %3660 = vmatprep.subr.mxu0 0.0
    %3661 = vmatpush2.msra.mxu0 0.0
    %3662 = vmatprep.subr.mxu0 0.0
    %3663 = vmatpush2.msra.mxu0 0.0
    %3664 = vmatprep.subr.mxu0 0.0
    %3665 = vmatpush2.msra.mxu0 0.0
    %3666 = vmatprep.subr.mxu0 0.0
    %3667 = vmatpush2.msra.mxu0 0.0
    %3668 = vmatprep.subr.mxu0 0.0
    %3669 = vmatpush2.msra.mxu0 0.0
    %3670 = vmatprep.subr.mxu0 0.0
    %3671 = vmatpush2.msra.mxu0 0.0
    %3672 = vmatprep.subr.mxu0 0.0
    %3673 = vmatpush2.msra.mxu0 0.0
    %3674 = vmatprep.subr.mxu0 0.0
    %3675 = vmatpush2.msra.mxu0 0.0
    %3676 = vmatprep.subr.mxu0 0.0
    %3677 = vmatpush2.msra.mxu0 0.0
    %3678 = vmatprep.subr.mxu0 0.0
    %3679 = vmatpush2.msra.mxu0 0.0
    %3680 = vmatprep.subr.mxu0 0.0
    %3681 = vmatpush2.msra.mxu0 0.0
    %3682 = vmatprep.subr.mxu0 0.0
    %3683 = vmatpush2.msra.mxu0 0.0
    %3684 = vmatprep.mubr.f32.mxu0 0.0
    %3685 = vmatmul.mubr.f32.gmra.mxu0 %v3618
    %v3686 = vpop.f32.mrf.mxu0
    %v3687 = vadd.f32 0.0, %v3686
    %v3688 = vpop.f32.mrf.mxu0
    %3689 = vdwg.mxu0
    %v3690 = vlaneseq
    %v3691 = vshrl.u32 %v3690, 7
    %v3692 = vsub.s32 0, %v3691
    %v3693 = vrot.slane %v3687, %v3692
    %v3694 = vlaneseq
    %v3695 = vshrl.u32 %v3694, 7
    %v3696 = vsub.s32 1, %v3695
    %v3697 = vrot.slane %v3687, %v3696
    %v3698 = vsel %vm1049, %v3697, %v3693
    %v3699 = vsel %vm1050, %v3697, %v3693
    %v3700 = vadd.f32 %v991, %v3698
    %v3701 = vadd.f32 %v997, %v3699
    %v3702 = vmax.f32 %v3700, 0.0
    %v3703 = vmax.f32 %v3701, 0.0
    %v3704 = vmul.f32 %v3702, %v1365
    %v3705 = vmul.f32 %v3703, %v1365
    %v3706 = vsel %vm724, %v3704, 0.0
    %3707 = vadd.xlane.f32.xlu0 %v3706
    %v3708 = vpop.xlane.xlu0 %3707
    %v3709 = vsel %vm724, %v3705, 0.0
    %3710 = vadd.xlane.f32.xlu0 %v3709
    %v3711 = vpop.xlane.xlu0 %3710
    %v3712 = vmax.f32 %v3708, %v3711
    %v3713 = vrot.slane %v3712, 4
    %v3714 = vmax.f32 %v3712, %v3713
    %v3715 = vrot.slane %v3714, 2
    %v3716 = vmax.f32 %v3714, %v3715
    %v3717 = vrot.slane %v3716, 1
    %v3718 = vmax.f32 %v3716, %v3717
    %v3719 = vsub.f32 %v3708, %v3718
    %v3720 = vsub.f32 %v3711, %v3718
    %v3721 = vmul.f32 %v3719, 1.442695
    %v3722 = vpow.pop %v3721
    %v3723 = vmul.f32 %v3720, 1.442695
    %v3724 = vpow.pop %v3723
    %v3725 = vmul.f32 %v3722, %v894
    %v3726 = vmul.f32 %v3724, %v895
    %3727 = vmatprep.subr.mxu0 0.0
    %3728 = vmatpush1.msra.mxu0 0.0
    %3729 = vmatprep.subr.mxu0 0.0
    %3730 = vmatpush1.msra.mxu0 0.0
    %3731 = vmatprep.subr.mxu0 0.0
    %3732 = vmatpush1.msra.mxu0 0.0
    %3733 = vmatprep.subr.mxu0 0.0
    %3734 = vmatpush1.msra.mxu0 0.0
    %3735 = vmatprep.subr.mxu0 0.0
    %3736 = vmatpush1.msra.mxu0 0.0
    %3737 = vmatprep.subr.mxu0 0.0
    %3738 = vmatpush1.msra.mxu0 0.0
    %3739 = vmatprep.subr.mxu0 0.0
    %3740 = vmatpush1.msra.mxu0 0.0
    %3741 = vmatprep.subr.mxu0 0.0
    %3742 = vmatpush1.msra.mxu0 0.0
    %3743 = vmatprep.subr.mxu0 0.0
    %3744 = vmatpush1.msra.mxu0 0.0
    %3745 = vmatprep.subr.mxu0 0.0
    %3746 = vmatpush1.msra.mxu0 0.0
    %3747 = vmatprep.subr.mxu0 0.0
    %3748 = vmatpush1.msra.mxu0 0.0
    %3749 = vmatprep.subr.mxu0 0.0
    %3750 = vmatpush1.msra.mxu0 0.0
    %3751 = vmatprep.subr.mxu0 0.0
    %3752 = vmatpush1.msra.mxu0 0.0
    %3753 = vmatprep.subr.mxu0 0.0
    %3754 = vmatpush1.msra.mxu0 0.0
    %3755 = vmatprep.subr.mxu0 0.0
    %3756 = vmatpush1.msra.mxu0 %v3726
    %3757 = vmatprep.subr.mxu0 0.0
    %3758 = vmatpush1.msra.mxu0 %v3725
    %3759 = vmatprep.subr.mxu0 0.0
    %3760 = vmatpush2.msra.mxu0 0.0
    %3761 = vmatprep.subr.mxu0 0.0
    %3762 = vmatpush2.msra.mxu0 0.0
    %3763 = vmatprep.subr.mxu0 0.0
    %3764 = vmatpush2.msra.mxu0 0.0
    %3765 = vmatprep.subr.mxu0 0.0
    %3766 = vmatpush2.msra.mxu0 0.0
    %3767 = vmatprep.subr.mxu0 0.0
    %3768 = vmatpush2.msra.mxu0 0.0
    %3769 = vmatprep.subr.mxu0 0.0
    %3770 = vmatpush2.msra.mxu0 0.0
    %3771 = vmatprep.subr.mxu0 0.0
    %3772 = vmatpush2.msra.mxu0 0.0
    %3773 = vmatprep.subr.mxu0 0.0
    %3774 = vmatpush2.msra.mxu0 0.0
    %3775 = vmatprep.subr.mxu0 0.0
    %3776 = vmatpush2.msra.mxu0 0.0
    %3777 = vmatprep.subr.mxu0 0.0
    %3778 = vmatpush2.msra.mxu0 0.0
    %3779 = vmatprep.subr.mxu0 0.0
    %3780 = vmatpush2.msra.mxu0 0.0
    %3781 = vmatprep.subr.mxu0 0.0
    %3782 = vmatpush2.msra.mxu0 0.0
    %3783 = vmatprep.subr.mxu0 0.0
    %3784 = vmatpush2.msra.mxu0 0.0
    %3785 = vmatprep.subr.mxu0 0.0
    %3786 = vmatpush2.msra.mxu0 0.0
    %3787 = vmatprep.subr.mxu0 0.0
    %3788 = vmatpush2.msra.mxu0 0.0
    %3789 = vmatprep.subr.mxu0 0.0
    %3790 = vmatpush2.msra.mxu0 0.0
    %3791 = vmatprep.mubr.f32.mxu0 0.0
    %3792 = vmatmul.mubr.f32.gmra.mxu0 %v1392
    %v3793 = vpop.f32.mrf.mxu0
    %v3794 = vadd.f32 0.0, %v3793
    %v3795 = vpop.f32.mrf.mxu0
    %3796 = vdwg.mxu0
    %3797 = vmatprep.subr.mxu0 0.0
    %3798 = vmatpush1.msra.mxu0 0.0
    %3799 = vmatprep.subr.mxu0 0.0
    %3800 = vmatpush1.msra.mxu0 0.0
    %3801 = vmatprep.subr.mxu0 0.0
    %3802 = vmatpush1.msra.mxu0 0.0
    %3803 = vmatprep.subr.mxu0 0.0
    %3804 = vmatpush1.msra.mxu0 0.0
    %3805 = vmatprep.subr.mxu0 0.0
    %3806 = vmatpush1.msra.mxu0 0.0
    %3807 = vmatprep.subr.mxu0 0.0
    %3808 = vmatpush1.msra.mxu0 0.0
    %3809 = vmatprep.subr.mxu0 0.0
    %3810 = vmatpush1.msra.mxu0 0.0
    %3811 = vmatprep.subr.mxu0 0.0
    %3812 = vmatpush1.msra.mxu0 0.0
    %3813 = vmatprep.subr.mxu0 0.0
    %3814 = vmatpush1.msra.mxu0 0.0
    %3815 = vmatprep.subr.mxu0 0.0
    %3816 = vmatpush1.msra.mxu0 0.0
    %3817 = vmatprep.subr.mxu0 0.0
    %3818 = vmatpush1.msra.mxu0 0.0
    %3819 = vmatprep.subr.mxu0 0.0
    %3820 = vmatpush1.msra.mxu0 0.0
    %3821 = vmatprep.subr.mxu0 0.0
    %3822 = vmatpush1.msra.mxu0 0.0
    %3823 = vmatprep.subr.mxu0 0.0
    %3824 = vmatpush1.msra.mxu0 0.0
    %3825 = vmatprep.subr.mxu0 0.0
    %3826 = vmatpush1.msra.mxu0 %v3724
    %3827 = vmatprep.subr.mxu0 0.0
    %3828 = vmatpush1.msra.mxu0 %v3722
    %3829 = vmatprep.subr.mxu0 0.0
    %3830 = vmatpush2.msra.mxu0 0.0
    %3831 = vmatprep.subr.mxu0 0.0
    %3832 = vmatpush2.msra.mxu0 0.0
    %3833 = vmatprep.subr.mxu0 0.0
    %3834 = vmatpush2.msra.mxu0 0.0
    %3835 = vmatprep.subr.mxu0 0.0
    %3836 = vmatpush2.msra.mxu0 0.0
    %3837 = vmatprep.subr.mxu0 0.0
    %3838 = vmatpush2.msra.mxu0 0.0
    %3839 = vmatprep.subr.mxu0 0.0
    %3840 = vmatpush2.msra.mxu0 0.0
    %3841 = vmatprep.subr.mxu0 0.0
    %3842 = vmatpush2.msra.mxu0 0.0
    %3843 = vmatprep.subr.mxu0 0.0
    %3844 = vmatpush2.msra.mxu0 0.0
    %3845 = vmatprep.subr.mxu0 0.0
    %3846 = vmatpush2.msra.mxu0 0.0
    %3847 = vmatprep.subr.mxu0 0.0
    %3848 = vmatpush2.msra.mxu0 0.0
    %3849 = vmatprep.subr.mxu0 0.0
    %3850 = vmatpush2.msra.mxu0 0.0
    %3851 = vmatprep.subr.mxu0 0.0
    %3852 = vmatpush2.msra.mxu0 0.0
    %3853 = vmatprep.subr.mxu0 0.0
    %3854 = vmatpush2.msra.mxu0 0.0
    %3855 = vmatprep.subr.mxu0 0.0
    %3856 = vmatpush2.msra.mxu0 0.0
    %3857 = vmatprep.subr.mxu0 0.0
    %3858 = vmatpush2.msra.mxu0 0.0
    %3859 = vmatprep.subr.mxu0 0.0
    %3860 = vmatpush2.msra.mxu0 0.0
    %3861 = vmatprep.mubr.f32.mxu0 0.0
    %3862 = vmatmul.mubr.f32.gmra.mxu0 %v1392
    %v3863 = vpop.f32.mrf.mxu0
    %v3864 = vadd.f32 0.0, %v3863
    %v3865 = vpop.f32.mrf.mxu0
    %3866 = vdwg.mxu0
    %v3867 = vrcp.pop %v3864
    %3869 = vset.pattern.permute.xlu0 0
    %3870 = vperm.xlu0 %3869, %v3867
    %v3871 = vpop.permute.xlu0 %3870
    %v3873 = vmul.f32 %v3794, %v3871
    %3874 = vst.msk [vmem:[#allocation2 + $0x8] sm:$0x3] %vm1269, %v3873
    %3876 = vrot.lane.b32.xlu0 %v3873, 32
    %v3877 = vpop.permute.xlu0 %3876
    %v3879 = vsel %vm724, %v3494, %v3877
    %v3880 = vld [vmem:[%s14] sm:$0xff]
    %v3881 = vld [vmem:[%s14 + $0x8] sm:$0xff]
    %v3882 = vld [vmem:[%s14 + $0x10] sm:$0xff]
    %v3883 = vld [vmem:[%s14 + $0x18] sm:$0xff]
    %v3884 = vld [vmem:[%s14 + $0x20] sm:$0xff]
    %v3885 = vld [vmem:[%s14 + $0x28] sm:$0xff]
    %v3886 = vld [vmem:[%s14 + $0x30] sm:$0xff]
    %v3887 = vld [vmem:[%s14 + $0x38] sm:$0xff]
    %v3888 = vld [vmem:[%s15] sm:$0x1]
    %v3890 = vlaneseq
    %v3891 = vshrl.u32 %v3890, 7
    %v3892 = vsub.s32 0, %v3891
    %v3893 = vrot.slane %v3888, %v3892
    %v3896 = vsel %vm1170, %v3879, 0
    %3898 = vmatprep.subr.mxu0 0.0
    %3899 = vmatpush1.msra.mxu0 0.0
    %3900 = vmatprep.subr.mxu0 0.0
    %3901 = vmatpush1.msra.mxu0 0.0
    %3902 = vmatprep.subr.mxu0 0.0
    %3903 = vmatpush1.msra.mxu0 0.0
    %3904 = vmatprep.subr.mxu0 0.0
    %3905 = vmatpush1.msra.mxu0 0.0
    %3906 = vmatprep.subr.mxu0 0.0
    %3907 = vmatpush1.msra.mxu0 0.0
    %3908 = vmatprep.subr.mxu0 0.0
    %3909 = vmatpush1.msra.mxu0 0.0
    %3910 = vmatprep.subr.mxu0 0.0
    %3911 = vmatpush1.msra.mxu0 0.0
    %3912 = vmatprep.subr.mxu0 0.0
    %3913 = vmatpush1.msra.mxu0 0.0
    %3914 = vmatprep.subr.mxu0 0.0
    %3915 = vmatpush1.msra.mxu0 %v3887
    %3916 = vmatprep.subr.mxu0 0.0
    %3917 = vmatpush1.msra.mxu0 %v3886
    %3918 = vmatprep.subr.mxu0 0.0
    %3919 = vmatpush1.msra.mxu0 %v3885
    %3920 = vmatprep.subr.mxu0 0.0
    %3921 = vmatpush1.msra.mxu0 %v3884
    %3922 = vmatprep.subr.mxu0 0.0
    %3923 = vmatpush1.msra.mxu0 %v3883
    %3924 = vmatprep.subr.mxu0 0.0
    %3925 = vmatpush1.msra.mxu0 %v3882
    %3926 = vmatprep.subr.mxu0 0.0
    %3927 = vmatpush1.msra.mxu0 %v3881
    %3928 = vmatprep.subr.mxu0 0.0
    %3929 = vmatpush1.msra.mxu0 %v3880
    %3930 = vmatprep.subr.mxu0 0.0
    %3931 = vmatpush2.msra.mxu0 0.0
    %3932 = vmatprep.subr.mxu0 0.0
    %3933 = vmatpush2.msra.mxu0 0.0
    %3934 = vmatprep.subr.mxu0 0.0
    %3935 = vmatpush2.msra.mxu0 0.0
    %3936 = vmatprep.subr.mxu0 0.0
    %3937 = vmatpush2.msra.mxu0 0.0
    %3938 = vmatprep.subr.mxu0 0.0
    %3939 = vmatpush2.msra.mxu0 0.0
    %3940 = vmatprep.subr.mxu0 0.0
    %3941 = vmatpush2.msra.mxu0 0.0
    %3942 = vmatprep.subr.mxu0 0.0
    %3943 = vmatpush2.msra.mxu0 0.0
    %3944 = vmatprep.subr.mxu0 0.0
    %3945 = vmatpush2.msra.mxu0 0.0
    %3946 = vmatprep.subr.mxu0 0.0
    %3947 = vmatpush2.msra.mxu0 0.0
    %3948 = vmatprep.subr.mxu0 0.0
    %3949 = vmatpush2.msra.mxu0 0.0
    %3950 = vmatprep.subr.mxu0 0.0
    %3951 = vmatpush2.msra.mxu0 0.0
    %3952 = vmatprep.subr.mxu0 0.0
    %3953 = vmatpush2.msra.mxu0 0.0
    %3954 = vmatprep.subr.mxu0 0.0
    %3955 = vmatpush2.msra.mxu0 0.0
    %3956 = vmatprep.subr.mxu0 0.0
    %3957 = vmatpush2.msra.mxu0 0.0
    %3958 = vmatprep.subr.mxu0 0.0
    %3959 = vmatpush2.msra.mxu0 0.0
    %3960 = vmatprep.subr.mxu0 0.0
    %3961 = vmatpush2.msra.mxu0 0.0
    %3962 = vmatprep.mubr.f32.mxu0 0.0
    %3963 = vmatmul.mubr.f32.gmra.mxu0 %v3896
    %v3964 = vpop.f32.mrf.mxu0
    %v3965 = vadd.f32 %v3893, %v3964
    %v3966 = vpop.f32.mrf.mxu0
    %3967 = vdwg.mxu0
    %v3968 = vld [vmem:[%s9] sm:$0xff]
    %v3969 = vld [vmem:[%s9 + $0x8] sm:$0xff]
    %v3970 = vld [vmem:[%s9 + $0x10] sm:$0xff]
    %v3971 = vld [vmem:[%s9 + $0x18] sm:$0xff]
    %v3973 = vsel %vm724, %v3965, 0
    %3975 = vmatprep.subr.mxu0 0.0
    %3976 = vmatpush1.msra.mxu0 0.0
    %3977 = vmatprep.subr.mxu0 0.0
    %3978 = vmatpush1.msra.mxu0 0.0
    %3979 = vmatprep.subr.mxu0 0.0
    %3980 = vmatpush1.msra.mxu0 0.0
    %3981 = vmatprep.subr.mxu0 0.0
    %3982 = vmatpush1.msra.mxu0 0.0
    %3983 = vmatprep.subr.mxu0 0.0
    %3984 = vmatpush1.msra.mxu0 0.0
    %3985 = vmatprep.subr.mxu0 0.0
    %3986 = vmatpush1.msra.mxu0 0.0
    %3987 = vmatprep.subr.mxu0 0.0
    %3988 = vmatpush1.msra.mxu0 0.0
    %3989 = vmatprep.subr.mxu0 0.0
    %3990 = vmatpush1.msra.mxu0 0.0
    %3991 = vmatprep.subr.mxu0 0.0
    %3992 = vmatpush1.msra.mxu0 0.0
    %3993 = vmatprep.subr.mxu0 0.0
    %3994 = vmatpush1.msra.mxu0 0.0
    %3995 = vmatprep.subr.mxu0 0.0
    %3996 = vmatpush1.msra.mxu0 0.0
    %3997 = vmatprep.subr.mxu0 0.0
    %3998 = vmatpush1.msra.mxu0 0.0
    %3999 = vmatprep.subr.mxu0 0.0
    %4000 = vmatpush1.msra.mxu0 %v3971
    %4001 = vmatprep.subr.mxu0 0.0
    %4002 = vmatpush1.msra.mxu0 %v3970
    %4003 = vmatprep.subr.mxu0 0.0
    %4004 = vmatpush1.msra.mxu0 %v3969
    %4005 = vmatprep.subr.mxu0 0.0
    %4006 = vmatpush1.msra.mxu0 %v3968
    %4007 = vmatprep.subr.mxu0 0.0
    %4008 = vmatpush2.msra.mxu0 0.0
    %4009 = vmatprep.subr.mxu0 0.0
    %4010 = vmatpush2.msra.mxu0 0.0
    %4011 = vmatprep.subr.mxu0 0.0
    %4012 = vmatpush2.msra.mxu0 0.0
    %4013 = vmatprep.subr.mxu0 0.0
    %4014 = vmatpush2.msra.mxu0 0.0
    %4015 = vmatprep.subr.mxu0 0.0
    %4016 = vmatpush2.msra.mxu0 0.0
    %4017 = vmatprep.subr.mxu0 0.0
    %4018 = vmatpush2.msra.mxu0 0.0
    %4019 = vmatprep.subr.mxu0 0.0
    %4020 = vmatpush2.msra.mxu0 0.0
    %4021 = vmatprep.subr.mxu0 0.0
    %4022 = vmatpush2.msra.mxu0 0.0
    %4023 = vmatprep.subr.mxu0 0.0
    %4024 = vmatpush2.msra.mxu0 0.0
    %4025 = vmatprep.subr.mxu0 0.0
    %4026 = vmatpush2.msra.mxu0 0.0
    %4027 = vmatprep.subr.mxu0 0.0
    %4028 = vmatpush2.msra.mxu0 0.0
    %4029 = vmatprep.subr.mxu0 0.0
    %4030 = vmatpush2.msra.mxu0 0.0
    %4031 = vmatprep.subr.mxu0 0.0
    %4032 = vmatpush2.msra.mxu0 0.0
    %4033 = vmatprep.subr.mxu0 0.0
    %4034 = vmatpush2.msra.mxu0 0.0
    %4035 = vmatprep.subr.mxu0 0.0
    %4036 = vmatpush2.msra.mxu0 0.0
    %4037 = vmatprep.subr.mxu0 0.0
    %4038 = vmatpush2.msra.mxu0 0.0
    %4039 = vmatprep.mubr.f32.mxu0 0.0
    %4040 = vmatmul.mubr.f32.gmra.mxu0 %v3973
    %v4041 = vpop.f32.mrf.mxu0
    %v4042 = vadd.f32 0.0, %v4041
    %v4043 = vpop.f32.mrf.mxu0
    %4044 = vdwg.mxu0
    %v4046 = vrot.slane %v4042, 6
    %v4048 = vadd.f32 %v995, %v4046
    %v4049 = vmul.f32 %v4048, %v1005
    %v4050 = vtanh.pop %v4049
    %v4051 = vmul.f32 %v1005, %v4050
    %v4052 = vadd.f32 %v4051, %v1006
    %v4054 = vrot.slane %v3485, 6
    %v4056 = vmul.f32 %v4052, %v4054
    %4058 = vrot.lane.b32.xlu0 %v4052, 64
    %v4059 = vpop.permute.xlu0 %4058
    %v4061 = vmul.f32 %v4052, %v4059
    %4063 = vrot.lane.b32.xlu0 %v4061, 32
    %v4064 = vpop.permute.xlu0 %4063
    %v4066 = vadd.f32 %v4056, %v4064
    %v4067 = vtanh.pop %v4066
    %4069 = vrot.lane.b32.xlu0 %v4067, 64
    %v4070 = vpop.permute.xlu0 %4069
    %v4072 = vmul.f32 %v4052, %v4070
    %4074 = vrot.lane.b32.xlu0 %v4072, 32
    %v4075 = vpop.permute.xlu0 %4074
    %v4077 = vrot.slane %v3608, 6
    %4078 = vrot.lane.b32.xlu0 %v4077, 64
    %v4079 = vpop.permute.xlu0 %4078
    %v4081 = vsel %vm724, %v4075, %v4079
    %v4082 = vld [vmem:[%s10] sm:$0xff]
    %v4083 = vld [vmem:[%s10 + $0x8] sm:$0xff]
    %v4084 = vld [vmem:[%s10 + $0x10] sm:$0xff]
    %v4085 = vld [vmem:[%s10 + $0x18] sm:$0xff]
    %v4086 = vld [vmem:[%s10 + $0x20] sm:$0xff]
    %v4087 = vld [vmem:[%s10 + $0x28] sm:$0xff]
    %v4088 = vld [vmem:[%s10 + $0x30] sm:$0xff]
    %v4089 = vld [vmem:[%s10 + $0x38] sm:$0xff]
    %v4090 = vld [vmem:[%s11] sm:$0x1]
    %v4092 = vlaneseq
    %v4093 = vshrl.u32 %v4092, 7
    %v4094 = vsub.s32 0, %v4093
    %v4095 = vrot.slane %v4090, %v4094
    %v4098 = vrot.slane %v4081, 2
    %v4099 = vsel %vm1170, %v4098, 0
    %4101 = vmatprep.subr.mxu0 0.0
    %4102 = vmatpush1.msra.mxu0 0.0
    %4103 = vmatprep.subr.mxu0 0.0
    %4104 = vmatpush1.msra.mxu0 0.0
    %4105 = vmatprep.subr.mxu0 0.0
    %4106 = vmatpush1.msra.mxu0 0.0
    %4107 = vmatprep.subr.mxu0 0.0
    %4108 = vmatpush1.msra.mxu0 0.0
    %4109 = vmatprep.subr.mxu0 0.0
    %4110 = vmatpush1.msra.mxu0 0.0
    %4111 = vmatprep.subr.mxu0 0.0
    %4112 = vmatpush1.msra.mxu0 0.0
    %4113 = vmatprep.subr.mxu0 0.0
    %4114 = vmatpush1.msra.mxu0 0.0
    %4115 = vmatprep.subr.mxu0 0.0
    %4116 = vmatpush1.msra.mxu0 0.0
    %4117 = vmatprep.subr.mxu0 0.0
    %4118 = vmatpush1.msra.mxu0 %v4089
    %4119 = vmatprep.subr.mxu0 0.0
    %4120 = vmatpush1.msra.mxu0 %v4088
    %4121 = vmatprep.subr.mxu0 0.0
    %4122 = vmatpush1.msra.mxu0 %v4087
    %4123 = vmatprep.subr.mxu0 0.0
    %4124 = vmatpush1.msra.mxu0 %v4086
    %4125 = vmatprep.subr.mxu0 0.0
    %4126 = vmatpush1.msra.mxu0 %v4085
    %4127 = vmatprep.subr.mxu0 0.0
    %4128 = vmatpush1.msra.mxu0 %v4084
    %4129 = vmatprep.subr.mxu0 0.0
    %4130 = vmatpush1.msra.mxu0 %v4083
    %4131 = vmatprep.subr.mxu0 0.0
    %4132 = vmatpush1.msra.mxu0 %v4082
    %4133 = vmatprep.subr.mxu0 0.0
    %4134 = vmatpush2.msra.mxu0 0.0
    %4135 = vmatprep.subr.mxu0 0.0
    %4136 = vmatpush2.msra.mxu0 0.0
    %4137 = vmatprep.subr.mxu0 0.0
    %4138 = vmatpush2.msra.mxu0 0.0
    %4139 = vmatprep.subr.mxu0 0.0
    %4140 = vmatpush2.msra.mxu0 0.0
    %4141 = vmatprep.subr.mxu0 0.0
    %4142 = vmatpush2.msra.mxu0 0.0
    %4143 = vmatprep.subr.mxu0 0.0
    %4144 = vmatpush2.msra.mxu0 0.0
    %4145 = vmatprep.subr.mxu0 0.0
    %4146 = vmatpush2.msra.mxu0 0.0
    %4147 = vmatprep.subr.mxu0 0.0
    %4148 = vmatpush2.msra.mxu0 0.0
    %4149 = vmatprep.subr.mxu0 0.0
    %4150 = vmatpush2.msra.mxu0 0.0
    %4151 = vmatprep.subr.mxu0 0.0
    %4152 = vmatpush2.msra.mxu0 0.0
    %4153 = vmatprep.subr.mxu0 0.0
    %4154 = vmatpush2.msra.mxu0 0.0
    %4155 = vmatprep.subr.mxu0 0.0
    %4156 = vmatpush2.msra.mxu0 0.0
    %4157 = vmatprep.subr.mxu0 0.0
    %4158 = vmatpush2.msra.mxu0 0.0
    %4159 = vmatprep.subr.mxu0 0.0
    %4160 = vmatpush2.msra.mxu0 0.0
    %4161 = vmatprep.subr.mxu0 0.0
    %4162 = vmatpush2.msra.mxu0 0.0
    %4163 = vmatprep.subr.mxu0 0.0
    %4164 = vmatpush2.msra.mxu0 0.0
    %4165 = vmatprep.mubr.f32.mxu0 0.0
    %4166 = vmatmul.mubr.f32.gmra.mxu0 %v4099
    %v4167 = vpop.f32.mrf.mxu0
    %v4168 = vadd.f32 %v4095, %v4167
    %v4169 = vpop.f32.mrf.mxu0
    %4170 = vdwg.mxu0
    %v4171 = vmul.f32 %v4168, %v1005
    %v4172 = vtanh.pop %v4171
    %v4173 = vmul.f32 %v1005, %v4172
    %v4174 = vadd.f32 %v4173, %v1006
    %v4175 = vmul.f32 %v4174, %v3602
    %4177 = vrot.lane.b32.xlu0 %v4174, 64
    %v4178 = vpop.permute.xlu0 %4177
    %v4180 = vmul.f32 %v4174, %v4178
    %4182 = vrot.lane.b32.xlu0 %v4180, 32
    %v4183 = vpop.permute.xlu0 %4182
    %v4185 = vadd.f32 %v4175, %v4183
    %v4186 = vtanh.pop %v4185
    %4188 = vrot.lane.b32.xlu0 %v4186, 64
    %v4189 = vpop.permute.xlu0 %4188
    %v4191 = vmul.f32 %v4174, %v4189
    %4193 = vrot.lane.b32.xlu0 %v4191, 32
    %v4194 = vpop.permute.xlu0 %4193
    %4196 = vst.msk [vmem:[#allocation3 + $0xa] sm:$0x3] %vm1269, %v4194
    %v4197 = vld [vmem:[%s12] sm:$0xff]
    %v4198 = vld [vmem:[%s12 + $0x8] sm:$0xff]
    %v4199 = vld [vmem:[%s12 + $0x10] sm:$0xff]
    %v4200 = vld [vmem:[%s12 + $0x18] sm:$0xff]
    %v4201 = vsel %vm724, %v4194, 0
    %4203 = vmatprep.subr.mxu0 0.0
    %4204 = vmatpush1.msra.mxu0 0.0
    %4205 = vmatprep.subr.mxu0 0.0
    %4206 = vmatpush1.msra.mxu0 0.0
    %4207 = vmatprep.subr.mxu0 0.0
    %4208 = vmatpush1.msra.mxu0 0.0
    %4209 = vmatprep.subr.mxu0 0.0
    %4210 = vmatpush1.msra.mxu0 0.0
    %4211 = vmatprep.subr.mxu0 0.0
    %4212 = vmatpush1.msra.mxu0 0.0
    %4213 = vmatprep.subr.mxu0 0.0
    %4214 = vmatpush1.msra.mxu0 0.0
    %4215 = vmatprep.subr.mxu0 0.0
    %4216 = vmatpush1.msra.mxu0 0.0
    %4217 = vmatprep.subr.mxu0 0.0
    %4218 = vmatpush1.msra.mxu0 0.0
    %4219 = vmatprep.subr.mxu0 0.0
    %4220 = vmatpush1.msra.mxu0 0.0
    %4221 = vmatprep.subr.mxu0 0.0
    %4222 = vmatpush1.msra.mxu0 0.0
    %4223 = vmatprep.subr.mxu0 0.0
    %4224 = vmatpush1.msra.mxu0 0.0
    %4225 = vmatprep.subr.mxu0 0.0
    %4226 = vmatpush1.msra.mxu0 0.0
    %4227 = vmatprep.subr.mxu0 0.0
    %4228 = vmatpush1.msra.mxu0 %v4200
    %4229 = vmatprep.subr.mxu0 0.0
    %4230 = vmatpush1.msra.mxu0 %v4199
    %4231 = vmatprep.subr.mxu0 0.0
    %4232 = vmatpush1.msra.mxu0 %v4198
    %4233 = vmatprep.subr.mxu0 0.0
    %4234 = vmatpush1.msra.mxu0 %v4197
    %4235 = vmatprep.subr.mxu0 0.0
    %4236 = vmatpush2.msra.mxu0 0.0
    %4237 = vmatprep.subr.mxu0 0.0
    %4238 = vmatpush2.msra.mxu0 0.0
    %4239 = vmatprep.subr.mxu0 0.0
    %4240 = vmatpush2.msra.mxu0 0.0
    %4241 = vmatprep.subr.mxu0 0.0
    %4242 = vmatpush2.msra.mxu0 0.0
    %4243 = vmatprep.subr.mxu0 0.0
    %4244 = vmatpush2.msra.mxu0 0.0
    %4245 = vmatprep.subr.mxu0 0.0
    %4246 = vmatpush2.msra.mxu0 0.0
    %4247 = vmatprep.subr.mxu0 0.0
    %4248 = vmatpush2.msra.mxu0 0.0
    %4249 = vmatprep.subr.mxu0 0.0
    %4250 = vmatpush2.msra.mxu0 0.0
    %4251 = vmatprep.subr.mxu0 0.0
    %4252 = vmatpush2.msra.mxu0 0.0
    %4253 = vmatprep.subr.mxu0 0.0
    %4254 = vmatpush2.msra.mxu0 0.0
    %4255 = vmatprep.subr.mxu0 0.0
    %4256 = vmatpush2.msra.mxu0 0.0
    %4257 = vmatprep.subr.mxu0 0.0
    %4258 = vmatpush2.msra.mxu0 0.0
    %4259 = vmatprep.subr.mxu0 0.0
    %4260 = vmatpush2.msra.mxu0 0.0
    %4261 = vmatprep.subr.mxu0 0.0
    %4262 = vmatpush2.msra.mxu0 0.0
    %4263 = vmatprep.subr.mxu0 0.0
    %4264 = vmatpush2.msra.mxu0 0.0
    %4265 = vmatprep.subr.mxu0 0.0
    %4266 = vmatpush2.msra.mxu0 0.0
    %4267 = vmatprep.mubr.f32.mxu0 0.0
    %4268 = vmatmul.mubr.f32.gmra.mxu0 %v4201
    %v4269 = vpop.f32.mrf.mxu0
    %v4270 = vadd.f32 0.0, %v4269
    %v4271 = vpop.f32.mrf.mxu0
    %4272 = vdwg.mxu0
    %v4273 = vlaneseq
    %v4274 = vshrl.u32 %v4273, 7
    %v4275 = vsub.s32 0, %v4274
    %v4276 = vrot.slane %v4270, %v4275
    %v4277 = vlaneseq
    %v4278 = vshrl.u32 %v4277, 7
    %v4279 = vsub.s32 1, %v4278
    %v4280 = vrot.slane %v4270, %v4279
    %v4281 = vsel %vm1049, %v4280, %v4276
    %v4282 = vsel %vm1050, %v4280, %v4276
    %v4283 = vadd.f32 %v991, %v4281
    %v4284 = vadd.f32 %v997, %v4282
    %v4285 = vmax.f32 %v4283, 0.0
    %v4286 = vmax.f32 %v4284, 0.0
    %v4287 = vmul.f32 %v4285, %v1365
    %v4288 = vmul.f32 %v4286, %v1365
    %v4289 = vsel %vm724, %v4287, 0.0
    %4290 = vadd.xlane.f32.xlu0 %v4289
    %v4291 = vpop.xlane.xlu0 %4290
    %v4292 = vsel %vm724, %v4288, 0.0
    %4293 = vadd.xlane.f32.xlu0 %v4292
    %v4294 = vpop.xlane.xlu0 %4293
    %v4295 = vmax.f32 %v4291, %v4294
    %v4296 = vrot.slane %v4295, 4
    %v4297 = vmax.f32 %v4295, %v4296
    %v4298 = vrot.slane %v4297, 2
    %v4299 = vmax.f32 %v4297, %v4298
    %v4300 = vrot.slane %v4299, 1
    %v4301 = vmax.f32 %v4299, %v4300
    %v4302 = vsub.f32 %v4291, %v4301
    %v4303 = vsub.f32 %v4294, %v4301
    %v4304 = vmul.f32 %v4302, 1.442695
    %v4305 = vpow.pop %v4304
    %v4306 = vmul.f32 %v4303, 1.442695
    %v4307 = vpow.pop %v4306
    %v4308 = vmul.f32 %v4305, %v894
    %v4309 = vmul.f32 %v4307, %v895
    %4310 = vmatprep.subr.mxu0 0.0
    %4311 = vmatpush1.msra.mxu0 0.0
    %4312 = vmatprep.subr.mxu0 0.0
    %4313 = vmatpush1.msra.mxu0 0.0
    %4314 = vmatprep.subr.mxu0 0.0
    %4315 = vmatpush1.msra.mxu0 0.0
    %4316 = vmatprep.subr.mxu0 0.0
    %4317 = vmatpush1.msra.mxu0 0.0
    %4318 = vmatprep.subr.mxu0 0.0
    %4319 = vmatpush1.msra.mxu0 0.0
    %4320 = vmatprep.subr.mxu0 0.0
    %4321 = vmatpush1.msra.mxu0 0.0
    %4322 = vmatprep.subr.mxu0 0.0
    %4323 = vmatpush1.msra.mxu0 0.0
    %4324 = vmatprep.subr.mxu0 0.0
    %4325 = vmatpush1.msra.mxu0 0.0
    %4326 = vmatprep.subr.mxu0 0.0
    %4327 = vmatpush1.msra.mxu0 0.0
    %4328 = vmatprep.subr.mxu0 0.0
    %4329 = vmatpush1.msra.mxu0 0.0
    %4330 = vmatprep.subr.mxu0 0.0
    %4331 = vmatpush1.msra.mxu0 0.0
    %4332 = vmatprep.subr.mxu0 0.0
    %4333 = vmatpush1.msra.mxu0 0.0
    %4334 = vmatprep.subr.mxu0 0.0
    %4335 = vmatpush1.msra.mxu0 0.0
    %4336 = vmatprep.subr.mxu0 0.0
    %4337 = vmatpush1.msra.mxu0 0.0
    %4338 = vmatprep.subr.mxu0 0.0
    %4339 = vmatpush1.msra.mxu0 %v4309
    %4340 = vmatprep.subr.mxu0 0.0
    %4341 = vmatpush1.msra.mxu0 %v4308
    %4342 = vmatprep.subr.mxu0 0.0
    %4343 = vmatpush2.msra.mxu0 0.0
    %4344 = vmatprep.subr.mxu0 0.0
    %4345 = vmatpush2.msra.mxu0 0.0
    %4346 = vmatprep.subr.mxu0 0.0
    %4347 = vmatpush2.msra.mxu0 0.0
    %4348 = vmatprep.subr.mxu0 0.0
    %4349 = vmatpush2.msra.mxu0 0.0
    %4350 = vmatprep.subr.mxu0 0.0
    %4351 = vmatpush2.msra.mxu0 0.0
    %4352 = vmatprep.subr.mxu0 0.0
    %4353 = vmatpush2.msra.mxu0 0.0
    %4354 = vmatprep.subr.mxu0 0.0
    %4355 = vmatpush2.msra.mxu0 0.0
    %4356 = vmatprep.subr.mxu0 0.0
    %4357 = vmatpush2.msra.mxu0 0.0
    %4358 = vmatprep.subr.mxu0 0.0
    %4359 = vmatpush2.msra.mxu0 0.0
    %4360 = vmatprep.subr.mxu0 0.0
    %4361 = vmatpush2.msra.mxu0 0.0
    %4362 = vmatprep.subr.mxu0 0.0
    %4363 = vmatpush2.msra.mxu0 0.0
    %4364 = vmatprep.subr.mxu0 0.0
    %4365 = vmatpush2.msra.mxu0 0.0
    %4366 = vmatprep.subr.mxu0 0.0
    %4367 = vmatpush2.msra.mxu0 0.0
    %4368 = vmatprep.subr.mxu0 0.0
    %4369 = vmatpush2.msra.mxu0 0.0
    %4370 = vmatprep.subr.mxu0 0.0
    %4371 = vmatpush2.msra.mxu0 0.0
    %4372 = vmatprep.subr.mxu0 0.0
    %4373 = vmatpush2.msra.mxu0 0.0
    %4374 = vmatprep.mubr.f32.mxu0 0.0
    %4375 = vmatmul.mubr.f32.gmra.mxu0 %v1392
    %v4376 = vpop.f32.mrf.mxu0
    %v4377 = vadd.f32 0.0, %v4376
    %v4378 = vpop.f32.mrf.mxu0
    %4379 = vdwg.mxu0
    %4380 = vmatprep.subr.mxu0 0.0
    %4381 = vmatpush1.msra.mxu0 0.0
    %4382 = vmatprep.subr.mxu0 0.0
    %4383 = vmatpush1.msra.mxu0 0.0
    %4384 = vmatprep.subr.mxu0 0.0
    %4385 = vmatpush1.msra.mxu0 0.0
    %4386 = vmatprep.subr.mxu0 0.0
    %4387 = vmatpush1.msra.mxu0 0.0
    %4388 = vmatprep.subr.mxu0 0.0
    %4389 = vmatpush1.msra.mxu0 0.0
    %4390 = vmatprep.subr.mxu0 0.0
    %4391 = vmatpush1.msra.mxu0 0.0
    %4392 = vmatprep.subr.mxu0 0.0
    %4393 = vmatpush1.msra.mxu0 0.0
    %4394 = vmatprep.subr.mxu0 0.0
    %4395 = vmatpush1.msra.mxu0 0.0
    %4396 = vmatprep.subr.mxu0 0.0
    %4397 = vmatpush1.msra.mxu0 0.0
    %4398 = vmatprep.subr.mxu0 0.0
    %4399 = vmatpush1.msra.mxu0 0.0
    %4400 = vmatprep.subr.mxu0 0.0
    %4401 = vmatpush1.msra.mxu0 0.0
    %4402 = vmatprep.subr.mxu0 0.0
    %4403 = vmatpush1.msra.mxu0 0.0
    %4404 = vmatprep.subr.mxu0 0.0
    %4405 = vmatpush1.msra.mxu0 0.0
    %4406 = vmatprep.subr.mxu0 0.0
    %4407 = vmatpush1.msra.mxu0 0.0
    %4408 = vmatprep.subr.mxu0 0.0
    %4409 = vmatpush1.msra.mxu0 %v4307
    %4410 = vmatprep.subr.mxu0 0.0
    %4411 = vmatpush1.msra.mxu0 %v4305
    %4412 = vmatprep.subr.mxu0 0.0
    %4413 = vmatpush2.msra.mxu0 0.0
    %4414 = vmatprep.subr.mxu0 0.0
    %4415 = vmatpush2.msra.mxu0 0.0
    %4416 = vmatprep.subr.mxu0 0.0
    %4417 = vmatpush2.msra.mxu0 0.0
    %4418 = vmatprep.subr.mxu0 0.0
    %4419 = vmatpush2.msra.mxu0 0.0
    %4420 = vmatprep.subr.mxu0 0.0
    %4421 = vmatpush2.msra.mxu0 0.0
    %4422 = vmatprep.subr.mxu0 0.0
    %4423 = vmatpush2.msra.mxu0 0.0
    %4424 = vmatprep.subr.mxu0 0.0
    %4425 = vmatpush2.msra.mxu0 0.0
    %4426 = vmatprep.subr.mxu0 0.0
    %4427 = vmatpush2.msra.mxu0 0.0
    %4428 = vmatprep.subr.mxu0 0.0
    %4429 = vmatpush2.msra.mxu0 0.0
    %4430 = vmatprep.subr.mxu0 0.0
    %4431 = vmatpush2.msra.mxu0 0.0
    %4432 = vmatprep.subr.mxu0 0.0
    %4433 = vmatpush2.msra.mxu0 0.0
    %4434 = vmatprep.subr.mxu0 0.0
    %4435 = vmatpush2.msra.mxu0 0.0
    %4436 = vmatprep.subr.mxu0 0.0
    %4437 = vmatpush2.msra.mxu0 0.0
    %4438 = vmatprep.subr.mxu0 0.0
    %4439 = vmatpush2.msra.mxu0 0.0
    %4440 = vmatprep.subr.mxu0 0.0
    %4441 = vmatpush2.msra.mxu0 0.0
    %4442 = vmatprep.subr.mxu0 0.0
    %4443 = vmatpush2.msra.mxu0 0.0
    %4444 = vmatprep.mubr.f32.mxu0 0.0
    %4445 = vmatmul.mubr.f32.gmra.mxu0 %v1392
    %v4446 = vpop.f32.mrf.mxu0
    %v4447 = vadd.f32 0.0, %v4446
    %v4448 = vpop.f32.mrf.mxu0
    %4449 = vdwg.mxu0
    %v4450 = vrcp.pop %v4447
    %4452 = vset.pattern.permute.xlu0 0
    %4453 = vperm.xlu0 %4452, %v4450
    %v4454 = vpop.permute.xlu0 %4453
    %v4456 = vmul.f32 %v4377, %v4454
    %4457 = vst.msk [vmem:[#allocation2 + $0xa] sm:$0x3] %vm1269, %v4456
    %v4459 = vrot.slane %v4456, 6
    %4460 = vrot.lane.b32.xlu0 %v4459, 32
    %v4461 = vpop.permute.xlu0 %4460
    %v4463 = vsel %vm724, %v4075, %v4461
    %v4464 = vld [vmem:[%s14] sm:$0xff]
    %v4465 = vld [vmem:[%s14 + $0x8] sm:$0xff]
    %v4466 = vld [vmem:[%s14 + $0x10] sm:$0xff]
    %v4467 = vld [vmem:[%s14 + $0x18] sm:$0xff]
    %v4468 = vld [vmem:[%s14 + $0x20] sm:$0xff]
    %v4469 = vld [vmem:[%s14 + $0x28] sm:$0xff]
    %v4470 = vld [vmem:[%s14 + $0x30] sm:$0xff]
    %v4471 = vld [vmem:[%s14 + $0x38] sm:$0xff]
    %v4472 = vld [vmem:[%s15] sm:$0x1]
    %v4474 = vlaneseq
    %v4475 = vshrl.u32 %v4474, 7
    %v4476 = vsub.s32 0, %v4475
    %v4477 = vrot.slane %v4472, %v4476
    %v4480 = vrot.slane %v4463, 2
    %v4481 = vsel %vm1170, %v4480, 0
    %4483 = vmatprep.subr.mxu0 0.0
    %4484 = vmatpush1.msra.mxu0 0.0
    %4485 = vmatprep.subr.mxu0 0.0
    %4486 = vmatpush1.msra.mxu0 0.0
    %4487 = vmatprep.subr.mxu0 0.0
    %4488 = vmatpush1.msra.mxu0 0.0
    %4489 = vmatprep.subr.mxu0 0.0
    %4490 = vmatpush1.msra.mxu0 0.0
    %4491 = vmatprep.subr.mxu0 0.0
    %4492 = vmatpush1.msra.mxu0 0.0
    %4493 = vmatprep.subr.mxu0 0.0
    %4494 = vmatpush1.msra.mxu0 0.0
    %4495 = vmatprep.subr.mxu0 0.0
    %4496 = vmatpush1.msra.mxu0 0.0
    %4497 = vmatprep.subr.mxu0 0.0
    %4498 = vmatpush1.msra.mxu0 0.0
    %4499 = vmatprep.subr.mxu0 0.0
    %4500 = vmatpush1.msra.mxu0 %v4471
    %4501 = vmatprep.subr.mxu0 0.0
    %4502 = vmatpush1.msra.mxu0 %v4470
    %4503 = vmatprep.subr.mxu0 0.0
    %4504 = vmatpush1.msra.mxu0 %v4469
    %4505 = vmatprep.subr.mxu0 0.0
    %4506 = vmatpush1.msra.mxu0 %v4468
    %4507 = vmatprep.subr.mxu0 0.0
    %4508 = vmatpush1.msra.mxu0 %v4467
    %4509 = vmatprep.subr.mxu0 0.0
    %4510 = vmatpush1.msra.mxu0 %v4466
    %4511 = vmatprep.subr.mxu0 0.0
    %4512 = vmatpush1.msra.mxu0 %v4465
    %4513 = vmatprep.subr.mxu0 0.0
    %4514 = vmatpush1.msra.mxu0 %v4464
    %4515 = vmatprep.subr.mxu0 0.0
    %4516 = vmatpush2.msra.mxu0 0.0
    %4517 = vmatprep.subr.mxu0 0.0
    %4518 = vmatpush2.msra.mxu0 0.0
    %4519 = vmatprep.subr.mxu0 0.0
    %4520 = vmatpush2.msra.mxu0 0.0
    %4521 = vmatprep.subr.mxu0 0.0
    %4522 = vmatpush2.msra.mxu0 0.0
    %4523 = vmatprep.subr.mxu0 0.0
    %4524 = vmatpush2.msra.mxu0 0.0
    %4525 = vmatprep.subr.mxu0 0.0
    %4526 = vmatpush2.msra.mxu0 0.0
    %4527 = vmatprep.subr.mxu0 0.0
    %4528 = vmatpush2.msra.mxu0 0.0
    %4529 = vmatprep.subr.mxu0 0.0
    %4530 = vmatpush2.msra.mxu0 0.0
    %4531 = vmatprep.subr.mxu0 0.0
    %4532 = vmatpush2.msra.mxu0 0.0
    %4533 = vmatprep.subr.mxu0 0.0
    %4534 = vmatpush2.msra.mxu0 0.0
    %4535 = vmatprep.subr.mxu0 0.0
    %4536 = vmatpush2.msra.mxu0 0.0
    %4537 = vmatprep.subr.mxu0 0.0
    %4538 = vmatpush2.msra.mxu0 0.0
    %4539 = vmatprep.subr.mxu0 0.0
    %4540 = vmatpush2.msra.mxu0 0.0
    %4541 = vmatprep.subr.mxu0 0.0
    %4542 = vmatpush2.msra.mxu0 0.0
    %4543 = vmatprep.subr.mxu0 0.0
    %4544 = vmatpush2.msra.mxu0 0.0
    %4545 = vmatprep.subr.mxu0 0.0
    %4546 = vmatpush2.msra.mxu0 0.0
    %4547 = vmatprep.mubr.f32.mxu0 0.0
    %4548 = vmatmul.mubr.f32.gmra.mxu0 %v4481
    %v4549 = vpop.f32.mrf.mxu0
    %v4550 = vadd.f32 %v4477, %v4549
    %v4551 = vpop.f32.mrf.mxu0
    %4552 = vdwg.mxu0
    %v4553 = vld [vmem:[%s9] sm:$0xff]
    %v4554 = vld [vmem:[%s9 + $0x8] sm:$0xff]
    %v4555 = vld [vmem:[%s9 + $0x10] sm:$0xff]
    %v4556 = vld [vmem:[%s9 + $0x18] sm:$0xff]
    %v4558 = vsel %vm724, %v4550, 0
    %4560 = vmatprep.subr.mxu0 0.0
    %4561 = vmatpush1.msra.mxu0 0.0
    %4562 = vmatprep.subr.mxu0 0.0
    %4563 = vmatpush1.msra.mxu0 0.0
    %4564 = vmatprep.subr.mxu0 0.0
    %4565 = vmatpush1.msra.mxu0 0.0
    %4566 = vmatprep.subr.mxu0 0.0
    %4567 = vmatpush1.msra.mxu0 0.0
    %4568 = vmatprep.subr.mxu0 0.0
    %4569 = vmatpush1.msra.mxu0 0.0
    %4570 = vmatprep.subr.mxu0 0.0
    %4571 = vmatpush1.msra.mxu0 0.0
    %4572 = vmatprep.subr.mxu0 0.0
    %4573 = vmatpush1.msra.mxu0 0.0
    %4574 = vmatprep.subr.mxu0 0.0
    %4575 = vmatpush1.msra.mxu0 0.0
    %4576 = vmatprep.subr.mxu0 0.0
    %4577 = vmatpush1.msra.mxu0 0.0
    %4578 = vmatprep.subr.mxu0 0.0
    %4579 = vmatpush1.msra.mxu0 0.0
    %4580 = vmatprep.subr.mxu0 0.0
    %4581 = vmatpush1.msra.mxu0 0.0
    %4582 = vmatprep.subr.mxu0 0.0
    %4583 = vmatpush1.msra.mxu0 0.0
    %4584 = vmatprep.subr.mxu0 0.0
    %4585 = vmatpush1.msra.mxu0 %v4556
    %4586 = vmatprep.subr.mxu0 0.0
    %4587 = vmatpush1.msra.mxu0 %v4555
    %4588 = vmatprep.subr.mxu0 0.0
    %4589 = vmatpush1.msra.mxu0 %v4554
    %4590 = vmatprep.subr.mxu0 0.0
    %4591 = vmatpush1.msra.mxu0 %v4553
    %4592 = vmatprep.subr.mxu0 0.0
    %4593 = vmatpush2.msra.mxu0 0.0
    %4594 = vmatprep.subr.mxu0 0.0
    %4595 = vmatpush2.msra.mxu0 0.0
    %4596 = vmatprep.subr.mxu0 0.0
    %4597 = vmatpush2.msra.mxu0 0.0
    %4598 = vmatprep.subr.mxu0 0.0
    %4599 = vmatpush2.msra.mxu0 0.0
    %4600 = vmatprep.subr.mxu0 0.0
    %4601 = vmatpush2.msra.mxu0 0.0
    %4602 = vmatprep.subr.mxu0 0.0
    %4603 = vmatpush2.msra.mxu0 0.0
    %4604 = vmatprep.subr.mxu0 0.0
    %4605 = vmatpush2.msra.mxu0 0.0
    %4606 = vmatprep.subr.mxu0 0.0
    %4607 = vmatpush2.msra.mxu0 0.0
    %4608 = vmatprep.subr.mxu0 0.0
    %4609 = vmatpush2.msra.mxu0 0.0
    %4610 = vmatprep.subr.mxu0 0.0
    %4611 = vmatpush2.msra.mxu0 0.0
    %4612 = vmatprep.subr.mxu0 0.0
    %4613 = vmatpush2.msra.mxu0 0.0
    %4614 = vmatprep.subr.mxu0 0.0
    %4615 = vmatpush2.msra.mxu0 0.0
    %4616 = vmatprep.subr.mxu0 0.0
    %4617 = vmatpush2.msra.mxu0 0.0
    %4618 = vmatprep.subr.mxu0 0.0
    %4619 = vmatpush2.msra.mxu0 0.0
    %4620 = vmatprep.subr.mxu0 0.0
    %4621 = vmatpush2.msra.mxu0 0.0
    %4622 = vmatprep.subr.mxu0 0.0
    %4623 = vmatpush2.msra.mxu0 0.0
    %4624 = vmatprep.mubr.f32.mxu0 0.0
    %4625 = vmatmul.mubr.f32.gmra.mxu0 %v4558
    %v4626 = vpop.f32.mrf.mxu0
    %v4627 = vadd.f32 0.0, %v4626
    %v4628 = vpop.f32.mrf.mxu0
    %4629 = vdwg.mxu0
    %v4631 = vrot.slane %v4627, 4
    %v4633 = vadd.f32 %v995, %v4631
    %v4634 = vmul.f32 %v4633, %v1005
    %v4635 = vtanh.pop %v4634
    %v4636 = vmul.f32 %v1005, %v4635
    %v4637 = vadd.f32 %v4636, %v1006
    %v4639 = vrot.slane %v4066, 6
    %v4641 = vmul.f32 %v4637, %v4639
    %4643 = vrot.lane.b32.xlu0 %v4637, 64
    %v4644 = vpop.permute.xlu0 %4643
    %v4646 = vmul.f32 %v4637, %v4644
    %4648 = vrot.lane.b32.xlu0 %v4646, 32
    %v4649 = vpop.permute.xlu0 %4648
    %v4651 = vadd.f32 %v4641, %v4649
    %v4652 = vtanh.pop %v4651
    %4654 = vrot.lane.b32.xlu0 %v4652, 64
    %v4655 = vpop.permute.xlu0 %4654
    %v4657 = vmul.f32 %v4637, %v4655
    %4659 = vrot.lane.b32.xlu0 %v4657, 32
    %v4660 = vpop.permute.xlu0 %4659
    %v4662 = vrot.slane %v4191, 4
    %4663 = vrot.lane.b32.xlu0 %v4662, 64
    %v4664 = vpop.permute.xlu0 %4663
    %v4666 = vsel %vm724, %v4660, %v4664
    %v4667 = vld [vmem:[%s10] sm:$0xff]
    %v4668 = vld [vmem:[%s10 + $0x8] sm:$0xff]
    %v4669 = vld [vmem:[%s10 + $0x10] sm:$0xff]
    %v4670 = vld [vmem:[%s10 + $0x18] sm:$0xff]
    %v4671 = vld [vmem:[%s10 + $0x20] sm:$0xff]
    %v4672 = vld [vmem:[%s10 + $0x28] sm:$0xff]
    %v4673 = vld [vmem:[%s10 + $0x30] sm:$0xff]
    %v4674 = vld [vmem:[%s10 + $0x38] sm:$0xff]
    %v4675 = vld [vmem:[%s11] sm:$0x1]
    %v4677 = vlaneseq
    %v4678 = vshrl.u32 %v4677, 7
    %v4679 = vsub.s32 0, %v4678
    %v4680 = vrot.slane %v4675, %v4679
    %v4683 = vrot.slane %v4666, 4
    %v4684 = vsel %vm1170, %v4683, 0
    %4686 = vmatprep.subr.mxu0 0.0
    %4687 = vmatpush1.msra.mxu0 0.0
    %4688 = vmatprep.subr.mxu0 0.0
    %4689 = vmatpush1.msra.mxu0 0.0
    %4690 = vmatprep.subr.mxu0 0.0
    %4691 = vmatpush1.msra.mxu0 0.0
    %4692 = vmatprep.subr.mxu0 0.0
    %4693 = vmatpush1.msra.mxu0 0.0
    %4694 = vmatprep.subr.mxu0 0.0
    %4695 = vmatpush1.msra.mxu0 0.0
    %4696 = vmatprep.subr.mxu0 0.0
    %4697 = vmatpush1.msra.mxu0 0.0
    %4698 = vmatprep.subr.mxu0 0.0
    %4699 = vmatpush1.msra.mxu0 0.0
    %4700 = vmatprep.subr.mxu0 0.0
    %4701 = vmatpush1.msra.mxu0 0.0
    %4702 = vmatprep.subr.mxu0 0.0
    %4703 = vmatpush1.msra.mxu0 %v4674
    %4704 = vmatprep.subr.mxu0 0.0
    %4705 = vmatpush1.msra.mxu0 %v4673
    %4706 = vmatprep.subr.mxu0 0.0
    %4707 = vmatpush1.msra.mxu0 %v4672
    %4708 = vmatprep.subr.mxu0 0.0
    %4709 = vmatpush1.msra.mxu0 %v4671
    %4710 = vmatprep.subr.mxu0 0.0
    %4711 = vmatpush1.msra.mxu0 %v4670
    %4712 = vmatprep.subr.mxu0 0.0
    %4713 = vmatpush1.msra.mxu0 %v4669
    %4714 = vmatprep.subr.mxu0 0.0
    %4715 = vmatpush1.msra.mxu0 %v4668
    %4716 = vmatprep.subr.mxu0 0.0
    %4717 = vmatpush1.msra.mxu0 %v4667
    %4718 = vmatprep.subr.mxu0 0.0
    %4719 = vmatpush2.msra.mxu0 0.0
    %4720 = vmatprep.subr.mxu0 0.0
    %4721 = vmatpush2.msra.mxu0 0.0
    %4722 = vmatprep.subr.mxu0 0.0
    %4723 = vmatpush2.msra.mxu0 0.0
    %4724 = vmatprep.subr.mxu0 0.0
    %4725 = vmatpush2.msra.mxu0 0.0
    %4726 = vmatprep.subr.mxu0 0.0
    %4727 = vmatpush2.msra.mxu0 0.0
    %4728 = vmatprep.subr.mxu0 0.0
    %4729 = vmatpush2.msra.mxu0 0.0
    %4730 = vmatprep.subr.mxu0 0.0
    %4731 = vmatpush2.msra.mxu0 0.0
    %4732 = vmatprep.subr.mxu0 0.0
    %4733 = vmatpush2.msra.mxu0 0.0
    %4734 = vmatprep.subr.mxu0 0.0
    %4735 = vmatpush2.msra.mxu0 0.0
    %4736 = vmatprep.subr.mxu0 0.0
    %4737 = vmatpush2.msra.mxu0 0.0
    %4738 = vmatprep.subr.mxu0 0.0
    %4739 = vmatpush2.msra.mxu0 0.0
    %4740 = vmatprep.subr.mxu0 0.0
    %4741 = vmatpush2.msra.mxu0 0.0
    %4742 = vmatprep.subr.mxu0 0.0
    %4743 = vmatpush2.msra.mxu0 0.0
    %4744 = vmatprep.subr.mxu0 0.0
    %4745 = vmatpush2.msra.mxu0 0.0
    %4746 = vmatprep.subr.mxu0 0.0
    %4747 = vmatpush2.msra.mxu0 0.0
    %4748 = vmatprep.subr.mxu0 0.0
    %4749 = vmatpush2.msra.mxu0 0.0
    %4750 = vmatprep.mubr.f32.mxu0 0.0
    %4751 = vmatmul.mubr.f32.gmra.mxu0 %v4684
    %v4752 = vpop.f32.mrf.mxu0
    %v4753 = vadd.f32 %v4680, %v4752
    %v4754 = vpop.f32.mrf.mxu0
    %4755 = vdwg.mxu0
    %v4756 = vmul.f32 %v4753, %v1005
    %v4757 = vtanh.pop %v4756
    %v4758 = vmul.f32 %v1005, %v4757
    %v4759 = vadd.f32 %v4758, %v1006
    %v4760 = vmul.f32 %v4759, %v4185
    %4762 = vrot.lane.b32.xlu0 %v4759, 64
    %v4763 = vpop.permute.xlu0 %4762
    %v4765 = vmul.f32 %v4759, %v4763
    %4767 = vrot.lane.b32.xlu0 %v4765, 32
    %v4768 = vpop.permute.xlu0 %4767
    %v4770 = vadd.f32 %v4760, %v4768
    %v4771 = vtanh.pop %v4770
    %4773 = vrot.lane.b32.xlu0 %v4771, 64
    %v4774 = vpop.permute.xlu0 %4773
    %v4776 = vmul.f32 %v4759, %v4774
    %4778 = vrot.lane.b32.xlu0 %v4776, 32
    %v4779 = vpop.permute.xlu0 %4778
    %4781 = vst.msk [vmem:[#allocation3 + $0xc] sm:$0x3] %vm1269, %v4779
    %v4782 = vld [vmem:[%s12] sm:$0xff]
    %v4783 = vld [vmem:[%s12 + $0x8] sm:$0xff]
    %v4784 = vld [vmem:[%s12 + $0x10] sm:$0xff]
    %v4785 = vld [vmem:[%s12 + $0x18] sm:$0xff]
    %v4786 = vsel %vm724, %v4779, 0
    %4788 = vmatprep.subr.mxu0 0.0
    %4789 = vmatpush1.msra.mxu0 0.0
    %4790 = vmatprep.subr.mxu0 0.0
    %4791 = vmatpush1.msra.mxu0 0.0
    %4792 = vmatprep.subr.mxu0 0.0
    %4793 = vmatpush1.msra.mxu0 0.0
    %4794 = vmatprep.subr.mxu0 0.0
    %4795 = vmatpush1.msra.mxu0 0.0
    %4796 = vmatprep.subr.mxu0 0.0
    %4797 = vmatpush1.msra.mxu0 0.0
    %4798 = vmatprep.subr.mxu0 0.0
    %4799 = vmatpush1.msra.mxu0 0.0
    %4800 = vmatprep.subr.mxu0 0.0
    %4801 = vmatpush1.msra.mxu0 0.0
    %4802 = vmatprep.subr.mxu0 0.0
    %4803 = vmatpush1.msra.mxu0 0.0
    %4804 = vmatprep.subr.mxu0 0.0
    %4805 = vmatpush1.msra.mxu0 0.0
    %4806 = vmatprep.subr.mxu0 0.0
    %4807 = vmatpush1.msra.mxu0 0.0
    %4808 = vmatprep.subr.mxu0 0.0
    %4809 = vmatpush1.msra.mxu0 0.0
    %4810 = vmatprep.subr.mxu0 0.0
    %4811 = vmatpush1.msra.mxu0 0.0
    %4812 = vmatprep.subr.mxu0 0.0
    %4813 = vmatpush1.msra.mxu0 %v4785
    %4814 = vmatprep.subr.mxu0 0.0
    %4815 = vmatpush1.msra.mxu0 %v4784
    %4816 = vmatprep.subr.mxu0 0.0
    %4817 = vmatpush1.msra.mxu0 %v4783
    %4818 = vmatprep.subr.mxu0 0.0
    %4819 = vmatpush1.msra.mxu0 %v4782
    %4820 = vmatprep.subr.mxu0 0.0
    %4821 = vmatpush2.msra.mxu0 0.0
    %4822 = vmatprep.subr.mxu0 0.0
    %4823 = vmatpush2.msra.mxu0 0.0
    %4824 = vmatprep.subr.mxu0 0.0
    %4825 = vmatpush2.msra.mxu0 0.0
    %4826 = vmatprep.subr.mxu0 0.0
    %4827 = vmatpush2.msra.mxu0 0.0
    %4828 = vmatprep.subr.mxu0 0.0
    %4829 = vmatpush2.msra.mxu0 0.0
    %4830 = vmatprep.subr.mxu0 0.0
    %4831 = vmatpush2.msra.mxu0 0.0
    %4832 = vmatprep.subr.mxu0 0.0
    %4833 = vmatpush2.msra.mxu0 0.0
    %4834 = vmatprep.subr.mxu0 0.0
    %4835 = vmatpush2.msra.mxu0 0.0
    %4836 = vmatprep.subr.mxu0 0.0
    %4837 = vmatpush2.msra.mxu0 0.0
    %4838 = vmatprep.subr.mxu0 0.0
    %4839 = vmatpush2.msra.mxu0 0.0
    %4840 = vmatprep.subr.mxu0 0.0
    %4841 = vmatpush2.msra.mxu0 0.0
    %4842 = vmatprep.subr.mxu0 0.0
    %4843 = vmatpush2.msra.mxu0 0.0
    %4844 = vmatprep.subr.mxu0 0.0
    %4845 = vmatpush2.msra.mxu0 0.0
    %4846 = vmatprep.subr.mxu0 0.0
    %4847 = vmatpush2.msra.mxu0 0.0
    %4848 = vmatprep.subr.mxu0 0.0
    %4849 = vmatpush2.msra.mxu0 0.0
    %4850 = vmatprep.subr.mxu0 0.0
    %4851 = vmatpush2.msra.mxu0 0.0
    %4852 = vmatprep.mubr.f32.mxu0 0.0
    %4853 = vmatmul.mubr.f32.gmra.mxu0 %v4786
    %v4854 = vpop.f32.mrf.mxu0
    %v4855 = vadd.f32 0.0, %v4854
    %v4856 = vpop.f32.mrf.mxu0
    %4857 = vdwg.mxu0
    %v4858 = vlaneseq
    %v4859 = vshrl.u32 %v4858, 7
    %v4860 = vsub.s32 0, %v4859
    %v4861 = vrot.slane %v4855, %v4860
    %v4862 = vlaneseq
    %v4863 = vshrl.u32 %v4862, 7
    %v4864 = vsub.s32 1, %v4863
    %v4865 = vrot.slane %v4855, %v4864
    %v4866 = vsel %vm1049, %v4865, %v4861
    %v4867 = vsel %vm1050, %v4865, %v4861
    %v4868 = vadd.f32 %v991, %v4866
    %v4869 = vadd.f32 %v997, %v4867
    %v4870 = vmax.f32 %v4868, 0.0
    %v4871 = vmax.f32 %v4869, 0.0
    %v4872 = vmul.f32 %v4870, %v1365
    %v4873 = vmul.f32 %v4871, %v1365
    %v4874 = vsel %vm724, %v4872, 0.0
    %4875 = vadd.xlane.f32.xlu0 %v4874
    %v4876 = vpop.xlane.xlu0 %4875
    %v4877 = vsel %vm724, %v4873, 0.0
    %4878 = vadd.xlane.f32.xlu0 %v4877
    %v4879 = vpop.xlane.xlu0 %4878
    %v4880 = vmax.f32 %v4876, %v4879
    %v4881 = vrot.slane %v4880, 4
    %v4882 = vmax.f32 %v4880, %v4881
    %v4883 = vrot.slane %v4882, 2
    %v4884 = vmax.f32 %v4882, %v4883
    %v4885 = vrot.slane %v4884, 1
    %v4886 = vmax.f32 %v4884, %v4885
    %v4887 = vsub.f32 %v4876, %v4886
    %v4888 = vsub.f32 %v4879, %v4886
    %v4889 = vmul.f32 %v4887, 1.442695
    %v4890 = vpow.pop %v4889
    %v4891 = vmul.f32 %v4888, 1.442695
    %v4892 = vpow.pop %v4891
    %v4893 = vmul.f32 %v4890, %v894
    %v4894 = vmul.f32 %v4892, %v895
    %4895 = vmatprep.subr.mxu0 0.0
    %4896 = vmatpush1.msra.mxu0 0.0
    %4897 = vmatprep.subr.mxu0 0.0
    %4898 = vmatpush1.msra.mxu0 0.0
    %4899 = vmatprep.subr.mxu0 0.0
    %4900 = vmatpush1.msra.mxu0 0.0
    %4901 = vmatprep.subr.mxu0 0.0
    %4902 = vmatpush1.msra.mxu0 0.0
    %4903 = vmatprep.subr.mxu0 0.0
    %4904 = vmatpush1.msra.mxu0 0.0
    %4905 = vmatprep.subr.mxu0 0.0
    %4906 = vmatpush1.msra.mxu0 0.0
    %4907 = vmatprep.subr.mxu0 0.0
    %4908 = vmatpush1.msra.mxu0 0.0
    %4909 = vmatprep.subr.mxu0 0.0
    %4910 = vmatpush1.msra.mxu0 0.0
    %4911 = vmatprep.subr.mxu0 0.0
    %4912 = vmatpush1.msra.mxu0 0.0
    %4913 = vmatprep.subr.mxu0 0.0
    %4914 = vmatpush1.msra.mxu0 0.0
    %4915 = vmatprep.subr.mxu0 0.0
    %4916 = vmatpush1.msra.mxu0 0.0
    %4917 = vmatprep.subr.mxu0 0.0
    %4918 = vmatpush1.msra.mxu0 0.0
    %4919 = vmatprep.subr.mxu0 0.0
    %4920 = vmatpush1.msra.mxu0 0.0
    %4921 = vmatprep.subr.mxu0 0.0
    %4922 = vmatpush1.msra.mxu0 0.0
    %4923 = vmatprep.subr.mxu0 0.0
    %4924 = vmatpush1.msra.mxu0 %v4894
    %4925 = vmatprep.subr.mxu0 0.0
    %4926 = vmatpush1.msra.mxu0 %v4893
    %4927 = vmatprep.subr.mxu0 0.0
    %4928 = vmatpush2.msra.mxu0 0.0
    %4929 = vmatprep.subr.mxu0 0.0
    %4930 = vmatpush2.msra.mxu0 0.0
    %4931 = vmatprep.subr.mxu0 0.0
    %4932 = vmatpush2.msra.mxu0 0.0
    %4933 = vmatprep.subr.mxu0 0.0
    %4934 = vmatpush2.msra.mxu0 0.0
    %4935 = vmatprep.subr.mxu0 0.0
    %4936 = vmatpush2.msra.mxu0 0.0
    %4937 = vmatprep.subr.mxu0 0.0
    %4938 = vmatpush2.msra.mxu0 0.0
    %4939 = vmatprep.subr.mxu0 0.0
    %4940 = vmatpush2.msra.mxu0 0.0
    %4941 = vmatprep.subr.mxu0 0.0
    %4942 = vmatpush2.msra.mxu0 0.0
    %4943 = vmatprep.subr.mxu0 0.0
    %4944 = vmatpush2.msra.mxu0 0.0
    %4945 = vmatprep.subr.mxu0 0.0
    %4946 = vmatpush2.msra.mxu0 0.0
    %4947 = vmatprep.subr.mxu0 0.0
    %4948 = vmatpush2.msra.mxu0 0.0
    %4949 = vmatprep.subr.mxu0 0.0
    %4950 = vmatpush2.msra.mxu0 0.0
    %4951 = vmatprep.subr.mxu0 0.0
    %4952 = vmatpush2.msra.mxu0 0.0
    %4953 = vmatprep.subr.mxu0 0.0
    %4954 = vmatpush2.msra.mxu0 0.0
    %4955 = vmatprep.subr.mxu0 0.0
    %4956 = vmatpush2.msra.mxu0 0.0
    %4957 = vmatprep.subr.mxu0 0.0
    %4958 = vmatpush2.msra.mxu0 0.0
    %4959 = vmatprep.mubr.f32.mxu0 0.0
    %4960 = vmatmul.mubr.f32.gmra.mxu0 %v1392
    %v4961 = vpop.f32.mrf.mxu0
    %v4962 = vadd.f32 0.0, %v4961
    %v4963 = vpop.f32.mrf.mxu0
    %4964 = vdwg.mxu0
    %4965 = vmatprep.subr.mxu0 0.0
    %4966 = vmatpush1.msra.mxu0 0.0
    %4967 = vmatprep.subr.mxu0 0.0
    %4968 = vmatpush1.msra.mxu0 0.0
    %4969 = vmatprep.subr.mxu0 0.0
    %4970 = vmatpush1.msra.mxu0 0.0
    %4971 = vmatprep.subr.mxu0 0.0
    %4972 = vmatpush1.msra.mxu0 0.0
    %4973 = vmatprep.subr.mxu0 0.0
    %4974 = vmatpush1.msra.mxu0 0.0
    %4975 = vmatprep.subr.mxu0 0.0
    %4976 = vmatpush1.msra.mxu0 0.0
    %4977 = vmatprep.subr.mxu0 0.0
    %4978 = vmatpush1.msra.mxu0 0.0
    %4979 = vmatprep.subr.mxu0 0.0
    %4980 = vmatpush1.msra.mxu0 0.0
    %4981 = vmatprep.subr.mxu0 0.0
    %4982 = vmatpush1.msra.mxu0 0.0
    %4983 = vmatprep.subr.mxu0 0.0
    %4984 = vmatpush1.msra.mxu0 0.0
    %4985 = vmatprep.subr.mxu0 0.0
    %4986 = vmatpush1.msra.mxu0 0.0
    %4987 = vmatprep.subr.mxu0 0.0
    %4988 = vmatpush1.msra.mxu0 0.0
    %4989 = vmatprep.subr.mxu0 0.0
    %4990 = vmatpush1.msra.mxu0 0.0
    %4991 = vmatprep.subr.mxu0 0.0
    %4992 = vmatpush1.msra.mxu0 0.0
    %4993 = vmatprep.subr.mxu0 0.0
    %4994 = vmatpush1.msra.mxu0 %v4892
    %4995 = vmatprep.subr.mxu0 0.0
    %4996 = vmatpush1.msra.mxu0 %v4890
    %4997 = vmatprep.subr.mxu0 0.0
    %4998 = vmatpush2.msra.mxu0 0.0
    %4999 = vmatprep.subr.mxu0 0.0
    %5000 = vmatpush2.msra.mxu0 0.0
    %5001 = vmatprep.subr.mxu0 0.0
    %5002 = vmatpush2.msra.mxu0 0.0
    %5003 = vmatprep.subr.mxu0 0.0
    %5004 = vmatpush2.msra.mxu0 0.0
    %5005 = vmatprep.subr.mxu0 0.0
    %5006 = vmatpush2.msra.mxu0 0.0
    %5007 = vmatprep.subr.mxu0 0.0
    %5008 = vmatpush2.msra.mxu0 0.0
    %5009 = vmatprep.subr.mxu0 0.0
    %5010 = vmatpush2.msra.mxu0 0.0
    %5011 = vmatprep.subr.mxu0 0.0
    %5012 = vmatpush2.msra.mxu0 0.0
    %5013 = vmatprep.subr.mxu0 0.0
    %5014 = vmatpush2.msra.mxu0 0.0
    %5015 = vmatprep.subr.mxu0 0.0
    %5016 = vmatpush2.msra.mxu0 0.0
    %5017 = vmatprep.subr.mxu0 0.0
    %5018 = vmatpush2.msra.mxu0 0.0
    %5019 = vmatprep.subr.mxu0 0.0
    %5020 = vmatpush2.msra.mxu0 0.0
    %5021 = vmatprep.subr.mxu0 0.0
    %5022 = vmatpush2.msra.mxu0 0.0
    %5023 = vmatprep.subr.mxu0 0.0
    %5024 = vmatpush2.msra.mxu0 0.0
    %5025 = vmatprep.subr.mxu0 0.0
    %5026 = vmatpush2.msra.mxu0 0.0
    %5027 = vmatprep.subr.mxu0 0.0
    %5028 = vmatpush2.msra.mxu0 0.0
    %5029 = vmatprep.mubr.f32.mxu0 0.0
    %5030 = vmatmul.mubr.f32.gmra.mxu0 %v1392
    %v5031 = vpop.f32.mrf.mxu0
    %v5032 = vadd.f32 0.0, %v5031
    %v5033 = vpop.f32.mrf.mxu0
    %5034 = vdwg.mxu0
    %v5035 = vrcp.pop %v5032
    %5037 = vset.pattern.permute.xlu0 0
    %5038 = vperm.xlu0 %5037, %v5035
    %v5039 = vpop.permute.xlu0 %5038
    %v5041 = vmul.f32 %v4962, %v5039
    %5042 = vst.msk [vmem:[#allocation2 + $0xc] sm:$0x3] %vm1269, %v5041
    %v5044 = vrot.slane %v5041, 4
    %5045 = vrot.lane.b32.xlu0 %v5044, 32
    %v5046 = vpop.permute.xlu0 %5045
    %v5048 = vsel %vm724, %v4660, %v5046
    %v5049 = vld [vmem:[%s14] sm:$0xff]
    %v5050 = vld [vmem:[%s14 + $0x8] sm:$0xff]
    %v5051 = vld [vmem:[%s14 + $0x10] sm:$0xff]
    %v5052 = vld [vmem:[%s14 + $0x18] sm:$0xff]
    %v5053 = vld [vmem:[%s14 + $0x20] sm:$0xff]
    %v5054 = vld [vmem:[%s14 + $0x28] sm:$0xff]
    %v5055 = vld [vmem:[%s14 + $0x30] sm:$0xff]
    %v5056 = vld [vmem:[%s14 + $0x38] sm:$0xff]
    %v5057 = vld [vmem:[%s15] sm:$0x1]
    %v5059 = vlaneseq
    %v5060 = vshrl.u32 %v5059, 7
    %v5061 = vsub.s32 0, %v5060
    %v5062 = vrot.slane %v5057, %v5061
    %v5065 = vrot.slane %v5048, 4
    %v5066 = vsel %vm1170, %v5065, 0
    %5068 = vmatprep.subr.mxu0 0.0
    %5069 = vmatpush1.msra.mxu0 0.0
    %5070 = vmatprep.subr.mxu0 0.0
    %5071 = vmatpush1.msra.mxu0 0.0
    %5072 = vmatprep.subr.mxu0 0.0
    %5073 = vmatpush1.msra.mxu0 0.0
    %5074 = vmatprep.subr.mxu0 0.0
    %5075 = vmatpush1.msra.mxu0 0.0
    %5076 = vmatprep.subr.mxu0 0.0
    %5077 = vmatpush1.msra.mxu0 0.0
    %5078 = vmatprep.subr.mxu0 0.0
    %5079 = vmatpush1.msra.mxu0 0.0
    %5080 = vmatprep.subr.mxu0 0.0
    %5081 = vmatpush1.msra.mxu0 0.0
    %5082 = vmatprep.subr.mxu0 0.0
    %5083 = vmatpush1.msra.mxu0 0.0
    %5084 = vmatprep.subr.mxu0 0.0
    %5085 = vmatpush1.msra.mxu0 %v5056
    %5086 = vmatprep.subr.mxu0 0.0
    %5087 = vmatpush1.msra.mxu0 %v5055
    %5088 = vmatprep.subr.mxu0 0.0
    %5089 = vmatpush1.msra.mxu0 %v5054
    %5090 = vmatprep.subr.mxu0 0.0
    %5091 = vmatpush1.msra.mxu0 %v5053
    %5092 = vmatprep.subr.mxu0 0.0
    %5093 = vmatpush1.msra.mxu0 %v5052
    %5094 = vmatprep.subr.mxu0 0.0
    %5095 = vmatpush1.msra.mxu0 %v5051
    %5096 = vmatprep.subr.mxu0 0.0
    %5097 = vmatpush1.msra.mxu0 %v5050
    %5098 = vmatprep.subr.mxu0 0.0
    %5099 = vmatpush1.msra.mxu0 %v5049
    %5100 = vmatprep.subr.mxu0 0.0
    %5101 = vmatpush2.msra.mxu0 0.0
    %5102 = vmatprep.subr.mxu0 0.0
    %5103 = vmatpush2.msra.mxu0 0.0
    %5104 = vmatprep.subr.mxu0 0.0
    %5105 = vmatpush2.msra.mxu0 0.0
    %5106 = vmatprep.subr.mxu0 0.0
    %5107 = vmatpush2.msra.mxu0 0.0
    %5108 = vmatprep.subr.mxu0 0.0
    %5109 = vmatpush2.msra.mxu0 0.0
    %5110 = vmatprep.subr.mxu0 0.0
    %5111 = vmatpush2.msra.mxu0 0.0
    %5112 = vmatprep.subr.mxu0 0.0
    %5113 = vmatpush2.msra.mxu0 0.0
    %5114 = vmatprep.subr.mxu0 0.0
    %5115 = vmatpush2.msra.mxu0 0.0
    %5116 = vmatprep.subr.mxu0 0.0
    %5117 = vmatpush2.msra.mxu0 0.0
    %5118 = vmatprep.subr.mxu0 0.0
    %5119 = vmatpush2.msra.mxu0 0.0
    %5120 = vmatprep.subr.mxu0 0.0
    %5121 = vmatpush2.msra.mxu0 0.0
    %5122 = vmatprep.subr.mxu0 0.0
    %5123 = vmatpush2.msra.mxu0 0.0
    %5124 = vmatprep.subr.mxu0 0.0
    %5125 = vmatpush2.msra.mxu0 0.0
    %5126 = vmatprep.subr.mxu0 0.0
    %5127 = vmatpush2.msra.mxu0 0.0
    %5128 = vmatprep.subr.mxu0 0.0
    %5129 = vmatpush2.msra.mxu0 0.0
    %5130 = vmatprep.subr.mxu0 0.0
    %5131 = vmatpush2.msra.mxu0 0.0
    %5132 = vmatprep.mubr.f32.mxu0 0.0
    %5133 = vmatmul.mubr.f32.gmra.mxu0 %v5066
    %v5134 = vpop.f32.mrf.mxu0
    %v5135 = vadd.f32 %v5062, %v5134
    %v5136 = vpop.f32.mrf.mxu0
    %5137 = vdwg.mxu0
    %v5138 = vld [vmem:[%s9] sm:$0xff]
    %v5139 = vld [vmem:[%s9 + $0x8] sm:$0xff]
    %v5140 = vld [vmem:[%s9 + $0x10] sm:$0xff]
    %v5141 = vld [vmem:[%s9 + $0x18] sm:$0xff]
    %v5143 = vsel %vm724, %v5135, 0
    %5145 = vmatprep.subr.mxu0 0.0
    %5146 = vmatpush1.msra.mxu0 0.0
    %5147 = vmatprep.subr.mxu0 0.0
    %5148 = vmatpush1.msra.mxu0 0.0
    %5149 = vmatprep.subr.mxu0 0.0
    %5150 = vmatpush1.msra.mxu0 0.0
    %5151 = vmatprep.subr.mxu0 0.0
    %5152 = vmatpush1.msra.mxu0 0.0
    %5153 = vmatprep.subr.mxu0 0.0
    %5154 = vmatpush1.msra.mxu0 0.0
    %5155 = vmatprep.subr.mxu0 0.0
    %5156 = vmatpush1.msra.mxu0 0.0
    %5157 = vmatprep.subr.mxu0 0.0
    %5158 = vmatpush1.msra.mxu0 0.0
    %5159 = vmatprep.subr.mxu0 0.0
    %5160 = vmatpush1.msra.mxu0 0.0
    %5161 = vmatprep.subr.mxu0 0.0
    %5162 = vmatpush1.msra.mxu0 0.0
    %5163 = vmatprep.subr.mxu0 0.0
    %5164 = vmatpush1.msra.mxu0 0.0
    %5165 = vmatprep.subr.mxu0 0.0
    %5166 = vmatpush1.msra.mxu0 0.0
    %5167 = vmatprep.subr.mxu0 0.0
    %5168 = vmatpush1.msra.mxu0 0.0
    %5169 = vmatprep.subr.mxu0 0.0
    %5170 = vmatpush1.msra.mxu0 %v5141
    %5171 = vmatprep.subr.mxu0 0.0
    %5172 = vmatpush1.msra.mxu0 %v5140
    %5173 = vmatprep.subr.mxu0 0.0
    %5174 = vmatpush1.msra.mxu0 %v5139
    %5175 = vmatprep.subr.mxu0 0.0
    %5176 = vmatpush1.msra.mxu0 %v5138
    %5177 = vmatprep.subr.mxu0 0.0
    %5178 = vmatpush2.msra.mxu0 0.0
    %5179 = vmatprep.subr.mxu0 0.0
    %5180 = vmatpush2.msra.mxu0 0.0
    %5181 = vmatprep.subr.mxu0 0.0
    %5182 = vmatpush2.msra.mxu0 0.0
    %5183 = vmatprep.subr.mxu0 0.0
    %5184 = vmatpush2.msra.mxu0 0.0
    %5185 = vmatprep.subr.mxu0 0.0
    %5186 = vmatpush2.msra.mxu0 0.0
    %5187 = vmatprep.subr.mxu0 0.0
    %5188 = vmatpush2.msra.mxu0 0.0
    %5189 = vmatprep.subr.mxu0 0.0
    %5190 = vmatpush2.msra.mxu0 0.0
    %5191 = vmatprep.subr.mxu0 0.0
    %5192 = vmatpush2.msra.mxu0 0.0
    %5193 = vmatprep.subr.mxu0 0.0
    %5194 = vmatpush2.msra.mxu0 0.0
    %5195 = vmatprep.subr.mxu0 0.0
    %5196 = vmatpush2.msra.mxu0 0.0
    %5197 = vmatprep.subr.mxu0 0.0
    %5198 = vmatpush2.msra.mxu0 0.0
    %5199 = vmatprep.subr.mxu0 0.0
    %5200 = vmatpush2.msra.mxu0 0.0
    %5201 = vmatprep.subr.mxu0 0.0
    %5202 = vmatpush2.msra.mxu0 0.0
    %5203 = vmatprep.subr.mxu0 0.0
    %5204 = vmatpush2.msra.mxu0 0.0
    %5205 = vmatprep.subr.mxu0 0.0
    %5206 = vmatpush2.msra.mxu0 0.0
    %5207 = vmatprep.subr.mxu0 0.0
    %5208 = vmatpush2.msra.mxu0 0.0
    %5209 = vmatprep.mubr.f32.mxu0 0.0
    %5210 = vmatmul.mubr.f32.gmra.mxu0 %v5143
    %v5211 = vpop.f32.mrf.mxu0
    %v5212 = vadd.f32 0.0, %v5211
    %v5213 = vpop.f32.mrf.mxu0
    %5214 = vdwg.mxu0
    %v5216 = vrot.slane %v5212, 2
    %v5218 = vadd.f32 %v995, %v5216
    %v5219 = vmul.f32 %v5218, %v1005
    %v5220 = vtanh.pop %v5219
    %v5221 = vmul.f32 %v1005, %v5220
    %v5222 = vadd.f32 %v5221, %v1006
    %v5224 = vrot.slane %v4651, 6
    %v5226 = vmul.f32 %v5222, %v5224
    %5228 = vrot.lane.b32.xlu0 %v5222, 64
    %v5229 = vpop.permute.xlu0 %5228
    %v5231 = vmul.f32 %v5222, %v5229
    %5233 = vrot.lane.b32.xlu0 %v5231, 32
    %v5234 = vpop.permute.xlu0 %5233
    %v5236 = vadd.f32 %v5226, %v5234
    %v5237 = vtanh.pop %v5236
    %5239 = vrot.lane.b32.xlu0 %v5237, 64
    %v5240 = vpop.permute.xlu0 %5239
    %v5242 = vmul.f32 %v5222, %v5240
    %5244 = vrot.lane.b32.xlu0 %v5242, 32
    %v5245 = vpop.permute.xlu0 %5244
    %v5247 = vrot.slane %v4776, 2
    %5248 = vrot.lane.b32.xlu0 %v5247, 64
    %v5249 = vpop.permute.xlu0 %5248
    %v5251 = vsel %vm724, %v5245, %v5249
    %v5252 = vld [vmem:[%s10] sm:$0xff]
    %v5253 = vld [vmem:[%s10 + $0x8] sm:$0xff]
    %v5254 = vld [vmem:[%s10 + $0x10] sm:$0xff]
    %v5255 = vld [vmem:[%s10 + $0x18] sm:$0xff]
    %v5256 = vld [vmem:[%s10 + $0x20] sm:$0xff]
    %v5257 = vld [vmem:[%s10 + $0x28] sm:$0xff]
    %v5258 = vld [vmem:[%s10 + $0x30] sm:$0xff]
    %v5259 = vld [vmem:[%s10 + $0x38] sm:$0xff]
    %v5260 = vld [vmem:[%s11] sm:$0x1]
    %v5262 = vlaneseq
    %v5263 = vshrl.u32 %v5262, 7
    %v5264 = vsub.s32 0, %v5263
    %v5265 = vrot.slane %v5260, %v5264
    %v5268 = vrot.slane %v5251, 6
    %v5269 = vsel %vm1170, %v5268, 0
    %5271 = vmatprep.subr.mxu0 0.0
    %5272 = vmatpush1.msra.mxu0 0.0
    %5273 = vmatprep.subr.mxu0 0.0
    %5274 = vmatpush1.msra.mxu0 0.0
    %5275 = vmatprep.subr.mxu0 0.0
    %5276 = vmatpush1.msra.mxu0 0.0
    %5277 = vmatprep.subr.mxu0 0.0
    %5278 = vmatpush1.msra.mxu0 0.0
    %5279 = vmatprep.subr.mxu0 0.0
    %5280 = vmatpush1.msra.mxu0 0.0
    %5281 = vmatprep.subr.mxu0 0.0
    %5282 = vmatpush1.msra.mxu0 0.0
    %5283 = vmatprep.subr.mxu0 0.0
    %5284 = vmatpush1.msra.mxu0 0.0
    %5285 = vmatprep.subr.mxu0 0.0
    %5286 = vmatpush1.msra.mxu0 0.0
    %5287 = vmatprep.subr.mxu0 0.0
    %5288 = vmatpush1.msra.mxu0 %v5259
    %5289 = vmatprep.subr.mxu0 0.0
    %5290 = vmatpush1.msra.mxu0 %v5258
    %5291 = vmatprep.subr.mxu0 0.0
    %5292 = vmatpush1.msra.mxu0 %v5257
    %5293 = vmatprep.subr.mxu0 0.0
    %5294 = vmatpush1.msra.mxu0 %v5256
    %5295 = vmatprep.subr.mxu0 0.0
    %5296 = vmatpush1.msra.mxu0 %v5255
    %5297 = vmatprep.subr.mxu0 0.0
    %5298 = vmatpush1.msra.mxu0 %v5254
    %5299 = vmatprep.subr.mxu0 0.0
    %5300 = vmatpush1.msra.mxu0 %v5253
    %5301 = vmatprep.subr.mxu0 0.0
    %5302 = vmatpush1.msra.mxu0 %v5252
    %5303 = vmatprep.subr.mxu0 0.0
    %5304 = vmatpush2.msra.mxu0 0.0
    %5305 = vmatprep.subr.mxu0 0.0
    %5306 = vmatpush2.msra.mxu0 0.0
    %5307 = vmatprep.subr.mxu0 0.0
    %5308 = vmatpush2.msra.mxu0 0.0
    %5309 = vmatprep.subr.mxu0 0.0
    %5310 = vmatpush2.msra.mxu0 0.0
    %5311 = vmatprep.subr.mxu0 0.0
    %5312 = vmatpush2.msra.mxu0 0.0
    %5313 = vmatprep.subr.mxu0 0.0
    %5314 = vmatpush2.msra.mxu0 0.0
    %5315 = vmatprep.subr.mxu0 0.0
    %5316 = vmatpush2.msra.mxu0 0.0
    %5317 = vmatprep.subr.mxu0 0.0
    %5318 = vmatpush2.msra.mxu0 0.0
    %5319 = vmatprep.subr.mxu0 0.0
    %5320 = vmatpush2.msra.mxu0 0.0
    %5321 = vmatprep.subr.mxu0 0.0
    %5322 = vmatpush2.msra.mxu0 0.0
    %5323 = vmatprep.subr.mxu0 0.0
    %5324 = vmatpush2.msra.mxu0 0.0
    %5325 = vmatprep.subr.mxu0 0.0
    %5326 = vmatpush2.msra.mxu0 0.0
    %5327 = vmatprep.subr.mxu0 0.0
    %5328 = vmatpush2.msra.mxu0 0.0
    %5329 = vmatprep.subr.mxu0 0.0
    %5330 = vmatpush2.msra.mxu0 0.0
    %5331 = vmatprep.subr.mxu0 0.0
    %5332 = vmatpush2.msra.mxu0 0.0
    %5333 = vmatprep.subr.mxu0 0.0
    %5334 = vmatpush2.msra.mxu0 0.0
    %5335 = vmatprep.mubr.f32.mxu0 0.0
    %5336 = vmatmul.mubr.f32.gmra.mxu0 %v5269
    %v5337 = vpop.f32.mrf.mxu0
    %v5338 = vadd.f32 %v5265, %v5337
    %v5339 = vpop.f32.mrf.mxu0
    %5340 = vdwg.mxu0
    %v5341 = vmul.f32 %v5338, %v1005
    %v5342 = vtanh.pop %v5341
    %v5343 = vmul.f32 %v1005, %v5342
    %v5344 = vadd.f32 %v5343, %v1006
    %v5345 = vmul.f32 %v5344, %v4770
    %5347 = vrot.lane.b32.xlu0 %v5344, 64
    %v5348 = vpop.permute.xlu0 %5347
    %v5350 = vmul.f32 %v5344, %v5348
    %5352 = vrot.lane.b32.xlu0 %v5350, 32
    %v5353 = vpop.permute.xlu0 %5352
    %v5355 = vadd.f32 %v5345, %v5353
    %v5356 = vtanh.pop %v5355
    %5358 = vrot.lane.b32.xlu0 %v5356, 64
    %v5359 = vpop.permute.xlu0 %5358
    %v5361 = vmul.f32 %v5344, %v5359
    %5363 = vrot.lane.b32.xlu0 %v5361, 32
    %v5364 = vpop.permute.xlu0 %5363
    %5366 = vst.msk [vmem:[#allocation3 + $0xe] sm:$0x3] %vm1269, %v5364
    %v5367 = vld [vmem:[%s12] sm:$0xff]
    %v5368 = vld [vmem:[%s12 + $0x8] sm:$0xff]
    %v5369 = vld [vmem:[%s12 + $0x10] sm:$0xff]
    %v5370 = vld [vmem:[%s12 + $0x18] sm:$0xff]
    %v5371 = vsel %vm724, %v5364, 0
    %5373 = vmatprep.subr.mxu0 0.0
    %5374 = vmatpush1.msra.mxu0 0.0
    %5375 = vmatprep.subr.mxu0 0.0
    %5376 = vmatpush1.msra.mxu0 0.0
    %5377 = vmatprep.subr.mxu0 0.0
    %5378 = vmatpush1.msra.mxu0 0.0
    %5379 = vmatprep.subr.mxu0 0.0
    %5380 = vmatpush1.msra.mxu0 0.0
    %5381 = vmatprep.subr.mxu0 0.0
    %5382 = vmatpush1.msra.mxu0 0.0
    %5383 = vmatprep.subr.mxu0 0.0
    %5384 = vmatpush1.msra.mxu0 0.0
    %5385 = vmatprep.subr.mxu0 0.0
    %5386 = vmatpush1.msra.mxu0 0.0
    %5387 = vmatprep.subr.mxu0 0.0
    %5388 = vmatpush1.msra.mxu0 0.0
    %5389 = vmatprep.subr.mxu0 0.0
    %5390 = vmatpush1.msra.mxu0 0.0
    %5391 = vmatprep.subr.mxu0 0.0
    %5392 = vmatpush1.msra.mxu0 0.0
    %5393 = vmatprep.subr.mxu0 0.0
    %5394 = vmatpush1.msra.mxu0 0.0
    %5395 = vmatprep.subr.mxu0 0.0
    %5396 = vmatpush1.msra.mxu0 0.0
    %5397 = vmatprep.subr.mxu0 0.0
    %5398 = vmatpush1.msra.mxu0 %v5370
    %5399 = vmatprep.subr.mxu0 0.0
    %5400 = vmatpush1.msra.mxu0 %v5369
    %5401 = vmatprep.subr.mxu0 0.0
    %5402 = vmatpush1.msra.mxu0 %v5368
    %5403 = vmatprep.subr.mxu0 0.0
    %5404 = vmatpush1.msra.mxu0 %v5367
    %5405 = vmatprep.subr.mxu0 0.0
    %5406 = vmatpush2.msra.mxu0 0.0
    %5407 = vmatprep.subr.mxu0 0.0
    %5408 = vmatpush2.msra.mxu0 0.0
    %5409 = vmatprep.subr.mxu0 0.0
    %5410 = vmatpush2.msra.mxu0 0.0
    %5411 = vmatprep.subr.mxu0 0.0
    %5412 = vmatpush2.msra.mxu0 0.0
    %5413 = vmatprep.subr.mxu0 0.0
    %5414 = vmatpush2.msra.mxu0 0.0
    %5415 = vmatprep.subr.mxu0 0.0
    %5416 = vmatpush2.msra.mxu0 0.0
    %5417 = vmatprep.subr.mxu0 0.0
    %5418 = vmatpush2.msra.mxu0 0.0
    %5419 = vmatprep.subr.mxu0 0.0
    %5420 = vmatpush2.msra.mxu0 0.0
    %5421 = vmatprep.subr.mxu0 0.0
    %5422 = vmatpush2.msra.mxu0 0.0
    %5423 = vmatprep.subr.mxu0 0.0
    %5424 = vmatpush2.msra.mxu0 0.0
    %5425 = vmatprep.subr.mxu0 0.0
    %5426 = vmatpush2.msra.mxu0 0.0
    %5427 = vmatprep.subr.mxu0 0.0
    %5428 = vmatpush2.msra.mxu0 0.0
    %5429 = vmatprep.subr.mxu0 0.0
    %5430 = vmatpush2.msra.mxu0 0.0
    %5431 = vmatprep.subr.mxu0 0.0
    %5432 = vmatpush2.msra.mxu0 0.0
    %5433 = vmatprep.subr.mxu0 0.0
    %5434 = vmatpush2.msra.mxu0 0.0
    %5435 = vmatprep.subr.mxu0 0.0
    %5436 = vmatpush2.msra.mxu0 0.0
    %5437 = vmatprep.mubr.f32.mxu0 0.0
    %5438 = vmatmul.mubr.f32.gmra.mxu0 %v5371
    %v5439 = vpop.f32.mrf.mxu0
    %v5440 = vadd.f32 0.0, %v5439
    %v5441 = vpop.f32.mrf.mxu0
    %5442 = vdwg.mxu0
    %v5443 = vlaneseq
    %v5444 = vshrl.u32 %v5443, 7
    %v5445 = vsub.s32 0, %v5444
    %v5446 = vrot.slane %v5440, %v5445
    %v5447 = vlaneseq
    %v5448 = vshrl.u32 %v5447, 7
    %v5449 = vsub.s32 1, %v5448
    %v5450 = vrot.slane %v5440, %v5449
    %v5451 = vsel %vm1049, %v5450, %v5446
    %v5452 = vsel %vm1050, %v5450, %v5446
    %v5453 = vadd.f32 %v991, %v5451
    %v5454 = vadd.f32 %v997, %v5452
    %v5455 = vmax.f32 %v5453, 0.0
    %v5456 = vmax.f32 %v5454, 0.0
    %v5457 = vmul.f32 %v5455, %v1365
    %v5458 = vmul.f32 %v5456, %v1365
    %v5459 = vsel %vm724, %v5457, 0.0
    %5460 = vadd.xlane.f32.xlu0 %v5459
    %v5461 = vpop.xlane.xlu0 %5460
    %v5462 = vsel %vm724, %v5458, 0.0
    %5463 = vadd.xlane.f32.xlu0 %v5462
    %v5464 = vpop.xlane.xlu0 %5463
    %v5465 = vmax.f32 %v5461, %v5464
    %v5466 = vrot.slane %v5465, 4
    %v5467 = vmax.f32 %v5465, %v5466
    %v5468 = vrot.slane %v5467, 2
    %v5469 = vmax.f32 %v5467, %v5468
    %v5470 = vrot.slane %v5469, 1
    %v5471 = vmax.f32 %v5469, %v5470
    %v5472 = vsub.f32 %v5461, %v5471
    %v5473 = vsub.f32 %v5464, %v5471
    %v5474 = vmul.f32 %v5472, 1.442695
    %v5475 = vpow.pop %v5474
    %v5476 = vmul.f32 %v5473, 1.442695
    %v5477 = vpow.pop %v5476
    %v5478 = vmul.f32 %v5475, %v894
    %v5479 = vmul.f32 %v5477, %v895
    %5480 = vmatprep.subr.mxu0 0.0
    %5481 = vmatpush1.msra.mxu0 0.0
    %5482 = vmatprep.subr.mxu0 0.0
    %5483 = vmatpush1.msra.mxu0 0.0
    %5484 = vmatprep.subr.mxu0 0.0
    %5485 = vmatpush1.msra.mxu0 0.0
    %5486 = vmatprep.subr.mxu0 0.0
    %5487 = vmatpush1.msra.mxu0 0.0
    %5488 = vmatprep.subr.mxu0 0.0
    %5489 = vmatpush1.msra.mxu0 0.0
    %5490 = vmatprep.subr.mxu0 0.0
    %5491 = vmatpush1.msra.mxu0 0.0
    %5492 = vmatprep.subr.mxu0 0.0
    %5493 = vmatpush1.msra.mxu0 0.0
    %5494 = vmatprep.subr.mxu0 0.0
    %5495 = vmatpush1.msra.mxu0 0.0
    %5496 = vmatprep.subr.mxu0 0.0
    %5497 = vmatpush1.msra.mxu0 0.0
    %5498 = vmatprep.subr.mxu0 0.0
    %5499 = vmatpush1.msra.mxu0 0.0
    %5500 = vmatprep.subr.mxu0 0.0
    %5501 = vmatpush1.msra.mxu0 0.0
    %5502 = vmatprep.subr.mxu0 0.0
    %5503 = vmatpush1.msra.mxu0 0.0
    %5504 = vmatprep.subr.mxu0 0.0
    %5505 = vmatpush1.msra.mxu0 0.0
    %5506 = vmatprep.subr.mxu0 0.0
    %5507 = vmatpush1.msra.mxu0 0.0
    %5508 = vmatprep.subr.mxu0 0.0
    %5509 = vmatpush1.msra.mxu0 %v5479
    %5510 = vmatprep.subr.mxu0 0.0
    %5511 = vmatpush1.msra.mxu0 %v5478
    %5512 = vmatprep.subr.mxu0 0.0
    %5513 = vmatpush2.msra.mxu0 0.0
    %5514 = vmatprep.subr.mxu0 0.0
    %5515 = vmatpush2.msra.mxu0 0.0
    %5516 = vmatprep.subr.mxu0 0.0
    %5517 = vmatpush2.msra.mxu0 0.0
    %5518 = vmatprep.subr.mxu0 0.0
    %5519 = vmatpush2.msra.mxu0 0.0
    %5520 = vmatprep.subr.mxu0 0.0
    %5521 = vmatpush2.msra.mxu0 0.0
    %5522 = vmatprep.subr.mxu0 0.0
    %5523 = vmatpush2.msra.mxu0 0.0
    %5524 = vmatprep.subr.mxu0 0.0
    %5525 = vmatpush2.msra.mxu0 0.0
    %5526 = vmatprep.subr.mxu0 0.0
    %5527 = vmatpush2.msra.mxu0 0.0
    %5528 = vmatprep.subr.mxu0 0.0
    %5529 = vmatpush2.msra.mxu0 0.0
    %5530 = vmatprep.subr.mxu0 0.0
    %5531 = vmatpush2.msra.mxu0 0.0
    %5532 = vmatprep.subr.mxu0 0.0
    %5533 = vmatpush2.msra.mxu0 0.0
    %5534 = vmatprep.subr.mxu0 0.0
    %5535 = vmatpush2.msra.mxu0 0.0
    %5536 = vmatprep.subr.mxu0 0.0
    %5537 = vmatpush2.msra.mxu0 0.0
    %5538 = vmatprep.subr.mxu0 0.0
    %5539 = vmatpush2.msra.mxu0 0.0
    %5540 = vmatprep.subr.mxu0 0.0
    %5541 = vmatpush2.msra.mxu0 0.0
    %5542 = vmatprep.subr.mxu0 0.0
    %5543 = vmatpush2.msra.mxu0 0.0
    %5544 = vmatprep.mubr.f32.mxu0 0.0
    %5545 = vmatmul.mubr.f32.gmra.mxu0 %v1392
    %v5546 = vpop.f32.mrf.mxu0
    %v5547 = vadd.f32 0.0, %v5546
    %v5548 = vpop.f32.mrf.mxu0
    %5549 = vdwg.mxu0
    %5550 = vmatprep.subr.mxu0 0.0
    %5551 = vmatpush1.msra.mxu0 0.0
    %5552 = vmatprep.subr.mxu0 0.0
    %5553 = vmatpush1.msra.mxu0 0.0
    %5554 = vmatprep.subr.mxu0 0.0
    %5555 = vmatpush1.msra.mxu0 0.0
    %5556 = vmatprep.subr.mxu0 0.0
    %5557 = vmatpush1.msra.mxu0 0.0
    %5558 = vmatprep.subr.mxu0 0.0
    %5559 = vmatpush1.msra.mxu0 0.0
    %5560 = vmatprep.subr.mxu0 0.0
    %5561 = vmatpush1.msra.mxu0 0.0
    %5562 = vmatprep.subr.mxu0 0.0
    %5563 = vmatpush1.msra.mxu0 0.0
    %5564 = vmatprep.subr.mxu0 0.0
    %5565 = vmatpush1.msra.mxu0 0.0
    %5566 = vmatprep.subr.mxu0 0.0
    %5567 = vmatpush1.msra.mxu0 0.0
    %5568 = vmatprep.subr.mxu0 0.0
    %5569 = vmatpush1.msra.mxu0 0.0
    %5570 = vmatprep.subr.mxu0 0.0
    %5571 = vmatpush1.msra.mxu0 0.0
    %5572 = vmatprep.subr.mxu0 0.0
    %5573 = vmatpush1.msra.mxu0 0.0
    %5574 = vmatprep.subr.mxu0 0.0
    %5575 = vmatpush1.msra.mxu0 0.0
    %5576 = vmatprep.subr.mxu0 0.0
    %5577 = vmatpush1.msra.mxu0 0.0
    %5578 = vmatprep.subr.mxu0 0.0
    %5579 = vmatpush1.msra.mxu0 %v5477
    %5580 = vmatprep.subr.mxu0 0.0
    %5581 = vmatpush1.msra.mxu0 %v5475
    %5582 = vmatprep.subr.mxu0 0.0
    %5583 = vmatpush2.msra.mxu0 0.0
    %5584 = vmatprep.subr.mxu0 0.0
    %5585 = vmatpush2.msra.mxu0 0.0
    %5586 = vmatprep.subr.mxu0 0.0
    %5587 = vmatpush2.msra.mxu0 0.0
    %5588 = vmatprep.subr.mxu0 0.0
    %5589 = vmatpush2.msra.mxu0 0.0
    %5590 = vmatprep.subr.mxu0 0.0
    %5591 = vmatpush2.msra.mxu0 0.0
    %5592 = vmatprep.subr.mxu0 0.0
    %5593 = vmatpush2.msra.mxu0 0.0
    %5594 = vmatprep.subr.mxu0 0.0
    %5595 = vmatpush2.msra.mxu0 0.0
    %5596 = vmatprep.subr.mxu0 0.0
    %5597 = vmatpush2.msra.mxu0 0.0
    %5598 = vmatprep.subr.mxu0 0.0
    %5599 = vmatpush2.msra.mxu0 0.0
    %5600 = vmatprep.subr.mxu0 0.0
    %5601 = vmatpush2.msra.mxu0 0.0
    %5602 = vmatprep.subr.mxu0 0.0
    %5603 = vmatpush2.msra.mxu0 0.0
    %5604 = vmatprep.subr.mxu0 0.0
    %5605 = vmatpush2.msra.mxu0 0.0
    %5606 = vmatprep.subr.mxu0 0.0
    %5607 = vmatpush2.msra.mxu0 0.0
    %5608 = vmatprep.subr.mxu0 0.0
    %5609 = vmatpush2.msra.mxu0 0.0
    %5610 = vmatprep.subr.mxu0 0.0
    %5611 = vmatpush2.msra.mxu0 0.0
    %5612 = vmatprep.subr.mxu0 0.0
    %5613 = vmatpush2.msra.mxu0 0.0
    %5614 = vmatprep.mubr.f32.mxu0 0.0
    %5615 = vmatmul.mubr.f32.gmra.mxu0 %v1392
    %v5616 = vpop.f32.mrf.mxu0
    %v5617 = vadd.f32 0.0, %v5616
    %v5618 = vpop.f32.mrf.mxu0
    %5619 = vdwg.mxu0
    %v5620 = vrcp.pop %v5617
    %5622 = vset.pattern.permute.xlu0 0
    %5623 = vperm.xlu0 %5622, %v5620
    %v5624 = vpop.permute.xlu0 %5623
    %v5626 = vmul.f32 %v5547, %v5624
    %5627 = vst.msk [vmem:[#allocation2 + $0xe] sm:$0x3] %vm1269, %v5626
    %v5628 = vld [vmem:[#allocation2] sm:$0xff]
    %v5629 = vld [vmem:[#allocation2 + $0x8] sm:$0xff]
    %v5630 = vld [vmem:[%s16] sm:$0xff]
    %v5631 = vld [vmem:[%s16 + $0x8] sm:$0xff]
    %v5632 = vld [vmem:[%s16 + $0x10] sm:$0xff]
    %v5633 = vld [vmem:[%s16 + $0x18] sm:$0xff]
    %v5634 = vld [vmem:[#allocation3] sm:$0xff]
    %v5635 = vld [vmem:[#allocation3 + $0x8] sm:$0xff]
    %v5636 = vld [vmem:[%s17] sm:$0xff]
    %v5637 = vld [vmem:[%s17 + $0x8] sm:$0xff]
    %v5638 = vld [vmem:[%s17 + $0x10] sm:$0xff]
    %v5639 = vld [vmem:[%s17 + $0x18] sm:$0xff]
    %v5641 = vsel %vm724, %v5634, 0
    %v5644 = vsel %vm724, %v5635, 0
    %5646 = vmatprep.subr.mxu0 0.0
    %5647 = vmatpush1.msra.mxu0 0.0
    %5648 = vmatprep.subr.mxu0 0.0
    %5649 = vmatpush1.msra.mxu0 0.0
    %5650 = vmatprep.subr.mxu0 0.0
    %5651 = vmatpush1.msra.mxu0 0.0
    %5652 = vmatprep.subr.mxu0 0.0
    %5653 = vmatpush1.msra.mxu0 0.0
    %5654 = vmatprep.subr.mxu0 0.0
    %5655 = vmatpush1.msra.mxu0 0.0
    %5656 = vmatprep.subr.mxu0 0.0
    %5657 = vmatpush1.msra.mxu0 0.0
    %5658 = vmatprep.subr.mxu0 0.0
    %5659 = vmatpush1.msra.mxu0 0.0
    %5660 = vmatprep.subr.mxu0 0.0
    %5661 = vmatpush1.msra.mxu0 0.0
    %5662 = vmatprep.subr.mxu0 0.0
    %5663 = vmatpush1.msra.mxu0 0.0
    %5664 = vmatprep.subr.mxu0 0.0
    %5665 = vmatpush1.msra.mxu0 0.0
    %5666 = vmatprep.subr.mxu0 0.0
    %5667 = vmatpush1.msra.mxu0 0.0
    %5668 = vmatprep.subr.mxu0 0.0
    %5669 = vmatpush1.msra.mxu0 0.0
    %5670 = vmatprep.subr.mxu0 0.0
    %5671 = vmatpush1.msra.mxu0 %v5639
    %5672 = vmatprep.subr.mxu0 0.0
    %5673 = vmatpush1.msra.mxu0 %v5638
    %5674 = vmatprep.subr.mxu0 0.0
    %5675 = vmatpush1.msra.mxu0 %v5637
    %5676 = vmatprep.subr.mxu0 0.0
    %5677 = vmatpush1.msra.mxu0 %v5636
    %5678 = vmatprep.subr.mxu0 0.0
    %5679 = vmatpush2.msra.mxu0 0.0
    %5680 = vmatprep.subr.mxu0 0.0
    %5681 = vmatpush2.msra.mxu0 0.0
    %5682 = vmatprep.subr.mxu0 0.0
    %5683 = vmatpush2.msra.mxu0 0.0
    %5684 = vmatprep.subr.mxu0 0.0
    %5685 = vmatpush2.msra.mxu0 0.0
    %5686 = vmatprep.subr.mxu0 0.0
    %5687 = vmatpush2.msra.mxu0 0.0
    %5688 = vmatprep.subr.mxu0 0.0
    %5689 = vmatpush2.msra.mxu0 0.0
    %5690 = vmatprep.subr.mxu0 0.0
    %5691 = vmatpush2.msra.mxu0 0.0
    %5692 = vmatprep.subr.mxu0 0.0
    %5693 = vmatpush2.msra.mxu0 0.0
    %5694 = vmatprep.subr.mxu0 0.0
    %5695 = vmatpush2.msra.mxu0 0.0
    %5696 = vmatprep.subr.mxu0 0.0
    %5697 = vmatpush2.msra.mxu0 0.0
    %5698 = vmatprep.subr.mxu0 0.0
    %5699 = vmatpush2.msra.mxu0 0.0
    %5700 = vmatprep.subr.mxu0 0.0
    %5701 = vmatpush2.msra.mxu0 0.0
    %5702 = vmatprep.subr.mxu0 0.0
    %5703 = vmatpush2.msra.mxu0 0.0
    %5704 = vmatprep.subr.mxu0 0.0
    %5705 = vmatpush2.msra.mxu0 0.0
    %5706 = vmatprep.subr.mxu0 0.0
    %5707 = vmatpush2.msra.mxu0 0.0
    %5708 = vmatprep.subr.mxu0 0.0
    %5709 = vmatpush2.msra.mxu0 0.0
    %5710 = vmatprep.mubr.f32.mxu0 0.0
    %5711 = vmatmul.mubr.f32.gmra.mxu0 %v5641
    %v5712 = vpop.f32.mrf.mxu0
    %v5713 = vadd.f32 0.0, %v5712
    %v5714 = vpop.f32.mrf.mxu0
    %5715 = vmatprep.mubr.f32.mxu0 0.0
    %5716 = vmatmul.mubr.f32.gmra.mxu0 %v5644
    %v5717 = vpop.f32.mrf.mxu0
    %v5718 = vadd.f32 0.0, %v5717
    %v5719 = vpop.f32.mrf.mxu0
    %5720 = vdwg.mxu0
    %v5722 = vsel %vm724, %v5628, 0
    %v5725 = vsel %vm724, %v5629, 0
    %5727 = vmatprep.subr.mxu0 0.0
    %5728 = vmatpush1.msra.mxu0 0.0
    %5729 = vmatprep.subr.mxu0 0.0
    %5730 = vmatpush1.msra.mxu0 0.0
    %5731 = vmatprep.subr.mxu0 0.0
    %5732 = vmatpush1.msra.mxu0 0.0
    %5733 = vmatprep.subr.mxu0 0.0
    %5734 = vmatpush1.msra.mxu0 0.0
    %5735 = vmatprep.subr.mxu0 0.0
    %5736 = vmatpush1.msra.mxu0 0.0
    %5737 = vmatprep.subr.mxu0 0.0
    %5738 = vmatpush1.msra.mxu0 0.0
    %5739 = vmatprep.subr.mxu0 0.0
    %5740 = vmatpush1.msra.mxu0 0.0
    %5741 = vmatprep.subr.mxu0 0.0
    %5742 = vmatpush1.msra.mxu0 0.0
    %5743 = vmatprep.subr.mxu0 0.0
    %5744 = vmatpush1.msra.mxu0 0.0
    %5745 = vmatprep.subr.mxu0 0.0
    %5746 = vmatpush1.msra.mxu0 0.0
    %5747 = vmatprep.subr.mxu0 0.0
    %5748 = vmatpush1.msra.mxu0 0.0
    %5749 = vmatprep.subr.mxu0 0.0
    %5750 = vmatpush1.msra.mxu0 0.0
    %5751 = vmatprep.subr.mxu0 0.0
    %5752 = vmatpush1.msra.mxu0 %v5633
    %5753 = vmatprep.subr.mxu0 0.0
    %5754 = vmatpush1.msra.mxu0 %v5632
    %5755 = vmatprep.subr.mxu0 0.0
    %5756 = vmatpush1.msra.mxu0 %v5631
    %5757 = vmatprep.subr.mxu0 0.0
    %5758 = vmatpush1.msra.mxu0 %v5630
    %5759 = vmatprep.subr.mxu0 0.0
    %5760 = vmatpush2.msra.mxu0 0.0
    %5761 = vmatprep.subr.mxu0 0.0
    %5762 = vmatpush2.msra.mxu0 0.0
    %5763 = vmatprep.subr.mxu0 0.0
    %5764 = vmatpush2.msra.mxu0 0.0
    %5765 = vmatprep.subr.mxu0 0.0
    %5766 = vmatpush2.msra.mxu0 0.0
    %5767 = vmatprep.subr.mxu0 0.0
    %5768 = vmatpush2.msra.mxu0 0.0
    %5769 = vmatprep.subr.mxu0 0.0
    %5770 = vmatpush2.msra.mxu0 0.0
    %5771 = vmatprep.subr.mxu0 0.0
    %5772 = vmatpush2.msra.mxu0 0.0
    %5773 = vmatprep.subr.mxu0 0.0
    %5774 = vmatpush2.msra.mxu0 0.0
    %5775 = vmatprep.subr.mxu0 0.0
    %5776 = vmatpush2.msra.mxu0 0.0
    %5777 = vmatprep.subr.mxu0 0.0
    %5778 = vmatpush2.msra.mxu0 0.0
    %5779 = vmatprep.subr.mxu0 0.0
    %5780 = vmatpush2.msra.mxu0 0.0
    %5781 = vmatprep.subr.mxu0 0.0
    %5782 = vmatpush2.msra.mxu0 0.0
    %5783 = vmatprep.subr.mxu0 0.0
    %5784 = vmatpush2.msra.mxu0 0.0
    %5785 = vmatprep.subr.mxu0 0.0
    %5786 = vmatpush2.msra.mxu0 0.0
    %5787 = vmatprep.subr.mxu0 0.0
    %5788 = vmatpush2.msra.mxu0 0.0
    %5789 = vmatprep.subr.mxu0 0.0
    %5790 = vmatpush2.msra.mxu0 0.0
    %5791 = vmatprep.mubr.f32.mxu0 0.0
    %5792 = vmatmul.mubr.f32.gmra.mxu0 %v5722
    %v5793 = vpop.f32.mrf.mxu0
    %v5794 = vadd.f32 %v5713, %v5793
    %v5795 = vpop.f32.mrf.mxu0
    %5796 = vmatprep.mubr.f32.mxu0 0.0
    %5797 = vmatmul.mubr.f32.gmra.mxu0 %v5725
    %v5798 = vpop.f32.mrf.mxu0
    %v5799 = vadd.f32 %v5718, %v5798
    %v5800 = vpop.f32.mrf.mxu0
    %5801 = vdwg.mxu0
    %v5802 = vld [vmem:[%s18] sm:$0x1]
    %v5804 = vlaneseq
    %v5805 = vshrl.u32 %v5804, 7
    %v5806 = vsub.s32 0, %v5805
    %v5807 = vrot.slane %v5802, %v5806
    %v5809 = vadd.f32 %v5794, %v5807
    %v5810 = vadd.f32 %v5799, %v5807
    %vm5811 = vcmask 326656
    %v5812 = vsel %vm5811, %v5809, -inf
    %5813 = vmax.xlane.f32.xlu0 %v5812
    %v5814 = vpop.xlane.xlu0 %5813
    %v5815 = vsel %vm5811, %v5810, -inf
    %5816 = vmax.xlane.f32.xlu0 %v5815
    %v5817 = vpop.xlane.xlu0 %5816
    %v5818 = vsub.f32 %v5809, %v5814
    %v5819 = vsub.f32 %v5810, %v5817
    %v5820 = vmul.f32 %v5818, 1.442695
    %v5821 = vpow.pop %v5820
    %v5822 = vmul.f32 %v5819, 1.442695
    %v5823 = vpow.pop %v5822
    %v5824 = vsel %vm5811, %v5821, 0.0
    %5825 = vadd.xlane.f32.xlu0 %v5824
    %v5826 = vpop.xlane.xlu0 %5825
    %v5827 = vsel %vm5811, %v5823, 0.0
    %5828 = vadd.xlane.f32.xlu0 %v5827
    %v5829 = vpop.xlane.xlu0 %5828
    %v5830 = vlog2.pop %v5826
    %v5831 = vmul.f32 %v5830, 0.6931472
    %v5832 = vlog2.pop %v5829
    %v5833 = vmul.f32 %v5832, 0.6931472
    %v5834 = vsub.f32 %v5818, %v5831
    %v5835 = vsub.f32 %v5819, %v5833
    %5836 = vst.msk [vmem:[#allocation4] sm:$0xff] %vm5811, %v5834
    %5837 = vst.msk [vmem:[#allocation4 + $0x8] sm:$0xff] %vm5811, %v5835
    // Predicated region
    $region78: #{tpu_custom_call.1} parent=1 // pred_check
      _
    $region79: #{tpu_custom_call.1} parent=1 // pred_check_branch
      %5839 = sbr.rel (0) target = $region81
    $region80: #{tpu_custom_call.1} parent=1 // pred_region
      %s5841 = ssub.s32 256, 256
      %5842 = vsyncadd [#allocation5], %s5841
      %s5843 = sshll.u32 [#allocation4], 4
      %s5844 = int_to_ptr.vmem [resolvable:$true] %s5843
      %5849 = dma.vmem_to_hbm [thread:$0]  %s5844, 256, %s19, [#allocation5], 128, 128, 8
    $region81: #{tpu_custom_call.1} parent=1 // pred_fallthru
      _
    // Predicated region
    $region82: #{tpu_custom_call.1} parent=1 // pred_check
      _
    $region83: #{tpu_custom_call.1} parent=1 // pred_check_branch
      %5851 = sbr.rel (0) target = $region85
    $region84: #{tpu_custom_call.1} parent=1 // pred_region
      %5852 = dma.done [#allocation5], 256
    $region85: #{tpu_custom_call.1} parent=1 // pred_fallthru
      _
    %5853 = vsyncpa [#allocation5], 1

</llo_original>
